<compile_context>
chip_gen: v7x
topology: tpu7x:2x2x1
jax: 0.10.0
libtpu: 0.0.40
codegen_flags: <defaults>
</compile_context>

<pallas_src>
import functools

import jax
import jax.numpy as jnp
from jax import lax
from jax.experimental import pallas as pl
from jax.experimental.pallas import tpu as pltpu


def _conv3x3_kernel(x_ref, w_ref, o_ref, *, wv):
    # x_ref: (Hp*Wv, Cp)   flattened, zero-padded image (one batch element)
    # w_ref: (9, Cp, Cp)    taps ordered kh*3 + kw  (HWIO, channel-padded)
    # o_ref: (H*Wv, Cp)     flattened output (cols >= W and chans >= Cout are junk)
    L, _ = o_ref.shape
    acc = None
    for kh in range(3):
        for kw in range(3):
            s = kh * wv + kw                     # static flattened shift for this tap
            xs = x_ref[pl.ds(s, L), :]           # (L, Cp) shifted window
            d = jnp.dot(xs, w_ref[kh * 3 + kw],  # single big MXU matmul per tap
                        preferred_element_type=jnp.float32)
            acc = d if acc is None else acc + d
    o_ref[...] = acc.astype(o_ref.dtype)         # one unmasked, lane-dense store


def conv2d_3x3_same(x_nchw, w_oihw):
    """PyTorch-semantics Conv2d(kernel=3, stride=1, padding=1, bias=False)."""
    N, Cin, H, W = x_nchw.shape
    Cout = w_oihw.shape[0]

    CP = ((max(Cin, Cout) + 127) // 128) * 128   # lane-pad channels -> 128
    WV = ((W + 2 + 7) // 8) * 8                  # internal width >= W+2, sublane aligned
    HP = H + 3                                   # 1 top pad + 2 bottom pad rows (slack)
    L = H * WV                                   # flattened output rows per image

    # ---- glue in plain JAX: layout + zero padding ----
    x_nhwc = jnp.transpose(x_nchw, (0, 2, 3, 1)).astype(jnp.float32)     # NCHW -> NHWC
    x_pad = jnp.pad(
        x_nhwc,
        ((0, 0), (1, HP - H - 1), (1, WV - W - 1), (0, CP - Cin)),
    )                                                                     # (N, HP, WV, CP)
    x_flat = x_pad.reshape(N, HP * WV, CP)                                # flatten spatial

    w_hwio = jnp.transpose(w_oihw, (2, 3, 1, 0)).astype(jnp.float32)      # OIHW -> HWIO
    w_pad = jnp.pad(w_hwio, ((0, 0), (0, 0), (0, CP - Cin), (0, CP - Cout)))
    w_taps = w_pad.reshape(9, CP, CP)                                     # (9, CP, CP)

    out_flat = pl.pallas_call(
        functools.partial(_conv3x3_kernel, wv=WV),
        out_shape=jax.ShapeDtypeStruct((N, L, CP), jnp.float32),
        grid=(N,),
        in_specs=[
            pl.BlockSpec((None, HP * WV, CP), lambda n: (n, 0, 0)),
            pl.BlockSpec((9, CP, CP), lambda n: (0, 0, 0)),
        ],
        out_specs=pl.BlockSpec((None, L, CP), lambda n: (n, 0, 0)),
        compiler_params=pltpu.CompilerParams(
            dimension_semantics=("parallel",)),
    )(x_flat, w_taps)

    out = out_flat.reshape(N, H, WV, CP)[:, :, :W, :Cout]                 # drop junk cols/chans
    return jnp.transpose(out, (0, 3, 1, 2)).astype(x_nchw.dtype)          # NHWC -> NCHW


if __name__ == "__main__":
    key = jax.random.PRNGKey(0)
    kx, kw = jax.random.split(key)

    # Shapes implied by the module: input [1, 96, 25, 25], weight [96, 96, 3, 3].
    x = jax.random.normal(kx, (1, 96, 25, 25), dtype=jnp.float32)
    fan_in = 96 * 3 * 3
    w = jax.random.uniform(kw, (96, 96, 3, 3), dtype=jnp.float32,
                           minval=-1.0, maxval=1.0) / jnp.sqrt(fan_in)

    out = conv2d_3x3_same(x, w)
    out = jax.block_until_ready(out)

    # Cross-check against the XLA convolution reference.
    ref = lax.conv_general_dilated(
        x, w, window_strides=(1, 1), padding=((1, 1), (1, 1)),
        dimension_numbers=("NCHW", "OIHW", "NCHW"))
    assert out.shape == (1, 96, 25, 25)
    assert jnp.allclose(out, ref, atol=2e-4, rtol=2e-4), "mismatch vs reference conv"

    print("KERNEL_OK")
</pallas_src>

<mosaic_0001>
module attributes {stable_mosaic.version = 11 : i64} {
  func.func @_conv3x3_kernel(%arg0: i32, %arg1: memref<1x896x128xf32, #tpu.memory_space<vmem>>, %arg2: memref<9x128x128xf32, #tpu.memory_space<vmem>>, %arg3: memref<1x800x128xf32, #tpu.memory_space<vmem>>) attributes {dimension_semantics = [#tpu.dimension_semantics<parallel>], iteration_bounds = array<i64: 1>, scalar_prefetch = 0 : i64, scratch_operands = 0 : i64, tpu.core_type = #tpu.core_type<tc>, window_params = [{transform_indices = @transform_0, window_bounds = array<i64: 1, 896, 128>}, {pipeline_mode = #tpu.pipeline_mode<synchronous>, transform_indices = @transform_1, window_bounds = array<i64: 9, 128, 128>}, {transform_indices = @transform_2, window_bounds = array<i64: 1, 800, 128>}]} {
    %c0 = arith.constant 0 : index
    %c0_0 = arith.constant 0 : index
    %c0_1 = arith.constant 0 : index
    %0 = vector.load %arg1[%c0, %c0_0, %c0_1] : memref<1x896x128xf32, #tpu.memory_space<vmem>>, vector<1x800x128xf32>
    %1 = vector.shape_cast %0 : vector<1x800x128xf32> to vector<800x128xf32>
    %c0_2 = arith.constant 0 : index
    %c0_3 = arith.constant 0 : index
    %c0_4 = arith.constant 0 : index
    %2 = vector.load %arg2[%c0_2, %c0_3, %c0_4] : memref<9x128x128xf32, #tpu.memory_space<vmem>>, vector<1x128x128xf32>
    %3 = vector.shape_cast %2 : vector<1x128x128xf32> to vector<128x128xf32>
    %cst = arith.constant dense<0.000000e+00> : vector<800x128xf32>
    %4 = tpu.matmul %1, %3, %cst {dimension_numbers = #tpu.dot_dimension_numbers<[1], [0], [0], [1], [0, 0, 1, 1], [], []>} : vector<800x128xf32>, vector<128x128xf32>, vector<800x128xf32> -> vector<800x128xf32>
    %c0_5 = arith.constant 0 : index
    %c1 = arith.constant 1 : index
    %c0_6 = arith.constant 0 : index
    %5 = vector.load %arg1[%c0_5, %c1, %c0_6] : memref<1x896x128xf32, #tpu.memory_space<vmem>>, vector<1x800x128xf32>
    %6 = vector.shape_cast %5 : vector<1x800x128xf32> to vector<800x128xf32>
    %c1_7 = arith.constant 1 : index
    %c0_8 = arith.constant 0 : index
    %c0_9 = arith.constant 0 : index
    %7 = vector.load %arg2[%c1_7, %c0_8, %c0_9] : memref<9x128x128xf32, #tpu.memory_space<vmem>>, vector<1x128x128xf32>
    %8 = vector.shape_cast %7 : vector<1x128x128xf32> to vector<128x128xf32>
    %cst_10 = arith.constant dense<0.000000e+00> : vector<800x128xf32>
    %9 = tpu.matmul %6, %8, %cst_10 {dimension_numbers = #tpu.dot_dimension_numbers<[1], [0], [0], [1], [0, 0, 1, 1], [], []>} : vector<800x128xf32>, vector<128x128xf32>, vector<800x128xf32> -> vector<800x128xf32>
    %10 = arith.addf %4, %9 : vector<800x128xf32>
    %c0_11 = arith.constant 0 : index
    %c2 = arith.constant 2 : index
    %c0_12 = arith.constant 0 : index
    %11 = vector.load %arg1[%c0_11, %c2, %c0_12] : memref<1x896x128xf32, #tpu.memory_space<vmem>>, vector<1x800x128xf32>
    %12 = vector.shape_cast %11 : vector<1x800x128xf32> to vector<800x128xf32>
    %c2_13 = arith.constant 2 : index
    %c0_14 = arith.constant 0 : index
    %c0_15 = arith.constant 0 : index
    %13 = vector.load %arg2[%c2_13, %c0_14, %c0_15] : memref<9x128x128xf32, #tpu.memory_space<vmem>>, vector<1x128x128xf32>
    %14 = vector.shape_cast %13 : vector<1x128x128xf32> to vector<128x128xf32>
    %cst_16 = arith.constant dense<0.000000e+00> : vector<800x128xf32>
    %15 = tpu.matmul %12, %14, %cst_16 {dimension_numbers = #tpu.dot_dimension_numbers<[1], [0], [0], [1], [0, 0, 1, 1], [], []>} : vector<800x128xf32>, vector<128x128xf32>, vector<800x128xf32> -> vector<800x128xf32>
    %16 = arith.addf %10, %15 : vector<800x128xf32>
    %c0_17 = arith.constant 0 : index
    %c32 = arith.constant 32 : index
    %c0_18 = arith.constant 0 : index
    %17 = vector.load %arg1[%c0_17, %c32, %c0_18] : memref<1x896x128xf32, #tpu.memory_space<vmem>>, vector<1x800x128xf32>
    %18 = vector.shape_cast %17 : vector<1x800x128xf32> to vector<800x128xf32>
    %c3 = arith.constant 3 : index
    %c0_19 = arith.constant 0 : index
    %c0_20 = arith.constant 0 : index
    %19 = vector.load %arg2[%c3, %c0_19, %c0_20] : memref<9x128x128xf32, #tpu.memory_space<vmem>>, vector<1x128x128xf32>
    %20 = vector.shape_cast %19 : vector<1x128x128xf32> to vector<128x128xf32>
    %cst_21 = arith.constant dense<0.000000e+00> : vector<800x128xf32>
    %21 = tpu.matmul %18, %20, %cst_21 {dimension_numbers = #tpu.dot_dimension_numbers<[1], [0], [0], [1], [0, 0, 1, 1], [], []>} : vector<800x128xf32>, vector<128x128xf32>, vector<800x128xf32> -> vector<800x128xf32>
    %22 = arith.addf %16, %21 : vector<800x128xf32>
    %c0_22 = arith.constant 0 : index
    %c33 = arith.constant 33 : index
    %c0_23 = arith.constant 0 : index
    %23 = vector.load %arg1[%c0_22, %c33, %c0_23] : memref<1x896x128xf32, #tpu.memory_space<vmem>>, vector<1x800x128xf32>
    %24 = vector.shape_cast %23 : vector<1x800x128xf32> to vector<800x128xf32>
    %c4 = arith.constant 4 : index
    %c0_24 = arith.constant 0 : index
    %c0_25 = arith.constant 0 : index
    %25 = vector.load %arg2[%c4, %c0_24, %c0_25] : memref<9x128x128xf32, #tpu.memory_space<vmem>>, vector<1x128x128xf32>
    %26 = vector.shape_cast %25 : vector<1x128x128xf32> to vector<128x128xf32>
    %cst_26 = arith.constant dense<0.000000e+00> : vector<800x128xf32>
    %27 = tpu.matmul %24, %26, %cst_26 {dimension_numbers = #tpu.dot_dimension_numbers<[1], [0], [0], [1], [0, 0, 1, 1], [], []>} : vector<800x128xf32>, vector<128x128xf32>, vector<800x128xf32> -> vector<800x128xf32>
    %28 = arith.addf %22, %27 : vector<800x128xf32>
    %c0_27 = arith.constant 0 : index
    %c34 = arith.constant 34 : index
    %c0_28 = arith.constant 0 : index
    %29 = vector.load %arg1[%c0_27, %c34, %c0_28] : memref<1x896x128xf32, #tpu.memory_space<vmem>>, vector<1x800x128xf32>
    %30 = vector.shape_cast %29 : vector<1x800x128xf32> to vector<800x128xf32>
    %c5 = arith.constant 5 : index
    %c0_29 = arith.constant 0 : index
    %c0_30 = arith.constant 0 : index
    %31 = vector.load %arg2[%c5, %c0_29, %c0_30] : memref<9x128x128xf32, #tpu.memory_space<vmem>>, vector<1x128x128xf32>
    %32 = vector.shape_cast %31 : vector<1x128x128xf32> to vector<128x128xf32>
    %cst_31 = arith.constant dense<0.000000e+00> : vector<800x128xf32>
    %33 = tpu.matmul %30, %32, %cst_31 {dimension_numbers = #tpu.dot_dimension_numbers<[1], [0], [0], [1], [0, 0, 1, 1], [], []>} : vector<800x128xf32>, vector<128x128xf32>, vector<800x128xf32> -> vector<800x128xf32>
    %34 = arith.addf %28, %33 : vector<800x128xf32>
    %c0_32 = arith.constant 0 : index
    %c64 = arith.constant 64 : index
    %c0_33 = arith.constant 0 : index
    %35 = vector.load %arg1[%c0_32, %c64, %c0_33] : memref<1x896x128xf32, #tpu.memory_space<vmem>>, vector<1x800x128xf32>
    %36 = vector.shape_cast %35 : vector<1x800x128xf32> to vector<800x128xf32>
    %c6 = arith.constant 6 : index
    %c0_34 = arith.constant 0 : index
    %c0_35 = arith.constant 0 : index
    %37 = vector.load %arg2[%c6, %c0_34, %c0_35] : memref<9x128x128xf32, #tpu.memory_space<vmem>>, vector<1x128x128xf32>
    %38 = vector.shape_cast %37 : vector<1x128x128xf32> to vector<128x128xf32>
    %cst_36 = arith.constant dense<0.000000e+00> : vector<800x128xf32>
    %39 = tpu.matmul %36, %38, %cst_36 {dimension_numbers = #tpu.dot_dimension_numbers<[1], [0], [0], [1], [0, 0, 1, 1], [], []>} : vector<800x128xf32>, vector<128x128xf32>, vector<800x128xf32> -> vector<800x128xf32>
    %40 = arith.addf %34, %39 : vector<800x128xf32>
    %c0_37 = arith.constant 0 : index
    %c65 = arith.constant 65 : index
    %c0_38 = arith.constant 0 : index
    %41 = vector.load %arg1[%c0_37, %c65, %c0_38] : memref<1x896x128xf32, #tpu.memory_space<vmem>>, vector<1x800x128xf32>
    %42 = vector.shape_cast %41 : vector<1x800x128xf32> to vector<800x128xf32>
    %c7 = arith.constant 7 : index
    %c0_39 = arith.constant 0 : index
    %c0_40 = arith.constant 0 : index
    %43 = vector.load %arg2[%c7, %c0_39, %c0_40] : memref<9x128x128xf32, #tpu.memory_space<vmem>>, vector<1x128x128xf32>
    %44 = vector.shape_cast %43 : vector<1x128x128xf32> to vector<128x128xf32>
    %cst_41 = arith.constant dense<0.000000e+00> : vector<800x128xf32>
    %45 = tpu.matmul %42, %44, %cst_41 {dimension_numbers = #tpu.dot_dimension_numbers<[1], [0], [0], [1], [0, 0, 1, 1], [], []>} : vector<800x128xf32>, vector<128x128xf32>, vector<800x128xf32> -> vector<800x128xf32>
    %46 = arith.addf %40, %45 : vector<800x128xf32>
    %c0_42 = arith.constant 0 : index
    %c66 = arith.constant 66 : index
    %c0_43 = arith.constant 0 : index
    %47 = vector.load %arg1[%c0_42, %c66, %c0_43] : memref<1x896x128xf32, #tpu.memory_space<vmem>>, vector<1x800x128xf32>
    %48 = vector.shape_cast %47 : vector<1x800x128xf32> to vector<800x128xf32>
    %c8 = arith.constant 8 : index
    %c0_44 = arith.constant 0 : index
    %c0_45 = arith.constant 0 : index
    %49 = vector.load %arg2[%c8, %c0_44, %c0_45] : memref<9x128x128xf32, #tpu.memory_space<vmem>>, vector<1x128x128xf32>
    %50 = vector.shape_cast %49 : vector<1x128x128xf32> to vector<128x128xf32>
    %cst_46 = arith.constant dense<0.000000e+00> : vector<800x128xf32>
    %51 = tpu.matmul %48, %50, %cst_46 {dimension_numbers = #tpu.dot_dimension_numbers<[1], [0], [0], [1], [0, 0, 1, 1], [], []>} : vector<800x128xf32>, vector<128x128xf32>, vector<800x128xf32> -> vector<800x128xf32>
    %52 = arith.addf %46, %51 : vector<800x128xf32>
    %c0_47 = arith.constant 0 : index
    %c0_48 = arith.constant 0 : index
    %c0_49 = arith.constant 0 : index
    %53 = vector.load %arg3[%c0_47, %c0_48, %c0_49] : memref<1x800x128xf32, #tpu.memory_space<vmem>>, vector<1x800x128xf32>
    %54 = vector.shape_cast %53 : vector<1x800x128xf32> to vector<800x128xf32>
    %55 = vector.shape_cast %52 : vector<800x128xf32> to vector<1x800x128xf32>
    tpu.vector_store %arg3[%c0_47, %c0_48, %c0_49], %55 {strides = array<i32>} : memref<1x800x128xf32, #tpu.memory_space<vmem>>, vector<1x800x128xf32>,
    return
  }
  func.func @transform_0(%arg0: i32) -> (i32, i32, i32) {
    %c0_i32 = arith.constant 0 : i32
    %c0_i32_0 = arith.constant 0 : i32
    %c0_i32_1 = arith.constant 0 : i32
    return %arg0, %c0_i32, %c0_i32_0 : i32, i32, i32
  }
  func.func @transform_1(%arg0: i32) -> (i32, i32, i32) {
    %c0_i32 = arith.constant 0 : i32
    %c0_i32_0 = arith.constant 0 : i32
    %c0_i32_1 = arith.constant 0 : i32
    %c0_i32_2 = arith.constant 0 : i32
    return %c0_i32, %c0_i32_0, %c0_i32_1 : i32, i32, i32
  }
  func.func @transform_2(%arg0: i32) -> (i32, i32, i32) {
    %c0_i32 = arith.constant 0 : i32
    %c0_i32_0 = arith.constant 0 : i32
    %c0_i32_1 = arith.constant 0 : i32
    return %arg0, %c0_i32, %c0_i32_0 : i32, i32, i32
  }
}

</mosaic_0001>

<llo_original>
// kernel: tpu_custom_call.1
$region0: #{tpu_custom_call.1}
  #allocation0 [shape = 'u32[]', space=smem, size = 0x4, offset = 0x4, fixed_abs, tag = 'smem constant byte address 0x4 - core index']
  #allocation1 [shape = 'u32[144,128]{1,0:T(1,128)}', space=vmem, size = 0x12000, scoped, tag = 'internal scratch']
  %s0 = inlined_call_operand.hbm [shape: f32[1,896,128], index: 0, kind: input, shape index: {}]
  %s1 = inlined_call_operand.hbm [shape: f32[9,128,128], index: 1, kind: input, shape index: {}]
  %s2 = inlined_call_operand.hbm [shape: f32[1,800,128], index: 2, kind: output, shape index: {}]
  %s3 = sld [smem:[#allocation0]]
  $region26: #{tpu_custom_call.1} parent=0
    _
  %s5 = ssub.s32 1, %s3
  %s6 = scalar_select 0, %s5, %s3
  $region1: #{tpu_custom_call.1} parent=0
    #allocation2 [shape = 'u8[458752]{0}', space=vmem, size = 0x70000, scoped, tag = 'input window, operand 0, single buffered']
    #allocation3 [shape = 's32[1]{0}', space=sflag, size = 0x4, scoped, tag = 'scoped memory for tpu_custom_call.1']
    #allocation4 [shape = 's32[1]{0}', space=sflag, size = 0x4, scoped, tag = 'scoped memory for tpu_custom_call.1']
    #allocation5 [shape = 'u8[589824]{0}', space=vmem, size = 0x90000, scoped, tag = 'input window, operand 1, single buffered']
    #allocation6 [shape = 's32[1]{0}', space=sflag, size = 0x4, scoped, tag = 'scoped memory for tpu_custom_call.1']
    #allocation7 [shape = 'u8[409600]{0}', space=vmem, size = 0x64000, scoped, tag = 'output window, operand 0, single buffered']
    %7 = vsyncpa [#allocation3], 0
    %8 = vsyncpa [#allocation6], 0
    %9 = vsyncpa [#allocation4], 0
    // Predicated region
    $region2: #{tpu_custom_call.1} parent=1 // pred_check
      _
    $region3: #{tpu_custom_call.1} parent=1 // pred_check_branch
      %11 = sbr.rel (0) target = $region5
    $region4: #{tpu_custom_call.1} parent=1 // pred_region
      %s13 = ssub.s32 14336, 14336
      %14 = vsyncadd [#allocation3], %s13
      %s15 = sshll.u32 [#allocation2], 4
      %s16 = int_to_ptr.vmem [resolvable:$true] %s15
      %21 = dma.hbm_to_vmem [thread:$0]  %s0, 14336, %s16, [#allocation3], 128, 128, 8
    $region5: #{tpu_custom_call.1} parent=1 // pred_fallthru
      _
    // Predicated region
    $region6: #{tpu_custom_call.1} parent=1 // pred_check
      _
    $region7: #{tpu_custom_call.1} parent=1 // pred_check_branch
      %23 = sbr.rel (0) target = $region9
    $region8: #{tpu_custom_call.1} parent=1 // pred_region
      %s25 = ssub.s32 18432, 18432
      %26 = vsyncadd [#allocation6], %s25
      %s27 = sshll.u32 [#allocation5], 4
      %s28 = int_to_ptr.vmem [resolvable:$true] %s27
      %33 = dma.hbm_to_vmem [thread:$0]  %s1, 18432, %s28, [#allocation6], 128, 128, 8
    $region9: #{tpu_custom_call.1} parent=1 // pred_fallthru
      _
    // Predicated region
    $region10: #{tpu_custom_call.1} parent=1 // pred_check
      _
    $region11: #{tpu_custom_call.1} parent=1 // pred_check_branch
      %35 = sbr.rel (0) target = $region13
    $region12: #{tpu_custom_call.1} parent=1 // pred_region
      %36 = dma.done [#allocation3], 14336
    $region13: #{tpu_custom_call.1} parent=1 // pred_fallthru
      _
    // Predicated region
    $region14: #{tpu_custom_call.1} parent=1 // pred_check
      _
    $region15: #{tpu_custom_call.1} parent=1 // pred_check_branch
      %38 = sbr.rel (0) target = $region17
    $region16: #{tpu_custom_call.1} parent=1 // pred_region
      %39 = dma.done [#allocation6], 18432
    $region17: #{tpu_custom_call.1} parent=1 // pred_fallthru
      _
    %v40 = vld [vmem:[#allocation2] sm:$0xff]
    %v41 = vld [vmem:[#allocation2 + $0x8] sm:$0xff]
    %v42 = vld [vmem:[#allocation2 + $0x10] sm:$0xff]
    %v43 = vld [vmem:[#allocation2 + $0x18] sm:$0xff]
    %v44 = vld [vmem:[#allocation2 + $0x20] sm:$0xff]
    %v45 = vld [vmem:[#allocation2 + $0x28] sm:$0xff]
    %v46 = vld [vmem:[#allocation2 + $0x30] sm:$0xff]
    %v47 = vld [vmem:[#allocation2 + $0x38] sm:$0xff]
    %v48 = vld [vmem:[#allocation2 + $0x40] sm:$0xff]
    %v49 = vld [vmem:[#allocation2 + $0x48] sm:$0xff]
    %v50 = vld [vmem:[#allocation2 + $0x50] sm:$0xff]
    %v51 = vld [vmem:[#allocation2 + $0x58] sm:$0xff]
    %v52 = vld [vmem:[#allocation2 + $0x60] sm:$0xff]
    %v53 = vld [vmem:[#allocation2 + $0x68] sm:$0xff]
    %v54 = vld [vmem:[#allocation2 + $0x70] sm:$0xff]
    %v55 = vld [vmem:[#allocation2 + $0x78] sm:$0xff]
    %v56 = vld [vmem:[#allocation2 + $0x80] sm:$0xff]
    %v57 = vld [vmem:[#allocation2 + $0x88] sm:$0xff]
    %v58 = vld [vmem:[#allocation2 + $0x90] sm:$0xff]
    %v59 = vld [vmem:[#allocation2 + $0x98] sm:$0xff]
    %v60 = vld [vmem:[#allocation2 + $0xa0] sm:$0xff]
    %v61 = vld [vmem:[#allocation2 + $0xa8] sm:$0xff]
    %v62 = vld [vmem:[#allocation2 + $0xb0] sm:$0xff]
    %v63 = vld [vmem:[#allocation2 + $0xb8] sm:$0xff]
    %v64 = vld [vmem:[#allocation2 + $0xc0] sm:$0xff]
    %v65 = vld [vmem:[#allocation2 + $0xc8] sm:$0xff]
    %v66 = vld [vmem:[#allocation2 + $0xd0] sm:$0xff]
    %v67 = vld [vmem:[#allocation2 + $0xd8] sm:$0xff]
    %v68 = vld [vmem:[#allocation2 + $0xe0] sm:$0xff]
    %v69 = vld [vmem:[#allocation2 + $0xe8] sm:$0xff]
    %v70 = vld [vmem:[#allocation2 + $0xf0] sm:$0xff]
    %v71 = vld [vmem:[#allocation2 + $0xf8] sm:$0xff]
    %v72 = vld [vmem:[#allocation2 + $0x100] sm:$0xff]
    %v73 = vld [vmem:[#allocation2 + $0x108] sm:$0xff]
    %v74 = vld [vmem:[#allocation2 + $0x110] sm:$0xff]
    %v75 = vld [vmem:[#allocation2 + $0x118] sm:$0xff]
    %v76 = vld [vmem:[#allocation2 + $0x120] sm:$0xff]
    %v77 = vld [vmem:[#allocation2 + $0x128] sm:$0xff]
    %v78 = vld [vmem:[#allocation2 + $0x130] sm:$0xff]
    %v79 = vld [vmem:[#allocation2 + $0x138] sm:$0xff]
    %v80 = vld [vmem:[#allocation2 + $0x140] sm:$0xff]
    %v81 = vld [vmem:[#allocation2 + $0x148] sm:$0xff]
    %v82 = vld [vmem:[#allocation2 + $0x150] sm:$0xff]
    %v83 = vld [vmem:[#allocation2 + $0x158] sm:$0xff]
    %v84 = vld [vmem:[#allocation2 + $0x160] sm:$0xff]
    %v85 = vld [vmem:[#allocation2 + $0x168] sm:$0xff]
    %v86 = vld [vmem:[#allocation2 + $0x170] sm:$0xff]
    %v87 = vld [vmem:[#allocation2 + $0x178] sm:$0xff]
    %v88 = vld [vmem:[#allocation2 + $0x180] sm:$0xff]
    %v89 = vld [vmem:[#allocation2 + $0x188] sm:$0xff]
    %v90 = vld [vmem:[#allocation2 + $0x190] sm:$0xff]
    %v91 = vld [vmem:[#allocation2 + $0x198] sm:$0xff]
    %v92 = vld [vmem:[#allocation2 + $0x1a0] sm:$0xff]
    %v93 = vld [vmem:[#allocation2 + $0x1a8] sm:$0xff]
    %v94 = vld [vmem:[#allocation2 + $0x1b0] sm:$0xff]
    %v95 = vld [vmem:[#allocation2 + $0x1b8] sm:$0xff]
    %v96 = vld [vmem:[#allocation2 + $0x1c0] sm:$0xff]
    %v97 = vld [vmem:[#allocation2 + $0x1c8] sm:$0xff]
    %v98 = vld [vmem:[#allocation2 + $0x1d0] sm:$0xff]
    %v99 = vld [vmem:[#allocation2 + $0x1d8] sm:$0xff]
    %v100 = vld [vmem:[#allocation2 + $0x1e0] sm:$0xff]
    %v101 = vld [vmem:[#allocation2 + $0x1e8] sm:$0xff]
    %v102 = vld [vmem:[#allocation2 + $0x1f0] sm:$0xff]
    %v103 = vld [vmem:[#allocation2 + $0x1f8] sm:$0xff]
    %v104 = vld [vmem:[#allocation2 + $0x200] sm:$0xff]
    %v105 = vld [vmem:[#allocation2 + $0x208] sm:$0xff]
    %v106 = vld [vmem:[#allocation2 + $0x210] sm:$0xff]
    %v107 = vld [vmem:[#allocation2 + $0x218] sm:$0xff]
    %v108 = vld [vmem:[#allocation2 + $0x220] sm:$0xff]
    %v109 = vld [vmem:[#allocation2 + $0x228] sm:$0xff]
    %v110 = vld [vmem:[#allocation2 + $0x230] sm:$0xff]
    %v111 = vld [vmem:[#allocation2 + $0x238] sm:$0xff]
    %v112 = vld [vmem:[#allocation2 + $0x240] sm:$0xff]
    %v113 = vld [vmem:[#allocation2 + $0x248] sm:$0xff]
    %v114 = vld [vmem:[#allocation2 + $0x250] sm:$0xff]
    %v115 = vld [vmem:[#allocation2 + $0x258] sm:$0xff]
    %v116 = vld [vmem:[#allocation2 + $0x260] sm:$0xff]
    %v117 = vld [vmem:[#allocation2 + $0x268] sm:$0xff]
    %v118 = vld [vmem:[#allocation2 + $0x270] sm:$0xff]
    %v119 = vld [vmem:[#allocation2 + $0x278] sm:$0xff]
    %v120 = vld [vmem:[#allocation2 + $0x280] sm:$0xff]
    %v121 = vld [vmem:[#allocation2 + $0x288] sm:$0xff]
    %v122 = vld [vmem:[#allocation2 + $0x290] sm:$0xff]
    %v123 = vld [vmem:[#allocation2 + $0x298] sm:$0xff]
    %v124 = vld [vmem:[#allocation2 + $0x2a0] sm:$0xff]
    %v125 = vld [vmem:[#allocation2 + $0x2a8] sm:$0xff]
    %v126 = vld [vmem:[#allocation2 + $0x2b0] sm:$0xff]
    %v127 = vld [vmem:[#allocation2 + $0x2b8] sm:$0xff]
    %v128 = vld [vmem:[#allocation2 + $0x2c0] sm:$0xff]
    %v129 = vld [vmem:[#allocation2 + $0x2c8] sm:$0xff]
    %v130 = vld [vmem:[#allocation2 + $0x2d0] sm:$0xff]
    %v131 = vld [vmem:[#allocation2 + $0x2d8] sm:$0xff]
    %v132 = vld [vmem:[#allocation2 + $0x2e0] sm:$0xff]
    %v133 = vld [vmem:[#allocation2 + $0x2e8] sm:$0xff]
    %v134 = vld [vmem:[#allocation2 + $0x2f0] sm:$0xff]
    %v135 = vld [vmem:[#allocation2 + $0x2f8] sm:$0xff]
    %v136 = vld [vmem:[#allocation2 + $0x300] sm:$0xff]
    %v137 = vld [vmem:[#allocation2 + $0x308] sm:$0xff]
    %v138 = vld [vmem:[#allocation2 + $0x310] sm:$0xff]
    %v139 = vld [vmem:[#allocation2 + $0x318] sm:$0xff]
    %v140 = vld [vmem:[#allocation5] sm:$0xff]
    %v141 = vld [vmem:[#allocation5 + $0x8] sm:$0xff]
    %v142 = vld [vmem:[#allocation5 + $0x10] sm:$0xff]
    %v143 = vld [vmem:[#allocation5 + $0x18] sm:$0xff]
    %v144 = vld [vmem:[#allocation5 + $0x20] sm:$0xff]
    %v145 = vld [vmem:[#allocation5 + $0x28] sm:$0xff]
    %v146 = vld [vmem:[#allocation5 + $0x30] sm:$0xff]
    %v147 = vld [vmem:[#allocation5 + $0x38] sm:$0xff]
    %v148 = vld [vmem:[#allocation5 + $0x40] sm:$0xff]
    %v149 = vld [vmem:[#allocation5 + $0x48] sm:$0xff]
    %v150 = vld [vmem:[#allocation5 + $0x50] sm:$0xff]
    %v151 = vld [vmem:[#allocation5 + $0x58] sm:$0xff]
    %v152 = vld [vmem:[#allocation5 + $0x60] sm:$0xff]
    %v153 = vld [vmem:[#allocation5 + $0x68] sm:$0xff]
    %v154 = vld [vmem:[#allocation5 + $0x70] sm:$0xff]
    %v155 = vld [vmem:[#allocation5 + $0x78] sm:$0xff]
    %v156 = vld [vmem:[#allocation2 + $0x1] sm:$0xff]
    %v157 = vld [vmem:[#allocation2 + $0x9] sm:$0xff]
    %v158 = vld [vmem:[#allocation2 + $0x11] sm:$0xff]
    %v159 = vld [vmem:[#allocation2 + $0x19] sm:$0xff]
    %v160 = vld [vmem:[#allocation2 + $0x21] sm:$0xff]
    %v161 = vld [vmem:[#allocation2 + $0x29] sm:$0xff]
    %v162 = vld [vmem:[#allocation2 + $0x31] sm:$0xff]
    %v163 = vld [vmem:[#allocation2 + $0x39] sm:$0xff]
    %v164 = vld [vmem:[#allocation2 + $0x41] sm:$0xff]
    %v165 = vld [vmem:[#allocation2 + $0x49] sm:$0xff]
    %v166 = vld [vmem:[#allocation2 + $0x51] sm:$0xff]
    %v167 = vld [vmem:[#allocation2 + $0x59] sm:$0xff]
    %v168 = vld [vmem:[#allocation2 + $0x61] sm:$0xff]
    %v169 = vld [vmem:[#allocation2 + $0x69] sm:$0xff]
    %v170 = vld [vmem:[#allocation2 + $0x71] sm:$0xff]
    %v171 = vld [vmem:[#allocation2 + $0x79] sm:$0xff]
    %v172 = vld [vmem:[#allocation2 + $0x81] sm:$0xff]
    %v173 = vld [vmem:[#allocation2 + $0x89] sm:$0xff]
    %v174 = vld [vmem:[#allocation2 + $0x91] sm:$0xff]
    %v175 = vld [vmem:[#allocation2 + $0x99] sm:$0xff]
    %v176 = vld [vmem:[#allocation2 + $0xa1] sm:$0xff]
    %v177 = vld [vmem:[#allocation2 + $0xa9] sm:$0xff]
    %v178 = vld [vmem:[#allocation2 + $0xb1] sm:$0xff]
    %v179 = vld [vmem:[#allocation2 + $0xb9] sm:$0xff]
    %v180 = vld [vmem:[#allocation2 + $0xc1] sm:$0xff]
    %v181 = vld [vmem:[#allocation2 + $0xc9] sm:$0xff]
    %v182 = vld [vmem:[#allocation2 + $0xd1] sm:$0xff]
    %v183 = vld [vmem:[#allocation2 + $0xd9] sm:$0xff]
    %v184 = vld [vmem:[#allocation2 + $0xe1] sm:$0xff]
    %v185 = vld [vmem:[#allocation2 + $0xe9] sm:$0xff]
    %v186 = vld [vmem:[#allocation2 + $0xf1] sm:$0xff]
    %v187 = vld [vmem:[#allocation2 + $0xf9] sm:$0xff]
    %v188 = vld [vmem:[#allocation2 + $0x101] sm:$0xff]
    %v189 = vld [vmem:[#allocation2 + $0x109] sm:$0xff]
    %v190 = vld [vmem:[#allocation2 + $0x111] sm:$0xff]
    %v191 = vld [vmem:[#allocation2 + $0x119] sm:$0xff]
    %v192 = vld [vmem:[#allocation2 + $0x121] sm:$0xff]
    %v193 = vld [vmem:[#allocation2 + $0x129] sm:$0xff]
    %v194 = vld [vmem:[#allocation2 + $0x131] sm:$0xff]
    %v195 = vld [vmem:[#allocation2 + $0x139] sm:$0xff]
    %v196 = vld [vmem:[#allocation2 + $0x141] sm:$0xff]
    %v197 = vld [vmem:[#allocation2 + $0x149] sm:$0xff]
    %v198 = vld [vmem:[#allocation2 + $0x151] sm:$0xff]
    %v199 = vld [vmem:[#allocation2 + $0x159] sm:$0xff]
    %v200 = vld [vmem:[#allocation2 + $0x161] sm:$0xff]
    %v201 = vld [vmem:[#allocation2 + $0x169] sm:$0xff]
    %v202 = vld [vmem:[#allocation2 + $0x171] sm:$0xff]
    %v203 = vld [vmem:[#allocation2 + $0x179] sm:$0xff]
    %v204 = vld [vmem:[#allocation2 + $0x181] sm:$0xff]
    %v205 = vld [vmem:[#allocation2 + $0x189] sm:$0xff]
    %v206 = vld [vmem:[#allocation2 + $0x191] sm:$0xff]
    %v207 = vld [vmem:[#allocation2 + $0x199] sm:$0xff]
    %v208 = vld [vmem:[#allocation2 + $0x1a1] sm:$0xff]
    %v209 = vld [vmem:[#allocation2 + $0x1a9] sm:$0xff]
    %v210 = vld [vmem:[#allocation2 + $0x1b1] sm:$0xff]
    %v211 = vld [vmem:[#allocation2 + $0x1b9] sm:$0xff]
    %v212 = vld [vmem:[#allocation2 + $0x1c1] sm:$0xff]
    %v213 = vld [vmem:[#allocation2 + $0x1c9] sm:$0xff]
    %v214 = vld [vmem:[#allocation2 + $0x1d1] sm:$0xff]
    %v215 = vld [vmem:[#allocation2 + $0x1d9] sm:$0xff]
    %v216 = vld [vmem:[#allocation2 + $0x1e1] sm:$0xff]
    %v217 = vld [vmem:[#allocation2 + $0x1e9] sm:$0xff]
    %v218 = vld [vmem:[#allocation2 + $0x1f1] sm:$0xff]
    %v219 = vld [vmem:[#allocation2 + $0x1f9] sm:$0xff]
    %v220 = vld [vmem:[#allocation2 + $0x201] sm:$0xff]
    %v221 = vld [vmem:[#allocation2 + $0x209] sm:$0xff]
    %v222 = vld [vmem:[#allocation2 + $0x211] sm:$0xff]
    %v223 = vld [vmem:[#allocation2 + $0x219] sm:$0xff]
    %v224 = vld [vmem:[#allocation2 + $0x221] sm:$0xff]
    %v225 = vld [vmem:[#allocation2 + $0x229] sm:$0xff]
    %v226 = vld [vmem:[#allocation2 + $0x231] sm:$0xff]
    %v227 = vld [vmem:[#allocation2 + $0x239] sm:$0xff]
    %v228 = vld [vmem:[#allocation2 + $0x241] sm:$0xff]
    %v229 = vld [vmem:[#allocation2 + $0x249] sm:$0xff]
    %v230 = vld [vmem:[#allocation2 + $0x251] sm:$0xff]
    %v231 = vld [vmem:[#allocation2 + $0x259] sm:$0xff]
    %v232 = vld [vmem:[#allocation2 + $0x261] sm:$0xff]
    %v233 = vld [vmem:[#allocation2 + $0x269] sm:$0xff]
    %v234 = vld [vmem:[#allocation2 + $0x271] sm:$0xff]
    %v235 = vld [vmem:[#allocation2 + $0x279] sm:$0xff]
    %v236 = vld [vmem:[#allocation2 + $0x281] sm:$0xff]
    %v237 = vld [vmem:[#allocation2 + $0x289] sm:$0xff]
    %v238 = vld [vmem:[#allocation2 + $0x291] sm:$0xff]
    %v239 = vld [vmem:[#allocation2 + $0x299] sm:$0xff]
    %v240 = vld [vmem:[#allocation2 + $0x2a1] sm:$0xff]
    %v241 = vld [vmem:[#allocation2 + $0x2a9] sm:$0xff]
    %v242 = vld [vmem:[#allocation2 + $0x2b1] sm:$0xff]
    %v243 = vld [vmem:[#allocation2 + $0x2b9] sm:$0xff]
    %v244 = vld [vmem:[#allocation2 + $0x2c1] sm:$0xff]
    %v245 = vld [vmem:[#allocation2 + $0x2c9] sm:$0xff]
    %v246 = vld [vmem:[#allocation2 + $0x2d1] sm:$0xff]
    %v247 = vld [vmem:[#allocation2 + $0x2d9] sm:$0xff]
    %v248 = vld [vmem:[#allocation2 + $0x2e1] sm:$0xff]
    %v249 = vld [vmem:[#allocation2 + $0x2e9] sm:$0xff]
    %v250 = vld [vmem:[#allocation2 + $0x2f1] sm:$0xff]
    %v251 = vld [vmem:[#allocation2 + $0x2f9] sm:$0xff]
    %v252 = vld [vmem:[#allocation2 + $0x301] sm:$0xff]
    %v253 = vld [vmem:[#allocation2 + $0x309] sm:$0xff]
    %v254 = vld [vmem:[#allocation2 + $0x311] sm:$0xff]
    %v255 = vld [vmem:[#allocation2 + $0x319] sm:$0xff]
    %s256 = scalar_lea.vmem [#allocation5], 128
    %v257 = vld [vmem:[%s256] sm:$0xff]
    %v258 = vld [vmem:[%s256 + $0x8] sm:$0xff]
    %v259 = vld [vmem:[%s256 + $0x10] sm:$0xff]
    %v260 = vld [vmem:[%s256 + $0x18] sm:$0xff]
    %v261 = vld [vmem:[%s256 + $0x20] sm:$0xff]
    %v262 = vld [vmem:[%s256 + $0x28] sm:$0xff]
    %v263 = vld [vmem:[%s256 + $0x30] sm:$0xff]
    %v264 = vld [vmem:[%s256 + $0x38] sm:$0xff]
    %v265 = vld [vmem:[%s256 + $0x40] sm:$0xff]
    %v266 = vld [vmem:[%s256 + $0x48] sm:$0xff]
    %v267 = vld [vmem:[%s256 + $0x50] sm:$0xff]
    %v268 = vld [vmem:[%s256 + $0x58] sm:$0xff]
    %v269 = vld [vmem:[%s256 + $0x60] sm:$0xff]
    %v270 = vld [vmem:[%s256 + $0x68] sm:$0xff]
    %v271 = vld [vmem:[%s256 + $0x70] sm:$0xff]
    %v272 = vld [vmem:[%s256 + $0x78] sm:$0xff]
    %273 = vmatprep.subr.mxu0 0.0
    %274 = vmatpush1.msra.mxu0 %v257
    %275 = vmatprep.subr.mxu0 0.0
    %276 = vmatpush1.msra.mxu0 %v258
    %277 = vmatprep.subr.mxu0 0.0
    %278 = vmatpush1.msra.mxu0 %v259
    %279 = vmatprep.subr.mxu0 0.0
    %280 = vmatpush1.msra.mxu0 %v260
    %281 = vmatprep.subr.mxu0 0.0
    %282 = vmatpush1.msra.mxu0 %v261
    %283 = vmatprep.subr.mxu0 0.0
    %284 = vmatpush1.msra.mxu0 %v262
    %285 = vmatprep.subr.mxu0 0.0
    %286 = vmatpush1.msra.mxu0 %v263
    %287 = vmatprep.subr.mxu0 0.0
    %288 = vmatpush1.msra.mxu0 %v264
    %289 = vmatprep.subr.mxu0 0.0
    %290 = vmatpush1.msra.mxu0 %v265
    %291 = vmatprep.subr.mxu0 0.0
    %292 = vmatpush1.msra.mxu0 %v266
    %293 = vmatprep.subr.mxu0 0.0
    %294 = vmatpush1.msra.mxu0 %v267
    %295 = vmatprep.subr.mxu0 0.0
    %296 = vmatpush1.msra.mxu0 %v268
    %297 = vmatprep.subr.mxu0 0.0
    %298 = vmatpush1.msra.mxu0 %v269
    %299 = vmatprep.subr.mxu0 0.0
    %300 = vmatpush1.msra.mxu0 %v270
    %301 = vmatprep.subr.mxu0 0.0
    %302 = vmatpush1.msra.mxu0 %v271
    %303 = vmatprep.subr.mxu0 0.0
    %304 = vmatpush1.msra.mxu0 %v272
    %305 = vmatprep.subr.mxu0 0.0
    %306 = vmatpush1.msra.mxu0 0.0
    %307 = vmatprep.subr.mxu0 0.0
    %308 = vmatpush1.msra.mxu0 0.0
    %309 = vmatprep.subr.mxu0 0.0
    %310 = vmatpush1.msra.mxu0 0.0
    %311 = vmatprep.subr.mxu0 0.0
    %312 = vmatpush1.msra.mxu0 0.0
    %313 = vmatprep.subr.mxu0 0.0
    %314 = vmatpush1.msra.mxu0 0.0
    %315 = vmatprep.subr.mxu0 0.0
    %316 = vmatpush1.msra.mxu0 0.0
    %317 = vmatprep.subr.mxu0 0.0
    %318 = vmatpush1.msra.mxu0 0.0
    %319 = vmatprep.subr.mxu0 0.0
    %320 = vmatpush1.msra.mxu0 0.0
    %321 = vmatprep.subr.mxu0 0.0
    %322 = vmatpush1.msra.mxu0 0.0
    %323 = vmatprep.subr.mxu0 0.0
    %324 = vmatpush1.msra.mxu0 0.0
    %325 = vmatprep.subr.mxu0 0.0
    %326 = vmatpush1.msra.mxu0 0.0
    %327 = vmatprep.subr.mxu0 0.0
    %328 = vmatpush1.msra.mxu0 0.0
    %329 = vmatprep.subr.mxu0 0.0
    %330 = vmatpush1.msra.mxu0 0.0
    %331 = vmatprep.subr.mxu0 0.0
    %332 = vmatpush1.msra.mxu0 0.0
    %333 = vmatprep.subr.mxu0 0.0
    %334 = vmatpush1.msra.mxu0 0.0
    %335 = vmatprep.subr.mxu0 0.0
    %336 = vmatpush1.msra.mxu0 0.0
    %337 = vmatprep.mubr.f32.mxu0 0.0
    %338 = vmatmul.mubr.f32.gmra.mrb[0].mxu0 %v156
    %v339 = vpop.f32.mrb[0].mxu0
    %v340 = vadd.f32 0.0, %v339
    %v341 = vpop.f32.mrb[0].mxu0
    %342 = vmatprep.mubr.f32.mxu0 0.0
    %343 = vmatmul.mubr.f32.gmra.mrb[0].mxu0 %v157
    %v344 = vpop.f32.mrb[0].mxu0
    %v345 = vadd.f32 0.0, %v344
    %v346 = vpop.f32.mrb[0].mxu0
    %347 = vmatprep.mubr.f32.mxu0 0.0
    %348 = vmatmul.mubr.f32.gmra.mrb[0].mxu0 %v158
    %v349 = vpop.f32.mrb[0].mxu0
    %v350 = vadd.f32 0.0, %v349
    %v351 = vpop.f32.mrb[0].mxu0
    %352 = vmatprep.mubr.f32.mxu0 0.0
    %353 = vmatmul.mubr.f32.gmra.mrb[0].mxu0 %v159
    %v354 = vpop.f32.mrb[0].mxu0
    %v355 = vadd.f32 0.0, %v354
    %v356 = vpop.f32.mrb[0].mxu0
    %357 = vmatprep.mubr.f32.mxu0 0.0
    %358 = vmatmul.mubr.f32.gmra.mrb[0].mxu0 %v160
    %v359 = vpop.f32.mrb[0].mxu0
    %v360 = vadd.f32 0.0, %v359
    %v361 = vpop.f32.mrb[0].mxu0
    %362 = vmatprep.mubr.f32.mxu0 0.0
    %363 = vmatmul.mubr.f32.gmra.mrb[0].mxu0 %v161
    %v364 = vpop.f32.mrb[0].mxu0
    %v365 = vadd.f32 0.0, %v364
    %v366 = vpop.f32.mrb[0].mxu0
    %367 = vmatprep.mubr.f32.mxu0 0.0
    %368 = vmatmul.mubr.f32.gmra.mrb[0].mxu0 %v162
    %v369 = vpop.f32.mrb[0].mxu0
    %v370 = vadd.f32 0.0, %v369
    %v371 = vpop.f32.mrb[0].mxu0
    %372 = vmatprep.mubr.f32.mxu0 0.0
    %373 = vmatmul.mubr.f32.gmra.mrb[0].mxu0 %v163
    %v374 = vpop.f32.mrb[0].mxu0
    %v375 = vadd.f32 0.0, %v374
    %v376 = vpop.f32.mrb[0].mxu0
    %377 = vmatprep.mubr.f32.mxu0 0.0
    %378 = vmatmul.mubr.f32.gmra.mrb[0].mxu0 %v164
    %v379 = vpop.f32.mrb[0].mxu0
    %v380 = vadd.f32 0.0, %v379
    %v381 = vpop.f32.mrb[0].mxu0
    %382 = vmatprep.mubr.f32.mxu0 0.0
    %383 = vmatmul.mubr.f32.gmra.mrb[0].mxu0 %v165
    %v384 = vpop.f32.mrb[0].mxu0
    %v385 = vadd.f32 0.0, %v384
    %v386 = vpop.f32.mrb[0].mxu0
    %387 = vmatprep.mubr.f32.mxu0 0.0
    %388 = vmatmul.mubr.f32.gmra.mrb[0].mxu0 %v166
    %v389 = vpop.f32.mrb[0].mxu0
    %v390 = vadd.f32 0.0, %v389
    %v391 = vpop.f32.mrb[0].mxu0
    %392 = vmatprep.mubr.f32.mxu0 0.0
    %393 = vmatmul.mubr.f32.gmra.mrb[0].mxu0 %v167
    %v394 = vpop.f32.mrb[0].mxu0
    %v395 = vadd.f32 0.0, %v394
    %v396 = vpop.f32.mrb[0].mxu0
    %397 = vmatprep.mubr.f32.mxu0 0.0
    %398 = vmatmul.mubr.f32.gmra.mrb[0].mxu0 %v168
    %v399 = vpop.f32.mrb[0].mxu0
    %v400 = vadd.f32 0.0, %v399
    %v401 = vpop.f32.mrb[0].mxu0
    %402 = vmatprep.mubr.f32.mxu0 0.0
    %403 = vmatmul.mubr.f32.gmra.mrb[0].mxu0 %v169
    %v404 = vpop.f32.mrb[0].mxu0
    %v405 = vadd.f32 0.0, %v404
    %v406 = vpop.f32.mrb[0].mxu0
    %407 = vmatprep.mubr.f32.mxu0 0.0
    %408 = vmatmul.mubr.f32.gmra.mrb[0].mxu0 %v170
    %v409 = vpop.f32.mrb[0].mxu0
    %v410 = vadd.f32 0.0, %v409
    %v411 = vpop.f32.mrb[0].mxu0
    %412 = vmatprep.mubr.f32.mxu0 0.0
    %413 = vmatmul.mubr.f32.gmra.mrb[0].mxu0 %v171
    %v414 = vpop.f32.mrb[0].mxu0
    %v415 = vadd.f32 0.0, %v414
    %v416 = vpop.f32.mrb[0].mxu0
    %417 = vmatprep.mubr.f32.mxu0 0.0
    %418 = vmatmul.mubr.f32.gmra.mrb[0].mxu0 %v172
    %v419 = vpop.f32.mrb[0].mxu0
    %v420 = vadd.f32 0.0, %v419
    %v421 = vpop.f32.mrb[0].mxu0
    %422 = vmatprep.mubr.f32.mxu0 0.0
    %423 = vmatmul.mubr.f32.gmra.mrb[0].mxu0 %v173
    %v424 = vpop.f32.mrb[0].mxu0
    %v425 = vadd.f32 0.0, %v424
    %v426 = vpop.f32.mrb[0].mxu0
    %427 = vmatprep.mubr.f32.mxu0 0.0
    %428 = vmatmul.mubr.f32.gmra.mrb[0].mxu0 %v174
    %v429 = vpop.f32.mrb[0].mxu0
    %v430 = vadd.f32 0.0, %v429
    %v431 = vpop.f32.mrb[0].mxu0
    %432 = vmatprep.mubr.f32.mxu0 0.0
    %433 = vmatmul.mubr.f32.gmra.mrb[0].mxu0 %v175
    %v434 = vpop.f32.mrb[0].mxu0
    %v435 = vadd.f32 0.0, %v434
    %v436 = vpop.f32.mrb[0].mxu0
    %437 = vmatprep.mubr.f32.mxu0 0.0
    %438 = vmatmul.mubr.f32.gmra.mrb[0].mxu0 %v176
    %v439 = vpop.f32.mrb[0].mxu0
    %v440 = vadd.f32 0.0, %v439
    %v441 = vpop.f32.mrb[0].mxu0
    %442 = vmatprep.mubr.f32.mxu0 0.0
    %443 = vmatmul.mubr.f32.gmra.mrb[0].mxu0 %v177
    %v444 = vpop.f32.mrb[0].mxu0
    %v445 = vadd.f32 0.0, %v444
    %v446 = vpop.f32.mrb[0].mxu0
    %447 = vmatprep.mubr.f32.mxu0 0.0
    %448 = vmatmul.mubr.f32.gmra.mrb[0].mxu0 %v178
    %v449 = vpop.f32.mrb[0].mxu0
    %v450 = vadd.f32 0.0, %v449
    %v451 = vpop.f32.mrb[0].mxu0
    %452 = vmatprep.mubr.f32.mxu0 0.0
    %453 = vmatmul.mubr.f32.gmra.mrb[0].mxu0 %v179
    %v454 = vpop.f32.mrb[0].mxu0
    %v455 = vadd.f32 0.0, %v454
    %v456 = vpop.f32.mrb[0].mxu0
    %457 = vmatprep.mubr.f32.mxu0 0.0
    %458 = vmatmul.mubr.f32.gmra.mrb[0].mxu0 %v180
    %v459 = vpop.f32.mrb[0].mxu0
    %v460 = vadd.f32 0.0, %v459
    %v461 = vpop.f32.mrb[0].mxu0
    %462 = vmatprep.mubr.f32.mxu0 0.0
    %463 = vmatmul.mubr.f32.gmra.mrb[0].mxu0 %v181
    %v464 = vpop.f32.mrb[0].mxu0
    %v465 = vadd.f32 0.0, %v464
    %v466 = vpop.f32.mrb[0].mxu0
    %467 = vmatprep.mubr.f32.mxu0 0.0
    %468 = vmatmul.mubr.f32.gmra.mrb[0].mxu0 %v182
    %v469 = vpop.f32.mrb[0].mxu0
    %v470 = vadd.f32 0.0, %v469
    %v471 = vpop.f32.mrb[0].mxu0
    %472 = vmatprep.mubr.f32.mxu0 0.0
    %473 = vmatmul.mubr.f32.gmra.mrb[0].mxu0 %v183
    %v474 = vpop.f32.mrb[0].mxu0
    %v475 = vadd.f32 0.0, %v474
    %v476 = vpop.f32.mrb[0].mxu0
    %477 = vmatprep.mubr.f32.mxu0 0.0
    %478 = vmatmul.mubr.f32.gmra.mrb[0].mxu0 %v184
    %v479 = vpop.f32.mrb[0].mxu0
    %v480 = vadd.f32 0.0, %v479
    %v481 = vpop.f32.mrb[0].mxu0
    %482 = vmatprep.mubr.f32.mxu0 0.0
    %483 = vmatmul.mubr.f32.gmra.mrb[0].mxu0 %v185
    %v484 = vpop.f32.mrb[0].mxu0
    %v485 = vadd.f32 0.0, %v484
    %v486 = vpop.f32.mrb[0].mxu0
    %487 = vmatprep.mubr.f32.mxu0 0.0
    %488 = vmatmul.mubr.f32.gmra.mrb[0].mxu0 %v186
    %v489 = vpop.f32.mrb[0].mxu0
    %v490 = vadd.f32 0.0, %v489
    %v491 = vpop.f32.mrb[0].mxu0
    %492 = vmatprep.mubr.f32.mxu0 0.0
    %493 = vmatmul.mubr.f32.gmra.mrb[0].mxu0 %v187
    %v494 = vpop.f32.mrb[0].mxu0
    %v495 = vadd.f32 0.0, %v494
    %v496 = vpop.f32.mrb[0].mxu0
    %497 = vmatprep.mubr.f32.mxu0 0.0
    %498 = vmatmul.mubr.f32.gmra.mrb[0].mxu0 %v188
    %v499 = vpop.f32.mrb[0].mxu0
    %v500 = vadd.f32 0.0, %v499
    %v501 = vpop.f32.mrb[0].mxu0
    %502 = vmatprep.mubr.f32.mxu0 0.0
    %503 = vmatmul.mubr.f32.gmra.mrb[0].mxu0 %v189
    %v504 = vpop.f32.mrb[0].mxu0
    %v505 = vadd.f32 0.0, %v504
    %v506 = vpop.f32.mrb[0].mxu0
    %507 = vmatprep.mubr.f32.mxu0 0.0
    %508 = vmatmul.mubr.f32.gmra.mrb[0].mxu0 %v190
    %v509 = vpop.f32.mrb[0].mxu0
    %v510 = vadd.f32 0.0, %v509
    %v511 = vpop.f32.mrb[0].mxu0
    %512 = vmatprep.mubr.f32.mxu0 0.0
    %513 = vmatmul.mubr.f32.gmra.mrb[0].mxu0 %v191
    %v514 = vpop.f32.mrb[0].mxu0
    %v515 = vadd.f32 0.0, %v514
    %v516 = vpop.f32.mrb[0].mxu0
    %517 = vmatprep.mubr.f32.mxu0 0.0
    %518 = vmatmul.mubr.f32.gmra.mrb[0].mxu0 %v192
    %v519 = vpop.f32.mrb[0].mxu0
    %v520 = vadd.f32 0.0, %v519
    %v521 = vpop.f32.mrb[0].mxu0
    %522 = vmatprep.mubr.f32.mxu0 0.0
    %523 = vmatmul.mubr.f32.gmra.mrb[0].mxu0 %v193
    %v524 = vpop.f32.mrb[0].mxu0
    %v525 = vadd.f32 0.0, %v524
    %v526 = vpop.f32.mrb[0].mxu0
    %527 = vmatprep.mubr.f32.mxu0 0.0
    %528 = vmatmul.mubr.f32.gmra.mrb[0].mxu0 %v194
    %v529 = vpop.f32.mrb[0].mxu0
    %v530 = vadd.f32 0.0, %v529
    %v531 = vpop.f32.mrb[0].mxu0
    %532 = vmatprep.mubr.f32.mxu0 0.0
    %533 = vmatmul.mubr.f32.gmra.mrb[0].mxu0 %v195
    %v534 = vpop.f32.mrb[0].mxu0
    %v535 = vadd.f32 0.0, %v534
    %v536 = vpop.f32.mrb[0].mxu0
    %537 = vmatprep.mubr.f32.mxu0 0.0
    %538 = vmatmul.mubr.f32.gmra.mrb[0].mxu0 %v196
    %v539 = vpop.f32.mrb[0].mxu0
    %v540 = vadd.f32 0.0, %v539
    %v541 = vpop.f32.mrb[0].mxu0
    %542 = vmatprep.mubr.f32.mxu0 0.0
    %543 = vmatmul.mubr.f32.gmra.mrb[0].mxu0 %v197
    %v544 = vpop.f32.mrb[0].mxu0
    %v545 = vadd.f32 0.0, %v544
    %v546 = vpop.f32.mrb[0].mxu0
    %547 = vmatprep.mubr.f32.mxu0 0.0
    %548 = vmatmul.mubr.f32.gmra.mrb[0].mxu0 %v198
    %v549 = vpop.f32.mrb[0].mxu0
    %v550 = vadd.f32 0.0, %v549
    %v551 = vpop.f32.mrb[0].mxu0
    %552 = vmatprep.mubr.f32.mxu0 0.0
    %553 = vmatmul.mubr.f32.gmra.mrb[0].mxu0 %v199
    %v554 = vpop.f32.mrb[0].mxu0
    %v555 = vadd.f32 0.0, %v554
    %v556 = vpop.f32.mrb[0].mxu0
    %557 = vmatprep.mubr.f32.mxu0 0.0
    %558 = vmatmul.mubr.f32.gmra.mrb[0].mxu0 %v200
    %v559 = vpop.f32.mrb[0].mxu0
    %v560 = vadd.f32 0.0, %v559
    %v561 = vpop.f32.mrb[0].mxu0
    %562 = vmatprep.mubr.f32.mxu0 0.0
    %563 = vmatmul.mubr.f32.gmra.mrb[0].mxu0 %v201
    %v564 = vpop.f32.mrb[0].mxu0
    %v565 = vadd.f32 0.0, %v564
    %v566 = vpop.f32.mrb[0].mxu0
    %567 = vmatprep.mubr.f32.mxu0 0.0
    %568 = vmatmul.mubr.f32.gmra.mrb[0].mxu0 %v202
    %v569 = vpop.f32.mrb[0].mxu0
    %v570 = vadd.f32 0.0, %v569
    %v571 = vpop.f32.mrb[0].mxu0
    %572 = vmatprep.mubr.f32.mxu0 0.0
    %573 = vmatmul.mubr.f32.gmra.mrb[0].mxu0 %v203
    %v574 = vpop.f32.mrb[0].mxu0
    %v575 = vadd.f32 0.0, %v574
    %v576 = vpop.f32.mrb[0].mxu0
    %577 = vmatprep.mubr.f32.mxu0 0.0
    %578 = vmatmul.mubr.f32.gmra.mrb[0].mxu0 %v204
    %v579 = vpop.f32.mrb[0].mxu0
    %v580 = vadd.f32 0.0, %v579
    %v581 = vpop.f32.mrb[0].mxu0
    %582 = vmatprep.mubr.f32.mxu0 0.0
    %583 = vmatmul.mubr.f32.gmra.mrb[0].mxu0 %v205
    %v584 = vpop.f32.mrb[0].mxu0
    %v585 = vadd.f32 0.0, %v584
    %v586 = vpop.f32.mrb[0].mxu0
    %587 = vmatprep.mubr.f32.mxu0 0.0
    %588 = vmatmul.mubr.f32.gmra.mrb[0].mxu0 %v206
    %v589 = vpop.f32.mrb[0].mxu0
    %v590 = vadd.f32 0.0, %v589
    %v591 = vpop.f32.mrb[0].mxu0
    %592 = vmatprep.mubr.f32.mxu0 0.0
    %593 = vmatmul.mubr.f32.gmra.mrb[0].mxu0 %v207
    %v594 = vpop.f32.mrb[0].mxu0
    %v595 = vadd.f32 0.0, %v594
    %v596 = vpop.f32.mrb[0].mxu0
    %597 = vmatprep.mubr.f32.mxu0 0.0
    %598 = vmatmul.mubr.f32.gmra.mrb[0].mxu0 %v208
    %v599 = vpop.f32.mrb[0].mxu0
    %v600 = vadd.f32 0.0, %v599
    %v601 = vpop.f32.mrb[0].mxu0
    %602 = vmatprep.mubr.f32.mxu0 0.0
    %603 = vmatmul.mubr.f32.gmra.mrb[0].mxu0 %v209
    %v604 = vpop.f32.mrb[0].mxu0
    %v605 = vadd.f32 0.0, %v604
    %v606 = vpop.f32.mrb[0].mxu0
    %607 = vmatprep.mubr.f32.mxu0 0.0
    %608 = vmatmul.mubr.f32.gmra.mrb[0].mxu0 %v210
    %v609 = vpop.f32.mrb[0].mxu0
    %v610 = vadd.f32 0.0, %v609
    %v611 = vpop.f32.mrb[0].mxu0
    %612 = vmatprep.mubr.f32.mxu0 0.0
    %613 = vmatmul.mubr.f32.gmra.mrb[0].mxu0 %v211
    %v614 = vpop.f32.mrb[0].mxu0
    %v615 = vadd.f32 0.0, %v614
    %v616 = vpop.f32.mrb[0].mxu0
    %617 = vmatprep.mubr.f32.mxu0 0.0
    %618 = vmatmul.mubr.f32.gmra.mrb[0].mxu0 %v212
    %v619 = vpop.f32.mrb[0].mxu0
    %v620 = vadd.f32 0.0, %v619
    %v621 = vpop.f32.mrb[0].mxu0
    %622 = vmatprep.mubr.f32.mxu0 0.0
    %623 = vmatmul.mubr.f32.gmra.mrb[0].mxu0 %v213
    %v624 = vpop.f32.mrb[0].mxu0
    %v625 = vadd.f32 0.0, %v624
    %v626 = vpop.f32.mrb[0].mxu0
    %627 = vmatprep.mubr.f32.mxu0 0.0
    %628 = vmatmul.mubr.f32.gmra.mrb[0].mxu0 %v214
    %v629 = vpop.f32.mrb[0].mxu0
    %v630 = vadd.f32 0.0, %v629
    %v631 = vpop.f32.mrb[0].mxu0
    %632 = vmatprep.mubr.f32.mxu0 0.0
    %633 = vmatmul.mubr.f32.gmra.mrb[0].mxu0 %v215
    %v634 = vpop.f32.mrb[0].mxu0
    %v635 = vadd.f32 0.0, %v634
    %v636 = vpop.f32.mrb[0].mxu0
    %637 = vmatprep.mubr.f32.mxu0 0.0
    %638 = vmatmul.mubr.f32.gmra.mrb[0].mxu0 %v216
    %v639 = vpop.f32.mrb[0].mxu0
    %v640 = vadd.f32 0.0, %v639
    %v641 = vpop.f32.mrb[0].mxu0
    %642 = vmatprep.mubr.f32.mxu0 0.0
    %643 = vmatmul.mubr.f32.gmra.mrb[0].mxu0 %v217
    %v644 = vpop.f32.mrb[0].mxu0
    %v645 = vadd.f32 0.0, %v644
    %v646 = vpop.f32.mrb[0].mxu0
    %647 = vmatprep.mubr.f32.mxu0 0.0
    %648 = vmatmul.mubr.f32.gmra.mrb[0].mxu0 %v218
    %v649 = vpop.f32.mrb[0].mxu0
    %v650 = vadd.f32 0.0, %v649
    %v651 = vpop.f32.mrb[0].mxu0
    %652 = vmatprep.mubr.f32.mxu0 0.0
    %653 = vmatmul.mubr.f32.gmra.mrb[0].mxu0 %v219
    %v654 = vpop.f32.mrb[0].mxu0
    %v655 = vadd.f32 0.0, %v654
    %v656 = vpop.f32.mrb[0].mxu0
    %657 = vmatprep.mubr.f32.mxu0 0.0
    %658 = vmatmul.mubr.f32.gmra.mrb[0].mxu0 %v220
    %v659 = vpop.f32.mrb[0].mxu0
    %v660 = vadd.f32 0.0, %v659
    %v661 = vpop.f32.mrb[0].mxu0
    %662 = vmatprep.mubr.f32.mxu0 0.0
    %663 = vmatmul.mubr.f32.gmra.mrb[0].mxu0 %v221
    %v664 = vpop.f32.mrb[0].mxu0
    %v665 = vadd.f32 0.0, %v664
    %v666 = vpop.f32.mrb[0].mxu0
    %667 = vmatprep.mubr.f32.mxu0 0.0
    %668 = vmatmul.mubr.f32.gmra.mrb[0].mxu0 %v222
    %v669 = vpop.f32.mrb[0].mxu0
    %v670 = vadd.f32 0.0, %v669
    %v671 = vpop.f32.mrb[0].mxu0
    %672 = vmatprep.mubr.f32.mxu0 0.0
    %673 = vmatmul.mubr.f32.gmra.mrb[0].mxu0 %v223
    %v674 = vpop.f32.mrb[0].mxu0
    %v675 = vadd.f32 0.0, %v674
    %v676 = vpop.f32.mrb[0].mxu0
    %677 = vmatprep.mubr.f32.mxu0 0.0
    %678 = vmatmul.mubr.f32.gmra.mrb[0].mxu0 %v224
    %v679 = vpop.f32.mrb[0].mxu0
    %v680 = vadd.f32 0.0, %v679
    %v681 = vpop.f32.mrb[0].mxu0
    %682 = vmatprep.mubr.f32.mxu0 0.0
    %683 = vmatmul.mubr.f32.gmra.mrb[0].mxu0 %v225
    %v684 = vpop.f32.mrb[0].mxu0
    %v685 = vadd.f32 0.0, %v684
    %v686 = vpop.f32.mrb[0].mxu0
    %687 = vmatprep.mubr.f32.mxu0 0.0
    %688 = vmatmul.mubr.f32.gmra.mrb[0].mxu0 %v226
    %v689 = vpop.f32.mrb[0].mxu0
    %v690 = vadd.f32 0.0, %v689
    %v691 = vpop.f32.mrb[0].mxu0
    %692 = vmatprep.mubr.f32.mxu0 0.0
    %693 = vmatmul.mubr.f32.gmra.mrb[0].mxu0 %v227
    %v694 = vpop.f32.mrb[0].mxu0
    %v695 = vadd.f32 0.0, %v694
    %v696 = vpop.f32.mrb[0].mxu0
    %697 = vmatprep.mubr.f32.mxu0 0.0
    %698 = vmatmul.mubr.f32.gmra.mrb[0].mxu0 %v228
    %v699 = vpop.f32.mrb[0].mxu0
    %v700 = vadd.f32 0.0, %v699
    %v701 = vpop.f32.mrb[0].mxu0
    %702 = vmatprep.mubr.f32.mxu0 0.0
    %703 = vmatmul.mubr.f32.gmra.mrb[0].mxu0 %v229
    %v704 = vpop.f32.mrb[0].mxu0
    %v705 = vadd.f32 0.0, %v704
    %v706 = vpop.f32.mrb[0].mxu0
    %707 = vmatprep.mubr.f32.mxu0 0.0
    %708 = vmatmul.mubr.f32.gmra.mrb[0].mxu0 %v230
    %v709 = vpop.f32.mrb[0].mxu0
    %v710 = vadd.f32 0.0, %v709
    %v711 = vpop.f32.mrb[0].mxu0
    %712 = vmatprep.mubr.f32.mxu0 0.0
    %713 = vmatmul.mubr.f32.gmra.mrb[0].mxu0 %v231
    %v714 = vpop.f32.mrb[0].mxu0
    %v715 = vadd.f32 0.0, %v714
    %v716 = vpop.f32.mrb[0].mxu0
    %717 = vmatprep.mubr.f32.mxu0 0.0
    %718 = vmatmul.mubr.f32.gmra.mrb[0].mxu0 %v232
    %v719 = vpop.f32.mrb[0].mxu0
    %v720 = vadd.f32 0.0, %v719
    %v721 = vpop.f32.mrb[0].mxu0
    %722 = vmatprep.mubr.f32.mxu0 0.0
    %723 = vmatmul.mubr.f32.gmra.mrb[0].mxu0 %v233
    %v724 = vpop.f32.mrb[0].mxu0
    %v725 = vadd.f32 0.0, %v724
    %v726 = vpop.f32.mrb[0].mxu0
    %727 = vmatprep.mubr.f32.mxu0 0.0
    %728 = vmatmul.mubr.f32.gmra.mrb[0].mxu0 %v234
    %v729 = vpop.f32.mrb[0].mxu0
    %v730 = vadd.f32 0.0, %v729
    %v731 = vpop.f32.mrb[0].mxu0
    %732 = vmatprep.mubr.f32.mxu0 0.0
    %733 = vmatmul.mubr.f32.gmra.mrb[0].mxu0 %v235
    %v734 = vpop.f32.mrb[0].mxu0
    %v735 = vadd.f32 0.0, %v734
    %v736 = vpop.f32.mrb[0].mxu0
    %737 = vmatprep.mubr.f32.mxu0 0.0
    %738 = vmatmul.mubr.f32.gmra.mrb[0].mxu0 %v236
    %v739 = vpop.f32.mrb[0].mxu0
    %v740 = vadd.f32 0.0, %v739
    %v741 = vpop.f32.mrb[0].mxu0
    %742 = vmatprep.mubr.f32.mxu0 0.0
    %743 = vmatmul.mubr.f32.gmra.mrb[0].mxu0 %v237
    %v744 = vpop.f32.mrb[0].mxu0
    %v745 = vadd.f32 0.0, %v744
    %v746 = vpop.f32.mrb[0].mxu0
    %747 = vmatprep.mubr.f32.mxu0 0.0
    %748 = vmatmul.mubr.f32.gmra.mrb[0].mxu0 %v238
    %v749 = vpop.f32.mrb[0].mxu0
    %v750 = vadd.f32 0.0, %v749
    %v751 = vpop.f32.mrb[0].mxu0
    %752 = vmatprep.mubr.f32.mxu0 0.0
    %753 = vmatmul.mubr.f32.gmra.mrb[0].mxu0 %v239
    %v754 = vpop.f32.mrb[0].mxu0
    %v755 = vadd.f32 0.0, %v754
    %v756 = vpop.f32.mrb[0].mxu0
    %757 = vmatprep.mubr.f32.mxu0 0.0
    %758 = vmatmul.mubr.f32.gmra.mrb[0].mxu0 %v240
    %v759 = vpop.f32.mrb[0].mxu0
    %v760 = vadd.f32 0.0, %v759
    %v761 = vpop.f32.mrb[0].mxu0
    %762 = vmatprep.mubr.f32.mxu0 0.0
    %763 = vmatmul.mubr.f32.gmra.mrb[0].mxu0 %v241
    %v764 = vpop.f32.mrb[0].mxu0
    %v765 = vadd.f32 0.0, %v764
    %v766 = vpop.f32.mrb[0].mxu0
    %767 = vmatprep.mubr.f32.mxu0 0.0
    %768 = vmatmul.mubr.f32.gmra.mrb[0].mxu0 %v242
    %v769 = vpop.f32.mrb[0].mxu0
    %v770 = vadd.f32 0.0, %v769
    %v771 = vpop.f32.mrb[0].mxu0
    %772 = vmatprep.mubr.f32.mxu0 0.0
    %773 = vmatmul.mubr.f32.gmra.mrb[0].mxu0 %v243
    %v774 = vpop.f32.mrb[0].mxu0
    %v775 = vadd.f32 0.0, %v774
    %v776 = vpop.f32.mrb[0].mxu0
    %777 = vmatprep.mubr.f32.mxu0 0.0
    %778 = vmatmul.mubr.f32.gmra.mrb[0].mxu0 %v244
    %v779 = vpop.f32.mrb[0].mxu0
    %v780 = vadd.f32 0.0, %v779
    %v781 = vpop.f32.mrb[0].mxu0
    %782 = vmatprep.mubr.f32.mxu0 0.0
    %783 = vmatmul.mubr.f32.gmra.mrb[0].mxu0 %v245
    %v784 = vpop.f32.mrb[0].mxu0
    %v785 = vadd.f32 0.0, %v784
    %v786 = vpop.f32.mrb[0].mxu0
    %787 = vmatprep.mubr.f32.mxu0 0.0
    %788 = vmatmul.mubr.f32.gmra.mrb[0].mxu0 %v246
    %v789 = vpop.f32.mrb[0].mxu0
    %v790 = vadd.f32 0.0, %v789
    %v791 = vpop.f32.mrb[0].mxu0
    %792 = vmatprep.mubr.f32.mxu0 0.0
    %793 = vmatmul.mubr.f32.gmra.mrb[0].mxu0 %v247
    %v794 = vpop.f32.mrb[0].mxu0
    %v795 = vadd.f32 0.0, %v794
    %v796 = vpop.f32.mrb[0].mxu0
    %797 = vmatprep.mubr.f32.mxu0 0.0
    %798 = vmatmul.mubr.f32.gmra.mrb[0].mxu0 %v248
    %v799 = vpop.f32.mrb[0].mxu0
    %v800 = vadd.f32 0.0, %v799
    %v801 = vpop.f32.mrb[0].mxu0
    %802 = vmatprep.mubr.f32.mxu0 0.0
    %803 = vmatmul.mubr.f32.gmra.mrb[0].mxu0 %v249
    %v804 = vpop.f32.mrb[0].mxu0
    %v805 = vadd.f32 0.0, %v804
    %v806 = vpop.f32.mrb[0].mxu0
    %807 = vmatprep.mubr.f32.mxu0 0.0
    %808 = vmatmul.mubr.f32.gmra.mrb[0].mxu0 %v250
    %v809 = vpop.f32.mrb[0].mxu0
    %v810 = vadd.f32 0.0, %v809
    %v811 = vpop.f32.mrb[0].mxu0
    %812 = vmatprep.mubr.f32.mxu0 0.0
    %813 = vmatmul.mubr.f32.gmra.mrb[0].mxu0 %v251
    %v814 = vpop.f32.mrb[0].mxu0
    %v815 = vadd.f32 0.0, %v814
    %v816 = vpop.f32.mrb[0].mxu0
    %817 = vmatprep.mubr.f32.mxu0 0.0
    %818 = vmatmul.mubr.f32.gmra.mrb[0].mxu0 %v252
    %v819 = vpop.f32.mrb[0].mxu0
    %v820 = vadd.f32 0.0, %v819
    %v821 = vpop.f32.mrb[0].mxu0
    %822 = vmatprep.mubr.f32.mxu0 0.0
    %823 = vmatmul.mubr.f32.gmra.mrb[0].mxu0 %v253
    %v824 = vpop.f32.mrb[0].mxu0
    %v825 = vadd.f32 0.0, %v824
    %v826 = vpop.f32.mrb[0].mxu0
    %827 = vmatprep.mubr.f32.mxu0 0.0
    %828 = vmatmul.mubr.f32.gmra.mrb[0].mxu0 %v254
    %v829 = vpop.f32.mrb[0].mxu0
    %v830 = vadd.f32 0.0, %v829
    %v831 = vpop.f32.mrb[0].mxu0
    %832 = vmatprep.mubr.f32.mxu0 0.0
    %833 = vmatmul.mubr.f32.gmra.mrb[0].mxu0 %v255
    %v834 = vpop.f32.mrb[0].mxu0
    %v835 = vadd.f32 0.0, %v834
    %v836 = vpop.f32.mrb[0].mxu0
    %837 = vdwg.mxu0
    %838 = vmatprep.subr.mxu0 0.0
    %839 = vmatpush1.msra.mxu0 %v140
    %840 = vmatprep.subr.mxu0 0.0
    %841 = vmatpush1.msra.mxu0 %v141
    %842 = vmatprep.subr.mxu0 0.0
    %843 = vmatpush1.msra.mxu0 %v142
    %844 = vmatprep.subr.mxu0 0.0
    %845 = vmatpush1.msra.mxu0 %v143
    %846 = vmatprep.subr.mxu0 0.0
    %847 = vmatpush1.msra.mxu0 %v144
    %848 = vmatprep.subr.mxu0 0.0
    %849 = vmatpush1.msra.mxu0 %v145
    %850 = vmatprep.subr.mxu0 0.0
    %851 = vmatpush1.msra.mxu0 %v146
    %852 = vmatprep.subr.mxu0 0.0
    %853 = vmatpush1.msra.mxu0 %v147
    %854 = vmatprep.subr.mxu0 0.0
    %855 = vmatpush1.msra.mxu0 %v148
    %856 = vmatprep.subr.mxu0 0.0
    %857 = vmatpush1.msra.mxu0 %v149
    %858 = vmatprep.subr.mxu0 0.0
    %859 = vmatpush1.msra.mxu0 %v150
    %860 = vmatprep.subr.mxu0 0.0
    %861 = vmatpush1.msra.mxu0 %v151
    %862 = vmatprep.subr.mxu0 0.0
    %863 = vmatpush1.msra.mxu0 %v152
    %864 = vmatprep.subr.mxu0 0.0
    %865 = vmatpush1.msra.mxu0 %v153
    %866 = vmatprep.subr.mxu0 0.0
    %867 = vmatpush1.msra.mxu0 %v154
    %868 = vmatprep.subr.mxu0 0.0
    %869 = vmatpush1.msra.mxu0 %v155
    %870 = vmatprep.subr.mxu0 0.0
    %871 = vmatpush1.msra.mxu0 0.0
    %872 = vmatprep.subr.mxu0 0.0
    %873 = vmatpush1.msra.mxu0 0.0
    %874 = vmatprep.subr.mxu0 0.0
    %875 = vmatpush1.msra.mxu0 0.0
    %876 = vmatprep.subr.mxu0 0.0
    %877 = vmatpush1.msra.mxu0 0.0
    %878 = vmatprep.subr.mxu0 0.0
    %879 = vmatpush1.msra.mxu0 0.0
    %880 = vmatprep.subr.mxu0 0.0
    %881 = vmatpush1.msra.mxu0 0.0
    %882 = vmatprep.subr.mxu0 0.0
    %883 = vmatpush1.msra.mxu0 0.0
    %884 = vmatprep.subr.mxu0 0.0
    %885 = vmatpush1.msra.mxu0 0.0
    %886 = vmatprep.subr.mxu0 0.0
    %887 = vmatpush1.msra.mxu0 0.0
    %888 = vmatprep.subr.mxu0 0.0
    %889 = vmatpush1.msra.mxu0 0.0
    %890 = vmatprep.subr.mxu0 0.0
    %891 = vmatpush1.msra.mxu0 0.0
    %892 = vmatprep.subr.mxu0 0.0
    %893 = vmatpush1.msra.mxu0 0.0
    %894 = vmatprep.subr.mxu0 0.0
    %895 = vmatpush1.msra.mxu0 0.0
    %896 = vmatprep.subr.mxu0 0.0
    %897 = vmatpush1.msra.mxu0 0.0
    %898 = vmatprep.subr.mxu0 0.0
    %899 = vmatpush1.msra.mxu0 0.0
    %900 = vmatprep.subr.mxu0 0.0
    %901 = vmatpush1.msra.mxu0 0.0
    %902 = vmatprep.mubr.f32.mxu0 0.0
    %903 = vmatmul.mubr.f32.gmra.mrb[0].mxu0 %v40
    %v904 = vpop.f32.mrb[0].mxu0
    %v905 = vadd.f32 %v340, %v904
    %v906 = vpop.f32.mrb[0].mxu0
    %907 = vmatprep.mubr.f32.mxu0 0.0
    %908 = vmatmul.mubr.f32.gmra.mrb[0].mxu0 %v41
    %v909 = vpop.f32.mrb[0].mxu0
    %v910 = vadd.f32 %v345, %v909
    %v911 = vpop.f32.mrb[0].mxu0
    %912 = vmatprep.mubr.f32.mxu0 0.0
    %913 = vmatmul.mubr.f32.gmra.mrb[0].mxu0 %v42
    %v914 = vpop.f32.mrb[0].mxu0
    %v915 = vadd.f32 %v350, %v914
    %v916 = vpop.f32.mrb[0].mxu0
    %917 = vmatprep.mubr.f32.mxu0 0.0
    %918 = vmatmul.mubr.f32.gmra.mrb[0].mxu0 %v43
    %v919 = vpop.f32.mrb[0].mxu0
    %v920 = vadd.f32 %v355, %v919
    %v921 = vpop.f32.mrb[0].mxu0
    %922 = vmatprep.mubr.f32.mxu0 0.0
    %923 = vmatmul.mubr.f32.gmra.mrb[0].mxu0 %v44
    %v924 = vpop.f32.mrb[0].mxu0
    %v925 = vadd.f32 %v360, %v924
    %v926 = vpop.f32.mrb[0].mxu0
    %927 = vmatprep.mubr.f32.mxu0 0.0
    %928 = vmatmul.mubr.f32.gmra.mrb[0].mxu0 %v45
    %v929 = vpop.f32.mrb[0].mxu0
    %v930 = vadd.f32 %v365, %v929
    %v931 = vpop.f32.mrb[0].mxu0
    %932 = vmatprep.mubr.f32.mxu0 0.0
    %933 = vmatmul.mubr.f32.gmra.mrb[0].mxu0 %v46
    %v934 = vpop.f32.mrb[0].mxu0
    %v935 = vadd.f32 %v370, %v934
    %v936 = vpop.f32.mrb[0].mxu0
    %937 = vmatprep.mubr.f32.mxu0 0.0
    %938 = vmatmul.mubr.f32.gmra.mrb[0].mxu0 %v47
    %v939 = vpop.f32.mrb[0].mxu0
    %v940 = vadd.f32 %v375, %v939
    %v941 = vpop.f32.mrb[0].mxu0
    %942 = vmatprep.mubr.f32.mxu0 0.0
    %943 = vmatmul.mubr.f32.gmra.mrb[0].mxu0 %v48
    %v944 = vpop.f32.mrb[0].mxu0
    %v945 = vadd.f32 %v380, %v944
    %v946 = vpop.f32.mrb[0].mxu0
    %947 = vmatprep.mubr.f32.mxu0 0.0
    %948 = vmatmul.mubr.f32.gmra.mrb[0].mxu0 %v49
    %v949 = vpop.f32.mrb[0].mxu0
    %v950 = vadd.f32 %v385, %v949
    %v951 = vpop.f32.mrb[0].mxu0
    %952 = vmatprep.mubr.f32.mxu0 0.0
    %953 = vmatmul.mubr.f32.gmra.mrb[0].mxu0 %v50
    %v954 = vpop.f32.mrb[0].mxu0
    %v955 = vadd.f32 %v390, %v954
    %v956 = vpop.f32.mrb[0].mxu0
    %957 = vmatprep.mubr.f32.mxu0 0.0
    %958 = vmatmul.mubr.f32.gmra.mrb[0].mxu0 %v51
    %v959 = vpop.f32.mrb[0].mxu0
    %v960 = vadd.f32 %v395, %v959
    %v961 = vpop.f32.mrb[0].mxu0
    %962 = vmatprep.mubr.f32.mxu0 0.0
    %963 = vmatmul.mubr.f32.gmra.mrb[0].mxu0 %v52
    %v964 = vpop.f32.mrb[0].mxu0
    %v965 = vadd.f32 %v400, %v964
    %v966 = vpop.f32.mrb[0].mxu0
    %967 = vmatprep.mubr.f32.mxu0 0.0
    %968 = vmatmul.mubr.f32.gmra.mrb[0].mxu0 %v53
    %v969 = vpop.f32.mrb[0].mxu0
    %v970 = vadd.f32 %v405, %v969
    %v971 = vpop.f32.mrb[0].mxu0
    %972 = vmatprep.mubr.f32.mxu0 0.0
    %973 = vmatmul.mubr.f32.gmra.mrb[0].mxu0 %v54
    %v974 = vpop.f32.mrb[0].mxu0
    %v975 = vadd.f32 %v410, %v974
    %v976 = vpop.f32.mrb[0].mxu0
    %977 = vmatprep.mubr.f32.mxu0 0.0
    %978 = vmatmul.mubr.f32.gmra.mrb[0].mxu0 %v55
    %v979 = vpop.f32.mrb[0].mxu0
    %v980 = vadd.f32 %v415, %v979
    %v981 = vpop.f32.mrb[0].mxu0
    %982 = vmatprep.mubr.f32.mxu0 0.0
    %983 = vmatmul.mubr.f32.gmra.mrb[0].mxu0 %v56
    %v984 = vpop.f32.mrb[0].mxu0
    %v985 = vadd.f32 %v420, %v984
    %v986 = vpop.f32.mrb[0].mxu0
    %987 = vmatprep.mubr.f32.mxu0 0.0
    %988 = vmatmul.mubr.f32.gmra.mrb[0].mxu0 %v57
    %v989 = vpop.f32.mrb[0].mxu0
    %v990 = vadd.f32 %v425, %v989
    %v991 = vpop.f32.mrb[0].mxu0
    %992 = vmatprep.mubr.f32.mxu0 0.0
    %993 = vmatmul.mubr.f32.gmra.mrb[0].mxu0 %v58
    %v994 = vpop.f32.mrb[0].mxu0
    %v995 = vadd.f32 %v430, %v994
    %v996 = vpop.f32.mrb[0].mxu0
    %997 = vmatprep.mubr.f32.mxu0 0.0
    %998 = vmatmul.mubr.f32.gmra.mrb[0].mxu0 %v59
    %v999 = vpop.f32.mrb[0].mxu0
    %v1000 = vadd.f32 %v435, %v999
    %v1001 = vpop.f32.mrb[0].mxu0
    %1002 = vmatprep.mubr.f32.mxu0 0.0
    %1003 = vmatmul.mubr.f32.gmra.mrb[0].mxu0 %v60
    %v1004 = vpop.f32.mrb[0].mxu0
    %v1005 = vadd.f32 %v440, %v1004
    %v1006 = vpop.f32.mrb[0].mxu0
    %1007 = vmatprep.mubr.f32.mxu0 0.0
    %1008 = vmatmul.mubr.f32.gmra.mrb[0].mxu0 %v61
    %v1009 = vpop.f32.mrb[0].mxu0
    %v1010 = vadd.f32 %v445, %v1009
    %v1011 = vpop.f32.mrb[0].mxu0
    %1012 = vmatprep.mubr.f32.mxu0 0.0
    %1013 = vmatmul.mubr.f32.gmra.mrb[0].mxu0 %v62
    %v1014 = vpop.f32.mrb[0].mxu0
    %v1015 = vadd.f32 %v450, %v1014
    %v1016 = vpop.f32.mrb[0].mxu0
    %1017 = vmatprep.mubr.f32.mxu0 0.0
    %1018 = vmatmul.mubr.f32.gmra.mrb[0].mxu0 %v63
    %v1019 = vpop.f32.mrb[0].mxu0
    %v1020 = vadd.f32 %v455, %v1019
    %v1021 = vpop.f32.mrb[0].mxu0
    %1022 = vmatprep.mubr.f32.mxu0 0.0
    %1023 = vmatmul.mubr.f32.gmra.mrb[0].mxu0 %v64
    %v1024 = vpop.f32.mrb[0].mxu0
    %v1025 = vadd.f32 %v460, %v1024
    %v1026 = vpop.f32.mrb[0].mxu0
    %1027 = vmatprep.mubr.f32.mxu0 0.0
    %1028 = vmatmul.mubr.f32.gmra.mrb[0].mxu0 %v65
    %v1029 = vpop.f32.mrb[0].mxu0
    %v1030 = vadd.f32 %v465, %v1029
    %v1031 = vpop.f32.mrb[0].mxu0
    %1032 = vmatprep.mubr.f32.mxu0 0.0
    %1033 = vmatmul.mubr.f32.gmra.mrb[0].mxu0 %v66
    %v1034 = vpop.f32.mrb[0].mxu0
    %v1035 = vadd.f32 %v470, %v1034
    %v1036 = vpop.f32.mrb[0].mxu0
    %1037 = vmatprep.mubr.f32.mxu0 0.0
    %1038 = vmatmul.mubr.f32.gmra.mrb[0].mxu0 %v67
    %v1039 = vpop.f32.mrb[0].mxu0
    %v1040 = vadd.f32 %v475, %v1039
    %v1041 = vpop.f32.mrb[0].mxu0
    %1042 = vmatprep.mubr.f32.mxu0 0.0
    %1043 = vmatmul.mubr.f32.gmra.mrb[0].mxu0 %v68
    %v1044 = vpop.f32.mrb[0].mxu0
    %v1045 = vadd.f32 %v480, %v1044
    %v1046 = vpop.f32.mrb[0].mxu0
    %1047 = vmatprep.mubr.f32.mxu0 0.0
    %1048 = vmatmul.mubr.f32.gmra.mrb[0].mxu0 %v69
    %v1049 = vpop.f32.mrb[0].mxu0
    %v1050 = vadd.f32 %v485, %v1049
    %v1051 = vpop.f32.mrb[0].mxu0
    %1052 = vmatprep.mubr.f32.mxu0 0.0
    %1053 = vmatmul.mubr.f32.gmra.mrb[0].mxu0 %v70
    %v1054 = vpop.f32.mrb[0].mxu0
    %v1055 = vadd.f32 %v490, %v1054
    %v1056 = vpop.f32.mrb[0].mxu0
    %1057 = vmatprep.mubr.f32.mxu0 0.0
    %1058 = vmatmul.mubr.f32.gmra.mrb[0].mxu0 %v71
    %v1059 = vpop.f32.mrb[0].mxu0
    %v1060 = vadd.f32 %v495, %v1059
    %v1061 = vpop.f32.mrb[0].mxu0
    %1062 = vmatprep.mubr.f32.mxu0 0.0
    %1063 = vmatmul.mubr.f32.gmra.mrb[0].mxu0 %v72
    %v1064 = vpop.f32.mrb[0].mxu0
    %v1065 = vadd.f32 %v500, %v1064
    %v1066 = vpop.f32.mrb[0].mxu0
    %1067 = vmatprep.mubr.f32.mxu0 0.0
    %1068 = vmatmul.mubr.f32.gmra.mrb[0].mxu0 %v73
    %v1069 = vpop.f32.mrb[0].mxu0
    %v1070 = vadd.f32 %v505, %v1069
    %v1071 = vpop.f32.mrb[0].mxu0
    %1072 = vmatprep.mubr.f32.mxu0 0.0
    %1073 = vmatmul.mubr.f32.gmra.mrb[0].mxu0 %v74
    %v1074 = vpop.f32.mrb[0].mxu0
    %v1075 = vadd.f32 %v510, %v1074
    %v1076 = vpop.f32.mrb[0].mxu0
    %1077 = vmatprep.mubr.f32.mxu0 0.0
    %1078 = vmatmul.mubr.f32.gmra.mrb[0].mxu0 %v75
    %v1079 = vpop.f32.mrb[0].mxu0
    %v1080 = vadd.f32 %v515, %v1079
    %v1081 = vpop.f32.mrb[0].mxu0
    %1082 = vmatprep.mubr.f32.mxu0 0.0
    %1083 = vmatmul.mubr.f32.gmra.mrb[0].mxu0 %v76
    %v1084 = vpop.f32.mrb[0].mxu0
    %v1085 = vadd.f32 %v520, %v1084
    %v1086 = vpop.f32.mrb[0].mxu0
    %1087 = vmatprep.mubr.f32.mxu0 0.0
    %1088 = vmatmul.mubr.f32.gmra.mrb[0].mxu0 %v77
    %v1089 = vpop.f32.mrb[0].mxu0
    %v1090 = vadd.f32 %v525, %v1089
    %v1091 = vpop.f32.mrb[0].mxu0
    %1092 = vmatprep.mubr.f32.mxu0 0.0
    %1093 = vmatmul.mubr.f32.gmra.mrb[0].mxu0 %v78
    %v1094 = vpop.f32.mrb[0].mxu0
    %v1095 = vadd.f32 %v530, %v1094
    %v1096 = vpop.f32.mrb[0].mxu0
    %1097 = vmatprep.mubr.f32.mxu0 0.0
    %1098 = vmatmul.mubr.f32.gmra.mrb[0].mxu0 %v79
    %v1099 = vpop.f32.mrb[0].mxu0
    %v1100 = vadd.f32 %v535, %v1099
    %v1101 = vpop.f32.mrb[0].mxu0
    %1102 = vmatprep.mubr.f32.mxu0 0.0
    %1103 = vmatmul.mubr.f32.gmra.mrb[0].mxu0 %v80
    %v1104 = vpop.f32.mrb[0].mxu0
    %v1105 = vadd.f32 %v540, %v1104
    %v1106 = vpop.f32.mrb[0].mxu0
    %1107 = vmatprep.mubr.f32.mxu0 0.0
    %1108 = vmatmul.mubr.f32.gmra.mrb[0].mxu0 %v81
    %v1109 = vpop.f32.mrb[0].mxu0
    %v1110 = vadd.f32 %v545, %v1109
    %v1111 = vpop.f32.mrb[0].mxu0
    %1112 = vmatprep.mubr.f32.mxu0 0.0
    %1113 = vmatmul.mubr.f32.gmra.mrb[0].mxu0 %v82
    %v1114 = vpop.f32.mrb[0].mxu0
    %v1115 = vadd.f32 %v550, %v1114
    %v1116 = vpop.f32.mrb[0].mxu0
    %1117 = vmatprep.mubr.f32.mxu0 0.0
    %1118 = vmatmul.mubr.f32.gmra.mrb[0].mxu0 %v83
    %v1119 = vpop.f32.mrb[0].mxu0
    %v1120 = vadd.f32 %v555, %v1119
    %v1121 = vpop.f32.mrb[0].mxu0
    %1122 = vmatprep.mubr.f32.mxu0 0.0
    %1123 = vmatmul.mubr.f32.gmra.mrb[0].mxu0 %v84
    %v1124 = vpop.f32.mrb[0].mxu0
    %v1125 = vadd.f32 %v560, %v1124
    %v1126 = vpop.f32.mrb[0].mxu0
    %1127 = vmatprep.mubr.f32.mxu0 0.0
    %1128 = vmatmul.mubr.f32.gmra.mrb[0].mxu0 %v85
    %v1129 = vpop.f32.mrb[0].mxu0
    %v1130 = vadd.f32 %v565, %v1129
    %v1131 = vpop.f32.mrb[0].mxu0
    %1132 = vmatprep.mubr.f32.mxu0 0.0
    %1133 = vmatmul.mubr.f32.gmra.mrb[0].mxu0 %v86
    %v1134 = vpop.f32.mrb[0].mxu0
    %v1135 = vadd.f32 %v570, %v1134
    %v1136 = vpop.f32.mrb[0].mxu0
    %1137 = vmatprep.mubr.f32.mxu0 0.0
    %1138 = vmatmul.mubr.f32.gmra.mrb[0].mxu0 %v87
    %v1139 = vpop.f32.mrb[0].mxu0
    %v1140 = vadd.f32 %v575, %v1139
    %v1141 = vpop.f32.mrb[0].mxu0
    %1142 = vmatprep.mubr.f32.mxu0 0.0
    %1143 = vmatmul.mubr.f32.gmra.mrb[0].mxu0 %v88
    %v1144 = vpop.f32.mrb[0].mxu0
    %v1145 = vadd.f32 %v580, %v1144
    %v1146 = vpop.f32.mrb[0].mxu0
    %1147 = vmatprep.mubr.f32.mxu0 0.0
    %1148 = vmatmul.mubr.f32.gmra.mrb[0].mxu0 %v89
    %v1149 = vpop.f32.mrb[0].mxu0
    %v1150 = vadd.f32 %v585, %v1149
    %v1151 = vpop.f32.mrb[0].mxu0
    %1152 = vmatprep.mubr.f32.mxu0 0.0
    %1153 = vmatmul.mubr.f32.gmra.mrb[0].mxu0 %v90
    %v1154 = vpop.f32.mrb[0].mxu0
    %v1155 = vadd.f32 %v590, %v1154
    %v1156 = vpop.f32.mrb[0].mxu0
    %1157 = vmatprep.mubr.f32.mxu0 0.0
    %1158 = vmatmul.mubr.f32.gmra.mrb[0].mxu0 %v91
    %v1159 = vpop.f32.mrb[0].mxu0
    %v1160 = vadd.f32 %v595, %v1159
    %v1161 = vpop.f32.mrb[0].mxu0
    %1162 = vmatprep.mubr.f32.mxu0 0.0
    %1163 = vmatmul.mubr.f32.gmra.mrb[0].mxu0 %v92
    %v1164 = vpop.f32.mrb[0].mxu0
    %v1165 = vadd.f32 %v600, %v1164
    %v1166 = vpop.f32.mrb[0].mxu0
    %1167 = vmatprep.mubr.f32.mxu0 0.0
    %1168 = vmatmul.mubr.f32.gmra.mrb[0].mxu0 %v93
    %v1169 = vpop.f32.mrb[0].mxu0
    %v1170 = vadd.f32 %v605, %v1169
    %v1171 = vpop.f32.mrb[0].mxu0
    %1172 = vmatprep.mubr.f32.mxu0 0.0
    %1173 = vmatmul.mubr.f32.gmra.mrb[0].mxu0 %v94
    %v1174 = vpop.f32.mrb[0].mxu0
    %v1175 = vadd.f32 %v610, %v1174
    %v1176 = vpop.f32.mrb[0].mxu0
    %1177 = vmatprep.mubr.f32.mxu0 0.0
    %1178 = vmatmul.mubr.f32.gmra.mrb[0].mxu0 %v95
    %v1179 = vpop.f32.mrb[0].mxu0
    %v1180 = vadd.f32 %v615, %v1179
    %v1181 = vpop.f32.mrb[0].mxu0
    %1182 = vmatprep.mubr.f32.mxu0 0.0
    %1183 = vmatmul.mubr.f32.gmra.mrb[0].mxu0 %v96
    %v1184 = vpop.f32.mrb[0].mxu0
    %v1185 = vadd.f32 %v620, %v1184
    %v1186 = vpop.f32.mrb[0].mxu0
    %1187 = vmatprep.mubr.f32.mxu0 0.0
    %1188 = vmatmul.mubr.f32.gmra.mrb[0].mxu0 %v97
    %v1189 = vpop.f32.mrb[0].mxu0
    %v1190 = vadd.f32 %v625, %v1189
    %v1191 = vpop.f32.mrb[0].mxu0
    %1192 = vmatprep.mubr.f32.mxu0 0.0
    %1193 = vmatmul.mubr.f32.gmra.mrb[0].mxu0 %v98
    %v1194 = vpop.f32.mrb[0].mxu0
    %v1195 = vadd.f32 %v630, %v1194
    %v1196 = vpop.f32.mrb[0].mxu0
    %1197 = vmatprep.mubr.f32.mxu0 0.0
    %1198 = vmatmul.mubr.f32.gmra.mrb[0].mxu0 %v99
    %v1199 = vpop.f32.mrb[0].mxu0
    %v1200 = vadd.f32 %v635, %v1199
    %v1201 = vpop.f32.mrb[0].mxu0
    %1202 = vmatprep.mubr.f32.mxu0 0.0
    %1203 = vmatmul.mubr.f32.gmra.mrb[0].mxu0 %v100
    %v1204 = vpop.f32.mrb[0].mxu0
    %v1205 = vadd.f32 %v640, %v1204
    %v1206 = vpop.f32.mrb[0].mxu0
    %1207 = vmatprep.mubr.f32.mxu0 0.0
    %1208 = vmatmul.mubr.f32.gmra.mrb[0].mxu0 %v101
    %v1209 = vpop.f32.mrb[0].mxu0
    %v1210 = vadd.f32 %v645, %v1209
    %v1211 = vpop.f32.mrb[0].mxu0
    %1212 = vmatprep.mubr.f32.mxu0 0.0
    %1213 = vmatmul.mubr.f32.gmra.mrb[0].mxu0 %v102
    %v1214 = vpop.f32.mrb[0].mxu0
    %v1215 = vadd.f32 %v650, %v1214
    %v1216 = vpop.f32.mrb[0].mxu0
    %1217 = vmatprep.mubr.f32.mxu0 0.0
    %1218 = vmatmul.mubr.f32.gmra.mrb[0].mxu0 %v103
    %v1219 = vpop.f32.mrb[0].mxu0
    %v1220 = vadd.f32 %v655, %v1219
    %v1221 = vpop.f32.mrb[0].mxu0
    %1222 = vmatprep.mubr.f32.mxu0 0.0
    %1223 = vmatmul.mubr.f32.gmra.mrb[0].mxu0 %v104
    %v1224 = vpop.f32.mrb[0].mxu0
    %v1225 = vadd.f32 %v660, %v1224
    %v1226 = vpop.f32.mrb[0].mxu0
    %1227 = vmatprep.mubr.f32.mxu0 0.0
    %1228 = vmatmul.mubr.f32.gmra.mrb[0].mxu0 %v105
    %v1229 = vpop.f32.mrb[0].mxu0
    %v1230 = vadd.f32 %v665, %v1229
    %v1231 = vpop.f32.mrb[0].mxu0
    %1232 = vmatprep.mubr.f32.mxu0 0.0
    %1233 = vmatmul.mubr.f32.gmra.mrb[0].mxu0 %v106
    %v1234 = vpop.f32.mrb[0].mxu0
    %v1235 = vadd.f32 %v670, %v1234
    %v1236 = vpop.f32.mrb[0].mxu0
    %1237 = vmatprep.mubr.f32.mxu0 0.0
    %1238 = vmatmul.mubr.f32.gmra.mrb[0].mxu0 %v107
    %v1239 = vpop.f32.mrb[0].mxu0
    %v1240 = vadd.f32 %v675, %v1239
    %v1241 = vpop.f32.mrb[0].mxu0
    %1242 = vmatprep.mubr.f32.mxu0 0.0
    %1243 = vmatmul.mubr.f32.gmra.mrb[0].mxu0 %v108
    %v1244 = vpop.f32.mrb[0].mxu0
    %v1245 = vadd.f32 %v680, %v1244
    %v1246 = vpop.f32.mrb[0].mxu0
    %1247 = vmatprep.mubr.f32.mxu0 0.0
    %1248 = vmatmul.mubr.f32.gmra.mrb[0].mxu0 %v109
    %v1249 = vpop.f32.mrb[0].mxu0
    %v1250 = vadd.f32 %v685, %v1249
    %v1251 = vpop.f32.mrb[0].mxu0
    %1252 = vmatprep.mubr.f32.mxu0 0.0
    %1253 = vmatmul.mubr.f32.gmra.mrb[0].mxu0 %v110
    %v1254 = vpop.f32.mrb[0].mxu0
    %v1255 = vadd.f32 %v690, %v1254
    %v1256 = vpop.f32.mrb[0].mxu0
    %1257 = vmatprep.mubr.f32.mxu0 0.0
    %1258 = vmatmul.mubr.f32.gmra.mrb[0].mxu0 %v111
    %v1259 = vpop.f32.mrb[0].mxu0
    %v1260 = vadd.f32 %v695, %v1259
    %v1261 = vpop.f32.mrb[0].mxu0
    %1262 = vmatprep.mubr.f32.mxu0 0.0
    %1263 = vmatmul.mubr.f32.gmra.mrb[0].mxu0 %v112
    %v1264 = vpop.f32.mrb[0].mxu0
    %v1265 = vadd.f32 %v700, %v1264
    %v1266 = vpop.f32.mrb[0].mxu0
    %1267 = vmatprep.mubr.f32.mxu0 0.0
    %1268 = vmatmul.mubr.f32.gmra.mrb[0].mxu0 %v113
    %v1269 = vpop.f32.mrb[0].mxu0
    %v1270 = vadd.f32 %v705, %v1269
    %v1271 = vpop.f32.mrb[0].mxu0
    %1272 = vmatprep.mubr.f32.mxu0 0.0
    %1273 = vmatmul.mubr.f32.gmra.mrb[0].mxu0 %v114
    %v1274 = vpop.f32.mrb[0].mxu0
    %v1275 = vadd.f32 %v710, %v1274
    %v1276 = vpop.f32.mrb[0].mxu0
    %1277 = vmatprep.mubr.f32.mxu0 0.0
    %1278 = vmatmul.mubr.f32.gmra.mrb[0].mxu0 %v115
    %v1279 = vpop.f32.mrb[0].mxu0
    %v1280 = vadd.f32 %v715, %v1279
    %v1281 = vpop.f32.mrb[0].mxu0
    %1282 = vmatprep.mubr.f32.mxu0 0.0
    %1283 = vmatmul.mubr.f32.gmra.mrb[0].mxu0 %v116
    %v1284 = vpop.f32.mrb[0].mxu0
    %v1285 = vadd.f32 %v720, %v1284
    %v1286 = vpop.f32.mrb[0].mxu0
    %1287 = vmatprep.mubr.f32.mxu0 0.0
    %1288 = vmatmul.mubr.f32.gmra.mrb[0].mxu0 %v117
    %v1289 = vpop.f32.mrb[0].mxu0
    %v1290 = vadd.f32 %v725, %v1289
    %v1291 = vpop.f32.mrb[0].mxu0
    %1292 = vmatprep.mubr.f32.mxu0 0.0
    %1293 = vmatmul.mubr.f32.gmra.mrb[0].mxu0 %v118
    %v1294 = vpop.f32.mrb[0].mxu0
    %v1295 = vadd.f32 %v730, %v1294
    %v1296 = vpop.f32.mrb[0].mxu0
    %1297 = vmatprep.mubr.f32.mxu0 0.0
    %1298 = vmatmul.mubr.f32.gmra.mrb[0].mxu0 %v119
    %v1299 = vpop.f32.mrb[0].mxu0
    %v1300 = vadd.f32 %v735, %v1299
    %v1301 = vpop.f32.mrb[0].mxu0
    %1302 = vmatprep.mubr.f32.mxu0 0.0
    %1303 = vmatmul.mubr.f32.gmra.mrb[0].mxu0 %v120
    %v1304 = vpop.f32.mrb[0].mxu0
    %v1305 = vadd.f32 %v740, %v1304
    %v1306 = vpop.f32.mrb[0].mxu0
    %1307 = vmatprep.mubr.f32.mxu0 0.0
    %1308 = vmatmul.mubr.f32.gmra.mrb[0].mxu0 %v121
    %v1309 = vpop.f32.mrb[0].mxu0
    %v1310 = vadd.f32 %v745, %v1309
    %v1311 = vpop.f32.mrb[0].mxu0
    %1312 = vmatprep.mubr.f32.mxu0 0.0
    %1313 = vmatmul.mubr.f32.gmra.mrb[0].mxu0 %v122
    %v1314 = vpop.f32.mrb[0].mxu0
    %v1315 = vadd.f32 %v750, %v1314
    %v1316 = vpop.f32.mrb[0].mxu0
    %1317 = vmatprep.mubr.f32.mxu0 0.0
    %1318 = vmatmul.mubr.f32.gmra.mrb[0].mxu0 %v123
    %v1319 = vpop.f32.mrb[0].mxu0
    %v1320 = vadd.f32 %v755, %v1319
    %v1321 = vpop.f32.mrb[0].mxu0
    %1322 = vmatprep.mubr.f32.mxu0 0.0
    %1323 = vmatmul.mubr.f32.gmra.mrb[0].mxu0 %v124
    %v1324 = vpop.f32.mrb[0].mxu0
    %v1325 = vadd.f32 %v760, %v1324
    %v1326 = vpop.f32.mrb[0].mxu0
    %1327 = vmatprep.mubr.f32.mxu0 0.0
    %1328 = vmatmul.mubr.f32.gmra.mrb[0].mxu0 %v125
    %v1329 = vpop.f32.mrb[0].mxu0
    %v1330 = vadd.f32 %v765, %v1329
    %v1331 = vpop.f32.mrb[0].mxu0
    %1332 = vmatprep.mubr.f32.mxu0 0.0
    %1333 = vmatmul.mubr.f32.gmra.mrb[0].mxu0 %v126
    %v1334 = vpop.f32.mrb[0].mxu0
    %v1335 = vadd.f32 %v770, %v1334
    %v1336 = vpop.f32.mrb[0].mxu0
    %1337 = vmatprep.mubr.f32.mxu0 0.0
    %1338 = vmatmul.mubr.f32.gmra.mrb[0].mxu0 %v127
    %v1339 = vpop.f32.mrb[0].mxu0
    %v1340 = vadd.f32 %v775, %v1339
    %v1341 = vpop.f32.mrb[0].mxu0
    %1342 = vmatprep.mubr.f32.mxu0 0.0
    %1343 = vmatmul.mubr.f32.gmra.mrb[0].mxu0 %v128
    %v1344 = vpop.f32.mrb[0].mxu0
    %v1345 = vadd.f32 %v780, %v1344
    %v1346 = vpop.f32.mrb[0].mxu0
    %1347 = vmatprep.mubr.f32.mxu0 0.0
    %1348 = vmatmul.mubr.f32.gmra.mrb[0].mxu0 %v129
    %v1349 = vpop.f32.mrb[0].mxu0
    %v1350 = vadd.f32 %v785, %v1349
    %v1351 = vpop.f32.mrb[0].mxu0
    %1352 = vmatprep.mubr.f32.mxu0 0.0
    %1353 = vmatmul.mubr.f32.gmra.mrb[0].mxu0 %v130
    %v1354 = vpop.f32.mrb[0].mxu0
    %v1355 = vadd.f32 %v790, %v1354
    %v1356 = vpop.f32.mrb[0].mxu0
    %1357 = vmatprep.mubr.f32.mxu0 0.0
    %1358 = vmatmul.mubr.f32.gmra.mrb[0].mxu0 %v131
    %v1359 = vpop.f32.mrb[0].mxu0
    %v1360 = vadd.f32 %v795, %v1359
    %v1361 = vpop.f32.mrb[0].mxu0
    %1362 = vmatprep.mubr.f32.mxu0 0.0
    %1363 = vmatmul.mubr.f32.gmra.mrb[0].mxu0 %v132
    %v1364 = vpop.f32.mrb[0].mxu0
    %v1365 = vadd.f32 %v800, %v1364
    %v1366 = vpop.f32.mrb[0].mxu0
    %1367 = vmatprep.mubr.f32.mxu0 0.0
    %1368 = vmatmul.mubr.f32.gmra.mrb[0].mxu0 %v133
    %v1369 = vpop.f32.mrb[0].mxu0
    %v1370 = vadd.f32 %v805, %v1369
    %v1371 = vpop.f32.mrb[0].mxu0
    %1372 = vmatprep.mubr.f32.mxu0 0.0
    %1373 = vmatmul.mubr.f32.gmra.mrb[0].mxu0 %v134
    %v1374 = vpop.f32.mrb[0].mxu0
    %v1375 = vadd.f32 %v810, %v1374
    %v1376 = vpop.f32.mrb[0].mxu0
    %1377 = vmatprep.mubr.f32.mxu0 0.0
    %1378 = vmatmul.mubr.f32.gmra.mrb[0].mxu0 %v135
    %v1379 = vpop.f32.mrb[0].mxu0
    %v1380 = vadd.f32 %v815, %v1379
    %v1381 = vpop.f32.mrb[0].mxu0
    %1382 = vmatprep.mubr.f32.mxu0 0.0
    %1383 = vmatmul.mubr.f32.gmra.mrb[0].mxu0 %v136
    %v1384 = vpop.f32.mrb[0].mxu0
    %v1385 = vadd.f32 %v820, %v1384
    %v1386 = vpop.f32.mrb[0].mxu0
    %1387 = vmatprep.mubr.f32.mxu0 0.0
    %1388 = vmatmul.mubr.f32.gmra.mrb[0].mxu0 %v137
    %v1389 = vpop.f32.mrb[0].mxu0
    %v1390 = vadd.f32 %v825, %v1389
    %v1391 = vpop.f32.mrb[0].mxu0
    %1392 = vmatprep.mubr.f32.mxu0 0.0
    %1393 = vmatmul.mubr.f32.gmra.mrb[0].mxu0 %v138
    %v1394 = vpop.f32.mrb[0].mxu0
    %v1395 = vadd.f32 %v830, %v1394
    %v1396 = vpop.f32.mrb[0].mxu0
    %1397 = vmatprep.mubr.f32.mxu0 0.0
    %1398 = vmatmul.mubr.f32.gmra.mrb[0].mxu0 %v139
    %v1399 = vpop.f32.mrb[0].mxu0
    %v1400 = vadd.f32 %v835, %v1399
    %v1401 = vpop.f32.mrb[0].mxu0
    %1402 = vdwg.mxu0
    %v1403 = vld [vmem:[#allocation2 + $0x2] sm:$0xff]
    %v1404 = vld [vmem:[#allocation2 + $0xa] sm:$0xff]
    %v1405 = vld [vmem:[#allocation2 + $0x12] sm:$0xff]
    %v1406 = vld [vmem:[#allocation2 + $0x1a] sm:$0xff]
    %v1407 = vld [vmem:[#allocation2 + $0x22] sm:$0xff]
    %v1408 = vld [vmem:[#allocation2 + $0x2a] sm:$0xff]
    %v1409 = vld [vmem:[#allocation2 + $0x32] sm:$0xff]
    %v1410 = vld [vmem:[#allocation2 + $0x3a] sm:$0xff]
    %v1411 = vld [vmem:[#allocation2 + $0x42] sm:$0xff]
    %v1412 = vld [vmem:[#allocation2 + $0x4a] sm:$0xff]
    %v1413 = vld [vmem:[#allocation2 + $0x52] sm:$0xff]
    %v1414 = vld [vmem:[#allocation2 + $0x5a] sm:$0xff]
    %v1415 = vld [vmem:[#allocation2 + $0x62] sm:$0xff]
    %v1416 = vld [vmem:[#allocation2 + $0x6a] sm:$0xff]
    %v1417 = vld [vmem:[#allocation2 + $0x72] sm:$0xff]
    %v1418 = vld [vmem:[#allocation2 + $0x7a] sm:$0xff]
    %v1419 = vld [vmem:[#allocation2 + $0x82] sm:$0xff]
    %v1420 = vld [vmem:[#allocation2 + $0x8a] sm:$0xff]
    %v1421 = vld [vmem:[#allocation2 + $0x92] sm:$0xff]
    %v1422 = vld [vmem:[#allocation2 + $0x9a] sm:$0xff]
    %v1423 = vld [vmem:[#allocation2 + $0xa2] sm:$0xff]
    %v1424 = vld [vmem:[#allocation2 + $0xaa] sm:$0xff]
    %v1425 = vld [vmem:[#allocation2 + $0xb2] sm:$0xff]
    %v1426 = vld [vmem:[#allocation2 + $0xba] sm:$0xff]
    %v1427 = vld [vmem:[#allocation2 + $0xc2] sm:$0xff]
    %v1428 = vld [vmem:[#allocation2 + $0xca] sm:$0xff]
    %v1429 = vld [vmem:[#allocation2 + $0xd2] sm:$0xff]
    %v1430 = vld [vmem:[#allocation2 + $0xda] sm:$0xff]
    %v1431 = vld [vmem:[#allocation2 + $0xe2] sm:$0xff]
    %v1432 = vld [vmem:[#allocation2 + $0xea] sm:$0xff]
    %v1433 = vld [vmem:[#allocation2 + $0xf2] sm:$0xff]
    %v1434 = vld [vmem:[#allocation2 + $0xfa] sm:$0xff]
    %v1435 = vld [vmem:[#allocation2 + $0x102] sm:$0xff]
    %v1436 = vld [vmem:[#allocation2 + $0x10a] sm:$0xff]
    %v1437 = vld [vmem:[#allocation2 + $0x112] sm:$0xff]
    %v1438 = vld [vmem:[#allocation2 + $0x11a] sm:$0xff]
    %v1439 = vld [vmem:[#allocation2 + $0x122] sm:$0xff]
    %v1440 = vld [vmem:[#allocation2 + $0x12a] sm:$0xff]
    %v1441 = vld [vmem:[#allocation2 + $0x132] sm:$0xff]
    %v1442 = vld [vmem:[#allocation2 + $0x13a] sm:$0xff]
    %v1443 = vld [vmem:[#allocation2 + $0x142] sm:$0xff]
    %v1444 = vld [vmem:[#allocation2 + $0x14a] sm:$0xff]
    %v1445 = vld [vmem:[#allocation2 + $0x152] sm:$0xff]
    %v1446 = vld [vmem:[#allocation2 + $0x15a] sm:$0xff]
    %v1447 = vld [vmem:[#allocation2 + $0x162] sm:$0xff]
    %v1448 = vld [vmem:[#allocation2 + $0x16a] sm:$0xff]
    %v1449 = vld [vmem:[#allocation2 + $0x172] sm:$0xff]
    %v1450 = vld [vmem:[#allocation2 + $0x17a] sm:$0xff]
    %v1451 = vld [vmem:[#allocation2 + $0x182] sm:$0xff]
    %v1452 = vld [vmem:[#allocation2 + $0x18a] sm:$0xff]
    %v1453 = vld [vmem:[#allocation2 + $0x192] sm:$0xff]
    %v1454 = vld [vmem:[#allocation2 + $0x19a] sm:$0xff]
    %v1455 = vld [vmem:[#allocation2 + $0x1a2] sm:$0xff]
    %v1456 = vld [vmem:[#allocation2 + $0x1aa] sm:$0xff]
    %v1457 = vld [vmem:[#allocation2 + $0x1b2] sm:$0xff]
    %v1458 = vld [vmem:[#allocation2 + $0x1ba] sm:$0xff]
    %v1459 = vld [vmem:[#allocation2 + $0x1c2] sm:$0xff]
    %v1460 = vld [vmem:[#allocation2 + $0x1ca] sm:$0xff]
    %v1461 = vld [vmem:[#allocation2 + $0x1d2] sm:$0xff]
    %v1462 = vld [vmem:[#allocation2 + $0x1da] sm:$0xff]
    %v1463 = vld [vmem:[#allocation2 + $0x1e2] sm:$0xff]
    %v1464 = vld [vmem:[#allocation2 + $0x1ea] sm:$0xff]
    %v1465 = vld [vmem:[#allocation2 + $0x1f2] sm:$0xff]
    %v1466 = vld [vmem:[#allocation2 + $0x1fa] sm:$0xff]
    %v1467 = vld [vmem:[#allocation2 + $0x202] sm:$0xff]
    %v1468 = vld [vmem:[#allocation2 + $0x20a] sm:$0xff]
    %v1469 = vld [vmem:[#allocation2 + $0x212] sm:$0xff]
    %v1470 = vld [vmem:[#allocation2 + $0x21a] sm:$0xff]
    %v1471 = vld [vmem:[#allocation2 + $0x222] sm:$0xff]
    %v1472 = vld [vmem:[#allocation2 + $0x22a] sm:$0xff]
    %v1473 = vld [vmem:[#allocation2 + $0x232] sm:$0xff]
    %v1474 = vld [vmem:[#allocation2 + $0x23a] sm:$0xff]
    %v1475 = vld [vmem:[#allocation2 + $0x242] sm:$0xff]
    %v1476 = vld [vmem:[#allocation2 + $0x24a] sm:$0xff]
    %v1477 = vld [vmem:[#allocation2 + $0x252] sm:$0xff]
    %v1478 = vld [vmem:[#allocation2 + $0x25a] sm:$0xff]
    %v1479 = vld [vmem:[#allocation2 + $0x262] sm:$0xff]
    %v1480 = vld [vmem:[#allocation2 + $0x26a] sm:$0xff]
    %v1481 = vld [vmem:[#allocation2 + $0x272] sm:$0xff]
    %v1482 = vld [vmem:[#allocation2 + $0x27a] sm:$0xff]
    %v1483 = vld [vmem:[#allocation2 + $0x282] sm:$0xff]
    %v1484 = vld [vmem:[#allocation2 + $0x28a] sm:$0xff]
    %v1485 = vld [vmem:[#allocation2 + $0x292] sm:$0xff]
    %v1486 = vld [vmem:[#allocation2 + $0x29a] sm:$0xff]
    %v1487 = vld [vmem:[#allocation2 + $0x2a2] sm:$0xff]
    %v1488 = vld [vmem:[#allocation2 + $0x2aa] sm:$0xff]
    %v1489 = vld [vmem:[#allocation2 + $0x2b2] sm:$0xff]
    %v1490 = vld [vmem:[#allocation2 + $0x2ba] sm:$0xff]
    %v1491 = vld [vmem:[#allocation2 + $0x2c2] sm:$0xff]
    %v1492 = vld [vmem:[#allocation2 + $0x2ca] sm:$0xff]
    %v1493 = vld [vmem:[#allocation2 + $0x2d2] sm:$0xff]
    %v1494 = vld [vmem:[#allocation2 + $0x2da] sm:$0xff]
    %v1495 = vld [vmem:[#allocation2 + $0x2e2] sm:$0xff]
    %v1496 = vld [vmem:[#allocation2 + $0x2ea] sm:$0xff]
    %v1497 = vld [vmem:[#allocation2 + $0x2f2] sm:$0xff]
    %v1498 = vld [vmem:[#allocation2 + $0x2fa] sm:$0xff]
    %v1499 = vld [vmem:[#allocation2 + $0x302] sm:$0xff]
    %v1500 = vld [vmem:[#allocation2 + $0x30a] sm:$0xff]
    %v1501 = vld [vmem:[#allocation2 + $0x312] sm:$0xff]
    %v1502 = vld [vmem:[#allocation2 + $0x31a] sm:$0xff]
    %s1503 = scalar_lea.vmem [#allocation5], 256
    %v1504 = vld [vmem:[%s1503] sm:$0xff]
    %v1505 = vld [vmem:[%s1503 + $0x8] sm:$0xff]
    %v1506 = vld [vmem:[%s1503 + $0x10] sm:$0xff]
    %v1507 = vld [vmem:[%s1503 + $0x18] sm:$0xff]
    %v1508 = vld [vmem:[%s1503 + $0x20] sm:$0xff]
    %v1509 = vld [vmem:[%s1503 + $0x28] sm:$0xff]
    %v1510 = vld [vmem:[%s1503 + $0x30] sm:$0xff]
    %v1511 = vld [vmem:[%s1503 + $0x38] sm:$0xff]
    %v1512 = vld [vmem:[%s1503 + $0x40] sm:$0xff]
    %v1513 = vld [vmem:[%s1503 + $0x48] sm:$0xff]
    %v1514 = vld [vmem:[%s1503 + $0x50] sm:$0xff]
    %v1515 = vld [vmem:[%s1503 + $0x58] sm:$0xff]
    %v1516 = vld [vmem:[%s1503 + $0x60] sm:$0xff]
    %v1517 = vld [vmem:[%s1503 + $0x68] sm:$0xff]
    %v1518 = vld [vmem:[%s1503 + $0x70] sm:$0xff]
    %v1519 = vld [vmem:[%s1503 + $0x78] sm:$0xff]
    %1520 = vmatprep.subr.mxu0 0.0
    %1521 = vmatpush1.msra.mxu0 %v1504
    %1522 = vmatprep.subr.mxu0 0.0
    %1523 = vmatpush1.msra.mxu0 %v1505
    %1524 = vmatprep.subr.mxu0 0.0
    %1525 = vmatpush1.msra.mxu0 %v1506
    %1526 = vmatprep.subr.mxu0 0.0
    %1527 = vmatpush1.msra.mxu0 %v1507
    %1528 = vmatprep.subr.mxu0 0.0
    %1529 = vmatpush1.msra.mxu0 %v1508
    %1530 = vmatprep.subr.mxu0 0.0
    %1531 = vmatpush1.msra.mxu0 %v1509
    %1532 = vmatprep.subr.mxu0 0.0
    %1533 = vmatpush1.msra.mxu0 %v1510
    %1534 = vmatprep.subr.mxu0 0.0
    %1535 = vmatpush1.msra.mxu0 %v1511
    %1536 = vmatprep.subr.mxu0 0.0
    %1537 = vmatpush1.msra.mxu0 %v1512
    %1538 = vmatprep.subr.mxu0 0.0
    %1539 = vmatpush1.msra.mxu0 %v1513
    %1540 = vmatprep.subr.mxu0 0.0
    %1541 = vmatpush1.msra.mxu0 %v1514
    %1542 = vmatprep.subr.mxu0 0.0
    %1543 = vmatpush1.msra.mxu0 %v1515
    %1544 = vmatprep.subr.mxu0 0.0
    %1545 = vmatpush1.msra.mxu0 %v1516
    %1546 = vmatprep.subr.mxu0 0.0
    %1547 = vmatpush1.msra.mxu0 %v1517
    %1548 = vmatprep.subr.mxu0 0.0
    %1549 = vmatpush1.msra.mxu0 %v1518
    %1550 = vmatprep.subr.mxu0 0.0
    %1551 = vmatpush1.msra.mxu0 %v1519
    %1552 = vmatprep.subr.mxu0 0.0
    %1553 = vmatpush1.msra.mxu0 0.0
    %1554 = vmatprep.subr.mxu0 0.0
    %1555 = vmatpush1.msra.mxu0 0.0
    %1556 = vmatprep.subr.mxu0 0.0
    %1557 = vmatpush1.msra.mxu0 0.0
    %1558 = vmatprep.subr.mxu0 0.0
    %1559 = vmatpush1.msra.mxu0 0.0
    %1560 = vmatprep.subr.mxu0 0.0
    %1561 = vmatpush1.msra.mxu0 0.0
    %1562 = vmatprep.subr.mxu0 0.0
    %1563 = vmatpush1.msra.mxu0 0.0
    %1564 = vmatprep.subr.mxu0 0.0
    %1565 = vmatpush1.msra.mxu0 0.0
    %1566 = vmatprep.subr.mxu0 0.0
    %1567 = vmatpush1.msra.mxu0 0.0
    %1568 = vmatprep.subr.mxu0 0.0
    %1569 = vmatpush1.msra.mxu0 0.0
    %1570 = vmatprep.subr.mxu0 0.0
    %1571 = vmatpush1.msra.mxu0 0.0
    %1572 = vmatprep.subr.mxu0 0.0
    %1573 = vmatpush1.msra.mxu0 0.0
    %1574 = vmatprep.subr.mxu0 0.0
    %1575 = vmatpush1.msra.mxu0 0.0
    %1576 = vmatprep.subr.mxu0 0.0
    %1577 = vmatpush1.msra.mxu0 0.0
    %1578 = vmatprep.subr.mxu0 0.0
    %1579 = vmatpush1.msra.mxu0 0.0
    %1580 = vmatprep.subr.mxu0 0.0
    %1581 = vmatpush1.msra.mxu0 0.0
    %1582 = vmatprep.subr.mxu0 0.0
    %1583 = vmatpush1.msra.mxu0 0.0
    %1584 = vmatprep.mubr.f32.mxu0 0.0
    %1585 = vmatmul.mubr.f32.gmra.mrb[0].mxu0 %v1403
    %v1586 = vpop.f32.mrb[0].mxu0
    %v1587 = vadd.f32 0.0, %v1586
    %v1588 = vpop.f32.mrb[0].mxu0
    %1589 = vmatprep.mubr.f32.mxu0 0.0
    %1590 = vmatmul.mubr.f32.gmra.mrb[0].mxu0 %v1404
    %v1591 = vpop.f32.mrb[0].mxu0
    %v1592 = vadd.f32 0.0, %v1591
    %v1593 = vpop.f32.mrb[0].mxu0
    %1594 = vmatprep.mubr.f32.mxu0 0.0
    %1595 = vmatmul.mubr.f32.gmra.mrb[0].mxu0 %v1405
    %v1596 = vpop.f32.mrb[0].mxu0
    %v1597 = vadd.f32 0.0, %v1596
    %v1598 = vpop.f32.mrb[0].mxu0
    %1599 = vmatprep.mubr.f32.mxu0 0.0
    %1600 = vmatmul.mubr.f32.gmra.mrb[0].mxu0 %v1406
    %v1601 = vpop.f32.mrb[0].mxu0
    %v1602 = vadd.f32 0.0, %v1601
    %v1603 = vpop.f32.mrb[0].mxu0
    %1604 = vmatprep.mubr.f32.mxu0 0.0
    %1605 = vmatmul.mubr.f32.gmra.mrb[0].mxu0 %v1407
    %v1606 = vpop.f32.mrb[0].mxu0
    %v1607 = vadd.f32 0.0, %v1606
    %v1608 = vpop.f32.mrb[0].mxu0
    %1609 = vmatprep.mubr.f32.mxu0 0.0
    %1610 = vmatmul.mubr.f32.gmra.mrb[0].mxu0 %v1408
    %v1611 = vpop.f32.mrb[0].mxu0
    %v1612 = vadd.f32 0.0, %v1611
    %v1613 = vpop.f32.mrb[0].mxu0
    %1614 = vmatprep.mubr.f32.mxu0 0.0
    %1615 = vmatmul.mubr.f32.gmra.mrb[0].mxu0 %v1409
    %v1616 = vpop.f32.mrb[0].mxu0
    %v1617 = vadd.f32 0.0, %v1616
    %v1618 = vpop.f32.mrb[0].mxu0
    %1619 = vmatprep.mubr.f32.mxu0 0.0
    %1620 = vmatmul.mubr.f32.gmra.mrb[0].mxu0 %v1410
    %v1621 = vpop.f32.mrb[0].mxu0
    %v1622 = vadd.f32 0.0, %v1621
    %v1623 = vpop.f32.mrb[0].mxu0
    %1624 = vmatprep.mubr.f32.mxu0 0.0
    %1625 = vmatmul.mubr.f32.gmra.mrb[0].mxu0 %v1411
    %v1626 = vpop.f32.mrb[0].mxu0
    %v1627 = vadd.f32 0.0, %v1626
    %v1628 = vpop.f32.mrb[0].mxu0
    %1629 = vmatprep.mubr.f32.mxu0 0.0
    %1630 = vmatmul.mubr.f32.gmra.mrb[0].mxu0 %v1412
    %v1631 = vpop.f32.mrb[0].mxu0
    %v1632 = vadd.f32 0.0, %v1631
    %v1633 = vpop.f32.mrb[0].mxu0
    %1634 = vmatprep.mubr.f32.mxu0 0.0
    %1635 = vmatmul.mubr.f32.gmra.mrb[0].mxu0 %v1413
    %v1636 = vpop.f32.mrb[0].mxu0
    %v1637 = vadd.f32 0.0, %v1636
    %v1638 = vpop.f32.mrb[0].mxu0
    %1639 = vmatprep.mubr.f32.mxu0 0.0
    %1640 = vmatmul.mubr.f32.gmra.mrb[0].mxu0 %v1414
    %v1641 = vpop.f32.mrb[0].mxu0
    %v1642 = vadd.f32 0.0, %v1641
    %v1643 = vpop.f32.mrb[0].mxu0
    %1644 = vmatprep.mubr.f32.mxu0 0.0
    %1645 = vmatmul.mubr.f32.gmra.mrb[0].mxu0 %v1415
    %v1646 = vpop.f32.mrb[0].mxu0
    %v1647 = vadd.f32 0.0, %v1646
    %v1648 = vpop.f32.mrb[0].mxu0
    %1649 = vmatprep.mubr.f32.mxu0 0.0
    %1650 = vmatmul.mubr.f32.gmra.mrb[0].mxu0 %v1416
    %v1651 = vpop.f32.mrb[0].mxu0
    %v1652 = vadd.f32 0.0, %v1651
    %v1653 = vpop.f32.mrb[0].mxu0
    %1654 = vmatprep.mubr.f32.mxu0 0.0
    %1655 = vmatmul.mubr.f32.gmra.mrb[0].mxu0 %v1417
    %v1656 = vpop.f32.mrb[0].mxu0
    %v1657 = vadd.f32 0.0, %v1656
    %v1658 = vpop.f32.mrb[0].mxu0
    %1659 = vmatprep.mubr.f32.mxu0 0.0
    %1660 = vmatmul.mubr.f32.gmra.mrb[0].mxu0 %v1418
    %v1661 = vpop.f32.mrb[0].mxu0
    %v1662 = vadd.f32 0.0, %v1661
    %v1663 = vpop.f32.mrb[0].mxu0
    %1664 = vmatprep.mubr.f32.mxu0 0.0
    %1665 = vmatmul.mubr.f32.gmra.mrb[0].mxu0 %v1419
    %v1666 = vpop.f32.mrb[0].mxu0
    %v1667 = vadd.f32 0.0, %v1666
    %v1668 = vpop.f32.mrb[0].mxu0
    %1669 = vmatprep.mubr.f32.mxu0 0.0
    %1670 = vmatmul.mubr.f32.gmra.mrb[0].mxu0 %v1420
    %v1671 = vpop.f32.mrb[0].mxu0
    %v1672 = vadd.f32 0.0, %v1671
    %v1673 = vpop.f32.mrb[0].mxu0
    %1674 = vmatprep.mubr.f32.mxu0 0.0
    %1675 = vmatmul.mubr.f32.gmra.mrb[0].mxu0 %v1421
    %v1676 = vpop.f32.mrb[0].mxu0
    %v1677 = vadd.f32 0.0, %v1676
    %v1678 = vpop.f32.mrb[0].mxu0
    %1679 = vmatprep.mubr.f32.mxu0 0.0
    %1680 = vmatmul.mubr.f32.gmra.mrb[0].mxu0 %v1422
    %v1681 = vpop.f32.mrb[0].mxu0
    %v1682 = vadd.f32 0.0, %v1681
    %v1683 = vpop.f32.mrb[0].mxu0
    %1684 = vmatprep.mubr.f32.mxu0 0.0
    %1685 = vmatmul.mubr.f32.gmra.mrb[0].mxu0 %v1423
    %v1686 = vpop.f32.mrb[0].mxu0
    %v1687 = vadd.f32 0.0, %v1686
    %v1688 = vpop.f32.mrb[0].mxu0
    %1689 = vmatprep.mubr.f32.mxu0 0.0
    %1690 = vmatmul.mubr.f32.gmra.mrb[0].mxu0 %v1424
    %v1691 = vpop.f32.mrb[0].mxu0
    %v1692 = vadd.f32 0.0, %v1691
    %v1693 = vpop.f32.mrb[0].mxu0
    %1694 = vmatprep.mubr.f32.mxu0 0.0
    %1695 = vmatmul.mubr.f32.gmra.mrb[0].mxu0 %v1425
    %v1696 = vpop.f32.mrb[0].mxu0
    %v1697 = vadd.f32 0.0, %v1696
    %v1698 = vpop.f32.mrb[0].mxu0
    %1699 = vmatprep.mubr.f32.mxu0 0.0
    %1700 = vmatmul.mubr.f32.gmra.mrb[0].mxu0 %v1426
    %v1701 = vpop.f32.mrb[0].mxu0
    %v1702 = vadd.f32 0.0, %v1701
    %v1703 = vpop.f32.mrb[0].mxu0
    %1704 = vmatprep.mubr.f32.mxu0 0.0
    %1705 = vmatmul.mubr.f32.gmra.mrb[0].mxu0 %v1427
    %v1706 = vpop.f32.mrb[0].mxu0
    %v1707 = vadd.f32 0.0, %v1706
    %v1708 = vpop.f32.mrb[0].mxu0
    %1709 = vmatprep.mubr.f32.mxu0 0.0
    %1710 = vmatmul.mubr.f32.gmra.mrb[0].mxu0 %v1428
    %v1711 = vpop.f32.mrb[0].mxu0
    %v1712 = vadd.f32 0.0, %v1711
    %v1713 = vpop.f32.mrb[0].mxu0
    %1714 = vmatprep.mubr.f32.mxu0 0.0
    %1715 = vmatmul.mubr.f32.gmra.mrb[0].mxu0 %v1429
    %v1716 = vpop.f32.mrb[0].mxu0
    %v1717 = vadd.f32 0.0, %v1716
    %v1718 = vpop.f32.mrb[0].mxu0
    %1719 = vmatprep.mubr.f32.mxu0 0.0
    %1720 = vmatmul.mubr.f32.gmra.mrb[0].mxu0 %v1430
    %v1721 = vpop.f32.mrb[0].mxu0
    %v1722 = vadd.f32 0.0, %v1721
    %v1723 = vpop.f32.mrb[0].mxu0
    %1724 = vmatprep.mubr.f32.mxu0 0.0
    %1725 = vmatmul.mubr.f32.gmra.mrb[0].mxu0 %v1431
    %v1726 = vpop.f32.mrb[0].mxu0
    %v1727 = vadd.f32 0.0, %v1726
    %v1728 = vpop.f32.mrb[0].mxu0
    %1729 = vmatprep.mubr.f32.mxu0 0.0
    %1730 = vmatmul.mubr.f32.gmra.mrb[0].mxu0 %v1432
    %v1731 = vpop.f32.mrb[0].mxu0
    %v1732 = vadd.f32 0.0, %v1731
    %v1733 = vpop.f32.mrb[0].mxu0
    %1734 = vmatprep.mubr.f32.mxu0 0.0
    %1735 = vmatmul.mubr.f32.gmra.mrb[0].mxu0 %v1433
    %v1736 = vpop.f32.mrb[0].mxu0
    %v1737 = vadd.f32 0.0, %v1736
    %v1738 = vpop.f32.mrb[0].mxu0
    %1739 = vmatprep.mubr.f32.mxu0 0.0
    %1740 = vmatmul.mubr.f32.gmra.mrb[0].mxu0 %v1434
    %v1741 = vpop.f32.mrb[0].mxu0
    %v1742 = vadd.f32 0.0, %v1741
    %v1743 = vpop.f32.mrb[0].mxu0
    %1744 = vmatprep.mubr.f32.mxu0 0.0
    %1745 = vmatmul.mubr.f32.gmra.mrb[0].mxu0 %v1435
    %v1746 = vpop.f32.mrb[0].mxu0
    %v1747 = vadd.f32 0.0, %v1746
    %v1748 = vpop.f32.mrb[0].mxu0
    %1749 = vmatprep.mubr.f32.mxu0 0.0
    %1750 = vmatmul.mubr.f32.gmra.mrb[0].mxu0 %v1436
    %v1751 = vpop.f32.mrb[0].mxu0
    %v1752 = vadd.f32 0.0, %v1751
    %v1753 = vpop.f32.mrb[0].mxu0
    %1754 = vmatprep.mubr.f32.mxu0 0.0
    %1755 = vmatmul.mubr.f32.gmra.mrb[0].mxu0 %v1437
    %v1756 = vpop.f32.mrb[0].mxu0
    %v1757 = vadd.f32 0.0, %v1756
    %v1758 = vpop.f32.mrb[0].mxu0
    %1759 = vmatprep.mubr.f32.mxu0 0.0
    %1760 = vmatmul.mubr.f32.gmra.mrb[0].mxu0 %v1438
    %v1761 = vpop.f32.mrb[0].mxu0
    %v1762 = vadd.f32 0.0, %v1761
    %v1763 = vpop.f32.mrb[0].mxu0
    %1764 = vmatprep.mubr.f32.mxu0 0.0
    %1765 = vmatmul.mubr.f32.gmra.mrb[0].mxu0 %v1439
    %v1766 = vpop.f32.mrb[0].mxu0
    %v1767 = vadd.f32 0.0, %v1766
    %v1768 = vpop.f32.mrb[0].mxu0
    %1769 = vmatprep.mubr.f32.mxu0 0.0
    %1770 = vmatmul.mubr.f32.gmra.mrb[0].mxu0 %v1440
    %v1771 = vpop.f32.mrb[0].mxu0
    %v1772 = vadd.f32 0.0, %v1771
    %v1773 = vpop.f32.mrb[0].mxu0
    %1774 = vmatprep.mubr.f32.mxu0 0.0
    %1775 = vmatmul.mubr.f32.gmra.mrb[0].mxu0 %v1441
    %v1776 = vpop.f32.mrb[0].mxu0
    %v1777 = vadd.f32 0.0, %v1776
    %v1778 = vpop.f32.mrb[0].mxu0
    %1779 = vmatprep.mubr.f32.mxu0 0.0
    %1780 = vmatmul.mubr.f32.gmra.mrb[0].mxu0 %v1442
    %v1781 = vpop.f32.mrb[0].mxu0
    %v1782 = vadd.f32 0.0, %v1781
    %v1783 = vpop.f32.mrb[0].mxu0
    %1784 = vmatprep.mubr.f32.mxu0 0.0
    %1785 = vmatmul.mubr.f32.gmra.mrb[0].mxu0 %v1443
    %v1786 = vpop.f32.mrb[0].mxu0
    %v1787 = vadd.f32 0.0, %v1786
    %v1788 = vpop.f32.mrb[0].mxu0
    %1789 = vmatprep.mubr.f32.mxu0 0.0
    %1790 = vmatmul.mubr.f32.gmra.mrb[0].mxu0 %v1444
    %v1791 = vpop.f32.mrb[0].mxu0
    %v1792 = vadd.f32 0.0, %v1791
    %v1793 = vpop.f32.mrb[0].mxu0
    %1794 = vmatprep.mubr.f32.mxu0 0.0
    %1795 = vmatmul.mubr.f32.gmra.mrb[0].mxu0 %v1445
    %v1796 = vpop.f32.mrb[0].mxu0
    %v1797 = vadd.f32 0.0, %v1796
    %v1798 = vpop.f32.mrb[0].mxu0
    %1799 = vmatprep.mubr.f32.mxu0 0.0
    %1800 = vmatmul.mubr.f32.gmra.mrb[0].mxu0 %v1446
    %v1801 = vpop.f32.mrb[0].mxu0
    %v1802 = vadd.f32 0.0, %v1801
    %v1803 = vpop.f32.mrb[0].mxu0
    %1804 = vmatprep.mubr.f32.mxu0 0.0
    %1805 = vmatmul.mubr.f32.gmra.mrb[0].mxu0 %v1447
    %v1806 = vpop.f32.mrb[0].mxu0
    %v1807 = vadd.f32 0.0, %v1806
    %v1808 = vpop.f32.mrb[0].mxu0
    %1809 = vmatprep.mubr.f32.mxu0 0.0
    %1810 = vmatmul.mubr.f32.gmra.mrb[0].mxu0 %v1448
    %v1811 = vpop.f32.mrb[0].mxu0
    %v1812 = vadd.f32 0.0, %v1811
    %v1813 = vpop.f32.mrb[0].mxu0
    %1814 = vmatprep.mubr.f32.mxu0 0.0
    %1815 = vmatmul.mubr.f32.gmra.mrb[0].mxu0 %v1449
    %v1816 = vpop.f32.mrb[0].mxu0
    %v1817 = vadd.f32 0.0, %v1816
    %v1818 = vpop.f32.mrb[0].mxu0
    %1819 = vmatprep.mubr.f32.mxu0 0.0
    %1820 = vmatmul.mubr.f32.gmra.mrb[0].mxu0 %v1450
    %v1821 = vpop.f32.mrb[0].mxu0
    %v1822 = vadd.f32 0.0, %v1821
    %v1823 = vpop.f32.mrb[0].mxu0
    %1824 = vmatprep.mubr.f32.mxu0 0.0
    %1825 = vmatmul.mubr.f32.gmra.mrb[0].mxu0 %v1451
    %v1826 = vpop.f32.mrb[0].mxu0
    %v1827 = vadd.f32 0.0, %v1826
    %v1828 = vpop.f32.mrb[0].mxu0
    %1829 = vmatprep.mubr.f32.mxu0 0.0
    %1830 = vmatmul.mubr.f32.gmra.mrb[0].mxu0 %v1452
    %v1831 = vpop.f32.mrb[0].mxu0
    %v1832 = vadd.f32 0.0, %v1831
    %v1833 = vpop.f32.mrb[0].mxu0
    %1834 = vmatprep.mubr.f32.mxu0 0.0
    %1835 = vmatmul.mubr.f32.gmra.mrb[0].mxu0 %v1453
    %v1836 = vpop.f32.mrb[0].mxu0
    %v1837 = vadd.f32 0.0, %v1836
    %v1838 = vpop.f32.mrb[0].mxu0
    %1839 = vmatprep.mubr.f32.mxu0 0.0
    %1840 = vmatmul.mubr.f32.gmra.mrb[0].mxu0 %v1454
    %v1841 = vpop.f32.mrb[0].mxu0
    %v1842 = vadd.f32 0.0, %v1841
    %v1843 = vpop.f32.mrb[0].mxu0
    %1844 = vmatprep.mubr.f32.mxu0 0.0
    %1845 = vmatmul.mubr.f32.gmra.mrb[0].mxu0 %v1455
    %v1846 = vpop.f32.mrb[0].mxu0
    %v1847 = vadd.f32 0.0, %v1846
    %v1848 = vpop.f32.mrb[0].mxu0
    %1849 = vmatprep.mubr.f32.mxu0 0.0
    %1850 = vmatmul.mubr.f32.gmra.mrb[0].mxu0 %v1456
    %v1851 = vpop.f32.mrb[0].mxu0
    %v1852 = vadd.f32 0.0, %v1851
    %v1853 = vpop.f32.mrb[0].mxu0
    %1854 = vmatprep.mubr.f32.mxu0 0.0
    %1855 = vmatmul.mubr.f32.gmra.mrb[0].mxu0 %v1457
    %v1856 = vpop.f32.mrb[0].mxu0
    %v1857 = vadd.f32 0.0, %v1856
    %v1858 = vpop.f32.mrb[0].mxu0
    %1859 = vmatprep.mubr.f32.mxu0 0.0
    %1860 = vmatmul.mubr.f32.gmra.mrb[0].mxu0 %v1458
    %v1861 = vpop.f32.mrb[0].mxu0
    %v1862 = vadd.f32 0.0, %v1861
    %v1863 = vpop.f32.mrb[0].mxu0
    %1864 = vmatprep.mubr.f32.mxu0 0.0
    %1865 = vmatmul.mubr.f32.gmra.mrb[0].mxu0 %v1459
    %v1866 = vpop.f32.mrb[0].mxu0
    %v1867 = vadd.f32 0.0, %v1866
    %v1868 = vpop.f32.mrb[0].mxu0
    %1869 = vmatprep.mubr.f32.mxu0 0.0
    %1870 = vmatmul.mubr.f32.gmra.mrb[0].mxu0 %v1460
    %v1871 = vpop.f32.mrb[0].mxu0
    %v1872 = vadd.f32 0.0, %v1871
    %v1873 = vpop.f32.mrb[0].mxu0
    %1874 = vmatprep.mubr.f32.mxu0 0.0
    %1875 = vmatmul.mubr.f32.gmra.mrb[0].mxu0 %v1461
    %v1876 = vpop.f32.mrb[0].mxu0
    %v1877 = vadd.f32 0.0, %v1876
    %v1878 = vpop.f32.mrb[0].mxu0
    %1879 = vmatprep.mubr.f32.mxu0 0.0
    %1880 = vmatmul.mubr.f32.gmra.mrb[0].mxu0 %v1462
    %v1881 = vpop.f32.mrb[0].mxu0
    %v1882 = vadd.f32 0.0, %v1881
    %v1883 = vpop.f32.mrb[0].mxu0
    %1884 = vmatprep.mubr.f32.mxu0 0.0
    %1885 = vmatmul.mubr.f32.gmra.mrb[0].mxu0 %v1463
    %v1886 = vpop.f32.mrb[0].mxu0
    %v1887 = vadd.f32 0.0, %v1886
    %v1888 = vpop.f32.mrb[0].mxu0
    %1889 = vmatprep.mubr.f32.mxu0 0.0
    %1890 = vmatmul.mubr.f32.gmra.mrb[0].mxu0 %v1464
    %v1891 = vpop.f32.mrb[0].mxu0
    %v1892 = vadd.f32 0.0, %v1891
    %v1893 = vpop.f32.mrb[0].mxu0
    %1894 = vmatprep.mubr.f32.mxu0 0.0
    %1895 = vmatmul.mubr.f32.gmra.mrb[0].mxu0 %v1465
    %v1896 = vpop.f32.mrb[0].mxu0
    %v1897 = vadd.f32 0.0, %v1896
    %v1898 = vpop.f32.mrb[0].mxu0
    %1899 = vmatprep.mubr.f32.mxu0 0.0
    %1900 = vmatmul.mubr.f32.gmra.mrb[0].mxu0 %v1466
    %v1901 = vpop.f32.mrb[0].mxu0
    %v1902 = vadd.f32 0.0, %v1901
    %v1903 = vpop.f32.mrb[0].mxu0
    %1904 = vmatprep.mubr.f32.mxu0 0.0
    %1905 = vmatmul.mubr.f32.gmra.mrb[0].mxu0 %v1467
    %v1906 = vpop.f32.mrb[0].mxu0
    %v1907 = vadd.f32 0.0, %v1906
    %v1908 = vpop.f32.mrb[0].mxu0
    %1909 = vmatprep.mubr.f32.mxu0 0.0
    %1910 = vmatmul.mubr.f32.gmra.mrb[0].mxu0 %v1468
    %v1911 = vpop.f32.mrb[0].mxu0
    %v1912 = vadd.f32 0.0, %v1911
    %v1913 = vpop.f32.mrb[0].mxu0
    %1914 = vmatprep.mubr.f32.mxu0 0.0
    %1915 = vmatmul.mubr.f32.gmra.mrb[0].mxu0 %v1469
    %v1916 = vpop.f32.mrb[0].mxu0
    %v1917 = vadd.f32 0.0, %v1916
    %v1918 = vpop.f32.mrb[0].mxu0
    %1919 = vmatprep.mubr.f32.mxu0 0.0
    %1920 = vmatmul.mubr.f32.gmra.mrb[0].mxu0 %v1470
    %v1921 = vpop.f32.mrb[0].mxu0
    %v1922 = vadd.f32 0.0, %v1921
    %v1923 = vpop.f32.mrb[0].mxu0
    %1924 = vmatprep.mubr.f32.mxu0 0.0
    %1925 = vmatmul.mubr.f32.gmra.mrb[0].mxu0 %v1471
    %v1926 = vpop.f32.mrb[0].mxu0
    %v1927 = vadd.f32 0.0, %v1926
    %v1928 = vpop.f32.mrb[0].mxu0
    %1929 = vmatprep.mubr.f32.mxu0 0.0
    %1930 = vmatmul.mubr.f32.gmra.mrb[0].mxu0 %v1472
    %v1931 = vpop.f32.mrb[0].mxu0
    %v1932 = vadd.f32 0.0, %v1931
    %v1933 = vpop.f32.mrb[0].mxu0
    %1934 = vmatprep.mubr.f32.mxu0 0.0
    %1935 = vmatmul.mubr.f32.gmra.mrb[0].mxu0 %v1473
    %v1936 = vpop.f32.mrb[0].mxu0
    %v1937 = vadd.f32 0.0, %v1936
    %v1938 = vpop.f32.mrb[0].mxu0
    %1939 = vmatprep.mubr.f32.mxu0 0.0
    %1940 = vmatmul.mubr.f32.gmra.mrb[0].mxu0 %v1474
    %v1941 = vpop.f32.mrb[0].mxu0
    %v1942 = vadd.f32 0.0, %v1941
    %v1943 = vpop.f32.mrb[0].mxu0
    %1944 = vmatprep.mubr.f32.mxu0 0.0
    %1945 = vmatmul.mubr.f32.gmra.mrb[0].mxu0 %v1475
    %v1946 = vpop.f32.mrb[0].mxu0
    %v1947 = vadd.f32 0.0, %v1946
    %v1948 = vpop.f32.mrb[0].mxu0
    %1949 = vmatprep.mubr.f32.mxu0 0.0
    %1950 = vmatmul.mubr.f32.gmra.mrb[0].mxu0 %v1476
    %v1951 = vpop.f32.mrb[0].mxu0
    %v1952 = vadd.f32 0.0, %v1951
    %v1953 = vpop.f32.mrb[0].mxu0
    %1954 = vmatprep.mubr.f32.mxu0 0.0
    %1955 = vmatmul.mubr.f32.gmra.mrb[0].mxu0 %v1477
    %v1956 = vpop.f32.mrb[0].mxu0
    %v1957 = vadd.f32 0.0, %v1956
    %v1958 = vpop.f32.mrb[0].mxu0
    %1959 = vmatprep.mubr.f32.mxu0 0.0
    %1960 = vmatmul.mubr.f32.gmra.mrb[0].mxu0 %v1478
    %v1961 = vpop.f32.mrb[0].mxu0
    %v1962 = vadd.f32 0.0, %v1961
    %v1963 = vpop.f32.mrb[0].mxu0
    %1964 = vmatprep.mubr.f32.mxu0 0.0
    %1965 = vmatmul.mubr.f32.gmra.mrb[0].mxu0 %v1479
    %v1966 = vpop.f32.mrb[0].mxu0
    %v1967 = vadd.f32 0.0, %v1966
    %v1968 = vpop.f32.mrb[0].mxu0
    %1969 = vmatprep.mubr.f32.mxu0 0.0
    %1970 = vmatmul.mubr.f32.gmra.mrb[0].mxu0 %v1480
    %v1971 = vpop.f32.mrb[0].mxu0
    %v1972 = vadd.f32 0.0, %v1971
    %v1973 = vpop.f32.mrb[0].mxu0
    %1974 = vmatprep.mubr.f32.mxu0 0.0
    %1975 = vmatmul.mubr.f32.gmra.mrb[0].mxu0 %v1481
    %v1976 = vpop.f32.mrb[0].mxu0
    %v1977 = vadd.f32 0.0, %v1976
    %v1978 = vpop.f32.mrb[0].mxu0
    %1979 = vmatprep.mubr.f32.mxu0 0.0
    %1980 = vmatmul.mubr.f32.gmra.mrb[0].mxu0 %v1482
    %v1981 = vpop.f32.mrb[0].mxu0
    %v1982 = vadd.f32 0.0, %v1981
    %v1983 = vpop.f32.mrb[0].mxu0
    %1984 = vmatprep.mubr.f32.mxu0 0.0
    %1985 = vmatmul.mubr.f32.gmra.mrb[0].mxu0 %v1483
    %v1986 = vpop.f32.mrb[0].mxu0
    %v1987 = vadd.f32 0.0, %v1986
    %v1988 = vpop.f32.mrb[0].mxu0
    %1989 = vmatprep.mubr.f32.mxu0 0.0
    %1990 = vmatmul.mubr.f32.gmra.mrb[0].mxu0 %v1484
    %v1991 = vpop.f32.mrb[0].mxu0
    %v1992 = vadd.f32 0.0, %v1991
    %v1993 = vpop.f32.mrb[0].mxu0
    %1994 = vmatprep.mubr.f32.mxu0 0.0
    %1995 = vmatmul.mubr.f32.gmra.mrb[0].mxu0 %v1485
    %v1996 = vpop.f32.mrb[0].mxu0
    %v1997 = vadd.f32 0.0, %v1996
    %v1998 = vpop.f32.mrb[0].mxu0
    %1999 = vmatprep.mubr.f32.mxu0 0.0
    %2000 = vmatmul.mubr.f32.gmra.mrb[0].mxu0 %v1486
    %v2001 = vpop.f32.mrb[0].mxu0
    %v2002 = vadd.f32 0.0, %v2001
    %v2003 = vpop.f32.mrb[0].mxu0
    %2004 = vmatprep.mubr.f32.mxu0 0.0
    %2005 = vmatmul.mubr.f32.gmra.mrb[0].mxu0 %v1487
    %v2006 = vpop.f32.mrb[0].mxu0
    %v2007 = vadd.f32 0.0, %v2006
    %v2008 = vpop.f32.mrb[0].mxu0
    %2009 = vmatprep.mubr.f32.mxu0 0.0
    %2010 = vmatmul.mubr.f32.gmra.mrb[0].mxu0 %v1488
    %v2011 = vpop.f32.mrb[0].mxu0
    %v2012 = vadd.f32 0.0, %v2011
    %v2013 = vpop.f32.mrb[0].mxu0
    %2014 = vmatprep.mubr.f32.mxu0 0.0
    %2015 = vmatmul.mubr.f32.gmra.mrb[0].mxu0 %v1489
    %v2016 = vpop.f32.mrb[0].mxu0
    %v2017 = vadd.f32 0.0, %v2016
    %v2018 = vpop.f32.mrb[0].mxu0
    %2019 = vmatprep.mubr.f32.mxu0 0.0
    %2020 = vmatmul.mubr.f32.gmra.mrb[0].mxu0 %v1490
    %v2021 = vpop.f32.mrb[0].mxu0
    %v2022 = vadd.f32 0.0, %v2021
    %v2023 = vpop.f32.mrb[0].mxu0
    %2024 = vmatprep.mubr.f32.mxu0 0.0
    %2025 = vmatmul.mubr.f32.gmra.mrb[0].mxu0 %v1491
    %v2026 = vpop.f32.mrb[0].mxu0
    %v2027 = vadd.f32 0.0, %v2026
    %v2028 = vpop.f32.mrb[0].mxu0
    %2029 = vmatprep.mubr.f32.mxu0 0.0
    %2030 = vmatmul.mubr.f32.gmra.mrb[0].mxu0 %v1492
    %v2031 = vpop.f32.mrb[0].mxu0
    %v2032 = vadd.f32 0.0, %v2031
    %v2033 = vpop.f32.mrb[0].mxu0
    %2034 = vmatprep.mubr.f32.mxu0 0.0
    %2035 = vmatmul.mubr.f32.gmra.mrb[0].mxu0 %v1493
    %v2036 = vpop.f32.mrb[0].mxu0
    %v2037 = vadd.f32 0.0, %v2036
    %v2038 = vpop.f32.mrb[0].mxu0
    %2039 = vmatprep.mubr.f32.mxu0 0.0
    %2040 = vmatmul.mubr.f32.gmra.mrb[0].mxu0 %v1494
    %v2041 = vpop.f32.mrb[0].mxu0
    %v2042 = vadd.f32 0.0, %v2041
    %v2043 = vpop.f32.mrb[0].mxu0
    %2044 = vmatprep.mubr.f32.mxu0 0.0
    %2045 = vmatmul.mubr.f32.gmra.mrb[0].mxu0 %v1495
    %v2046 = vpop.f32.mrb[0].mxu0
    %v2047 = vadd.f32 0.0, %v2046
    %v2048 = vpop.f32.mrb[0].mxu0
    %2049 = vmatprep.mubr.f32.mxu0 0.0
    %2050 = vmatmul.mubr.f32.gmra.mrb[0].mxu0 %v1496
    %v2051 = vpop.f32.mrb[0].mxu0
    %v2052 = vadd.f32 0.0, %v2051
    %v2053 = vpop.f32.mrb[0].mxu0
    %2054 = vmatprep.mubr.f32.mxu0 0.0
    %2055 = vmatmul.mubr.f32.gmra.mrb[0].mxu0 %v1497
    %v2056 = vpop.f32.mrb[0].mxu0
    %v2057 = vadd.f32 0.0, %v2056
    %v2058 = vpop.f32.mrb[0].mxu0
    %2059 = vmatprep.mubr.f32.mxu0 0.0
    %2060 = vmatmul.mubr.f32.gmra.mrb[0].mxu0 %v1498
    %v2061 = vpop.f32.mrb[0].mxu0
    %v2062 = vadd.f32 0.0, %v2061
    %v2063 = vpop.f32.mrb[0].mxu0
    %2064 = vmatprep.mubr.f32.mxu0 0.0
    %2065 = vmatmul.mubr.f32.gmra.mrb[0].mxu0 %v1499
    %v2066 = vpop.f32.mrb[0].mxu0
    %v2067 = vadd.f32 0.0, %v2066
    %v2068 = vpop.f32.mrb[0].mxu0
    %2069 = vmatprep.mubr.f32.mxu0 0.0
    %2070 = vmatmul.mubr.f32.gmra.mrb[0].mxu0 %v1500
    %v2071 = vpop.f32.mrb[0].mxu0
    %v2072 = vadd.f32 0.0, %v2071
    %v2073 = vpop.f32.mrb[0].mxu0
    %2074 = vmatprep.mubr.f32.mxu0 0.0
    %2075 = vmatmul.mubr.f32.gmra.mrb[0].mxu0 %v1501
    %v2076 = vpop.f32.mrb[0].mxu0
    %v2077 = vadd.f32 0.0, %v2076
    %v2078 = vpop.f32.mrb[0].mxu0
    %2079 = vmatprep.mubr.f32.mxu0 0.0
    %2080 = vmatmul.mubr.f32.gmra.mrb[0].mxu0 %v1502
    %v2081 = vpop.f32.mrb[0].mxu0
    %v2082 = vadd.f32 0.0, %v2081
    %v2083 = vpop.f32.mrb[0].mxu0
    %2084 = vdwg.mxu0
    %v2085 = vadd.f32 %v905, %v1587
    %v2086 = vadd.f32 %v910, %v1592
    %v2087 = vadd.f32 %v915, %v1597
    %v2088 = vadd.f32 %v920, %v1602
    %v2089 = vadd.f32 %v925, %v1607
    %v2090 = vadd.f32 %v930, %v1612
    %v2091 = vadd.f32 %v935, %v1617
    %v2092 = vadd.f32 %v940, %v1622
    %v2093 = vadd.f32 %v945, %v1627
    %v2094 = vadd.f32 %v950, %v1632
    %v2095 = vadd.f32 %v955, %v1637
    %v2096 = vadd.f32 %v960, %v1642
    %v2097 = vadd.f32 %v965, %v1647
    %v2098 = vadd.f32 %v970, %v1652
    %v2099 = vadd.f32 %v975, %v1657
    %v2100 = vadd.f32 %v980, %v1662
    %v2101 = vadd.f32 %v985, %v1667
    %v2102 = vadd.f32 %v990, %v1672
    %v2103 = vadd.f32 %v995, %v1677
    %v2104 = vadd.f32 %v1000, %v1682
    %v2105 = vadd.f32 %v1005, %v1687
    %v2106 = vadd.f32 %v1010, %v1692
    %v2107 = vadd.f32 %v1015, %v1697
    %v2108 = vadd.f32 %v1020, %v1702
    %v2109 = vadd.f32 %v1025, %v1707
    %v2110 = vadd.f32 %v1030, %v1712
    %v2111 = vadd.f32 %v1035, %v1717
    %v2112 = vadd.f32 %v1040, %v1722
    %v2113 = vadd.f32 %v1045, %v1727
    %v2114 = vadd.f32 %v1050, %v1732
    %v2115 = vadd.f32 %v1055, %v1737
    %v2116 = vadd.f32 %v1060, %v1742
    %v2117 = vadd.f32 %v1065, %v1747
    %v2118 = vadd.f32 %v1070, %v1752
    %v2119 = vadd.f32 %v1075, %v1757
    %v2120 = vadd.f32 %v1080, %v1762
    %v2121 = vadd.f32 %v1085, %v1767
    %v2122 = vadd.f32 %v1090, %v1772
    %v2123 = vadd.f32 %v1095, %v1777
    %v2124 = vadd.f32 %v1100, %v1782
    %v2125 = vadd.f32 %v1105, %v1787
    %v2126 = vadd.f32 %v1110, %v1792
    %v2127 = vadd.f32 %v1115, %v1797
    %v2128 = vadd.f32 %v1120, %v1802
    %v2129 = vadd.f32 %v1125, %v1807
    %v2130 = vadd.f32 %v1130, %v1812
    %v2131 = vadd.f32 %v1135, %v1817
    %v2132 = vadd.f32 %v1140, %v1822
    %v2133 = vadd.f32 %v1145, %v1827
    %v2134 = vadd.f32 %v1150, %v1832
    %v2135 = vadd.f32 %v1155, %v1837
    %v2136 = vadd.f32 %v1160, %v1842
    %v2137 = vadd.f32 %v1165, %v1847
    %v2138 = vadd.f32 %v1170, %v1852
    %v2139 = vadd.f32 %v1175, %v1857
    %v2140 = vadd.f32 %v1180, %v1862
    %v2141 = vadd.f32 %v1185, %v1867
    %v2142 = vadd.f32 %v1190, %v1872
    %v2143 = vadd.f32 %v1195, %v1877
    %v2144 = vadd.f32 %v1200, %v1882
    %v2145 = vadd.f32 %v1205, %v1887
    %v2146 = vadd.f32 %v1210, %v1892
    %v2147 = vadd.f32 %v1215, %v1897
    %v2148 = vadd.f32 %v1220, %v1902
    %v2149 = vadd.f32 %v1225, %v1907
    %v2150 = vadd.f32 %v1230, %v1912
    %v2151 = vadd.f32 %v1235, %v1917
    %v2152 = vadd.f32 %v1240, %v1922
    %v2153 = vadd.f32 %v1245, %v1927
    %v2154 = vadd.f32 %v1250, %v1932
    %v2155 = vadd.f32 %v1255, %v1937
    %v2156 = vadd.f32 %v1260, %v1942
    %v2157 = vadd.f32 %v1265, %v1947
    %v2158 = vadd.f32 %v1270, %v1952
    %v2159 = vadd.f32 %v1275, %v1957
    %v2160 = vadd.f32 %v1280, %v1962
    %v2161 = vadd.f32 %v1285, %v1967
    %v2162 = vadd.f32 %v1290, %v1972
    %v2163 = vadd.f32 %v1295, %v1977
    %v2164 = vadd.f32 %v1300, %v1982
    %v2165 = vadd.f32 %v1305, %v1987
    %v2166 = vadd.f32 %v1310, %v1992
    %v2167 = vadd.f32 %v1315, %v1997
    %v2168 = vadd.f32 %v1320, %v2002
    %v2169 = vadd.f32 %v1325, %v2007
    %v2170 = vadd.f32 %v1330, %v2012
    %v2171 = vadd.f32 %v1335, %v2017
    %v2172 = vadd.f32 %v1340, %v2022
    %v2173 = vadd.f32 %v1345, %v2027
    %v2174 = vadd.f32 %v1350, %v2032
    %v2175 = vadd.f32 %v1355, %v2037
    %v2176 = vadd.f32 %v1360, %v2042
    %v2177 = vadd.f32 %v1365, %v2047
    %v2178 = vadd.f32 %v1370, %v2052
    %v2179 = vadd.f32 %v1375, %v2057
    %v2180 = vadd.f32 %v1380, %v2062
    %v2181 = vadd.f32 %v1385, %v2067
    %v2182 = vadd.f32 %v1390, %v2072
    %v2183 = vadd.f32 %v1395, %v2077
    %v2184 = vadd.f32 %v1400, %v2082
    %v2185 = vld [vmem:[#allocation2 + $0x20] sm:$0xff]
    %v2186 = vld [vmem:[#allocation2 + $0x28] sm:$0xff]
    %v2187 = vld [vmem:[#allocation2 + $0x30] sm:$0xff]
    %v2188 = vld [vmem:[#allocation2 + $0x38] sm:$0xff]
    %v2189 = vld [vmem:[#allocation2 + $0x40] sm:$0xff]
    %v2190 = vld [vmem:[#allocation2 + $0x48] sm:$0xff]
    %v2191 = vld [vmem:[#allocation2 + $0x50] sm:$0xff]
    %v2192 = vld [vmem:[#allocation2 + $0x58] sm:$0xff]
    %v2193 = vld [vmem:[#allocation2 + $0x60] sm:$0xff]
    %v2194 = vld [vmem:[#allocation2 + $0x68] sm:$0xff]
    %v2195 = vld [vmem:[#allocation2 + $0x70] sm:$0xff]
    %v2196 = vld [vmem:[#allocation2 + $0x78] sm:$0xff]
    %v2197 = vld [vmem:[#allocation2 + $0x80] sm:$0xff]
    %v2198 = vld [vmem:[#allocation2 + $0x88] sm:$0xff]
    %v2199 = vld [vmem:[#allocation2 + $0x90] sm:$0xff]
    %v2200 = vld [vmem:[#allocation2 + $0x98] sm:$0xff]
    %v2201 = vld [vmem:[#allocation2 + $0xa0] sm:$0xff]
    %v2202 = vld [vmem:[#allocation2 + $0xa8] sm:$0xff]
    %v2203 = vld [vmem:[#allocation2 + $0xb0] sm:$0xff]
    %v2204 = vld [vmem:[#allocation2 + $0xb8] sm:$0xff]
    %v2205 = vld [vmem:[#allocation2 + $0xc0] sm:$0xff]
    %v2206 = vld [vmem:[#allocation2 + $0xc8] sm:$0xff]
    %v2207 = vld [vmem:[#allocation2 + $0xd0] sm:$0xff]
    %v2208 = vld [vmem:[#allocation2 + $0xd8] sm:$0xff]
    %v2209 = vld [vmem:[#allocation2 + $0xe0] sm:$0xff]
    %v2210 = vld [vmem:[#allocation2 + $0xe8] sm:$0xff]
    %v2211 = vld [vmem:[#allocation2 + $0xf0] sm:$0xff]
    %v2212 = vld [vmem:[#allocation2 + $0xf8] sm:$0xff]
    %v2213 = vld [vmem:[#allocation2 + $0x100] sm:$0xff]
    %v2214 = vld [vmem:[#allocation2 + $0x108] sm:$0xff]
    %v2215 = vld [vmem:[#allocation2 + $0x110] sm:$0xff]
    %v2216 = vld [vmem:[#allocation2 + $0x118] sm:$0xff]
    %v2217 = vld [vmem:[#allocation2 + $0x120] sm:$0xff]
    %v2218 = vld [vmem:[#allocation2 + $0x128] sm:$0xff]
    %v2219 = vld [vmem:[#allocation2 + $0x130] sm:$0xff]
    %v2220 = vld [vmem:[#allocation2 + $0x138] sm:$0xff]
    %v2221 = vld [vmem:[#allocation2 + $0x140] sm:$0xff]
    %v2222 = vld [vmem:[#allocation2 + $0x148] sm:$0xff]
    %v2223 = vld [vmem:[#allocation2 + $0x150] sm:$0xff]
    %v2224 = vld [vmem:[#allocation2 + $0x158] sm:$0xff]
    %v2225 = vld [vmem:[#allocation2 + $0x160] sm:$0xff]
    %v2226 = vld [vmem:[#allocation2 + $0x168] sm:$0xff]
    %v2227 = vld [vmem:[#allocation2 + $0x170] sm:$0xff]
    %v2228 = vld [vmem:[#allocation2 + $0x178] sm:$0xff]
    %v2229 = vld [vmem:[#allocation2 + $0x180] sm:$0xff]
    %v2230 = vld [vmem:[#allocation2 + $0x188] sm:$0xff]
    %v2231 = vld [vmem:[#allocation2 + $0x190] sm:$0xff]
    %v2232 = vld [vmem:[#allocation2 + $0x198] sm:$0xff]
    %v2233 = vld [vmem:[#allocation2 + $0x1a0] sm:$0xff]
    %v2234 = vld [vmem:[#allocation2 + $0x1a8] sm:$0xff]
    %v2235 = vld [vmem:[#allocation2 + $0x1b0] sm:$0xff]
    %v2236 = vld [vmem:[#allocation2 + $0x1b8] sm:$0xff]
    %v2237 = vld [vmem:[#allocation2 + $0x1c0] sm:$0xff]
    %v2238 = vld [vmem:[#allocation2 + $0x1c8] sm:$0xff]
    %v2239 = vld [vmem:[#allocation2 + $0x1d0] sm:$0xff]
    %v2240 = vld [vmem:[#allocation2 + $0x1d8] sm:$0xff]
    %v2241 = vld [vmem:[#allocation2 + $0x1e0] sm:$0xff]
    %v2242 = vld [vmem:[#allocation2 + $0x1e8] sm:$0xff]
    %v2243 = vld [vmem:[#allocation2 + $0x1f0] sm:$0xff]
    %v2244 = vld [vmem:[#allocation2 + $0x1f8] sm:$0xff]
    %v2245 = vld [vmem:[#allocation2 + $0x200] sm:$0xff]
    %v2246 = vld [vmem:[#allocation2 + $0x208] sm:$0xff]
    %v2247 = vld [vmem:[#allocation2 + $0x210] sm:$0xff]
    %v2248 = vld [vmem:[#allocation2 + $0x218] sm:$0xff]
    %v2249 = vld [vmem:[#allocation2 + $0x220] sm:$0xff]
    %v2250 = vld [vmem:[#allocation2 + $0x228] sm:$0xff]
    %v2251 = vld [vmem:[#allocation2 + $0x230] sm:$0xff]
    %v2252 = vld [vmem:[#allocation2 + $0x238] sm:$0xff]
    %v2253 = vld [vmem:[#allocation2 + $0x240] sm:$0xff]
    %v2254 = vld [vmem:[#allocation2 + $0x248] sm:$0xff]
    %v2255 = vld [vmem:[#allocation2 + $0x250] sm:$0xff]
    %v2256 = vld [vmem:[#allocation2 + $0x258] sm:$0xff]
    %v2257 = vld [vmem:[#allocation2 + $0x260] sm:$0xff]
    %v2258 = vld [vmem:[#allocation2 + $0x268] sm:$0xff]
    %v2259 = vld [vmem:[#allocation2 + $0x270] sm:$0xff]
    %v2260 = vld [vmem:[#allocation2 + $0x278] sm:$0xff]
    %v2261 = vld [vmem:[#allocation2 + $0x280] sm:$0xff]
    %v2262 = vld [vmem:[#allocation2 + $0x288] sm:$0xff]
    %v2263 = vld [vmem:[#allocation2 + $0x290] sm:$0xff]
    %v2264 = vld [vmem:[#allocation2 + $0x298] sm:$0xff]
    %v2265 = vld [vmem:[#allocation2 + $0x2a0] sm:$0xff]
    %v2266 = vld [vmem:[#allocation2 + $0x2a8] sm:$0xff]
    %v2267 = vld [vmem:[#allocation2 + $0x2b0] sm:$0xff]
    %v2268 = vld [vmem:[#allocation2 + $0x2b8] sm:$0xff]
    %v2269 = vld [vmem:[#allocation2 + $0x2c0] sm:$0xff]
    %v2270 = vld [vmem:[#allocation2 + $0x2c8] sm:$0xff]
    %v2271 = vld [vmem:[#allocation2 + $0x2d0] sm:$0xff]
    %v2272 = vld [vmem:[#allocation2 + $0x2d8] sm:$0xff]
    %v2273 = vld [vmem:[#allocation2 + $0x2e0] sm:$0xff]
    %v2274 = vld [vmem:[#allocation2 + $0x2e8] sm:$0xff]
    %v2275 = vld [vmem:[#allocation2 + $0x2f0] sm:$0xff]
    %v2276 = vld [vmem:[#allocation2 + $0x2f8] sm:$0xff]
    %v2277 = vld [vmem:[#allocation2 + $0x300] sm:$0xff]
    %v2278 = vld [vmem:[#allocation2 + $0x308] sm:$0xff]
    %v2279 = vld [vmem:[#allocation2 + $0x310] sm:$0xff]
    %v2280 = vld [vmem:[#allocation2 + $0x318] sm:$0xff]
    %v2281 = vld [vmem:[#allocation2 + $0x320] sm:$0xff]
    %v2282 = vld [vmem:[#allocation2 + $0x328] sm:$0xff]
    %v2283 = vld [vmem:[#allocation2 + $0x330] sm:$0xff]
    %v2284 = vld [vmem:[#allocation2 + $0x338] sm:$0xff]
    %s2285 = scalar_lea.vmem [#allocation5], 384
    %v2286 = vld [vmem:[%s2285] sm:$0xff]
    %v2287 = vld [vmem:[%s2285 + $0x8] sm:$0xff]
    %v2288 = vld [vmem:[%s2285 + $0x10] sm:$0xff]
    %v2289 = vld [vmem:[%s2285 + $0x18] sm:$0xff]
    %v2290 = vld [vmem:[%s2285 + $0x20] sm:$0xff]
    %v2291 = vld [vmem:[%s2285 + $0x28] sm:$0xff]
    %v2292 = vld [vmem:[%s2285 + $0x30] sm:$0xff]
    %v2293 = vld [vmem:[%s2285 + $0x38] sm:$0xff]
    %v2294 = vld [vmem:[%s2285 + $0x40] sm:$0xff]
    %v2295 = vld [vmem:[%s2285 + $0x48] sm:$0xff]
    %v2296 = vld [vmem:[%s2285 + $0x50] sm:$0xff]
    %v2297 = vld [vmem:[%s2285 + $0x58] sm:$0xff]
    %v2298 = vld [vmem:[%s2285 + $0x60] sm:$0xff]
    %v2299 = vld [vmem:[%s2285 + $0x68] sm:$0xff]
    %v2300 = vld [vmem:[%s2285 + $0x70] sm:$0xff]
    %v2301 = vld [vmem:[%s2285 + $0x78] sm:$0xff]
    %2302 = vmatprep.subr.mxu0 0.0
    %2303 = vmatpush1.msra.mxu0 %v2286
    %2304 = vmatprep.subr.mxu0 0.0
    %2305 = vmatpush1.msra.mxu0 %v2287
    %2306 = vmatprep.subr.mxu0 0.0
    %2307 = vmatpush1.msra.mxu0 %v2288
    %2308 = vmatprep.subr.mxu0 0.0
    %2309 = vmatpush1.msra.mxu0 %v2289
    %2310 = vmatprep.subr.mxu0 0.0
    %2311 = vmatpush1.msra.mxu0 %v2290
    %2312 = vmatprep.subr.mxu0 0.0
    %2313 = vmatpush1.msra.mxu0 %v2291
    %2314 = vmatprep.subr.mxu0 0.0
    %2315 = vmatpush1.msra.mxu0 %v2292
    %2316 = vmatprep.subr.mxu0 0.0
    %2317 = vmatpush1.msra.mxu0 %v2293
    %2318 = vmatprep.subr.mxu0 0.0
    %2319 = vmatpush1.msra.mxu0 %v2294
    %2320 = vmatprep.subr.mxu0 0.0
    %2321 = vmatpush1.msra.mxu0 %v2295
    %2322 = vmatprep.subr.mxu0 0.0
    %2323 = vmatpush1.msra.mxu0 %v2296
    %2324 = vmatprep.subr.mxu0 0.0
    %2325 = vmatpush1.msra.mxu0 %v2297
    %2326 = vmatprep.subr.mxu0 0.0
    %2327 = vmatpush1.msra.mxu0 %v2298
    %2328 = vmatprep.subr.mxu0 0.0
    %2329 = vmatpush1.msra.mxu0 %v2299
    %2330 = vmatprep.subr.mxu0 0.0
    %2331 = vmatpush1.msra.mxu0 %v2300
    %2332 = vmatprep.subr.mxu0 0.0
    %2333 = vmatpush1.msra.mxu0 %v2301
    %2334 = vmatprep.subr.mxu0 0.0
    %2335 = vmatpush1.msra.mxu0 0.0
    %2336 = vmatprep.subr.mxu0 0.0
    %2337 = vmatpush1.msra.mxu0 0.0
    %2338 = vmatprep.subr.mxu0 0.0
    %2339 = vmatpush1.msra.mxu0 0.0
    %2340 = vmatprep.subr.mxu0 0.0
    %2341 = vmatpush1.msra.mxu0 0.0
    %2342 = vmatprep.subr.mxu0 0.0
    %2343 = vmatpush1.msra.mxu0 0.0
    %2344 = vmatprep.subr.mxu0 0.0
    %2345 = vmatpush1.msra.mxu0 0.0
    %2346 = vmatprep.subr.mxu0 0.0
    %2347 = vmatpush1.msra.mxu0 0.0
    %2348 = vmatprep.subr.mxu0 0.0
    %2349 = vmatpush1.msra.mxu0 0.0
    %2350 = vmatprep.subr.mxu0 0.0
    %2351 = vmatpush1.msra.mxu0 0.0
    %2352 = vmatprep.subr.mxu0 0.0
    %2353 = vmatpush1.msra.mxu0 0.0
    %2354 = vmatprep.subr.mxu0 0.0
    %2355 = vmatpush1.msra.mxu0 0.0
    %2356 = vmatprep.subr.mxu0 0.0
    %2357 = vmatpush1.msra.mxu0 0.0
    %2358 = vmatprep.subr.mxu0 0.0
    %2359 = vmatpush1.msra.mxu0 0.0
    %2360 = vmatprep.subr.mxu0 0.0
    %2361 = vmatpush1.msra.mxu0 0.0
    %2362 = vmatprep.subr.mxu0 0.0
    %2363 = vmatpush1.msra.mxu0 0.0
    %2364 = vmatprep.subr.mxu0 0.0
    %2365 = vmatpush1.msra.mxu0 0.0
    %2366 = vmatprep.mubr.f32.mxu0 0.0
    %2367 = vmatmul.mubr.f32.gmra.mrb[0].mxu0 %v2185
    %v2368 = vpop.f32.mrb[0].mxu0
    %v2369 = vadd.f32 0.0, %v2368
    %v2370 = vpop.f32.mrb[0].mxu0
    %2371 = vmatprep.mubr.f32.mxu0 0.0
    %2372 = vmatmul.mubr.f32.gmra.mrb[0].mxu0 %v2186
    %v2373 = vpop.f32.mrb[0].mxu0
    %v2374 = vadd.f32 0.0, %v2373
    %v2375 = vpop.f32.mrb[0].mxu0
    %2376 = vmatprep.mubr.f32.mxu0 0.0
    %2377 = vmatmul.mubr.f32.gmra.mrb[0].mxu0 %v2187
    %v2378 = vpop.f32.mrb[0].mxu0
    %v2379 = vadd.f32 0.0, %v2378
    %v2380 = vpop.f32.mrb[0].mxu0
    %2381 = vmatprep.mubr.f32.mxu0 0.0
    %2382 = vmatmul.mubr.f32.gmra.mrb[0].mxu0 %v2188
    %v2383 = vpop.f32.mrb[0].mxu0
    %v2384 = vadd.f32 0.0, %v2383
    %v2385 = vpop.f32.mrb[0].mxu0
    %2386 = vmatprep.mubr.f32.mxu0 0.0
    %2387 = vmatmul.mubr.f32.gmra.mrb[0].mxu0 %v2189
    %v2388 = vpop.f32.mrb[0].mxu0
    %v2389 = vadd.f32 0.0, %v2388
    %v2390 = vpop.f32.mrb[0].mxu0
    %2391 = vmatprep.mubr.f32.mxu0 0.0
    %2392 = vmatmul.mubr.f32.gmra.mrb[0].mxu0 %v2190
    %v2393 = vpop.f32.mrb[0].mxu0
    %v2394 = vadd.f32 0.0, %v2393
    %v2395 = vpop.f32.mrb[0].mxu0
    %2396 = vmatprep.mubr.f32.mxu0 0.0
    %2397 = vmatmul.mubr.f32.gmra.mrb[0].mxu0 %v2191
    %v2398 = vpop.f32.mrb[0].mxu0
    %v2399 = vadd.f32 0.0, %v2398
    %v2400 = vpop.f32.mrb[0].mxu0
    %2401 = vmatprep.mubr.f32.mxu0 0.0
    %2402 = vmatmul.mubr.f32.gmra.mrb[0].mxu0 %v2192
    %v2403 = vpop.f32.mrb[0].mxu0
    %v2404 = vadd.f32 0.0, %v2403
    %v2405 = vpop.f32.mrb[0].mxu0
    %2406 = vmatprep.mubr.f32.mxu0 0.0
    %2407 = vmatmul.mubr.f32.gmra.mrb[0].mxu0 %v2193
    %v2408 = vpop.f32.mrb[0].mxu0
    %v2409 = vadd.f32 0.0, %v2408
    %v2410 = vpop.f32.mrb[0].mxu0
    %2411 = vmatprep.mubr.f32.mxu0 0.0
    %2412 = vmatmul.mubr.f32.gmra.mrb[0].mxu0 %v2194
    %v2413 = vpop.f32.mrb[0].mxu0
    %v2414 = vadd.f32 0.0, %v2413
    %v2415 = vpop.f32.mrb[0].mxu0
    %2416 = vmatprep.mubr.f32.mxu0 0.0
    %2417 = vmatmul.mubr.f32.gmra.mrb[0].mxu0 %v2195
    %v2418 = vpop.f32.mrb[0].mxu0
    %v2419 = vadd.f32 0.0, %v2418
    %v2420 = vpop.f32.mrb[0].mxu0
    %2421 = vmatprep.mubr.f32.mxu0 0.0
    %2422 = vmatmul.mubr.f32.gmra.mrb[0].mxu0 %v2196
    %v2423 = vpop.f32.mrb[0].mxu0
    %v2424 = vadd.f32 0.0, %v2423
    %v2425 = vpop.f32.mrb[0].mxu0
    %2426 = vmatprep.mubr.f32.mxu0 0.0
    %2427 = vmatmul.mubr.f32.gmra.mrb[0].mxu0 %v2197
    %v2428 = vpop.f32.mrb[0].mxu0
    %v2429 = vadd.f32 0.0, %v2428
    %v2430 = vpop.f32.mrb[0].mxu0
    %2431 = vmatprep.mubr.f32.mxu0 0.0
    %2432 = vmatmul.mubr.f32.gmra.mrb[0].mxu0 %v2198
    %v2433 = vpop.f32.mrb[0].mxu0
    %v2434 = vadd.f32 0.0, %v2433
    %v2435 = vpop.f32.mrb[0].mxu0
    %2436 = vmatprep.mubr.f32.mxu0 0.0
    %2437 = vmatmul.mubr.f32.gmra.mrb[0].mxu0 %v2199
    %v2438 = vpop.f32.mrb[0].mxu0
    %v2439 = vadd.f32 0.0, %v2438
    %v2440 = vpop.f32.mrb[0].mxu0
    %2441 = vmatprep.mubr.f32.mxu0 0.0
    %2442 = vmatmul.mubr.f32.gmra.mrb[0].mxu0 %v2200
    %v2443 = vpop.f32.mrb[0].mxu0
    %v2444 = vadd.f32 0.0, %v2443
    %v2445 = vpop.f32.mrb[0].mxu0
    %2446 = vmatprep.mubr.f32.mxu0 0.0
    %2447 = vmatmul.mubr.f32.gmra.mrb[0].mxu0 %v2201
    %v2448 = vpop.f32.mrb[0].mxu0
    %v2449 = vadd.f32 0.0, %v2448
    %v2450 = vpop.f32.mrb[0].mxu0
    %2451 = vmatprep.mubr.f32.mxu0 0.0
    %2452 = vmatmul.mubr.f32.gmra.mrb[0].mxu0 %v2202
    %v2453 = vpop.f32.mrb[0].mxu0
    %v2454 = vadd.f32 0.0, %v2453
    %v2455 = vpop.f32.mrb[0].mxu0
    %2456 = vmatprep.mubr.f32.mxu0 0.0
    %2457 = vmatmul.mubr.f32.gmra.mrb[0].mxu0 %v2203
    %v2458 = vpop.f32.mrb[0].mxu0
    %v2459 = vadd.f32 0.0, %v2458
    %v2460 = vpop.f32.mrb[0].mxu0
    %2461 = vmatprep.mubr.f32.mxu0 0.0
    %2462 = vmatmul.mubr.f32.gmra.mrb[0].mxu0 %v2204
    %v2463 = vpop.f32.mrb[0].mxu0
    %v2464 = vadd.f32 0.0, %v2463
    %v2465 = vpop.f32.mrb[0].mxu0
    %2466 = vmatprep.mubr.f32.mxu0 0.0
    %2467 = vmatmul.mubr.f32.gmra.mrb[0].mxu0 %v2205
    %v2468 = vpop.f32.mrb[0].mxu0
    %v2469 = vadd.f32 0.0, %v2468
    %v2470 = vpop.f32.mrb[0].mxu0
    %2471 = vmatprep.mubr.f32.mxu0 0.0
    %2472 = vmatmul.mubr.f32.gmra.mrb[0].mxu0 %v2206
    %v2473 = vpop.f32.mrb[0].mxu0
    %v2474 = vadd.f32 0.0, %v2473
    %v2475 = vpop.f32.mrb[0].mxu0
    %2476 = vmatprep.mubr.f32.mxu0 0.0
    %2477 = vmatmul.mubr.f32.gmra.mrb[0].mxu0 %v2207
    %v2478 = vpop.f32.mrb[0].mxu0
    %v2479 = vadd.f32 0.0, %v2478
    %v2480 = vpop.f32.mrb[0].mxu0
    %2481 = vmatprep.mubr.f32.mxu0 0.0
    %2482 = vmatmul.mubr.f32.gmra.mrb[0].mxu0 %v2208
    %v2483 = vpop.f32.mrb[0].mxu0
    %v2484 = vadd.f32 0.0, %v2483
    %v2485 = vpop.f32.mrb[0].mxu0
    %2486 = vmatprep.mubr.f32.mxu0 0.0
    %2487 = vmatmul.mubr.f32.gmra.mrb[0].mxu0 %v2209
    %v2488 = vpop.f32.mrb[0].mxu0
    %v2489 = vadd.f32 0.0, %v2488
    %v2490 = vpop.f32.mrb[0].mxu0
    %2491 = vmatprep.mubr.f32.mxu0 0.0
    %2492 = vmatmul.mubr.f32.gmra.mrb[0].mxu0 %v2210
    %v2493 = vpop.f32.mrb[0].mxu0
    %v2494 = vadd.f32 0.0, %v2493
    %v2495 = vpop.f32.mrb[0].mxu0
    %2496 = vmatprep.mubr.f32.mxu0 0.0
    %2497 = vmatmul.mubr.f32.gmra.mrb[0].mxu0 %v2211
    %v2498 = vpop.f32.mrb[0].mxu0
    %v2499 = vadd.f32 0.0, %v2498
    %v2500 = vpop.f32.mrb[0].mxu0
    %2501 = vmatprep.mubr.f32.mxu0 0.0
    %2502 = vmatmul.mubr.f32.gmra.mrb[0].mxu0 %v2212
    %v2503 = vpop.f32.mrb[0].mxu0
    %v2504 = vadd.f32 0.0, %v2503
    %v2505 = vpop.f32.mrb[0].mxu0
    %2506 = vmatprep.mubr.f32.mxu0 0.0
    %2507 = vmatmul.mubr.f32.gmra.mrb[0].mxu0 %v2213
    %v2508 = vpop.f32.mrb[0].mxu0
    %v2509 = vadd.f32 0.0, %v2508
    %v2510 = vpop.f32.mrb[0].mxu0
    %2511 = vmatprep.mubr.f32.mxu0 0.0
    %2512 = vmatmul.mubr.f32.gmra.mrb[0].mxu0 %v2214
    %v2513 = vpop.f32.mrb[0].mxu0
    %v2514 = vadd.f32 0.0, %v2513
    %v2515 = vpop.f32.mrb[0].mxu0
    %2516 = vmatprep.mubr.f32.mxu0 0.0
    %2517 = vmatmul.mubr.f32.gmra.mrb[0].mxu0 %v2215
    %v2518 = vpop.f32.mrb[0].mxu0
    %v2519 = vadd.f32 0.0, %v2518
    %v2520 = vpop.f32.mrb[0].mxu0
    %2521 = vmatprep.mubr.f32.mxu0 0.0
    %2522 = vmatmul.mubr.f32.gmra.mrb[0].mxu0 %v2216
    %v2523 = vpop.f32.mrb[0].mxu0
    %v2524 = vadd.f32 0.0, %v2523
    %v2525 = vpop.f32.mrb[0].mxu0
    %2526 = vmatprep.mubr.f32.mxu0 0.0
    %2527 = vmatmul.mubr.f32.gmra.mrb[0].mxu0 %v2217
    %v2528 = vpop.f32.mrb[0].mxu0
    %v2529 = vadd.f32 0.0, %v2528
    %v2530 = vpop.f32.mrb[0].mxu0
    %2531 = vmatprep.mubr.f32.mxu0 0.0
    %2532 = vmatmul.mubr.f32.gmra.mrb[0].mxu0 %v2218
    %v2533 = vpop.f32.mrb[0].mxu0
    %v2534 = vadd.f32 0.0, %v2533
    %v2535 = vpop.f32.mrb[0].mxu0
    %2536 = vmatprep.mubr.f32.mxu0 0.0
    %2537 = vmatmul.mubr.f32.gmra.mrb[0].mxu0 %v2219
    %v2538 = vpop.f32.mrb[0].mxu0
    %v2539 = vadd.f32 0.0, %v2538
    %v2540 = vpop.f32.mrb[0].mxu0
    %2541 = vmatprep.mubr.f32.mxu0 0.0
    %2542 = vmatmul.mubr.f32.gmra.mrb[0].mxu0 %v2220
    %v2543 = vpop.f32.mrb[0].mxu0
    %v2544 = vadd.f32 0.0, %v2543
    %v2545 = vpop.f32.mrb[0].mxu0
    %2546 = vmatprep.mubr.f32.mxu0 0.0
    %2547 = vmatmul.mubr.f32.gmra.mrb[0].mxu0 %v2221
    %v2548 = vpop.f32.mrb[0].mxu0
    %v2549 = vadd.f32 0.0, %v2548
    %v2550 = vpop.f32.mrb[0].mxu0
    %2551 = vmatprep.mubr.f32.mxu0 0.0
    %2552 = vmatmul.mubr.f32.gmra.mrb[0].mxu0 %v2222
    %v2553 = vpop.f32.mrb[0].mxu0
    %v2554 = vadd.f32 0.0, %v2553
    %v2555 = vpop.f32.mrb[0].mxu0
    %2556 = vmatprep.mubr.f32.mxu0 0.0
    %2557 = vmatmul.mubr.f32.gmra.mrb[0].mxu0 %v2223
    %v2558 = vpop.f32.mrb[0].mxu0
    %v2559 = vadd.f32 0.0, %v2558
    %v2560 = vpop.f32.mrb[0].mxu0
    %2561 = vmatprep.mubr.f32.mxu0 0.0
    %2562 = vmatmul.mubr.f32.gmra.mrb[0].mxu0 %v2224
    %v2563 = vpop.f32.mrb[0].mxu0
    %v2564 = vadd.f32 0.0, %v2563
    %v2565 = vpop.f32.mrb[0].mxu0
    %2566 = vmatprep.mubr.f32.mxu0 0.0
    %2567 = vmatmul.mubr.f32.gmra.mrb[0].mxu0 %v2225
    %v2568 = vpop.f32.mrb[0].mxu0
    %v2569 = vadd.f32 0.0, %v2568
    %v2570 = vpop.f32.mrb[0].mxu0
    %2571 = vmatprep.mubr.f32.mxu0 0.0
    %2572 = vmatmul.mubr.f32.gmra.mrb[0].mxu0 %v2226
    %v2573 = vpop.f32.mrb[0].mxu0
    %v2574 = vadd.f32 0.0, %v2573
    %v2575 = vpop.f32.mrb[0].mxu0
    %2576 = vmatprep.mubr.f32.mxu0 0.0
    %2577 = vmatmul.mubr.f32.gmra.mrb[0].mxu0 %v2227
    %v2578 = vpop.f32.mrb[0].mxu0
    %v2579 = vadd.f32 0.0, %v2578
    %v2580 = vpop.f32.mrb[0].mxu0
    %2581 = vmatprep.mubr.f32.mxu0 0.0
    %2582 = vmatmul.mubr.f32.gmra.mrb[0].mxu0 %v2228
    %v2583 = vpop.f32.mrb[0].mxu0
    %v2584 = vadd.f32 0.0, %v2583
    %v2585 = vpop.f32.mrb[0].mxu0
    %2586 = vmatprep.mubr.f32.mxu0 0.0
    %2587 = vmatmul.mubr.f32.gmra.mrb[0].mxu0 %v2229
    %v2588 = vpop.f32.mrb[0].mxu0
    %v2589 = vadd.f32 0.0, %v2588
    %v2590 = vpop.f32.mrb[0].mxu0
    %2591 = vmatprep.mubr.f32.mxu0 0.0
    %2592 = vmatmul.mubr.f32.gmra.mrb[0].mxu0 %v2230
    %v2593 = vpop.f32.mrb[0].mxu0
    %v2594 = vadd.f32 0.0, %v2593
    %v2595 = vpop.f32.mrb[0].mxu0
    %2596 = vmatprep.mubr.f32.mxu0 0.0
    %2597 = vmatmul.mubr.f32.gmra.mrb[0].mxu0 %v2231
    %v2598 = vpop.f32.mrb[0].mxu0
    %v2599 = vadd.f32 0.0, %v2598
    %v2600 = vpop.f32.mrb[0].mxu0
    %2601 = vmatprep.mubr.f32.mxu0 0.0
    %2602 = vmatmul.mubr.f32.gmra.mrb[0].mxu0 %v2232
    %v2603 = vpop.f32.mrb[0].mxu0
    %v2604 = vadd.f32 0.0, %v2603
    %v2605 = vpop.f32.mrb[0].mxu0
    %2606 = vmatprep.mubr.f32.mxu0 0.0
    %2607 = vmatmul.mubr.f32.gmra.mrb[0].mxu0 %v2233
    %v2608 = vpop.f32.mrb[0].mxu0
    %v2609 = vadd.f32 0.0, %v2608
    %v2610 = vpop.f32.mrb[0].mxu0
    %2611 = vmatprep.mubr.f32.mxu0 0.0
    %2612 = vmatmul.mubr.f32.gmra.mrb[0].mxu0 %v2234
    %v2613 = vpop.f32.mrb[0].mxu0
    %v2614 = vadd.f32 0.0, %v2613
    %v2615 = vpop.f32.mrb[0].mxu0
    %2616 = vmatprep.mubr.f32.mxu0 0.0
    %2617 = vmatmul.mubr.f32.gmra.mrb[0].mxu0 %v2235
    %v2618 = vpop.f32.mrb[0].mxu0
    %v2619 = vadd.f32 0.0, %v2618
    %v2620 = vpop.f32.mrb[0].mxu0
    %2621 = vmatprep.mubr.f32.mxu0 0.0
    %2622 = vmatmul.mubr.f32.gmra.mrb[0].mxu0 %v2236
    %v2623 = vpop.f32.mrb[0].mxu0
    %v2624 = vadd.f32 0.0, %v2623
    %v2625 = vpop.f32.mrb[0].mxu0
    %2626 = vmatprep.mubr.f32.mxu0 0.0
    %2627 = vmatmul.mubr.f32.gmra.mrb[0].mxu0 %v2237
    %v2628 = vpop.f32.mrb[0].mxu0
    %v2629 = vadd.f32 0.0, %v2628
    %v2630 = vpop.f32.mrb[0].mxu0
    %2631 = vmatprep.mubr.f32.mxu0 0.0
    %2632 = vmatmul.mubr.f32.gmra.mrb[0].mxu0 %v2238
    %v2633 = vpop.f32.mrb[0].mxu0
    %v2634 = vadd.f32 0.0, %v2633
    %v2635 = vpop.f32.mrb[0].mxu0
    %2636 = vmatprep.mubr.f32.mxu0 0.0
    %2637 = vmatmul.mubr.f32.gmra.mrb[0].mxu0 %v2239
    %v2638 = vpop.f32.mrb[0].mxu0
    %v2639 = vadd.f32 0.0, %v2638
    %v2640 = vpop.f32.mrb[0].mxu0
    %2641 = vmatprep.mubr.f32.mxu0 0.0
    %2642 = vmatmul.mubr.f32.gmra.mrb[0].mxu0 %v2240
    %v2643 = vpop.f32.mrb[0].mxu0
    %v2644 = vadd.f32 0.0, %v2643
    %v2645 = vpop.f32.mrb[0].mxu0
    %2646 = vmatprep.mubr.f32.mxu0 0.0
    %2647 = vmatmul.mubr.f32.gmra.mrb[0].mxu0 %v2241
    %v2648 = vpop.f32.mrb[0].mxu0
    %v2649 = vadd.f32 0.0, %v2648
    %v2650 = vpop.f32.mrb[0].mxu0
    %2651 = vmatprep.mubr.f32.mxu0 0.0
    %2652 = vmatmul.mubr.f32.gmra.mrb[0].mxu0 %v2242
    %v2653 = vpop.f32.mrb[0].mxu0
    %v2654 = vadd.f32 0.0, %v2653
    %v2655 = vpop.f32.mrb[0].mxu0
    %2656 = vmatprep.mubr.f32.mxu0 0.0
    %2657 = vmatmul.mubr.f32.gmra.mrb[0].mxu0 %v2243
    %v2658 = vpop.f32.mrb[0].mxu0
    %v2659 = vadd.f32 0.0, %v2658
    %v2660 = vpop.f32.mrb[0].mxu0
    %2661 = vmatprep.mubr.f32.mxu0 0.0
    %2662 = vmatmul.mubr.f32.gmra.mrb[0].mxu0 %v2244
    %v2663 = vpop.f32.mrb[0].mxu0
    %v2664 = vadd.f32 0.0, %v2663
    %v2665 = vpop.f32.mrb[0].mxu0
    %2666 = vmatprep.mubr.f32.mxu0 0.0
    %2667 = vmatmul.mubr.f32.gmra.mrb[0].mxu0 %v2245
    %v2668 = vpop.f32.mrb[0].mxu0
    %v2669 = vadd.f32 0.0, %v2668
    %v2670 = vpop.f32.mrb[0].mxu0
    %2671 = vmatprep.mubr.f32.mxu0 0.0
    %2672 = vmatmul.mubr.f32.gmra.mrb[0].mxu0 %v2246
    %v2673 = vpop.f32.mrb[0].mxu0
    %v2674 = vadd.f32 0.0, %v2673
    %v2675 = vpop.f32.mrb[0].mxu0
    %2676 = vmatprep.mubr.f32.mxu0 0.0
    %2677 = vmatmul.mubr.f32.gmra.mrb[0].mxu0 %v2247
    %v2678 = vpop.f32.mrb[0].mxu0
    %v2679 = vadd.f32 0.0, %v2678
    %v2680 = vpop.f32.mrb[0].mxu0
    %2681 = vmatprep.mubr.f32.mxu0 0.0
    %2682 = vmatmul.mubr.f32.gmra.mrb[0].mxu0 %v2248
    %v2683 = vpop.f32.mrb[0].mxu0
    %v2684 = vadd.f32 0.0, %v2683
    %v2685 = vpop.f32.mrb[0].mxu0
    %2686 = vmatprep.mubr.f32.mxu0 0.0
    %2687 = vmatmul.mubr.f32.gmra.mrb[0].mxu0 %v2249
    %v2688 = vpop.f32.mrb[0].mxu0
    %v2689 = vadd.f32 0.0, %v2688
    %v2690 = vpop.f32.mrb[0].mxu0
    %2691 = vmatprep.mubr.f32.mxu0 0.0
    %2692 = vmatmul.mubr.f32.gmra.mrb[0].mxu0 %v2250
    %v2693 = vpop.f32.mrb[0].mxu0
    %v2694 = vadd.f32 0.0, %v2693
    %v2695 = vpop.f32.mrb[0].mxu0
    %2696 = vmatprep.mubr.f32.mxu0 0.0
    %2697 = vmatmul.mubr.f32.gmra.mrb[0].mxu0 %v2251
    %v2698 = vpop.f32.mrb[0].mxu0
    %v2699 = vadd.f32 0.0, %v2698
    %v2700 = vpop.f32.mrb[0].mxu0
    %2701 = vmatprep.mubr.f32.mxu0 0.0
    %2702 = vmatmul.mubr.f32.gmra.mrb[0].mxu0 %v2252
    %v2703 = vpop.f32.mrb[0].mxu0
    %v2704 = vadd.f32 0.0, %v2703
    %v2705 = vpop.f32.mrb[0].mxu0
    %2706 = vmatprep.mubr.f32.mxu0 0.0
    %2707 = vmatmul.mubr.f32.gmra.mrb[0].mxu0 %v2253
    %v2708 = vpop.f32.mrb[0].mxu0
    %v2709 = vadd.f32 0.0, %v2708
    %v2710 = vpop.f32.mrb[0].mxu0
    %2711 = vmatprep.mubr.f32.mxu0 0.0
    %2712 = vmatmul.mubr.f32.gmra.mrb[0].mxu0 %v2254
    %v2713 = vpop.f32.mrb[0].mxu0
    %v2714 = vadd.f32 0.0, %v2713
    %v2715 = vpop.f32.mrb[0].mxu0
    %2716 = vmatprep.mubr.f32.mxu0 0.0
    %2717 = vmatmul.mubr.f32.gmra.mrb[0].mxu0 %v2255
    %v2718 = vpop.f32.mrb[0].mxu0
    %v2719 = vadd.f32 0.0, %v2718
    %v2720 = vpop.f32.mrb[0].mxu0
    %2721 = vmatprep.mubr.f32.mxu0 0.0
    %2722 = vmatmul.mubr.f32.gmra.mrb[0].mxu0 %v2256
    %v2723 = vpop.f32.mrb[0].mxu0
    %v2724 = vadd.f32 0.0, %v2723
    %v2725 = vpop.f32.mrb[0].mxu0
    %2726 = vmatprep.mubr.f32.mxu0 0.0
    %2727 = vmatmul.mubr.f32.gmra.mrb[0].mxu0 %v2257
    %v2728 = vpop.f32.mrb[0].mxu0
    %v2729 = vadd.f32 0.0, %v2728
    %v2730 = vpop.f32.mrb[0].mxu0
    %2731 = vmatprep.mubr.f32.mxu0 0.0
    %2732 = vmatmul.mubr.f32.gmra.mrb[0].mxu0 %v2258
    %v2733 = vpop.f32.mrb[0].mxu0
    %v2734 = vadd.f32 0.0, %v2733
    %v2735 = vpop.f32.mrb[0].mxu0
    %2736 = vmatprep.mubr.f32.mxu0 0.0
    %2737 = vmatmul.mubr.f32.gmra.mrb[0].mxu0 %v2259
    %v2738 = vpop.f32.mrb[0].mxu0
    %v2739 = vadd.f32 0.0, %v2738
    %v2740 = vpop.f32.mrb[0].mxu0
    %2741 = vmatprep.mubr.f32.mxu0 0.0
    %2742 = vmatmul.mubr.f32.gmra.mrb[0].mxu0 %v2260
    %v2743 = vpop.f32.mrb[0].mxu0
    %v2744 = vadd.f32 0.0, %v2743
    %v2745 = vpop.f32.mrb[0].mxu0
    %2746 = vmatprep.mubr.f32.mxu0 0.0
    %2747 = vmatmul.mubr.f32.gmra.mrb[0].mxu0 %v2261
    %v2748 = vpop.f32.mrb[0].mxu0
    %v2749 = vadd.f32 0.0, %v2748
    %v2750 = vpop.f32.mrb[0].mxu0
    %2751 = vmatprep.mubr.f32.mxu0 0.0
    %2752 = vmatmul.mubr.f32.gmra.mrb[0].mxu0 %v2262
    %v2753 = vpop.f32.mrb[0].mxu0
    %v2754 = vadd.f32 0.0, %v2753
    %v2755 = vpop.f32.mrb[0].mxu0
    %2756 = vmatprep.mubr.f32.mxu0 0.0
    %2757 = vmatmul.mubr.f32.gmra.mrb[0].mxu0 %v2263
    %v2758 = vpop.f32.mrb[0].mxu0
    %v2759 = vadd.f32 0.0, %v2758
    %v2760 = vpop.f32.mrb[0].mxu0
    %2761 = vmatprep.mubr.f32.mxu0 0.0
    %2762 = vmatmul.mubr.f32.gmra.mrb[0].mxu0 %v2264
    %v2763 = vpop.f32.mrb[0].mxu0
    %v2764 = vadd.f32 0.0, %v2763
    %v2765 = vpop.f32.mrb[0].mxu0
    %2766 = vmatprep.mubr.f32.mxu0 0.0
    %2767 = vmatmul.mubr.f32.gmra.mrb[0].mxu0 %v2265
    %v2768 = vpop.f32.mrb[0].mxu0
    %v2769 = vadd.f32 0.0, %v2768
    %v2770 = vpop.f32.mrb[0].mxu0
    %2771 = vmatprep.mubr.f32.mxu0 0.0
    %2772 = vmatmul.mubr.f32.gmra.mrb[0].mxu0 %v2266
    %v2773 = vpop.f32.mrb[0].mxu0
    %v2774 = vadd.f32 0.0, %v2773
    %v2775 = vpop.f32.mrb[0].mxu0
    %2776 = vmatprep.mubr.f32.mxu0 0.0
    %2777 = vmatmul.mubr.f32.gmra.mrb[0].mxu0 %v2267
    %v2778 = vpop.f32.mrb[0].mxu0
    %v2779 = vadd.f32 0.0, %v2778
    %v2780 = vpop.f32.mrb[0].mxu0
    %2781 = vmatprep.mubr.f32.mxu0 0.0
    %2782 = vmatmul.mubr.f32.gmra.mrb[0].mxu0 %v2268
    %v2783 = vpop.f32.mrb[0].mxu0
    %v2784 = vadd.f32 0.0, %v2783
    %v2785 = vpop.f32.mrb[0].mxu0
    %2786 = vmatprep.mubr.f32.mxu0 0.0
    %2787 = vmatmul.mubr.f32.gmra.mrb[0].mxu0 %v2269
    %v2788 = vpop.f32.mrb[0].mxu0
    %v2789 = vadd.f32 0.0, %v2788
    %v2790 = vpop.f32.mrb[0].mxu0
    %2791 = vmatprep.mubr.f32.mxu0 0.0
    %2792 = vmatmul.mubr.f32.gmra.mrb[0].mxu0 %v2270
    %v2793 = vpop.f32.mrb[0].mxu0
    %v2794 = vadd.f32 0.0, %v2793
    %v2795 = vpop.f32.mrb[0].mxu0
    %2796 = vmatprep.mubr.f32.mxu0 0.0
    %2797 = vmatmul.mubr.f32.gmra.mrb[0].mxu0 %v2271
    %v2798 = vpop.f32.mrb[0].mxu0
    %v2799 = vadd.f32 0.0, %v2798
    %v2800 = vpop.f32.mrb[0].mxu0
    %2801 = vmatprep.mubr.f32.mxu0 0.0
    %2802 = vmatmul.mubr.f32.gmra.mrb[0].mxu0 %v2272
    %v2803 = vpop.f32.mrb[0].mxu0
    %v2804 = vadd.f32 0.0, %v2803
    %v2805 = vpop.f32.mrb[0].mxu0
    %2806 = vmatprep.mubr.f32.mxu0 0.0
    %2807 = vmatmul.mubr.f32.gmra.mrb[0].mxu0 %v2273
    %v2808 = vpop.f32.mrb[0].mxu0
    %v2809 = vadd.f32 0.0, %v2808
    %v2810 = vpop.f32.mrb[0].mxu0
    %2811 = vmatprep.mubr.f32.mxu0 0.0
    %2812 = vmatmul.mubr.f32.gmra.mrb[0].mxu0 %v2274
    %v2813 = vpop.f32.mrb[0].mxu0
    %v2814 = vadd.f32 0.0, %v2813
    %v2815 = vpop.f32.mrb[0].mxu0
    %2816 = vmatprep.mubr.f32.mxu0 0.0
    %2817 = vmatmul.mubr.f32.gmra.mrb[0].mxu0 %v2275
    %v2818 = vpop.f32.mrb[0].mxu0
    %v2819 = vadd.f32 0.0, %v2818
    %v2820 = vpop.f32.mrb[0].mxu0
    %2821 = vmatprep.mubr.f32.mxu0 0.0
    %2822 = vmatmul.mubr.f32.gmra.mrb[0].mxu0 %v2276
    %v2823 = vpop.f32.mrb[0].mxu0
    %v2824 = vadd.f32 0.0, %v2823
    %v2825 = vpop.f32.mrb[0].mxu0
    %2826 = vmatprep.mubr.f32.mxu0 0.0
    %2827 = vmatmul.mubr.f32.gmra.mrb[0].mxu0 %v2277
    %v2828 = vpop.f32.mrb[0].mxu0
    %v2829 = vadd.f32 0.0, %v2828
    %v2830 = vpop.f32.mrb[0].mxu0
    %2831 = vmatprep.mubr.f32.mxu0 0.0
    %2832 = vmatmul.mubr.f32.gmra.mrb[0].mxu0 %v2278
    %v2833 = vpop.f32.mrb[0].mxu0
    %v2834 = vadd.f32 0.0, %v2833
    %v2835 = vpop.f32.mrb[0].mxu0
    %2836 = vmatprep.mubr.f32.mxu0 0.0
    %2837 = vmatmul.mubr.f32.gmra.mrb[0].mxu0 %v2279
    %v2838 = vpop.f32.mrb[0].mxu0
    %v2839 = vadd.f32 0.0, %v2838
    %v2840 = vpop.f32.mrb[0].mxu0
    %2841 = vmatprep.mubr.f32.mxu0 0.0
    %2842 = vmatmul.mubr.f32.gmra.mrb[0].mxu0 %v2280
    %v2843 = vpop.f32.mrb[0].mxu0
    %v2844 = vadd.f32 0.0, %v2843
    %v2845 = vpop.f32.mrb[0].mxu0
    %2846 = vmatprep.mubr.f32.mxu0 0.0
    %2847 = vmatmul.mubr.f32.gmra.mrb[0].mxu0 %v2281
    %v2848 = vpop.f32.mrb[0].mxu0
    %v2849 = vadd.f32 0.0, %v2848
    %v2850 = vpop.f32.mrb[0].mxu0
    %2851 = vmatprep.mubr.f32.mxu0 0.0
    %2852 = vmatmul.mubr.f32.gmra.mrb[0].mxu0 %v2282
    %v2853 = vpop.f32.mrb[0].mxu0
    %v2854 = vadd.f32 0.0, %v2853
    %v2855 = vpop.f32.mrb[0].mxu0
    %2856 = vmatprep.mubr.f32.mxu0 0.0
    %2857 = vmatmul.mubr.f32.gmra.mrb[0].mxu0 %v2283
    %v2858 = vpop.f32.mrb[0].mxu0
    %v2859 = vadd.f32 0.0, %v2858
    %v2860 = vpop.f32.mrb[0].mxu0
    %2861 = vmatprep.mubr.f32.mxu0 0.0
    %2862 = vmatmul.mubr.f32.gmra.mrb[0].mxu0 %v2284
    %v2863 = vpop.f32.mrb[0].mxu0
    %v2864 = vadd.f32 0.0, %v2863
    %v2865 = vpop.f32.mrb[0].mxu0
    %2866 = vdwg.mxu0
    %v2867 = vadd.f32 %v2085, %v2369
    %v2868 = vadd.f32 %v2086, %v2374
    %v2869 = vadd.f32 %v2087, %v2379
    %v2870 = vadd.f32 %v2088, %v2384
    %v2871 = vadd.f32 %v2089, %v2389
    %v2872 = vadd.f32 %v2090, %v2394
    %v2873 = vadd.f32 %v2091, %v2399
    %v2874 = vadd.f32 %v2092, %v2404
    %v2875 = vadd.f32 %v2093, %v2409
    %v2876 = vadd.f32 %v2094, %v2414
    %v2877 = vadd.f32 %v2095, %v2419
    %v2878 = vadd.f32 %v2096, %v2424
    %v2879 = vadd.f32 %v2097, %v2429
    %v2880 = vadd.f32 %v2098, %v2434
    %v2881 = vadd.f32 %v2099, %v2439
    %v2882 = vadd.f32 %v2100, %v2444
    %v2883 = vadd.f32 %v2101, %v2449
    %v2884 = vadd.f32 %v2102, %v2454
    %v2885 = vadd.f32 %v2103, %v2459
    %v2886 = vadd.f32 %v2104, %v2464
    %v2887 = vadd.f32 %v2105, %v2469
    %v2888 = vadd.f32 %v2106, %v2474
    %v2889 = vadd.f32 %v2107, %v2479
    %v2890 = vadd.f32 %v2108, %v2484
    %v2891 = vadd.f32 %v2109, %v2489
    %v2892 = vadd.f32 %v2110, %v2494
    %v2893 = vadd.f32 %v2111, %v2499
    %v2894 = vadd.f32 %v2112, %v2504
    %v2895 = vadd.f32 %v2113, %v2509
    %v2896 = vadd.f32 %v2114, %v2514
    %v2897 = vadd.f32 %v2115, %v2519
    %v2898 = vadd.f32 %v2116, %v2524
    %v2899 = vadd.f32 %v2117, %v2529
    %v2900 = vadd.f32 %v2118, %v2534
    %v2901 = vadd.f32 %v2119, %v2539
    %v2902 = vadd.f32 %v2120, %v2544
    %v2903 = vadd.f32 %v2121, %v2549
    %v2904 = vadd.f32 %v2122, %v2554
    %v2905 = vadd.f32 %v2123, %v2559
    %v2906 = vadd.f32 %v2124, %v2564
    %v2907 = vadd.f32 %v2125, %v2569
    %v2908 = vadd.f32 %v2126, %v2574
    %v2909 = vadd.f32 %v2127, %v2579
    %v2910 = vadd.f32 %v2128, %v2584
    %v2911 = vadd.f32 %v2129, %v2589
    %v2912 = vadd.f32 %v2130, %v2594
    %v2913 = vadd.f32 %v2131, %v2599
    %v2914 = vadd.f32 %v2132, %v2604
    %v2915 = vadd.f32 %v2133, %v2609
    %v2916 = vadd.f32 %v2134, %v2614
    %v2917 = vadd.f32 %v2135, %v2619
    %v2918 = vadd.f32 %v2136, %v2624
    %v2919 = vadd.f32 %v2137, %v2629
    %v2920 = vadd.f32 %v2138, %v2634
    %v2921 = vadd.f32 %v2139, %v2639
    %v2922 = vadd.f32 %v2140, %v2644
    %v2923 = vadd.f32 %v2141, %v2649
    %v2924 = vadd.f32 %v2142, %v2654
    %v2925 = vadd.f32 %v2143, %v2659
    %v2926 = vadd.f32 %v2144, %v2664
    %v2927 = vadd.f32 %v2145, %v2669
    %v2928 = vadd.f32 %v2146, %v2674
    %v2929 = vadd.f32 %v2147, %v2679
    %v2930 = vadd.f32 %v2148, %v2684
    %v2931 = vadd.f32 %v2149, %v2689
    %v2932 = vadd.f32 %v2150, %v2694
    %v2933 = vadd.f32 %v2151, %v2699
    %v2934 = vadd.f32 %v2152, %v2704
    %v2935 = vadd.f32 %v2153, %v2709
    %v2936 = vadd.f32 %v2154, %v2714
    %v2937 = vadd.f32 %v2155, %v2719
    %v2938 = vadd.f32 %v2156, %v2724
    %v2939 = vadd.f32 %v2157, %v2729
    %v2940 = vadd.f32 %v2158, %v2734
    %v2941 = vadd.f32 %v2159, %v2739
    %v2942 = vadd.f32 %v2160, %v2744
    %v2943 = vadd.f32 %v2161, %v2749
    %v2944 = vadd.f32 %v2162, %v2754
    %v2945 = vadd.f32 %v2163, %v2759
    %v2946 = vadd.f32 %v2164, %v2764
    %v2947 = vadd.f32 %v2165, %v2769
    %v2948 = vadd.f32 %v2166, %v2774
    %v2949 = vadd.f32 %v2167, %v2779
    %v2950 = vadd.f32 %v2168, %v2784
    %v2951 = vadd.f32 %v2169, %v2789
    %v2952 = vadd.f32 %v2170, %v2794
    %v2953 = vadd.f32 %v2171, %v2799
    %v2954 = vadd.f32 %v2172, %v2804
    %v2955 = vadd.f32 %v2173, %v2809
    %v2956 = vadd.f32 %v2174, %v2814
    %v2957 = vadd.f32 %v2175, %v2819
    %v2958 = vadd.f32 %v2176, %v2824
    %v2959 = vadd.f32 %v2177, %v2829
    %v2960 = vadd.f32 %v2178, %v2834
    %v2961 = vadd.f32 %v2179, %v2839
    %v2962 = vadd.f32 %v2180, %v2844
    %v2963 = vadd.f32 %v2181, %v2849
    %v2964 = vadd.f32 %v2182, %v2854
    %v2965 = vadd.f32 %v2183, %v2859
    %v2966 = vadd.f32 %v2184, %v2864
    %v2967 = vld [vmem:[#allocation2 + $0x21] sm:$0xff]
    %v2968 = vld [vmem:[#allocation2 + $0x29] sm:$0xff]
    %v2969 = vld [vmem:[#allocation2 + $0x31] sm:$0xff]
    %v2970 = vld [vmem:[#allocation2 + $0x39] sm:$0xff]
    %v2971 = vld [vmem:[#allocation2 + $0x41] sm:$0xff]
    %v2972 = vld [vmem:[#allocation2 + $0x49] sm:$0xff]
    %v2973 = vld [vmem:[#allocation2 + $0x51] sm:$0xff]
    %v2974 = vld [vmem:[#allocation2 + $0x59] sm:$0xff]
    %v2975 = vld [vmem:[#allocation2 + $0x61] sm:$0xff]
    %v2976 = vld [vmem:[#allocation2 + $0x69] sm:$0xff]
    %v2977 = vld [vmem:[#allocation2 + $0x71] sm:$0xff]
    %v2978 = vld [vmem:[#allocation2 + $0x79] sm:$0xff]
    %v2979 = vld [vmem:[#allocation2 + $0x81] sm:$0xff]
    %v2980 = vld [vmem:[#allocation2 + $0x89] sm:$0xff]
    %v2981 = vld [vmem:[#allocation2 + $0x91] sm:$0xff]
    %v2982 = vld [vmem:[#allocation2 + $0x99] sm:$0xff]
    %v2983 = vld [vmem:[#allocation2 + $0xa1] sm:$0xff]
    %v2984 = vld [vmem:[#allocation2 + $0xa9] sm:$0xff]
    %v2985 = vld [vmem:[#allocation2 + $0xb1] sm:$0xff]
    %v2986 = vld [vmem:[#allocation2 + $0xb9] sm:$0xff]
    %v2987 = vld [vmem:[#allocation2 + $0xc1] sm:$0xff]
    %v2988 = vld [vmem:[#allocation2 + $0xc9] sm:$0xff]
    %v2989 = vld [vmem:[#allocation2 + $0xd1] sm:$0xff]
    %v2990 = vld [vmem:[#allocation2 + $0xd9] sm:$0xff]
    %v2991 = vld [vmem:[#allocation2 + $0xe1] sm:$0xff]
    %v2992 = vld [vmem:[#allocation2 + $0xe9] sm:$0xff]
    %v2993 = vld [vmem:[#allocation2 + $0xf1] sm:$0xff]
    %v2994 = vld [vmem:[#allocation2 + $0xf9] sm:$0xff]
    %v2995 = vld [vmem:[#allocation2 + $0x101] sm:$0xff]
    %v2996 = vld [vmem:[#allocation2 + $0x109] sm:$0xff]
    %v2997 = vld [vmem:[#allocation2 + $0x111] sm:$0xff]
    %v2998 = vld [vmem:[#allocation2 + $0x119] sm:$0xff]
    %v2999 = vld [vmem:[#allocation2 + $0x121] sm:$0xff]
    %v3000 = vld [vmem:[#allocation2 + $0x129] sm:$0xff]
    %v3001 = vld [vmem:[#allocation2 + $0x131] sm:$0xff]
    %v3002 = vld [vmem:[#allocation2 + $0x139] sm:$0xff]
    %v3003 = vld [vmem:[#allocation2 + $0x141] sm:$0xff]
    %v3004 = vld [vmem:[#allocation2 + $0x149] sm:$0xff]
    %v3005 = vld [vmem:[#allocation2 + $0x151] sm:$0xff]
    %v3006 = vld [vmem:[#allocation2 + $0x159] sm:$0xff]
    %v3007 = vld [vmem:[#allocation2 + $0x161] sm:$0xff]
    %v3008 = vld [vmem:[#allocation2 + $0x169] sm:$0xff]
    %v3009 = vld [vmem:[#allocation2 + $0x171] sm:$0xff]
    %v3010 = vld [vmem:[#allocation2 + $0x179] sm:$0xff]
    %v3011 = vld [vmem:[#allocation2 + $0x181] sm:$0xff]
    %v3012 = vld [vmem:[#allocation2 + $0x189] sm:$0xff]
    %v3013 = vld [vmem:[#allocation2 + $0x191] sm:$0xff]
    %v3014 = vld [vmem:[#allocation2 + $0x199] sm:$0xff]
    %v3015 = vld [vmem:[#allocation2 + $0x1a1] sm:$0xff]
    %v3016 = vld [vmem:[#allocation2 + $0x1a9] sm:$0xff]
    %v3017 = vld [vmem:[#allocation2 + $0x1b1] sm:$0xff]
    %v3018 = vld [vmem:[#allocation2 + $0x1b9] sm:$0xff]
    %v3019 = vld [vmem:[#allocation2 + $0x1c1] sm:$0xff]
    %v3020 = vld [vmem:[#allocation2 + $0x1c9] sm:$0xff]
    %v3021 = vld [vmem:[#allocation2 + $0x1d1] sm:$0xff]
    %v3022 = vld [vmem:[#allocation2 + $0x1d9] sm:$0xff]
    %v3023 = vld [vmem:[#allocation2 + $0x1e1] sm:$0xff]
    %v3024 = vld [vmem:[#allocation2 + $0x1e9] sm:$0xff]
    %v3025 = vld [vmem:[#allocation2 + $0x1f1] sm:$0xff]
    %v3026 = vld [vmem:[#allocation2 + $0x1f9] sm:$0xff]
    %v3027 = vld [vmem:[#allocation2 + $0x201] sm:$0xff]
    %v3028 = vld [vmem:[#allocation2 + $0x209] sm:$0xff]
    %v3029 = vld [vmem:[#allocation2 + $0x211] sm:$0xff]
    %v3030 = vld [vmem:[#allocation2 + $0x219] sm:$0xff]
    %v3031 = vld [vmem:[#allocation2 + $0x221] sm:$0xff]
    %v3032 = vld [vmem:[#allocation2 + $0x229] sm:$0xff]
    %v3033 = vld [vmem:[#allocation2 + $0x231] sm:$0xff]
    %v3034 = vld [vmem:[#allocation2 + $0x239] sm:$0xff]
    %v3035 = vld [vmem:[#allocation2 + $0x241] sm:$0xff]
    %v3036 = vld [vmem:[#allocation2 + $0x249] sm:$0xff]
    %v3037 = vld [vmem:[#allocation2 + $0x251] sm:$0xff]
    %v3038 = vld [vmem:[#allocation2 + $0x259] sm:$0xff]
    %v3039 = vld [vmem:[#allocation2 + $0x261] sm:$0xff]
    %v3040 = vld [vmem:[#allocation2 + $0x269] sm:$0xff]
    %v3041 = vld [vmem:[#allocation2 + $0x271] sm:$0xff]
    %v3042 = vld [vmem:[#allocation2 + $0x279] sm:$0xff]
    %v3043 = vld [vmem:[#allocation2 + $0x281] sm:$0xff]
    %v3044 = vld [vmem:[#allocation2 + $0x289] sm:$0xff]
    %v3045 = vld [vmem:[#allocation2 + $0x291] sm:$0xff]
    %v3046 = vld [vmem:[#allocation2 + $0x299] sm:$0xff]
    %v3047 = vld [vmem:[#allocation2 + $0x2a1] sm:$0xff]
    %v3048 = vld [vmem:[#allocation2 + $0x2a9] sm:$0xff]
    %v3049 = vld [vmem:[#allocation2 + $0x2b1] sm:$0xff]
    %v3050 = vld [vmem:[#allocation2 + $0x2b9] sm:$0xff]
    %v3051 = vld [vmem:[#allocation2 + $0x2c1] sm:$0xff]
    %v3052 = vld [vmem:[#allocation2 + $0x2c9] sm:$0xff]
    %v3053 = vld [vmem:[#allocation2 + $0x2d1] sm:$0xff]
    %v3054 = vld [vmem:[#allocation2 + $0x2d9] sm:$0xff]
    %v3055 = vld [vmem:[#allocation2 + $0x2e1] sm:$0xff]
    %v3056 = vld [vmem:[#allocation2 + $0x2e9] sm:$0xff]
    %v3057 = vld [vmem:[#allocation2 + $0x2f1] sm:$0xff]
    %v3058 = vld [vmem:[#allocation2 + $0x2f9] sm:$0xff]
    %v3059 = vld [vmem:[#allocation2 + $0x301] sm:$0xff]
    %v3060 = vld [vmem:[#allocation2 + $0x309] sm:$0xff]
    %v3061 = vld [vmem:[#allocation2 + $0x311] sm:$0xff]
    %v3062 = vld [vmem:[#allocation2 + $0x319] sm:$0xff]
    %v3063 = vld [vmem:[#allocation2 + $0x321] sm:$0xff]
    %v3064 = vld [vmem:[#allocation2 + $0x329] sm:$0xff]
    %v3065 = vld [vmem:[#allocation2 + $0x331] sm:$0xff]
    %v3066 = vld [vmem:[#allocation2 + $0x339] sm:$0xff]
    %s3067 = scalar_lea.vmem [#allocation5], 512
    %v3068 = vld [vmem:[%s3067] sm:$0xff]
    %v3069 = vld [vmem:[%s3067 + $0x8] sm:$0xff]
    %v3070 = vld [vmem:[%s3067 + $0x10] sm:$0xff]
    %v3071 = vld [vmem:[%s3067 + $0x18] sm:$0xff]
    %v3072 = vld [vmem:[%s3067 + $0x20] sm:$0xff]
    %v3073 = vld [vmem:[%s3067 + $0x28] sm:$0xff]
    %v3074 = vld [vmem:[%s3067 + $0x30] sm:$0xff]
    %v3075 = vld [vmem:[%s3067 + $0x38] sm:$0xff]
    %v3076 = vld [vmem:[%s3067 + $0x40] sm:$0xff]
    %v3077 = vld [vmem:[%s3067 + $0x48] sm:$0xff]
    %v3078 = vld [vmem:[%s3067 + $0x50] sm:$0xff]
    %v3079 = vld [vmem:[%s3067 + $0x58] sm:$0xff]
    %v3080 = vld [vmem:[%s3067 + $0x60] sm:$0xff]
    %v3081 = vld [vmem:[%s3067 + $0x68] sm:$0xff]
    %v3082 = vld [vmem:[%s3067 + $0x70] sm:$0xff]
    %v3083 = vld [vmem:[%s3067 + $0x78] sm:$0xff]
    %3084 = vmatprep.subr.mxu0 0.0
    %3085 = vmatpush1.msra.mxu0 %v3068
    %3086 = vmatprep.subr.mxu0 0.0
    %3087 = vmatpush1.msra.mxu0 %v3069
    %3088 = vmatprep.subr.mxu0 0.0
    %3089 = vmatpush1.msra.mxu0 %v3070
    %3090 = vmatprep.subr.mxu0 0.0
    %3091 = vmatpush1.msra.mxu0 %v3071
    %3092 = vmatprep.subr.mxu0 0.0
    %3093 = vmatpush1.msra.mxu0 %v3072
    %3094 = vmatprep.subr.mxu0 0.0
    %3095 = vmatpush1.msra.mxu0 %v3073
    %3096 = vmatprep.subr.mxu0 0.0
    %3097 = vmatpush1.msra.mxu0 %v3074
    %3098 = vmatprep.subr.mxu0 0.0
    %3099 = vmatpush1.msra.mxu0 %v3075
    %3100 = vmatprep.subr.mxu0 0.0
    %3101 = vmatpush1.msra.mxu0 %v3076
    %3102 = vmatprep.subr.mxu0 0.0
    %3103 = vmatpush1.msra.mxu0 %v3077
    %3104 = vmatprep.subr.mxu0 0.0
    %3105 = vmatpush1.msra.mxu0 %v3078
    %3106 = vmatprep.subr.mxu0 0.0
    %3107 = vmatpush1.msra.mxu0 %v3079
    %3108 = vmatprep.subr.mxu0 0.0
    %3109 = vmatpush1.msra.mxu0 %v3080
    %3110 = vmatprep.subr.mxu0 0.0
    %3111 = vmatpush1.msra.mxu0 %v3081
    %3112 = vmatprep.subr.mxu0 0.0
    %3113 = vmatpush1.msra.mxu0 %v3082
    %3114 = vmatprep.subr.mxu0 0.0
    %3115 = vmatpush1.msra.mxu0 %v3083
    %3116 = vmatprep.subr.mxu0 0.0
    %3117 = vmatpush1.msra.mxu0 0.0
    %3118 = vmatprep.subr.mxu0 0.0
    %3119 = vmatpush1.msra.mxu0 0.0
    %3120 = vmatprep.subr.mxu0 0.0
    %3121 = vmatpush1.msra.mxu0 0.0
    %3122 = vmatprep.subr.mxu0 0.0
    %3123 = vmatpush1.msra.mxu0 0.0
    %3124 = vmatprep.subr.mxu0 0.0
    %3125 = vmatpush1.msra.mxu0 0.0
    %3126 = vmatprep.subr.mxu0 0.0
    %3127 = vmatpush1.msra.mxu0 0.0
    %3128 = vmatprep.subr.mxu0 0.0
    %3129 = vmatpush1.msra.mxu0 0.0
    %3130 = vmatprep.subr.mxu0 0.0
    %3131 = vmatpush1.msra.mxu0 0.0
    %3132 = vmatprep.subr.mxu0 0.0
    %3133 = vmatpush1.msra.mxu0 0.0
    %3134 = vmatprep.subr.mxu0 0.0
    %3135 = vmatpush1.msra.mxu0 0.0
    %3136 = vmatprep.subr.mxu0 0.0
    %3137 = vmatpush1.msra.mxu0 0.0
    %3138 = vmatprep.subr.mxu0 0.0
    %3139 = vmatpush1.msra.mxu0 0.0
    %3140 = vmatprep.subr.mxu0 0.0
    %3141 = vmatpush1.msra.mxu0 0.0
    %3142 = vmatprep.subr.mxu0 0.0
    %3143 = vmatpush1.msra.mxu0 0.0
    %3144 = vmatprep.subr.mxu0 0.0
    %3145 = vmatpush1.msra.mxu0 0.0
    %3146 = vmatprep.subr.mxu0 0.0
    %3147 = vmatpush1.msra.mxu0 0.0
    %3148 = vmatprep.mubr.f32.mxu0 0.0
    %3149 = vmatmul.mubr.f32.gmra.mrb[0].mxu0 %v2967
    %v3150 = vpop.f32.mrb[0].mxu0
    %v3151 = vadd.f32 0.0, %v3150
    %v3152 = vpop.f32.mrb[0].mxu0
    %3153 = vmatprep.mubr.f32.mxu0 0.0
    %3154 = vmatmul.mubr.f32.gmra.mrb[0].mxu0 %v2968
    %v3155 = vpop.f32.mrb[0].mxu0
    %v3156 = vadd.f32 0.0, %v3155
    %v3157 = vpop.f32.mrb[0].mxu0
    %3158 = vmatprep.mubr.f32.mxu0 0.0
    %3159 = vmatmul.mubr.f32.gmra.mrb[0].mxu0 %v2969
    %v3160 = vpop.f32.mrb[0].mxu0
    %v3161 = vadd.f32 0.0, %v3160
    %v3162 = vpop.f32.mrb[0].mxu0
    %3163 = vmatprep.mubr.f32.mxu0 0.0
    %3164 = vmatmul.mubr.f32.gmra.mrb[0].mxu0 %v2970
    %v3165 = vpop.f32.mrb[0].mxu0
    %v3166 = vadd.f32 0.0, %v3165
    %v3167 = vpop.f32.mrb[0].mxu0
    %3168 = vmatprep.mubr.f32.mxu0 0.0
    %3169 = vmatmul.mubr.f32.gmra.mrb[0].mxu0 %v2971
    %v3170 = vpop.f32.mrb[0].mxu0
    %v3171 = vadd.f32 0.0, %v3170
    %v3172 = vpop.f32.mrb[0].mxu0
    %3173 = vmatprep.mubr.f32.mxu0 0.0
    %3174 = vmatmul.mubr.f32.gmra.mrb[0].mxu0 %v2972
    %v3175 = vpop.f32.mrb[0].mxu0
    %v3176 = vadd.f32 0.0, %v3175
    %v3177 = vpop.f32.mrb[0].mxu0
    %3178 = vmatprep.mubr.f32.mxu0 0.0
    %3179 = vmatmul.mubr.f32.gmra.mrb[0].mxu0 %v2973
    %v3180 = vpop.f32.mrb[0].mxu0
    %v3181 = vadd.f32 0.0, %v3180
    %v3182 = vpop.f32.mrb[0].mxu0
    %3183 = vmatprep.mubr.f32.mxu0 0.0
    %3184 = vmatmul.mubr.f32.gmra.mrb[0].mxu0 %v2974
    %v3185 = vpop.f32.mrb[0].mxu0
    %v3186 = vadd.f32 0.0, %v3185
    %v3187 = vpop.f32.mrb[0].mxu0
    %3188 = vmatprep.mubr.f32.mxu0 0.0
    %3189 = vmatmul.mubr.f32.gmra.mrb[0].mxu0 %v2975
    %v3190 = vpop.f32.mrb[0].mxu0
    %v3191 = vadd.f32 0.0, %v3190
    %v3192 = vpop.f32.mrb[0].mxu0
    %3193 = vmatprep.mubr.f32.mxu0 0.0
    %3194 = vmatmul.mubr.f32.gmra.mrb[0].mxu0 %v2976
    %v3195 = vpop.f32.mrb[0].mxu0
    %v3196 = vadd.f32 0.0, %v3195
    %v3197 = vpop.f32.mrb[0].mxu0
    %3198 = vmatprep.mubr.f32.mxu0 0.0
    %3199 = vmatmul.mubr.f32.gmra.mrb[0].mxu0 %v2977
    %v3200 = vpop.f32.mrb[0].mxu0
    %v3201 = vadd.f32 0.0, %v3200
    %v3202 = vpop.f32.mrb[0].mxu0
    %3203 = vmatprep.mubr.f32.mxu0 0.0
    %3204 = vmatmul.mubr.f32.gmra.mrb[0].mxu0 %v2978
    %v3205 = vpop.f32.mrb[0].mxu0
    %v3206 = vadd.f32 0.0, %v3205
    %v3207 = vpop.f32.mrb[0].mxu0
    %3208 = vmatprep.mubr.f32.mxu0 0.0
    %3209 = vmatmul.mubr.f32.gmra.mrb[0].mxu0 %v2979
    %v3210 = vpop.f32.mrb[0].mxu0
    %v3211 = vadd.f32 0.0, %v3210
    %v3212 = vpop.f32.mrb[0].mxu0
    %3213 = vmatprep.mubr.f32.mxu0 0.0
    %3214 = vmatmul.mubr.f32.gmra.mrb[0].mxu0 %v2980
    %v3215 = vpop.f32.mrb[0].mxu0
    %v3216 = vadd.f32 0.0, %v3215
    %v3217 = vpop.f32.mrb[0].mxu0
    %3218 = vmatprep.mubr.f32.mxu0 0.0
    %3219 = vmatmul.mubr.f32.gmra.mrb[0].mxu0 %v2981
    %v3220 = vpop.f32.mrb[0].mxu0
    %v3221 = vadd.f32 0.0, %v3220
    %v3222 = vpop.f32.mrb[0].mxu0
    %3223 = vmatprep.mubr.f32.mxu0 0.0
    %3224 = vmatmul.mubr.f32.gmra.mrb[0].mxu0 %v2982
    %v3225 = vpop.f32.mrb[0].mxu0
    %v3226 = vadd.f32 0.0, %v3225
    %v3227 = vpop.f32.mrb[0].mxu0
    %3228 = vmatprep.mubr.f32.mxu0 0.0
    %3229 = vmatmul.mubr.f32.gmra.mrb[0].mxu0 %v2983
    %v3230 = vpop.f32.mrb[0].mxu0
    %v3231 = vadd.f32 0.0, %v3230
    %v3232 = vpop.f32.mrb[0].mxu0
    %3233 = vmatprep.mubr.f32.mxu0 0.0
    %3234 = vmatmul.mubr.f32.gmra.mrb[0].mxu0 %v2984
    %v3235 = vpop.f32.mrb[0].mxu0
    %v3236 = vadd.f32 0.0, %v3235
    %v3237 = vpop.f32.mrb[0].mxu0
    %3238 = vmatprep.mubr.f32.mxu0 0.0
    %3239 = vmatmul.mubr.f32.gmra.mrb[0].mxu0 %v2985
    %v3240 = vpop.f32.mrb[0].mxu0
    %v3241 = vadd.f32 0.0, %v3240
    %v3242 = vpop.f32.mrb[0].mxu0
    %3243 = vmatprep.mubr.f32.mxu0 0.0
    %3244 = vmatmul.mubr.f32.gmra.mrb[0].mxu0 %v2986
    %v3245 = vpop.f32.mrb[0].mxu0
    %v3246 = vadd.f32 0.0, %v3245
    %v3247 = vpop.f32.mrb[0].mxu0
    %3248 = vmatprep.mubr.f32.mxu0 0.0
    %3249 = vmatmul.mubr.f32.gmra.mrb[0].mxu0 %v2987
    %v3250 = vpop.f32.mrb[0].mxu0
    %v3251 = vadd.f32 0.0, %v3250
    %v3252 = vpop.f32.mrb[0].mxu0
    %3253 = vmatprep.mubr.f32.mxu0 0.0
    %3254 = vmatmul.mubr.f32.gmra.mrb[0].mxu0 %v2988
    %v3255 = vpop.f32.mrb[0].mxu0
    %v3256 = vadd.f32 0.0, %v3255
    %v3257 = vpop.f32.mrb[0].mxu0
    %3258 = vmatprep.mubr.f32.mxu0 0.0
    %3259 = vmatmul.mubr.f32.gmra.mrb[0].mxu0 %v2989
    %v3260 = vpop.f32.mrb[0].mxu0
    %v3261 = vadd.f32 0.0, %v3260
    %v3262 = vpop.f32.mrb[0].mxu0
    %3263 = vmatprep.mubr.f32.mxu0 0.0
    %3264 = vmatmul.mubr.f32.gmra.mrb[0].mxu0 %v2990
    %v3265 = vpop.f32.mrb[0].mxu0
    %v3266 = vadd.f32 0.0, %v3265
    %v3267 = vpop.f32.mrb[0].mxu0
    %3268 = vmatprep.mubr.f32.mxu0 0.0
    %3269 = vmatmul.mubr.f32.gmra.mrb[0].mxu0 %v2991
    %v3270 = vpop.f32.mrb[0].mxu0
    %v3271 = vadd.f32 0.0, %v3270
    %v3272 = vpop.f32.mrb[0].mxu0
    %3273 = vmatprep.mubr.f32.mxu0 0.0
    %3274 = vmatmul.mubr.f32.gmra.mrb[0].mxu0 %v2992
    %v3275 = vpop.f32.mrb[0].mxu0
    %v3276 = vadd.f32 0.0, %v3275
    %v3277 = vpop.f32.mrb[0].mxu0
    %3278 = vmatprep.mubr.f32.mxu0 0.0
    %3279 = vmatmul.mubr.f32.gmra.mrb[0].mxu0 %v2993
    %v3280 = vpop.f32.mrb[0].mxu0
    %v3281 = vadd.f32 0.0, %v3280
    %v3282 = vpop.f32.mrb[0].mxu0
    %3283 = vmatprep.mubr.f32.mxu0 0.0
    %3284 = vmatmul.mubr.f32.gmra.mrb[0].mxu0 %v2994
    %v3285 = vpop.f32.mrb[0].mxu0
    %v3286 = vadd.f32 0.0, %v3285
    %v3287 = vpop.f32.mrb[0].mxu0
    %3288 = vmatprep.mubr.f32.mxu0 0.0
    %3289 = vmatmul.mubr.f32.gmra.mrb[0].mxu0 %v2995
    %v3290 = vpop.f32.mrb[0].mxu0
    %v3291 = vadd.f32 0.0, %v3290
    %v3292 = vpop.f32.mrb[0].mxu0
    %3293 = vmatprep.mubr.f32.mxu0 0.0
    %3294 = vmatmul.mubr.f32.gmra.mrb[0].mxu0 %v2996
    %v3295 = vpop.f32.mrb[0].mxu0
    %v3296 = vadd.f32 0.0, %v3295
    %v3297 = vpop.f32.mrb[0].mxu0
    %3298 = vmatprep.mubr.f32.mxu0 0.0
    %3299 = vmatmul.mubr.f32.gmra.mrb[0].mxu0 %v2997
    %v3300 = vpop.f32.mrb[0].mxu0
    %v3301 = vadd.f32 0.0, %v3300
    %v3302 = vpop.f32.mrb[0].mxu0
    %3303 = vmatprep.mubr.f32.mxu0 0.0
    %3304 = vmatmul.mubr.f32.gmra.mrb[0].mxu0 %v2998
    %v3305 = vpop.f32.mrb[0].mxu0
    %v3306 = vadd.f32 0.0, %v3305
    %v3307 = vpop.f32.mrb[0].mxu0
    %3308 = vmatprep.mubr.f32.mxu0 0.0
    %3309 = vmatmul.mubr.f32.gmra.mrb[0].mxu0 %v2999
    %v3310 = vpop.f32.mrb[0].mxu0
    %v3311 = vadd.f32 0.0, %v3310
    %v3312 = vpop.f32.mrb[0].mxu0
    %3313 = vmatprep.mubr.f32.mxu0 0.0
    %3314 = vmatmul.mubr.f32.gmra.mrb[0].mxu0 %v3000
    %v3315 = vpop.f32.mrb[0].mxu0
    %v3316 = vadd.f32 0.0, %v3315
    %v3317 = vpop.f32.mrb[0].mxu0
    %3318 = vmatprep.mubr.f32.mxu0 0.0
    %3319 = vmatmul.mubr.f32.gmra.mrb[0].mxu0 %v3001
    %v3320 = vpop.f32.mrb[0].mxu0
    %v3321 = vadd.f32 0.0, %v3320
    %v3322 = vpop.f32.mrb[0].mxu0
    %3323 = vmatprep.mubr.f32.mxu0 0.0
    %3324 = vmatmul.mubr.f32.gmra.mrb[0].mxu0 %v3002
    %v3325 = vpop.f32.mrb[0].mxu0
    %v3326 = vadd.f32 0.0, %v3325
    %v3327 = vpop.f32.mrb[0].mxu0
    %3328 = vmatprep.mubr.f32.mxu0 0.0
    %3329 = vmatmul.mubr.f32.gmra.mrb[0].mxu0 %v3003
    %v3330 = vpop.f32.mrb[0].mxu0
    %v3331 = vadd.f32 0.0, %v3330
    %v3332 = vpop.f32.mrb[0].mxu0
    %3333 = vmatprep.mubr.f32.mxu0 0.0
    %3334 = vmatmul.mubr.f32.gmra.mrb[0].mxu0 %v3004
    %v3335 = vpop.f32.mrb[0].mxu0
    %v3336 = vadd.f32 0.0, %v3335
    %v3337 = vpop.f32.mrb[0].mxu0
    %3338 = vmatprep.mubr.f32.mxu0 0.0
    %3339 = vmatmul.mubr.f32.gmra.mrb[0].mxu0 %v3005
    %v3340 = vpop.f32.mrb[0].mxu0
    %v3341 = vadd.f32 0.0, %v3340
    %v3342 = vpop.f32.mrb[0].mxu0
    %3343 = vmatprep.mubr.f32.mxu0 0.0
    %3344 = vmatmul.mubr.f32.gmra.mrb[0].mxu0 %v3006
    %v3345 = vpop.f32.mrb[0].mxu0
    %v3346 = vadd.f32 0.0, %v3345
    %v3347 = vpop.f32.mrb[0].mxu0
    %3348 = vmatprep.mubr.f32.mxu0 0.0
    %3349 = vmatmul.mubr.f32.gmra.mrb[0].mxu0 %v3007
    %v3350 = vpop.f32.mrb[0].mxu0
    %v3351 = vadd.f32 0.0, %v3350
    %v3352 = vpop.f32.mrb[0].mxu0
    %3353 = vmatprep.mubr.f32.mxu0 0.0
    %3354 = vmatmul.mubr.f32.gmra.mrb[0].mxu0 %v3008
    %v3355 = vpop.f32.mrb[0].mxu0
    %v3356 = vadd.f32 0.0, %v3355
    %v3357 = vpop.f32.mrb[0].mxu0
    %3358 = vmatprep.mubr.f32.mxu0 0.0
    %3359 = vmatmul.mubr.f32.gmra.mrb[0].mxu0 %v3009
    %v3360 = vpop.f32.mrb[0].mxu0
    %v3361 = vadd.f32 0.0, %v3360
    %v3362 = vpop.f32.mrb[0].mxu0
    %3363 = vmatprep.mubr.f32.mxu0 0.0
    %3364 = vmatmul.mubr.f32.gmra.mrb[0].mxu0 %v3010
    %v3365 = vpop.f32.mrb[0].mxu0
    %v3366 = vadd.f32 0.0, %v3365
    %v3367 = vpop.f32.mrb[0].mxu0
    %3368 = vmatprep.mubr.f32.mxu0 0.0
    %3369 = vmatmul.mubr.f32.gmra.mrb[0].mxu0 %v3011
    %v3370 = vpop.f32.mrb[0].mxu0
    %v3371 = vadd.f32 0.0, %v3370
    %v3372 = vpop.f32.mrb[0].mxu0
    %3373 = vmatprep.mubr.f32.mxu0 0.0
    %3374 = vmatmul.mubr.f32.gmra.mrb[0].mxu0 %v3012
    %v3375 = vpop.f32.mrb[0].mxu0
    %v3376 = vadd.f32 0.0, %v3375
    %v3377 = vpop.f32.mrb[0].mxu0
    %3378 = vmatprep.mubr.f32.mxu0 0.0
    %3379 = vmatmul.mubr.f32.gmra.mrb[0].mxu0 %v3013
    %v3380 = vpop.f32.mrb[0].mxu0
    %v3381 = vadd.f32 0.0, %v3380
    %v3382 = vpop.f32.mrb[0].mxu0
    %3383 = vmatprep.mubr.f32.mxu0 0.0
    %3384 = vmatmul.mubr.f32.gmra.mrb[0].mxu0 %v3014
    %v3385 = vpop.f32.mrb[0].mxu0
    %v3386 = vadd.f32 0.0, %v3385
    %v3387 = vpop.f32.mrb[0].mxu0
    %3388 = vmatprep.mubr.f32.mxu0 0.0
    %3389 = vmatmul.mubr.f32.gmra.mrb[0].mxu0 %v3015
    %v3390 = vpop.f32.mrb[0].mxu0
    %v3391 = vadd.f32 0.0, %v3390
    %v3392 = vpop.f32.mrb[0].mxu0
    %3393 = vmatprep.mubr.f32.mxu0 0.0
    %3394 = vmatmul.mubr.f32.gmra.mrb[0].mxu0 %v3016
    %v3395 = vpop.f32.mrb[0].mxu0
    %v3396 = vadd.f32 0.0, %v3395
    %v3397 = vpop.f32.mrb[0].mxu0
    %3398 = vmatprep.mubr.f32.mxu0 0.0
    %3399 = vmatmul.mubr.f32.gmra.mrb[0].mxu0 %v3017
    %v3400 = vpop.f32.mrb[0].mxu0
    %v3401 = vadd.f32 0.0, %v3400
    %v3402 = vpop.f32.mrb[0].mxu0
    %3403 = vmatprep.mubr.f32.mxu0 0.0
    %3404 = vmatmul.mubr.f32.gmra.mrb[0].mxu0 %v3018
    %v3405 = vpop.f32.mrb[0].mxu0
    %v3406 = vadd.f32 0.0, %v3405
    %v3407 = vpop.f32.mrb[0].mxu0
    %3408 = vmatprep.mubr.f32.mxu0 0.0
    %3409 = vmatmul.mubr.f32.gmra.mrb[0].mxu0 %v3019
    %v3410 = vpop.f32.mrb[0].mxu0
    %v3411 = vadd.f32 0.0, %v3410
    %v3412 = vpop.f32.mrb[0].mxu0
    %3413 = vmatprep.mubr.f32.mxu0 0.0
    %3414 = vmatmul.mubr.f32.gmra.mrb[0].mxu0 %v3020
    %v3415 = vpop.f32.mrb[0].mxu0
    %v3416 = vadd.f32 0.0, %v3415
    %v3417 = vpop.f32.mrb[0].mxu0
    %3418 = vmatprep.mubr.f32.mxu0 0.0
    %3419 = vmatmul.mubr.f32.gmra.mrb[0].mxu0 %v3021
    %v3420 = vpop.f32.mrb[0].mxu0
    %v3421 = vadd.f32 0.0, %v3420
    %v3422 = vpop.f32.mrb[0].mxu0
    %3423 = vmatprep.mubr.f32.mxu0 0.0
    %3424 = vmatmul.mubr.f32.gmra.mrb[0].mxu0 %v3022
    %v3425 = vpop.f32.mrb[0].mxu0
    %v3426 = vadd.f32 0.0, %v3425
    %v3427 = vpop.f32.mrb[0].mxu0
    %3428 = vmatprep.mubr.f32.mxu0 0.0
    %3429 = vmatmul.mubr.f32.gmra.mrb[0].mxu0 %v3023
    %v3430 = vpop.f32.mrb[0].mxu0
    %v3431 = vadd.f32 0.0, %v3430
    %v3432 = vpop.f32.mrb[0].mxu0
    %3433 = vmatprep.mubr.f32.mxu0 0.0
    %3434 = vmatmul.mubr.f32.gmra.mrb[0].mxu0 %v3024
    %v3435 = vpop.f32.mrb[0].mxu0
    %v3436 = vadd.f32 0.0, %v3435
    %v3437 = vpop.f32.mrb[0].mxu0
    %3438 = vmatprep.mubr.f32.mxu0 0.0
    %3439 = vmatmul.mubr.f32.gmra.mrb[0].mxu0 %v3025
    %v3440 = vpop.f32.mrb[0].mxu0
    %v3441 = vadd.f32 0.0, %v3440
    %v3442 = vpop.f32.mrb[0].mxu0
    %3443 = vmatprep.mubr.f32.mxu0 0.0
    %3444 = vmatmul.mubr.f32.gmra.mrb[0].mxu0 %v3026
    %v3445 = vpop.f32.mrb[0].mxu0
    %v3446 = vadd.f32 0.0, %v3445
    %v3447 = vpop.f32.mrb[0].mxu0
    %3448 = vmatprep.mubr.f32.mxu0 0.0
    %3449 = vmatmul.mubr.f32.gmra.mrb[0].mxu0 %v3027
    %v3450 = vpop.f32.mrb[0].mxu0
    %v3451 = vadd.f32 0.0, %v3450
    %v3452 = vpop.f32.mrb[0].mxu0
    %3453 = vmatprep.mubr.f32.mxu0 0.0
    %3454 = vmatmul.mubr.f32.gmra.mrb[0].mxu0 %v3028
    %v3455 = vpop.f32.mrb[0].mxu0
    %v3456 = vadd.f32 0.0, %v3455
    %v3457 = vpop.f32.mrb[0].mxu0
    %3458 = vmatprep.mubr.f32.mxu0 0.0
    %3459 = vmatmul.mubr.f32.gmra.mrb[0].mxu0 %v3029
    %v3460 = vpop.f32.mrb[0].mxu0
    %v3461 = vadd.f32 0.0, %v3460
    %v3462 = vpop.f32.mrb[0].mxu0
    %3463 = vmatprep.mubr.f32.mxu0 0.0
    %3464 = vmatmul.mubr.f32.gmra.mrb[0].mxu0 %v3030
    %v3465 = vpop.f32.mrb[0].mxu0
    %v3466 = vadd.f32 0.0, %v3465
    %v3467 = vpop.f32.mrb[0].mxu0
    %3468 = vmatprep.mubr.f32.mxu0 0.0
    %3469 = vmatmul.mubr.f32.gmra.mrb[0].mxu0 %v3031
    %v3470 = vpop.f32.mrb[0].mxu0
    %v3471 = vadd.f32 0.0, %v3470
    %v3472 = vpop.f32.mrb[0].mxu0
    %3473 = vmatprep.mubr.f32.mxu0 0.0
    %3474 = vmatmul.mubr.f32.gmra.mrb[0].mxu0 %v3032
    %v3475 = vpop.f32.mrb[0].mxu0
    %v3476 = vadd.f32 0.0, %v3475
    %v3477 = vpop.f32.mrb[0].mxu0
    %3478 = vmatprep.mubr.f32.mxu0 0.0
    %3479 = vmatmul.mubr.f32.gmra.mrb[0].mxu0 %v3033
    %v3480 = vpop.f32.mrb[0].mxu0
    %v3481 = vadd.f32 0.0, %v3480
    %v3482 = vpop.f32.mrb[0].mxu0
    %3483 = vmatprep.mubr.f32.mxu0 0.0
    %3484 = vmatmul.mubr.f32.gmra.mrb[0].mxu0 %v3034
    %v3485 = vpop.f32.mrb[0].mxu0
    %v3486 = vadd.f32 0.0, %v3485
    %v3487 = vpop.f32.mrb[0].mxu0
    %3488 = vmatprep.mubr.f32.mxu0 0.0
    %3489 = vmatmul.mubr.f32.gmra.mrb[0].mxu0 %v3035
    %v3490 = vpop.f32.mrb[0].mxu0
    %v3491 = vadd.f32 0.0, %v3490
    %v3492 = vpop.f32.mrb[0].mxu0
    %3493 = vmatprep.mubr.f32.mxu0 0.0
    %3494 = vmatmul.mubr.f32.gmra.mrb[0].mxu0 %v3036
    %v3495 = vpop.f32.mrb[0].mxu0
    %v3496 = vadd.f32 0.0, %v3495
    %v3497 = vpop.f32.mrb[0].mxu0
    %3498 = vmatprep.mubr.f32.mxu0 0.0
    %3499 = vmatmul.mubr.f32.gmra.mrb[0].mxu0 %v3037
    %v3500 = vpop.f32.mrb[0].mxu0
    %v3501 = vadd.f32 0.0, %v3500
    %v3502 = vpop.f32.mrb[0].mxu0
    %3503 = vmatprep.mubr.f32.mxu0 0.0
    %3504 = vmatmul.mubr.f32.gmra.mrb[0].mxu0 %v3038
    %v3505 = vpop.f32.mrb[0].mxu0
    %v3506 = vadd.f32 0.0, %v3505
    %v3507 = vpop.f32.mrb[0].mxu0
    %3508 = vmatprep.mubr.f32.mxu0 0.0
    %3509 = vmatmul.mubr.f32.gmra.mrb[0].mxu0 %v3039
    %v3510 = vpop.f32.mrb[0].mxu0
    %v3511 = vadd.f32 0.0, %v3510
    %v3512 = vpop.f32.mrb[0].mxu0
    %3513 = vmatprep.mubr.f32.mxu0 0.0
    %3514 = vmatmul.mubr.f32.gmra.mrb[0].mxu0 %v3040
    %v3515 = vpop.f32.mrb[0].mxu0
    %v3516 = vadd.f32 0.0, %v3515
    %v3517 = vpop.f32.mrb[0].mxu0
    %3518 = vmatprep.mubr.f32.mxu0 0.0
    %3519 = vmatmul.mubr.f32.gmra.mrb[0].mxu0 %v3041
    %v3520 = vpop.f32.mrb[0].mxu0
    %v3521 = vadd.f32 0.0, %v3520
    %v3522 = vpop.f32.mrb[0].mxu0
    %3523 = vmatprep.mubr.f32.mxu0 0.0
    %3524 = vmatmul.mubr.f32.gmra.mrb[0].mxu0 %v3042
    %v3525 = vpop.f32.mrb[0].mxu0
    %v3526 = vadd.f32 0.0, %v3525
    %v3527 = vpop.f32.mrb[0].mxu0
    %3528 = vmatprep.mubr.f32.mxu0 0.0
    %3529 = vmatmul.mubr.f32.gmra.mrb[0].mxu0 %v3043
    %v3530 = vpop.f32.mrb[0].mxu0
    %v3531 = vadd.f32 0.0, %v3530
    %v3532 = vpop.f32.mrb[0].mxu0
    %3533 = vmatprep.mubr.f32.mxu0 0.0
    %3534 = vmatmul.mubr.f32.gmra.mrb[0].mxu0 %v3044
    %v3535 = vpop.f32.mrb[0].mxu0
    %v3536 = vadd.f32 0.0, %v3535
    %v3537 = vpop.f32.mrb[0].mxu0
    %3538 = vmatprep.mubr.f32.mxu0 0.0
    %3539 = vmatmul.mubr.f32.gmra.mrb[0].mxu0 %v3045
    %v3540 = vpop.f32.mrb[0].mxu0
    %v3541 = vadd.f32 0.0, %v3540
    %v3542 = vpop.f32.mrb[0].mxu0
    %3543 = vmatprep.mubr.f32.mxu0 0.0
    %3544 = vmatmul.mubr.f32.gmra.mrb[0].mxu0 %v3046
    %v3545 = vpop.f32.mrb[0].mxu0
    %v3546 = vadd.f32 0.0, %v3545
    %v3547 = vpop.f32.mrb[0].mxu0
    %3548 = vmatprep.mubr.f32.mxu0 0.0
    %3549 = vmatmul.mubr.f32.gmra.mrb[0].mxu0 %v3047
    %v3550 = vpop.f32.mrb[0].mxu0
    %v3551 = vadd.f32 0.0, %v3550
    %v3552 = vpop.f32.mrb[0].mxu0
    %3553 = vmatprep.mubr.f32.mxu0 0.0
    %3554 = vmatmul.mubr.f32.gmra.mrb[0].mxu0 %v3048
    %v3555 = vpop.f32.mrb[0].mxu0
    %v3556 = vadd.f32 0.0, %v3555
    %v3557 = vpop.f32.mrb[0].mxu0
    %3558 = vmatprep.mubr.f32.mxu0 0.0
    %3559 = vmatmul.mubr.f32.gmra.mrb[0].mxu0 %v3049
    %v3560 = vpop.f32.mrb[0].mxu0
    %v3561 = vadd.f32 0.0, %v3560
    %v3562 = vpop.f32.mrb[0].mxu0
    %3563 = vmatprep.mubr.f32.mxu0 0.0
    %3564 = vmatmul.mubr.f32.gmra.mrb[0].mxu0 %v3050
    %v3565 = vpop.f32.mrb[0].mxu0
    %v3566 = vadd.f32 0.0, %v3565
    %v3567 = vpop.f32.mrb[0].mxu0
    %3568 = vmatprep.mubr.f32.mxu0 0.0
    %3569 = vmatmul.mubr.f32.gmra.mrb[0].mxu0 %v3051
    %v3570 = vpop.f32.mrb[0].mxu0
    %v3571 = vadd.f32 0.0, %v3570
    %v3572 = vpop.f32.mrb[0].mxu0
    %3573 = vmatprep.mubr.f32.mxu0 0.0
    %3574 = vmatmul.mubr.f32.gmra.mrb[0].mxu0 %v3052
    %v3575 = vpop.f32.mrb[0].mxu0
    %v3576 = vadd.f32 0.0, %v3575
    %v3577 = vpop.f32.mrb[0].mxu0
    %3578 = vmatprep.mubr.f32.mxu0 0.0
    %3579 = vmatmul.mubr.f32.gmra.mrb[0].mxu0 %v3053
    %v3580 = vpop.f32.mrb[0].mxu0
    %v3581 = vadd.f32 0.0, %v3580
    %v3582 = vpop.f32.mrb[0].mxu0
    %3583 = vmatprep.mubr.f32.mxu0 0.0
    %3584 = vmatmul.mubr.f32.gmra.mrb[0].mxu0 %v3054
    %v3585 = vpop.f32.mrb[0].mxu0
    %v3586 = vadd.f32 0.0, %v3585
    %v3587 = vpop.f32.mrb[0].mxu0
    %3588 = vmatprep.mubr.f32.mxu0 0.0
    %3589 = vmatmul.mubr.f32.gmra.mrb[0].mxu0 %v3055
    %v3590 = vpop.f32.mrb[0].mxu0
    %v3591 = vadd.f32 0.0, %v3590
    %v3592 = vpop.f32.mrb[0].mxu0
    %3593 = vmatprep.mubr.f32.mxu0 0.0
    %3594 = vmatmul.mubr.f32.gmra.mrb[0].mxu0 %v3056
    %v3595 = vpop.f32.mrb[0].mxu0
    %v3596 = vadd.f32 0.0, %v3595
    %v3597 = vpop.f32.mrb[0].mxu0
    %3598 = vmatprep.mubr.f32.mxu0 0.0
    %3599 = vmatmul.mubr.f32.gmra.mrb[0].mxu0 %v3057
    %v3600 = vpop.f32.mrb[0].mxu0
    %v3601 = vadd.f32 0.0, %v3600
    %v3602 = vpop.f32.mrb[0].mxu0
    %3603 = vmatprep.mubr.f32.mxu0 0.0
    %3604 = vmatmul.mubr.f32.gmra.mrb[0].mxu0 %v3058
    %v3605 = vpop.f32.mrb[0].mxu0
    %v3606 = vadd.f32 0.0, %v3605
    %v3607 = vpop.f32.mrb[0].mxu0
    %3608 = vmatprep.mubr.f32.mxu0 0.0
    %3609 = vmatmul.mubr.f32.gmra.mrb[0].mxu0 %v3059
    %v3610 = vpop.f32.mrb[0].mxu0
    %v3611 = vadd.f32 0.0, %v3610
    %v3612 = vpop.f32.mrb[0].mxu0
    %3613 = vmatprep.mubr.f32.mxu0 0.0
    %3614 = vmatmul.mubr.f32.gmra.mrb[0].mxu0 %v3060
    %v3615 = vpop.f32.mrb[0].mxu0
    %v3616 = vadd.f32 0.0, %v3615
    %v3617 = vpop.f32.mrb[0].mxu0
    %3618 = vmatprep.mubr.f32.mxu0 0.0
    %3619 = vmatmul.mubr.f32.gmra.mrb[0].mxu0 %v3061
    %v3620 = vpop.f32.mrb[0].mxu0
    %v3621 = vadd.f32 0.0, %v3620
    %v3622 = vpop.f32.mrb[0].mxu0
    %3623 = vmatprep.mubr.f32.mxu0 0.0
    %3624 = vmatmul.mubr.f32.gmra.mrb[0].mxu0 %v3062
    %v3625 = vpop.f32.mrb[0].mxu0
    %v3626 = vadd.f32 0.0, %v3625
    %v3627 = vpop.f32.mrb[0].mxu0
    %3628 = vmatprep.mubr.f32.mxu0 0.0
    %3629 = vmatmul.mubr.f32.gmra.mrb[0].mxu0 %v3063
    %v3630 = vpop.f32.mrb[0].mxu0
    %v3631 = vadd.f32 0.0, %v3630
    %v3632 = vpop.f32.mrb[0].mxu0
    %3633 = vmatprep.mubr.f32.mxu0 0.0
    %3634 = vmatmul.mubr.f32.gmra.mrb[0].mxu0 %v3064
    %v3635 = vpop.f32.mrb[0].mxu0
    %v3636 = vadd.f32 0.0, %v3635
    %v3637 = vpop.f32.mrb[0].mxu0
    %3638 = vmatprep.mubr.f32.mxu0 0.0
    %3639 = vmatmul.mubr.f32.gmra.mrb[0].mxu0 %v3065
    %v3640 = vpop.f32.mrb[0].mxu0
    %v3641 = vadd.f32 0.0, %v3640
    %v3642 = vpop.f32.mrb[0].mxu0
    %3643 = vmatprep.mubr.f32.mxu0 0.0
    %3644 = vmatmul.mubr.f32.gmra.mrb[0].mxu0 %v3066
    %v3645 = vpop.f32.mrb[0].mxu0
    %v3646 = vadd.f32 0.0, %v3645
    %v3647 = vpop.f32.mrb[0].mxu0
    %3648 = vdwg.mxu0
    %v3649 = vadd.f32 %v2867, %v3151
    %v3650 = vadd.f32 %v2868, %v3156
    %v3651 = vadd.f32 %v2869, %v3161
    %v3652 = vadd.f32 %v2870, %v3166
    %v3653 = vadd.f32 %v2871, %v3171
    %v3654 = vadd.f32 %v2872, %v3176
    %v3655 = vadd.f32 %v2873, %v3181
    %v3656 = vadd.f32 %v2874, %v3186
    %v3657 = vadd.f32 %v2875, %v3191
    %v3658 = vadd.f32 %v2876, %v3196
    %v3659 = vadd.f32 %v2877, %v3201
    %v3660 = vadd.f32 %v2878, %v3206
    %v3661 = vadd.f32 %v2879, %v3211
    %v3662 = vadd.f32 %v2880, %v3216
    %v3663 = vadd.f32 %v2881, %v3221
    %v3664 = vadd.f32 %v2882, %v3226
    %v3665 = vadd.f32 %v2883, %v3231
    %v3666 = vadd.f32 %v2884, %v3236
    %v3667 = vadd.f32 %v2885, %v3241
    %v3668 = vadd.f32 %v2886, %v3246
    %v3669 = vadd.f32 %v2887, %v3251
    %v3670 = vadd.f32 %v2888, %v3256
    %v3671 = vadd.f32 %v2889, %v3261
    %v3672 = vadd.f32 %v2890, %v3266
    %v3673 = vadd.f32 %v2891, %v3271
    %v3674 = vadd.f32 %v2892, %v3276
    %v3675 = vadd.f32 %v2893, %v3281
    %v3676 = vadd.f32 %v2894, %v3286
    %v3677 = vadd.f32 %v2895, %v3291
    %v3678 = vadd.f32 %v2896, %v3296
    %v3679 = vadd.f32 %v2897, %v3301
    %v3680 = vadd.f32 %v2898, %v3306
    %v3681 = vadd.f32 %v2899, %v3311
    %v3682 = vadd.f32 %v2900, %v3316
    %v3683 = vadd.f32 %v2901, %v3321
    %v3684 = vadd.f32 %v2902, %v3326
    %v3685 = vadd.f32 %v2903, %v3331
    %v3686 = vadd.f32 %v2904, %v3336
    %v3687 = vadd.f32 %v2905, %v3341
    %v3688 = vadd.f32 %v2906, %v3346
    %v3689 = vadd.f32 %v2907, %v3351
    %v3690 = vadd.f32 %v2908, %v3356
    %v3691 = vadd.f32 %v2909, %v3361
    %v3692 = vadd.f32 %v2910, %v3366
    %v3693 = vadd.f32 %v2911, %v3371
    %v3694 = vadd.f32 %v2912, %v3376
    %v3695 = vadd.f32 %v2913, %v3381
    %v3696 = vadd.f32 %v2914, %v3386
    %v3697 = vadd.f32 %v2915, %v3391
    %v3698 = vadd.f32 %v2916, %v3396
    %v3699 = vadd.f32 %v2917, %v3401
    %v3700 = vadd.f32 %v2918, %v3406
    %v3701 = vadd.f32 %v2919, %v3411
    %v3702 = vadd.f32 %v2920, %v3416
    %v3703 = vadd.f32 %v2921, %v3421
    %v3704 = vadd.f32 %v2922, %v3426
    %v3705 = vadd.f32 %v2923, %v3431
    %v3706 = vadd.f32 %v2924, %v3436
    %v3707 = vadd.f32 %v2925, %v3441
    %v3708 = vadd.f32 %v2926, %v3446
    %v3709 = vadd.f32 %v2927, %v3451
    %v3710 = vadd.f32 %v2928, %v3456
    %v3711 = vadd.f32 %v2929, %v3461
    %v3712 = vadd.f32 %v2930, %v3466
    %v3713 = vadd.f32 %v2931, %v3471
    %v3714 = vadd.f32 %v2932, %v3476
    %v3715 = vadd.f32 %v2933, %v3481
    %v3716 = vadd.f32 %v2934, %v3486
    %v3717 = vadd.f32 %v2935, %v3491
    %v3718 = vadd.f32 %v2936, %v3496
    %v3719 = vadd.f32 %v2937, %v3501
    %v3720 = vadd.f32 %v2938, %v3506
    %v3721 = vadd.f32 %v2939, %v3511
    %v3722 = vadd.f32 %v2940, %v3516
    %v3723 = vadd.f32 %v2941, %v3521
    %v3724 = vadd.f32 %v2942, %v3526
    %v3725 = vadd.f32 %v2943, %v3531
    %v3726 = vadd.f32 %v2944, %v3536
    %v3727 = vadd.f32 %v2945, %v3541
    %v3728 = vadd.f32 %v2946, %v3546
    %v3729 = vadd.f32 %v2947, %v3551
    %v3730 = vadd.f32 %v2948, %v3556
    %v3731 = vadd.f32 %v2949, %v3561
    %v3732 = vadd.f32 %v2950, %v3566
    %v3733 = vadd.f32 %v2951, %v3571
    %v3734 = vadd.f32 %v2952, %v3576
    %v3735 = vadd.f32 %v2953, %v3581
    %v3736 = vadd.f32 %v2954, %v3586
    %v3737 = vadd.f32 %v2955, %v3591
    %v3738 = vadd.f32 %v2956, %v3596
    %v3739 = vadd.f32 %v2957, %v3601
    %v3740 = vadd.f32 %v2958, %v3606
    %v3741 = vadd.f32 %v2959, %v3611
    %v3742 = vadd.f32 %v2960, %v3616
    %v3743 = vadd.f32 %v2961, %v3621
    %v3744 = vadd.f32 %v2962, %v3626
    %v3745 = vadd.f32 %v2963, %v3631
    %v3746 = vadd.f32 %v2964, %v3636
    %v3747 = vadd.f32 %v2965, %v3641
    %v3748 = vadd.f32 %v2966, %v3646
    %v3749 = vld [vmem:[#allocation2 + $0x22] sm:$0xff]
    %v3750 = vld [vmem:[#allocation2 + $0x2a] sm:$0xff]
    %v3751 = vld [vmem:[#allocation2 + $0x32] sm:$0xff]
    %v3752 = vld [vmem:[#allocation2 + $0x3a] sm:$0xff]
    %v3753 = vld [vmem:[#allocation2 + $0x42] sm:$0xff]
    %v3754 = vld [vmem:[#allocation2 + $0x4a] sm:$0xff]
    %v3755 = vld [vmem:[#allocation2 + $0x52] sm:$0xff]
    %v3756 = vld [vmem:[#allocation2 + $0x5a] sm:$0xff]
    %v3757 = vld [vmem:[#allocation2 + $0x62] sm:$0xff]
    %v3758 = vld [vmem:[#allocation2 + $0x6a] sm:$0xff]
    %v3759 = vld [vmem:[#allocation2 + $0x72] sm:$0xff]
    %v3760 = vld [vmem:[#allocation2 + $0x7a] sm:$0xff]
    %v3761 = vld [vmem:[#allocation2 + $0x82] sm:$0xff]
    %v3762 = vld [vmem:[#allocation2 + $0x8a] sm:$0xff]
    %v3763 = vld [vmem:[#allocation2 + $0x92] sm:$0xff]
    %v3764 = vld [vmem:[#allocation2 + $0x9a] sm:$0xff]
    %v3765 = vld [vmem:[#allocation2 + $0xa2] sm:$0xff]
    %v3766 = vld [vmem:[#allocation2 + $0xaa] sm:$0xff]
    %v3767 = vld [vmem:[#allocation2 + $0xb2] sm:$0xff]
    %v3768 = vld [vmem:[#allocation2 + $0xba] sm:$0xff]
    %v3769 = vld [vmem:[#allocation2 + $0xc2] sm:$0xff]
    %v3770 = vld [vmem:[#allocation2 + $0xca] sm:$0xff]
    %v3771 = vld [vmem:[#allocation2 + $0xd2] sm:$0xff]
    %v3772 = vld [vmem:[#allocation2 + $0xda] sm:$0xff]
    %v3773 = vld [vmem:[#allocation2 + $0xe2] sm:$0xff]
    %v3774 = vld [vmem:[#allocation2 + $0xea] sm:$0xff]
    %v3775 = vld [vmem:[#allocation2 + $0xf2] sm:$0xff]
    %v3776 = vld [vmem:[#allocation2 + $0xfa] sm:$0xff]
    %v3777 = vld [vmem:[#allocation2 + $0x102] sm:$0xff]
    %v3778 = vld [vmem:[#allocation2 + $0x10a] sm:$0xff]
    %v3779 = vld [vmem:[#allocation2 + $0x112] sm:$0xff]
    %v3780 = vld [vmem:[#allocation2 + $0x11a] sm:$0xff]
    %v3781 = vld [vmem:[#allocation2 + $0x122] sm:$0xff]
    %v3782 = vld [vmem:[#allocation2 + $0x12a] sm:$0xff]
    %v3783 = vld [vmem:[#allocation2 + $0x132] sm:$0xff]
    %v3784 = vld [vmem:[#allocation2 + $0x13a] sm:$0xff]
    %v3785 = vld [vmem:[#allocation2 + $0x142] sm:$0xff]
    %v3786 = vld [vmem:[#allocation2 + $0x14a] sm:$0xff]
    %v3787 = vld [vmem:[#allocation2 + $0x152] sm:$0xff]
    %v3788 = vld [vmem:[#allocation2 + $0x15a] sm:$0xff]
    %v3789 = vld [vmem:[#allocation2 + $0x162] sm:$0xff]
    %v3790 = vld [vmem:[#allocation2 + $0x16a] sm:$0xff]
    %v3791 = vld [vmem:[#allocation2 + $0x172] sm:$0xff]
    %v3792 = vld [vmem:[#allocation2 + $0x17a] sm:$0xff]
    %v3793 = vld [vmem:[#allocation2 + $0x182] sm:$0xff]
    %v3794 = vld [vmem:[#allocation2 + $0x18a] sm:$0xff]
    %v3795 = vld [vmem:[#allocation2 + $0x192] sm:$0xff]
    %v3796 = vld [vmem:[#allocation2 + $0x19a] sm:$0xff]
    %v3797 = vld [vmem:[#allocation2 + $0x1a2] sm:$0xff]
    %v3798 = vld [vmem:[#allocation2 + $0x1aa] sm:$0xff]
    %v3799 = vld [vmem:[#allocation2 + $0x1b2] sm:$0xff]
    %v3800 = vld [vmem:[#allocation2 + $0x1ba] sm:$0xff]
    %v3801 = vld [vmem:[#allocation2 + $0x1c2] sm:$0xff]
    %v3802 = vld [vmem:[#allocation2 + $0x1ca] sm:$0xff]
    %v3803 = vld [vmem:[#allocation2 + $0x1d2] sm:$0xff]
    %v3804 = vld [vmem:[#allocation2 + $0x1da] sm:$0xff]
    %v3805 = vld [vmem:[#allocation2 + $0x1e2] sm:$0xff]
    %v3806 = vld [vmem:[#allocation2 + $0x1ea] sm:$0xff]
    %v3807 = vld [vmem:[#allocation2 + $0x1f2] sm:$0xff]
    %v3808 = vld [vmem:[#allocation2 + $0x1fa] sm:$0xff]
    %v3809 = vld [vmem:[#allocation2 + $0x202] sm:$0xff]
    %v3810 = vld [vmem:[#allocation2 + $0x20a] sm:$0xff]
    %v3811 = vld [vmem:[#allocation2 + $0x212] sm:$0xff]
    %v3812 = vld [vmem:[#allocation2 + $0x21a] sm:$0xff]
    %v3813 = vld [vmem:[#allocation2 + $0x222] sm:$0xff]
    %v3814 = vld [vmem:[#allocation2 + $0x22a] sm:$0xff]
    %v3815 = vld [vmem:[#allocation2 + $0x232] sm:$0xff]
    %v3816 = vld [vmem:[#allocation2 + $0x23a] sm:$0xff]
    %v3817 = vld [vmem:[#allocation2 + $0x242] sm:$0xff]
    %v3818 = vld [vmem:[#allocation2 + $0x24a] sm:$0xff]
    %v3819 = vld [vmem:[#allocation2 + $0x252] sm:$0xff]
    %v3820 = vld [vmem:[#allocation2 + $0x25a] sm:$0xff]
    %v3821 = vld [vmem:[#allocation2 + $0x262] sm:$0xff]
    %v3822 = vld [vmem:[#allocation2 + $0x26a] sm:$0xff]
    %v3823 = vld [vmem:[#allocation2 + $0x272] sm:$0xff]
    %v3824 = vld [vmem:[#allocation2 + $0x27a] sm:$0xff]
    %v3825 = vld [vmem:[#allocation2 + $0x282] sm:$0xff]
    %v3826 = vld [vmem:[#allocation2 + $0x28a] sm:$0xff]
    %v3827 = vld [vmem:[#allocation2 + $0x292] sm:$0xff]
    %v3828 = vld [vmem:[#allocation2 + $0x29a] sm:$0xff]
    %v3829 = vld [vmem:[#allocation2 + $0x2a2] sm:$0xff]
    %v3830 = vld [vmem:[#allocation2 + $0x2aa] sm:$0xff]
    %v3831 = vld [vmem:[#allocation2 + $0x2b2] sm:$0xff]
    %v3832 = vld [vmem:[#allocation2 + $0x2ba] sm:$0xff]
    %v3833 = vld [vmem:[#allocation2 + $0x2c2] sm:$0xff]
    %v3834 = vld [vmem:[#allocation2 + $0x2ca] sm:$0xff]
    %v3835 = vld [vmem:[#allocation2 + $0x2d2] sm:$0xff]
    %v3836 = vld [vmem:[#allocation2 + $0x2da] sm:$0xff]
    %v3837 = vld [vmem:[#allocation2 + $0x2e2] sm:$0xff]
    %v3838 = vld [vmem:[#allocation2 + $0x2ea] sm:$0xff]
    %v3839 = vld [vmem:[#allocation2 + $0x2f2] sm:$0xff]
    %v3840 = vld [vmem:[#allocation2 + $0x2fa] sm:$0xff]
    %v3841 = vld [vmem:[#allocation2 + $0x302] sm:$0xff]
    %v3842 = vld [vmem:[#allocation2 + $0x30a] sm:$0xff]
    %v3843 = vld [vmem:[#allocation2 + $0x312] sm:$0xff]
    %v3844 = vld [vmem:[#allocation2 + $0x31a] sm:$0xff]
    %v3845 = vld [vmem:[#allocation2 + $0x322] sm:$0xff]
    %v3846 = vld [vmem:[#allocation2 + $0x32a] sm:$0xff]
    %v3847 = vld [vmem:[#allocation2 + $0x332] sm:$0xff]
    %v3848 = vld [vmem:[#allocation2 + $0x33a] sm:$0xff]
    %s3849 = scalar_lea.vmem [#allocation5], 640
    %v3850 = vld [vmem:[%s3849] sm:$0xff]
    %v3851 = vld [vmem:[%s3849 + $0x8] sm:$0xff]
    %v3852 = vld [vmem:[%s3849 + $0x10] sm:$0xff]
    %v3853 = vld [vmem:[%s3849 + $0x18] sm:$0xff]
    %v3854 = vld [vmem:[%s3849 + $0x20] sm:$0xff]
    %v3855 = vld [vmem:[%s3849 + $0x28] sm:$0xff]
    %v3856 = vld [vmem:[%s3849 + $0x30] sm:$0xff]
    %v3857 = vld [vmem:[%s3849 + $0x38] sm:$0xff]
    %v3858 = vld [vmem:[%s3849 + $0x40] sm:$0xff]
    %v3859 = vld [vmem:[%s3849 + $0x48] sm:$0xff]
    %v3860 = vld [vmem:[%s3849 + $0x50] sm:$0xff]
    %v3861 = vld [vmem:[%s3849 + $0x58] sm:$0xff]
    %v3862 = vld [vmem:[%s3849 + $0x60] sm:$0xff]
    %v3863 = vld [vmem:[%s3849 + $0x68] sm:$0xff]
    %v3864 = vld [vmem:[%s3849 + $0x70] sm:$0xff]
    %v3865 = vld [vmem:[%s3849 + $0x78] sm:$0xff]
    %3866 = vmatprep.subr.mxu0 0.0
    %3867 = vmatpush1.msra.mxu0 %v3850
    %3868 = vmatprep.subr.mxu0 0.0
    %3869 = vmatpush1.msra.mxu0 %v3851
    %3870 = vmatprep.subr.mxu0 0.0
    %3871 = vmatpush1.msra.mxu0 %v3852
    %3872 = vmatprep.subr.mxu0 0.0
    %3873 = vmatpush1.msra.mxu0 %v3853
    %3874 = vmatprep.subr.mxu0 0.0
    %3875 = vmatpush1.msra.mxu0 %v3854
    %3876 = vmatprep.subr.mxu0 0.0
    %3877 = vmatpush1.msra.mxu0 %v3855
    %3878 = vmatprep.subr.mxu0 0.0
    %3879 = vmatpush1.msra.mxu0 %v3856
    %3880 = vmatprep.subr.mxu0 0.0
    %3881 = vmatpush1.msra.mxu0 %v3857
    %3882 = vmatprep.subr.mxu0 0.0
    %3883 = vmatpush1.msra.mxu0 %v3858
    %3884 = vmatprep.subr.mxu0 0.0
    %3885 = vmatpush1.msra.mxu0 %v3859
    %3886 = vmatprep.subr.mxu0 0.0
    %3887 = vmatpush1.msra.mxu0 %v3860
    %3888 = vmatprep.subr.mxu0 0.0
    %3889 = vmatpush1.msra.mxu0 %v3861
    %3890 = vmatprep.subr.mxu0 0.0
    %3891 = vmatpush1.msra.mxu0 %v3862
    %3892 = vmatprep.subr.mxu0 0.0
    %3893 = vmatpush1.msra.mxu0 %v3863
    %3894 = vmatprep.subr.mxu0 0.0
    %3895 = vmatpush1.msra.mxu0 %v3864
    %3896 = vmatprep.subr.mxu0 0.0
    %3897 = vmatpush1.msra.mxu0 %v3865
    %3898 = vmatprep.subr.mxu0 0.0
    %3899 = vmatpush1.msra.mxu0 0.0
    %3900 = vmatprep.subr.mxu0 0.0
    %3901 = vmatpush1.msra.mxu0 0.0
    %3902 = vmatprep.subr.mxu0 0.0
    %3903 = vmatpush1.msra.mxu0 0.0
    %3904 = vmatprep.subr.mxu0 0.0
    %3905 = vmatpush1.msra.mxu0 0.0
    %3906 = vmatprep.subr.mxu0 0.0
    %3907 = vmatpush1.msra.mxu0 0.0
    %3908 = vmatprep.subr.mxu0 0.0
    %3909 = vmatpush1.msra.mxu0 0.0
    %3910 = vmatprep.subr.mxu0 0.0
    %3911 = vmatpush1.msra.mxu0 0.0
    %3912 = vmatprep.subr.mxu0 0.0
    %3913 = vmatpush1.msra.mxu0 0.0
    %3914 = vmatprep.subr.mxu0 0.0
    %3915 = vmatpush1.msra.mxu0 0.0
    %3916 = vmatprep.subr.mxu0 0.0
    %3917 = vmatpush1.msra.mxu0 0.0
    %3918 = vmatprep.subr.mxu0 0.0
    %3919 = vmatpush1.msra.mxu0 0.0
    %3920 = vmatprep.subr.mxu0 0.0
    %3921 = vmatpush1.msra.mxu0 0.0
    %3922 = vmatprep.subr.mxu0 0.0
    %3923 = vmatpush1.msra.mxu0 0.0
    %3924 = vmatprep.subr.mxu0 0.0
    %3925 = vmatpush1.msra.mxu0 0.0
    %3926 = vmatprep.subr.mxu0 0.0
    %3927 = vmatpush1.msra.mxu0 0.0
    %3928 = vmatprep.subr.mxu0 0.0
    %3929 = vmatpush1.msra.mxu0 0.0
    %3930 = vmatprep.mubr.f32.mxu0 0.0
    %3931 = vmatmul.mubr.f32.gmra.mrb[0].mxu0 %v3749
    %v3932 = vpop.f32.mrb[0].mxu0
    %v3933 = vadd.f32 0.0, %v3932
    %v3934 = vpop.f32.mrb[0].mxu0
    %3935 = vmatprep.mubr.f32.mxu0 0.0
    %3936 = vmatmul.mubr.f32.gmra.mrb[0].mxu0 %v3750
    %v3937 = vpop.f32.mrb[0].mxu0
    %v3938 = vadd.f32 0.0, %v3937
    %v3939 = vpop.f32.mrb[0].mxu0
    %3940 = vmatprep.mubr.f32.mxu0 0.0
    %3941 = vmatmul.mubr.f32.gmra.mrb[0].mxu0 %v3751
    %v3942 = vpop.f32.mrb[0].mxu0
    %v3943 = vadd.f32 0.0, %v3942
    %v3944 = vpop.f32.mrb[0].mxu0
    %3945 = vmatprep.mubr.f32.mxu0 0.0
    %3946 = vmatmul.mubr.f32.gmra.mrb[0].mxu0 %v3752
    %v3947 = vpop.f32.mrb[0].mxu0
    %v3948 = vadd.f32 0.0, %v3947
    %v3949 = vpop.f32.mrb[0].mxu0
    %3950 = vmatprep.mubr.f32.mxu0 0.0
    %3951 = vmatmul.mubr.f32.gmra.mrb[0].mxu0 %v3753
    %v3952 = vpop.f32.mrb[0].mxu0
    %v3953 = vadd.f32 0.0, %v3952
    %v3954 = vpop.f32.mrb[0].mxu0
    %3955 = vmatprep.mubr.f32.mxu0 0.0
    %3956 = vmatmul.mubr.f32.gmra.mrb[0].mxu0 %v3754
    %v3957 = vpop.f32.mrb[0].mxu0
    %v3958 = vadd.f32 0.0, %v3957
    %v3959 = vpop.f32.mrb[0].mxu0
    %3960 = vmatprep.mubr.f32.mxu0 0.0
    %3961 = vmatmul.mubr.f32.gmra.mrb[0].mxu0 %v3755
    %v3962 = vpop.f32.mrb[0].mxu0
    %v3963 = vadd.f32 0.0, %v3962
    %v3964 = vpop.f32.mrb[0].mxu0
    %3965 = vmatprep.mubr.f32.mxu0 0.0
    %3966 = vmatmul.mubr.f32.gmra.mrb[0].mxu0 %v3756
    %v3967 = vpop.f32.mrb[0].mxu0
    %v3968 = vadd.f32 0.0, %v3967
    %v3969 = vpop.f32.mrb[0].mxu0
    %3970 = vmatprep.mubr.f32.mxu0 0.0
    %3971 = vmatmul.mubr.f32.gmra.mrb[0].mxu0 %v3757
    %v3972 = vpop.f32.mrb[0].mxu0
    %v3973 = vadd.f32 0.0, %v3972
    %v3974 = vpop.f32.mrb[0].mxu0
    %3975 = vmatprep.mubr.f32.mxu0 0.0
    %3976 = vmatmul.mubr.f32.gmra.mrb[0].mxu0 %v3758
    %v3977 = vpop.f32.mrb[0].mxu0
    %v3978 = vadd.f32 0.0, %v3977
    %v3979 = vpop.f32.mrb[0].mxu0
    %3980 = vmatprep.mubr.f32.mxu0 0.0
    %3981 = vmatmul.mubr.f32.gmra.mrb[0].mxu0 %v3759
    %v3982 = vpop.f32.mrb[0].mxu0
    %v3983 = vadd.f32 0.0, %v3982
    %v3984 = vpop.f32.mrb[0].mxu0
    %3985 = vmatprep.mubr.f32.mxu0 0.0
    %3986 = vmatmul.mubr.f32.gmra.mrb[0].mxu0 %v3760
    %v3987 = vpop.f32.mrb[0].mxu0
    %v3988 = vadd.f32 0.0, %v3987
    %v3989 = vpop.f32.mrb[0].mxu0
    %3990 = vmatprep.mubr.f32.mxu0 0.0
    %3991 = vmatmul.mubr.f32.gmra.mrb[0].mxu0 %v3761
    %v3992 = vpop.f32.mrb[0].mxu0
    %v3993 = vadd.f32 0.0, %v3992
    %v3994 = vpop.f32.mrb[0].mxu0
    %3995 = vmatprep.mubr.f32.mxu0 0.0
    %3996 = vmatmul.mubr.f32.gmra.mrb[0].mxu0 %v3762
    %v3997 = vpop.f32.mrb[0].mxu0
    %v3998 = vadd.f32 0.0, %v3997
    %v3999 = vpop.f32.mrb[0].mxu0
    %4000 = vmatprep.mubr.f32.mxu0 0.0
    %4001 = vmatmul.mubr.f32.gmra.mrb[0].mxu0 %v3763
    %v4002 = vpop.f32.mrb[0].mxu0
    %v4003 = vadd.f32 0.0, %v4002
    %v4004 = vpop.f32.mrb[0].mxu0
    %4005 = vmatprep.mubr.f32.mxu0 0.0
    %4006 = vmatmul.mubr.f32.gmra.mrb[0].mxu0 %v3764
    %v4007 = vpop.f32.mrb[0].mxu0
    %v4008 = vadd.f32 0.0, %v4007
    %v4009 = vpop.f32.mrb[0].mxu0
    %4010 = vmatprep.mubr.f32.mxu0 0.0
    %4011 = vmatmul.mubr.f32.gmra.mrb[0].mxu0 %v3765
    %v4012 = vpop.f32.mrb[0].mxu0
    %v4013 = vadd.f32 0.0, %v4012
    %v4014 = vpop.f32.mrb[0].mxu0
    %4015 = vmatprep.mubr.f32.mxu0 0.0
    %4016 = vmatmul.mubr.f32.gmra.mrb[0].mxu0 %v3766
    %v4017 = vpop.f32.mrb[0].mxu0
    %v4018 = vadd.f32 0.0, %v4017
    %v4019 = vpop.f32.mrb[0].mxu0
    %4020 = vmatprep.mubr.f32.mxu0 0.0
    %4021 = vmatmul.mubr.f32.gmra.mrb[0].mxu0 %v3767
    %v4022 = vpop.f32.mrb[0].mxu0
    %v4023 = vadd.f32 0.0, %v4022
    %v4024 = vpop.f32.mrb[0].mxu0
    %4025 = vmatprep.mubr.f32.mxu0 0.0
    %4026 = vmatmul.mubr.f32.gmra.mrb[0].mxu0 %v3768
    %v4027 = vpop.f32.mrb[0].mxu0
    %v4028 = vadd.f32 0.0, %v4027
    %v4029 = vpop.f32.mrb[0].mxu0
    %4030 = vmatprep.mubr.f32.mxu0 0.0
    %4031 = vmatmul.mubr.f32.gmra.mrb[0].mxu0 %v3769
    %v4032 = vpop.f32.mrb[0].mxu0
    %v4033 = vadd.f32 0.0, %v4032
    %v4034 = vpop.f32.mrb[0].mxu0
    %4035 = vmatprep.mubr.f32.mxu0 0.0
    %4036 = vmatmul.mubr.f32.gmra.mrb[0].mxu0 %v3770
    %v4037 = vpop.f32.mrb[0].mxu0
    %v4038 = vadd.f32 0.0, %v4037
    %v4039 = vpop.f32.mrb[0].mxu0
    %4040 = vmatprep.mubr.f32.mxu0 0.0
    %4041 = vmatmul.mubr.f32.gmra.mrb[0].mxu0 %v3771
    %v4042 = vpop.f32.mrb[0].mxu0
    %v4043 = vadd.f32 0.0, %v4042
    %v4044 = vpop.f32.mrb[0].mxu0
    %4045 = vmatprep.mubr.f32.mxu0 0.0
    %4046 = vmatmul.mubr.f32.gmra.mrb[0].mxu0 %v3772
    %v4047 = vpop.f32.mrb[0].mxu0
    %v4048 = vadd.f32 0.0, %v4047
    %v4049 = vpop.f32.mrb[0].mxu0
    %4050 = vmatprep.mubr.f32.mxu0 0.0
    %4051 = vmatmul.mubr.f32.gmra.mrb[0].mxu0 %v3773
    %v4052 = vpop.f32.mrb[0].mxu0
    %v4053 = vadd.f32 0.0, %v4052
    %v4054 = vpop.f32.mrb[0].mxu0
    %4055 = vmatprep.mubr.f32.mxu0 0.0
    %4056 = vmatmul.mubr.f32.gmra.mrb[0].mxu0 %v3774
    %v4057 = vpop.f32.mrb[0].mxu0
    %v4058 = vadd.f32 0.0, %v4057
    %v4059 = vpop.f32.mrb[0].mxu0
    %4060 = vmatprep.mubr.f32.mxu0 0.0
    %4061 = vmatmul.mubr.f32.gmra.mrb[0].mxu0 %v3775
    %v4062 = vpop.f32.mrb[0].mxu0
    %v4063 = vadd.f32 0.0, %v4062
    %v4064 = vpop.f32.mrb[0].mxu0
    %4065 = vmatprep.mubr.f32.mxu0 0.0
    %4066 = vmatmul.mubr.f32.gmra.mrb[0].mxu0 %v3776
    %v4067 = vpop.f32.mrb[0].mxu0
    %v4068 = vadd.f32 0.0, %v4067
    %v4069 = vpop.f32.mrb[0].mxu0
    %4070 = vmatprep.mubr.f32.mxu0 0.0
    %4071 = vmatmul.mubr.f32.gmra.mrb[0].mxu0 %v3777
    %v4072 = vpop.f32.mrb[0].mxu0
    %v4073 = vadd.f32 0.0, %v4072
    %v4074 = vpop.f32.mrb[0].mxu0
    %4075 = vmatprep.mubr.f32.mxu0 0.0
    %4076 = vmatmul.mubr.f32.gmra.mrb[0].mxu0 %v3778
    %v4077 = vpop.f32.mrb[0].mxu0
    %v4078 = vadd.f32 0.0, %v4077
    %v4079 = vpop.f32.mrb[0].mxu0
    %4080 = vmatprep.mubr.f32.mxu0 0.0
    %4081 = vmatmul.mubr.f32.gmra.mrb[0].mxu0 %v3779
    %v4082 = vpop.f32.mrb[0].mxu0
    %v4083 = vadd.f32 0.0, %v4082
    %v4084 = vpop.f32.mrb[0].mxu0
    %4085 = vmatprep.mubr.f32.mxu0 0.0
    %4086 = vmatmul.mubr.f32.gmra.mrb[0].mxu0 %v3780
    %v4087 = vpop.f32.mrb[0].mxu0
    %v4088 = vadd.f32 0.0, %v4087
    %v4089 = vpop.f32.mrb[0].mxu0
    %4090 = vmatprep.mubr.f32.mxu0 0.0
    %4091 = vmatmul.mubr.f32.gmra.mrb[0].mxu0 %v3781
    %v4092 = vpop.f32.mrb[0].mxu0
    %v4093 = vadd.f32 0.0, %v4092
    %v4094 = vpop.f32.mrb[0].mxu0
    %4095 = vmatprep.mubr.f32.mxu0 0.0
    %4096 = vmatmul.mubr.f32.gmra.mrb[0].mxu0 %v3782
    %v4097 = vpop.f32.mrb[0].mxu0
    %v4098 = vadd.f32 0.0, %v4097
    %v4099 = vpop.f32.mrb[0].mxu0
    %4100 = vmatprep.mubr.f32.mxu0 0.0
    %4101 = vmatmul.mubr.f32.gmra.mrb[0].mxu0 %v3783
    %v4102 = vpop.f32.mrb[0].mxu0
    %v4103 = vadd.f32 0.0, %v4102
    %v4104 = vpop.f32.mrb[0].mxu0
    %4105 = vmatprep.mubr.f32.mxu0 0.0
    %4106 = vmatmul.mubr.f32.gmra.mrb[0].mxu0 %v3784
    %v4107 = vpop.f32.mrb[0].mxu0
    %v4108 = vadd.f32 0.0, %v4107
    %v4109 = vpop.f32.mrb[0].mxu0
    %4110 = vmatprep.mubr.f32.mxu0 0.0
    %4111 = vmatmul.mubr.f32.gmra.mrb[0].mxu0 %v3785
    %v4112 = vpop.f32.mrb[0].mxu0
    %v4113 = vadd.f32 0.0, %v4112
    %v4114 = vpop.f32.mrb[0].mxu0
    %4115 = vmatprep.mubr.f32.mxu0 0.0
    %4116 = vmatmul.mubr.f32.gmra.mrb[0].mxu0 %v3786
    %v4117 = vpop.f32.mrb[0].mxu0
    %v4118 = vadd.f32 0.0, %v4117
    %v4119 = vpop.f32.mrb[0].mxu0
    %4120 = vmatprep.mubr.f32.mxu0 0.0
    %4121 = vmatmul.mubr.f32.gmra.mrb[0].mxu0 %v3787
    %v4122 = vpop.f32.mrb[0].mxu0
    %v4123 = vadd.f32 0.0, %v4122
    %v4124 = vpop.f32.mrb[0].mxu0
    %4125 = vmatprep.mubr.f32.mxu0 0.0
    %4126 = vmatmul.mubr.f32.gmra.mrb[0].mxu0 %v3788
    %v4127 = vpop.f32.mrb[0].mxu0
    %v4128 = vadd.f32 0.0, %v4127
    %v4129 = vpop.f32.mrb[0].mxu0
    %4130 = vmatprep.mubr.f32.mxu0 0.0
    %4131 = vmatmul.mubr.f32.gmra.mrb[0].mxu0 %v3789
    %v4132 = vpop.f32.mrb[0].mxu0
    %v4133 = vadd.f32 0.0, %v4132
    %v4134 = vpop.f32.mrb[0].mxu0
    %4135 = vmatprep.mubr.f32.mxu0 0.0
    %4136 = vmatmul.mubr.f32.gmra.mrb[0].mxu0 %v3790
    %v4137 = vpop.f32.mrb[0].mxu0
    %v4138 = vadd.f32 0.0, %v4137
    %v4139 = vpop.f32.mrb[0].mxu0
    %4140 = vmatprep.mubr.f32.mxu0 0.0
    %4141 = vmatmul.mubr.f32.gmra.mrb[0].mxu0 %v3791
    %v4142 = vpop.f32.mrb[0].mxu0
    %v4143 = vadd.f32 0.0, %v4142
    %v4144 = vpop.f32.mrb[0].mxu0
    %4145 = vmatprep.mubr.f32.mxu0 0.0
    %4146 = vmatmul.mubr.f32.gmra.mrb[0].mxu0 %v3792
    %v4147 = vpop.f32.mrb[0].mxu0
    %v4148 = vadd.f32 0.0, %v4147
    %v4149 = vpop.f32.mrb[0].mxu0
    %4150 = vmatprep.mubr.f32.mxu0 0.0
    %4151 = vmatmul.mubr.f32.gmra.mrb[0].mxu0 %v3793
    %v4152 = vpop.f32.mrb[0].mxu0
    %v4153 = vadd.f32 0.0, %v4152
    %v4154 = vpop.f32.mrb[0].mxu0
    %4155 = vmatprep.mubr.f32.mxu0 0.0
    %4156 = vmatmul.mubr.f32.gmra.mrb[0].mxu0 %v3794
    %v4157 = vpop.f32.mrb[0].mxu0
    %v4158 = vadd.f32 0.0, %v4157
    %v4159 = vpop.f32.mrb[0].mxu0
    %4160 = vmatprep.mubr.f32.mxu0 0.0
    %4161 = vmatmul.mubr.f32.gmra.mrb[0].mxu0 %v3795
    %v4162 = vpop.f32.mrb[0].mxu0
    %v4163 = vadd.f32 0.0, %v4162
    %v4164 = vpop.f32.mrb[0].mxu0
    %4165 = vmatprep.mubr.f32.mxu0 0.0
    %4166 = vmatmul.mubr.f32.gmra.mrb[0].mxu0 %v3796
    %v4167 = vpop.f32.mrb[0].mxu0
    %v4168 = vadd.f32 0.0, %v4167
    %v4169 = vpop.f32.mrb[0].mxu0
    %4170 = vmatprep.mubr.f32.mxu0 0.0
    %4171 = vmatmul.mubr.f32.gmra.mrb[0].mxu0 %v3797
    %v4172 = vpop.f32.mrb[0].mxu0
    %v4173 = vadd.f32 0.0, %v4172
    %v4174 = vpop.f32.mrb[0].mxu0
    %4175 = vmatprep.mubr.f32.mxu0 0.0
    %4176 = vmatmul.mubr.f32.gmra.mrb[0].mxu0 %v3798
    %v4177 = vpop.f32.mrb[0].mxu0
    %v4178 = vadd.f32 0.0, %v4177
    %v4179 = vpop.f32.mrb[0].mxu0
    %4180 = vmatprep.mubr.f32.mxu0 0.0
    %4181 = vmatmul.mubr.f32.gmra.mrb[0].mxu0 %v3799
    %v4182 = vpop.f32.mrb[0].mxu0
    %v4183 = vadd.f32 0.0, %v4182
    %v4184 = vpop.f32.mrb[0].mxu0
    %4185 = vmatprep.mubr.f32.mxu0 0.0
    %4186 = vmatmul.mubr.f32.gmra.mrb[0].mxu0 %v3800
    %v4187 = vpop.f32.mrb[0].mxu0
    %v4188 = vadd.f32 0.0, %v4187
    %v4189 = vpop.f32.mrb[0].mxu0
    %4190 = vmatprep.mubr.f32.mxu0 0.0
    %4191 = vmatmul.mubr.f32.gmra.mrb[0].mxu0 %v3801
    %v4192 = vpop.f32.mrb[0].mxu0
    %v4193 = vadd.f32 0.0, %v4192
    %v4194 = vpop.f32.mrb[0].mxu0
    %4195 = vmatprep.mubr.f32.mxu0 0.0
    %4196 = vmatmul.mubr.f32.gmra.mrb[0].mxu0 %v3802
    %v4197 = vpop.f32.mrb[0].mxu0
    %v4198 = vadd.f32 0.0, %v4197
    %v4199 = vpop.f32.mrb[0].mxu0
    %4200 = vmatprep.mubr.f32.mxu0 0.0
    %4201 = vmatmul.mubr.f32.gmra.mrb[0].mxu0 %v3803
    %v4202 = vpop.f32.mrb[0].mxu0
    %v4203 = vadd.f32 0.0, %v4202
    %v4204 = vpop.f32.mrb[0].mxu0
    %4205 = vmatprep.mubr.f32.mxu0 0.0
    %4206 = vmatmul.mubr.f32.gmra.mrb[0].mxu0 %v3804
    %v4207 = vpop.f32.mrb[0].mxu0
    %v4208 = vadd.f32 0.0, %v4207
    %v4209 = vpop.f32.mrb[0].mxu0
    %4210 = vmatprep.mubr.f32.mxu0 0.0
    %4211 = vmatmul.mubr.f32.gmra.mrb[0].mxu0 %v3805
    %v4212 = vpop.f32.mrb[0].mxu0
    %v4213 = vadd.f32 0.0, %v4212
    %v4214 = vpop.f32.mrb[0].mxu0
    %4215 = vmatprep.mubr.f32.mxu0 0.0
    %4216 = vmatmul.mubr.f32.gmra.mrb[0].mxu0 %v3806
    %v4217 = vpop.f32.mrb[0].mxu0
    %v4218 = vadd.f32 0.0, %v4217
    %v4219 = vpop.f32.mrb[0].mxu0
    %4220 = vmatprep.mubr.f32.mxu0 0.0
    %4221 = vmatmul.mubr.f32.gmra.mrb[0].mxu0 %v3807
    %v4222 = vpop.f32.mrb[0].mxu0
    %v4223 = vadd.f32 0.0, %v4222
    %v4224 = vpop.f32.mrb[0].mxu0
    %4225 = vmatprep.mubr.f32.mxu0 0.0
    %4226 = vmatmul.mubr.f32.gmra.mrb[0].mxu0 %v3808
    %v4227 = vpop.f32.mrb[0].mxu0
    %v4228 = vadd.f32 0.0, %v4227
    %v4229 = vpop.f32.mrb[0].mxu0
    %4230 = vmatprep.mubr.f32.mxu0 0.0
    %4231 = vmatmul.mubr.f32.gmra.mrb[0].mxu0 %v3809
    %v4232 = vpop.f32.mrb[0].mxu0
    %v4233 = vadd.f32 0.0, %v4232
    %v4234 = vpop.f32.mrb[0].mxu0
    %4235 = vmatprep.mubr.f32.mxu0 0.0
    %4236 = vmatmul.mubr.f32.gmra.mrb[0].mxu0 %v3810
    %v4237 = vpop.f32.mrb[0].mxu0
    %v4238 = vadd.f32 0.0, %v4237
    %v4239 = vpop.f32.mrb[0].mxu0
    %4240 = vmatprep.mubr.f32.mxu0 0.0
    %4241 = vmatmul.mubr.f32.gmra.mrb[0].mxu0 %v3811
    %v4242 = vpop.f32.mrb[0].mxu0
    %v4243 = vadd.f32 0.0, %v4242
    %v4244 = vpop.f32.mrb[0].mxu0
    %4245 = vmatprep.mubr.f32.mxu0 0.0
    %4246 = vmatmul.mubr.f32.gmra.mrb[0].mxu0 %v3812
    %v4247 = vpop.f32.mrb[0].mxu0
    %v4248 = vadd.f32 0.0, %v4247
    %v4249 = vpop.f32.mrb[0].mxu0
    %4250 = vmatprep.mubr.f32.mxu0 0.0
    %4251 = vmatmul.mubr.f32.gmra.mrb[0].mxu0 %v3813
    %v4252 = vpop.f32.mrb[0].mxu0
    %v4253 = vadd.f32 0.0, %v4252
    %v4254 = vpop.f32.mrb[0].mxu0
    %4255 = vmatprep.mubr.f32.mxu0 0.0
    %4256 = vmatmul.mubr.f32.gmra.mrb[0].mxu0 %v3814
    %v4257 = vpop.f32.mrb[0].mxu0
    %v4258 = vadd.f32 0.0, %v4257
    %v4259 = vpop.f32.mrb[0].mxu0
    %4260 = vmatprep.mubr.f32.mxu0 0.0
    %4261 = vmatmul.mubr.f32.gmra.mrb[0].mxu0 %v3815
    %v4262 = vpop.f32.mrb[0].mxu0
    %v4263 = vadd.f32 0.0, %v4262
    %v4264 = vpop.f32.mrb[0].mxu0
    %4265 = vmatprep.mubr.f32.mxu0 0.0
    %4266 = vmatmul.mubr.f32.gmra.mrb[0].mxu0 %v3816
    %v4267 = vpop.f32.mrb[0].mxu0
    %v4268 = vadd.f32 0.0, %v4267
    %v4269 = vpop.f32.mrb[0].mxu0
    %4270 = vmatprep.mubr.f32.mxu0 0.0
    %4271 = vmatmul.mubr.f32.gmra.mrb[0].mxu0 %v3817
    %v4272 = vpop.f32.mrb[0].mxu0
    %v4273 = vadd.f32 0.0, %v4272
    %v4274 = vpop.f32.mrb[0].mxu0
    %4275 = vmatprep.mubr.f32.mxu0 0.0
    %4276 = vmatmul.mubr.f32.gmra.mrb[0].mxu0 %v3818
    %v4277 = vpop.f32.mrb[0].mxu0
    %v4278 = vadd.f32 0.0, %v4277
    %v4279 = vpop.f32.mrb[0].mxu0
    %4280 = vmatprep.mubr.f32.mxu0 0.0
    %4281 = vmatmul.mubr.f32.gmra.mrb[0].mxu0 %v3819
    %v4282 = vpop.f32.mrb[0].mxu0
    %v4283 = vadd.f32 0.0, %v4282
    %v4284 = vpop.f32.mrb[0].mxu0
    %4285 = vmatprep.mubr.f32.mxu0 0.0
    %4286 = vmatmul.mubr.f32.gmra.mrb[0].mxu0 %v3820
    %v4287 = vpop.f32.mrb[0].mxu0
    %v4288 = vadd.f32 0.0, %v4287
    %v4289 = vpop.f32.mrb[0].mxu0
    %4290 = vmatprep.mubr.f32.mxu0 0.0
    %4291 = vmatmul.mubr.f32.gmra.mrb[0].mxu0 %v3821
    %v4292 = vpop.f32.mrb[0].mxu0
    %v4293 = vadd.f32 0.0, %v4292
    %v4294 = vpop.f32.mrb[0].mxu0
    %4295 = vmatprep.mubr.f32.mxu0 0.0
    %4296 = vmatmul.mubr.f32.gmra.mrb[0].mxu0 %v3822
    %v4297 = vpop.f32.mrb[0].mxu0
    %v4298 = vadd.f32 0.0, %v4297
    %v4299 = vpop.f32.mrb[0].mxu0
    %4300 = vmatprep.mubr.f32.mxu0 0.0
    %4301 = vmatmul.mubr.f32.gmra.mrb[0].mxu0 %v3823
    %v4302 = vpop.f32.mrb[0].mxu0
    %v4303 = vadd.f32 0.0, %v4302
    %v4304 = vpop.f32.mrb[0].mxu0
    %4305 = vmatprep.mubr.f32.mxu0 0.0
    %4306 = vmatmul.mubr.f32.gmra.mrb[0].mxu0 %v3824
    %v4307 = vpop.f32.mrb[0].mxu0
    %v4308 = vadd.f32 0.0, %v4307
    %v4309 = vpop.f32.mrb[0].mxu0
    %4310 = vmatprep.mubr.f32.mxu0 0.0
    %4311 = vmatmul.mubr.f32.gmra.mrb[0].mxu0 %v3825
    %v4312 = vpop.f32.mrb[0].mxu0
    %v4313 = vadd.f32 0.0, %v4312
    %v4314 = vpop.f32.mrb[0].mxu0
    %4315 = vmatprep.mubr.f32.mxu0 0.0
    %4316 = vmatmul.mubr.f32.gmra.mrb[0].mxu0 %v3826
    %v4317 = vpop.f32.mrb[0].mxu0
    %v4318 = vadd.f32 0.0, %v4317
    %v4319 = vpop.f32.mrb[0].mxu0
    %4320 = vmatprep.mubr.f32.mxu0 0.0
    %4321 = vmatmul.mubr.f32.gmra.mrb[0].mxu0 %v3827
    %v4322 = vpop.f32.mrb[0].mxu0
    %v4323 = vadd.f32 0.0, %v4322
    %v4324 = vpop.f32.mrb[0].mxu0
    %4325 = vmatprep.mubr.f32.mxu0 0.0
    %4326 = vmatmul.mubr.f32.gmra.mrb[0].mxu0 %v3828
    %v4327 = vpop.f32.mrb[0].mxu0
    %v4328 = vadd.f32 0.0, %v4327
    %v4329 = vpop.f32.mrb[0].mxu0
    %4330 = vmatprep.mubr.f32.mxu0 0.0
    %4331 = vmatmul.mubr.f32.gmra.mrb[0].mxu0 %v3829
    %v4332 = vpop.f32.mrb[0].mxu0
    %v4333 = vadd.f32 0.0, %v4332
    %v4334 = vpop.f32.mrb[0].mxu0
    %4335 = vmatprep.mubr.f32.mxu0 0.0
    %4336 = vmatmul.mubr.f32.gmra.mrb[0].mxu0 %v3830
    %v4337 = vpop.f32.mrb[0].mxu0
    %v4338 = vadd.f32 0.0, %v4337
    %v4339 = vpop.f32.mrb[0].mxu0
    %4340 = vmatprep.mubr.f32.mxu0 0.0
    %4341 = vmatmul.mubr.f32.gmra.mrb[0].mxu0 %v3831
    %v4342 = vpop.f32.mrb[0].mxu0
    %v4343 = vadd.f32 0.0, %v4342
    %v4344 = vpop.f32.mrb[0].mxu0
    %4345 = vmatprep.mubr.f32.mxu0 0.0
    %4346 = vmatmul.mubr.f32.gmra.mrb[0].mxu0 %v3832
    %v4347 = vpop.f32.mrb[0].mxu0
    %v4348 = vadd.f32 0.0, %v4347
    %v4349 = vpop.f32.mrb[0].mxu0
    %4350 = vmatprep.mubr.f32.mxu0 0.0
    %4351 = vmatmul.mubr.f32.gmra.mrb[0].mxu0 %v3833
    %v4352 = vpop.f32.mrb[0].mxu0
    %v4353 = vadd.f32 0.0, %v4352
    %v4354 = vpop.f32.mrb[0].mxu0
    %4355 = vmatprep.mubr.f32.mxu0 0.0
    %4356 = vmatmul.mubr.f32.gmra.mrb[0].mxu0 %v3834
    %v4357 = vpop.f32.mrb[0].mxu0
    %v4358 = vadd.f32 0.0, %v4357
    %v4359 = vpop.f32.mrb[0].mxu0
    %4360 = vmatprep.mubr.f32.mxu0 0.0
    %4361 = vmatmul.mubr.f32.gmra.mrb[0].mxu0 %v3835
    %v4362 = vpop.f32.mrb[0].mxu0
    %v4363 = vadd.f32 0.0, %v4362
    %v4364 = vpop.f32.mrb[0].mxu0
    %4365 = vmatprep.mubr.f32.mxu0 0.0
    %4366 = vmatmul.mubr.f32.gmra.mrb[0].mxu0 %v3836
    %v4367 = vpop.f32.mrb[0].mxu0
    %v4368 = vadd.f32 0.0, %v4367
    %v4369 = vpop.f32.mrb[0].mxu0
    %4370 = vmatprep.mubr.f32.mxu0 0.0
    %4371 = vmatmul.mubr.f32.gmra.mrb[0].mxu0 %v3837
    %v4372 = vpop.f32.mrb[0].mxu0
    %v4373 = vadd.f32 0.0, %v4372
    %v4374 = vpop.f32.mrb[0].mxu0
    %4375 = vmatprep.mubr.f32.mxu0 0.0
    %4376 = vmatmul.mubr.f32.gmra.mrb[0].mxu0 %v3838
    %v4377 = vpop.f32.mrb[0].mxu0
    %v4378 = vadd.f32 0.0, %v4377
    %v4379 = vpop.f32.mrb[0].mxu0
    %4380 = vmatprep.mubr.f32.mxu0 0.0
    %4381 = vmatmul.mubr.f32.gmra.mrb[0].mxu0 %v3839
    %v4382 = vpop.f32.mrb[0].mxu0
    %v4383 = vadd.f32 0.0, %v4382
    %v4384 = vpop.f32.mrb[0].mxu0
    %4385 = vmatprep.mubr.f32.mxu0 0.0
    %4386 = vmatmul.mubr.f32.gmra.mrb[0].mxu0 %v3840
    %v4387 = vpop.f32.mrb[0].mxu0
    %v4388 = vadd.f32 0.0, %v4387
    %v4389 = vpop.f32.mrb[0].mxu0
    %4390 = vmatprep.mubr.f32.mxu0 0.0
    %4391 = vmatmul.mubr.f32.gmra.mrb[0].mxu0 %v3841
    %v4392 = vpop.f32.mrb[0].mxu0
    %v4393 = vadd.f32 0.0, %v4392
    %v4394 = vpop.f32.mrb[0].mxu0
    %4395 = vmatprep.mubr.f32.mxu0 0.0
    %4396 = vmatmul.mubr.f32.gmra.mrb[0].mxu0 %v3842
    %v4397 = vpop.f32.mrb[0].mxu0
    %v4398 = vadd.f32 0.0, %v4397
    %v4399 = vpop.f32.mrb[0].mxu0
    %4400 = vmatprep.mubr.f32.mxu0 0.0
    %4401 = vmatmul.mubr.f32.gmra.mrb[0].mxu0 %v3843
    %v4402 = vpop.f32.mrb[0].mxu0
    %v4403 = vadd.f32 0.0, %v4402
    %v4404 = vpop.f32.mrb[0].mxu0
    %4405 = vmatprep.mubr.f32.mxu0 0.0
    %4406 = vmatmul.mubr.f32.gmra.mrb[0].mxu0 %v3844
    %v4407 = vpop.f32.mrb[0].mxu0
    %v4408 = vadd.f32 0.0, %v4407
    %v4409 = vpop.f32.mrb[0].mxu0
    %4410 = vmatprep.mubr.f32.mxu0 0.0
    %4411 = vmatmul.mubr.f32.gmra.mrb[0].mxu0 %v3845
    %v4412 = vpop.f32.mrb[0].mxu0
    %v4413 = vadd.f32 0.0, %v4412
    %v4414 = vpop.f32.mrb[0].mxu0
    %4415 = vmatprep.mubr.f32.mxu0 0.0
    %4416 = vmatmul.mubr.f32.gmra.mrb[0].mxu0 %v3846
    %v4417 = vpop.f32.mrb[0].mxu0
    %v4418 = vadd.f32 0.0, %v4417
    %v4419 = vpop.f32.mrb[0].mxu0
    %4420 = vmatprep.mubr.f32.mxu0 0.0
    %4421 = vmatmul.mubr.f32.gmra.mrb[0].mxu0 %v3847
    %v4422 = vpop.f32.mrb[0].mxu0
    %v4423 = vadd.f32 0.0, %v4422
    %v4424 = vpop.f32.mrb[0].mxu0
    %4425 = vmatprep.mubr.f32.mxu0 0.0
    %4426 = vmatmul.mubr.f32.gmra.mrb[0].mxu0 %v3848
    %v4427 = vpop.f32.mrb[0].mxu0
    %v4428 = vadd.f32 0.0, %v4427
    %v4429 = vpop.f32.mrb[0].mxu0
    %4430 = vdwg.mxu0
    %v4431 = vadd.f32 %v3649, %v3933
    %v4432 = vadd.f32 %v3650, %v3938
    %v4433 = vadd.f32 %v3651, %v3943
    %v4434 = vadd.f32 %v3652, %v3948
    %v4435 = vadd.f32 %v3653, %v3953
    %v4436 = vadd.f32 %v3654, %v3958
    %v4437 = vadd.f32 %v3655, %v3963
    %v4438 = vadd.f32 %v3656, %v3968
    %v4439 = vadd.f32 %v3657, %v3973
    %v4440 = vadd.f32 %v3658, %v3978
    %v4441 = vadd.f32 %v3659, %v3983
    %v4442 = vadd.f32 %v3660, %v3988
    %v4443 = vadd.f32 %v3661, %v3993
    %v4444 = vadd.f32 %v3662, %v3998
    %v4445 = vadd.f32 %v3663, %v4003
    %v4446 = vadd.f32 %v3664, %v4008
    %v4447 = vadd.f32 %v3665, %v4013
    %v4448 = vadd.f32 %v3666, %v4018
    %v4449 = vadd.f32 %v3667, %v4023
    %v4450 = vadd.f32 %v3668, %v4028
    %v4451 = vadd.f32 %v3669, %v4033
    %v4452 = vadd.f32 %v3670, %v4038
    %v4453 = vadd.f32 %v3671, %v4043
    %v4454 = vadd.f32 %v3672, %v4048
    %v4455 = vadd.f32 %v3673, %v4053
    %v4456 = vadd.f32 %v3674, %v4058
    %v4457 = vadd.f32 %v3675, %v4063
    %v4458 = vadd.f32 %v3676, %v4068
    %v4459 = vadd.f32 %v3677, %v4073
    %v4460 = vadd.f32 %v3678, %v4078
    %v4461 = vadd.f32 %v3679, %v4083
    %v4462 = vadd.f32 %v3680, %v4088
    %v4463 = vadd.f32 %v3681, %v4093
    %v4464 = vadd.f32 %v3682, %v4098
    %v4465 = vadd.f32 %v3683, %v4103
    %v4466 = vadd.f32 %v3684, %v4108
    %v4467 = vadd.f32 %v3685, %v4113
    %v4468 = vadd.f32 %v3686, %v4118
    %v4469 = vadd.f32 %v3687, %v4123
    %v4470 = vadd.f32 %v3688, %v4128
    %v4471 = vadd.f32 %v3689, %v4133
    %v4472 = vadd.f32 %v3690, %v4138
    %v4473 = vadd.f32 %v3691, %v4143
    %v4474 = vadd.f32 %v3692, %v4148
    %v4475 = vadd.f32 %v3693, %v4153
    %v4476 = vadd.f32 %v3694, %v4158
    %v4477 = vadd.f32 %v3695, %v4163
    %v4478 = vadd.f32 %v3696, %v4168
    %v4479 = vadd.f32 %v3697, %v4173
    %v4480 = vadd.f32 %v3698, %v4178
    %v4481 = vadd.f32 %v3699, %v4183
    %v4482 = vadd.f32 %v3700, %v4188
    %v4483 = vadd.f32 %v3701, %v4193
    %v4484 = vadd.f32 %v3702, %v4198
    %v4485 = vadd.f32 %v3703, %v4203
    %v4486 = vadd.f32 %v3704, %v4208
    %v4487 = vadd.f32 %v3705, %v4213
    %v4488 = vadd.f32 %v3706, %v4218
    %v4489 = vadd.f32 %v3707, %v4223
    %v4490 = vadd.f32 %v3708, %v4228
    %v4491 = vadd.f32 %v3709, %v4233
    %v4492 = vadd.f32 %v3710, %v4238
    %v4493 = vadd.f32 %v3711, %v4243
    %v4494 = vadd.f32 %v3712, %v4248
    %v4495 = vadd.f32 %v3713, %v4253
    %v4496 = vadd.f32 %v3714, %v4258
    %v4497 = vadd.f32 %v3715, %v4263
    %v4498 = vadd.f32 %v3716, %v4268
    %v4499 = vadd.f32 %v3717, %v4273
    %v4500 = vadd.f32 %v3718, %v4278
    %v4501 = vadd.f32 %v3719, %v4283
    %v4502 = vadd.f32 %v3720, %v4288
    %v4503 = vadd.f32 %v3721, %v4293
    %v4504 = vadd.f32 %v3722, %v4298
    %v4505 = vadd.f32 %v3723, %v4303
    %v4506 = vadd.f32 %v3724, %v4308
    %v4507 = vadd.f32 %v3725, %v4313
    %v4508 = vadd.f32 %v3726, %v4318
    %v4509 = vadd.f32 %v3727, %v4323
    %v4510 = vadd.f32 %v3728, %v4328
    %v4511 = vadd.f32 %v3729, %v4333
    %v4512 = vadd.f32 %v3730, %v4338
    %v4513 = vadd.f32 %v3731, %v4343
    %v4514 = vadd.f32 %v3732, %v4348
    %v4515 = vadd.f32 %v3733, %v4353
    %v4516 = vadd.f32 %v3734, %v4358
    %v4517 = vadd.f32 %v3735, %v4363
    %v4518 = vadd.f32 %v3736, %v4368
    %v4519 = vadd.f32 %v3737, %v4373
    %v4520 = vadd.f32 %v3738, %v4378
    %v4521 = vadd.f32 %v3739, %v4383
    %v4522 = vadd.f32 %v3740, %v4388
    %v4523 = vadd.f32 %v3741, %v4393
    %v4524 = vadd.f32 %v3742, %v4398
    %v4525 = vadd.f32 %v3743, %v4403
    %v4526 = vadd.f32 %v3744, %v4408
    %v4527 = vadd.f32 %v3745, %v4413
    %v4528 = vadd.f32 %v3746, %v4418
    %v4529 = vadd.f32 %v3747, %v4423
    %v4530 = vadd.f32 %v3748, %v4428
    %v4531 = vld [vmem:[#allocation2 + $0x40] sm:$0xff]
    %v4532 = vld [vmem:[#allocation2 + $0x48] sm:$0xff]
    %v4533 = vld [vmem:[#allocation2 + $0x50] sm:$0xff]
    %v4534 = vld [vmem:[#allocation2 + $0x58] sm:$0xff]
    %v4535 = vld [vmem:[#allocation2 + $0x60] sm:$0xff]
    %v4536 = vld [vmem:[#allocation2 + $0x68] sm:$0xff]
    %v4537 = vld [vmem:[#allocation2 + $0x70] sm:$0xff]
    %v4538 = vld [vmem:[#allocation2 + $0x78] sm:$0xff]
    %v4539 = vld [vmem:[#allocation2 + $0x80] sm:$0xff]
    %v4540 = vld [vmem:[#allocation2 + $0x88] sm:$0xff]
    %v4541 = vld [vmem:[#allocation2 + $0x90] sm:$0xff]
    %v4542 = vld [vmem:[#allocation2 + $0x98] sm:$0xff]
    %v4543 = vld [vmem:[#allocation2 + $0xa0] sm:$0xff]
    %v4544 = vld [vmem:[#allocation2 + $0xa8] sm:$0xff]
    %v4545 = vld [vmem:[#allocation2 + $0xb0] sm:$0xff]
    %v4546 = vld [vmem:[#allocation2 + $0xb8] sm:$0xff]
    %v4547 = vld [vmem:[#allocation2 + $0xc0] sm:$0xff]
    %v4548 = vld [vmem:[#allocation2 + $0xc8] sm:$0xff]
    %v4549 = vld [vmem:[#allocation2 + $0xd0] sm:$0xff]
    %v4550 = vld [vmem:[#allocation2 + $0xd8] sm:$0xff]
    %v4551 = vld [vmem:[#allocation2 + $0xe0] sm:$0xff]
    %v4552 = vld [vmem:[#allocation2 + $0xe8] sm:$0xff]
    %v4553 = vld [vmem:[#allocation2 + $0xf0] sm:$0xff]
    %v4554 = vld [vmem:[#allocation2 + $0xf8] sm:$0xff]
    %v4555 = vld [vmem:[#allocation2 + $0x100] sm:$0xff]
    %v4556 = vld [vmem:[#allocation2 + $0x108] sm:$0xff]
    %v4557 = vld [vmem:[#allocation2 + $0x110] sm:$0xff]
    %v4558 = vld [vmem:[#allocation2 + $0x118] sm:$0xff]
    %v4559 = vld [vmem:[#allocation2 + $0x120] sm:$0xff]
    %v4560 = vld [vmem:[#allocation2 + $0x128] sm:$0xff]
    %v4561 = vld [vmem:[#allocation2 + $0x130] sm:$0xff]
    %v4562 = vld [vmem:[#allocation2 + $0x138] sm:$0xff]
    %v4563 = vld [vmem:[#allocation2 + $0x140] sm:$0xff]
    %v4564 = vld [vmem:[#allocation2 + $0x148] sm:$0xff]
    %v4565 = vld [vmem:[#allocation2 + $0x150] sm:$0xff]
    %v4566 = vld [vmem:[#allocation2 + $0x158] sm:$0xff]
    %v4567 = vld [vmem:[#allocation2 + $0x160] sm:$0xff]
    %v4568 = vld [vmem:[#allocation2 + $0x168] sm:$0xff]
    %v4569 = vld [vmem:[#allocation2 + $0x170] sm:$0xff]
    %v4570 = vld [vmem:[#allocation2 + $0x178] sm:$0xff]
    %v4571 = vld [vmem:[#allocation2 + $0x180] sm:$0xff]
    %v4572 = vld [vmem:[#allocation2 + $0x188] sm:$0xff]
    %v4573 = vld [vmem:[#allocation2 + $0x190] sm:$0xff]
    %v4574 = vld [vmem:[#allocation2 + $0x198] sm:$0xff]
    %v4575 = vld [vmem:[#allocation2 + $0x1a0] sm:$0xff]
    %v4576 = vld [vmem:[#allocation2 + $0x1a8] sm:$0xff]
    %v4577 = vld [vmem:[#allocation2 + $0x1b0] sm:$0xff]
    %v4578 = vld [vmem:[#allocation2 + $0x1b8] sm:$0xff]
    %v4579 = vld [vmem:[#allocation2 + $0x1c0] sm:$0xff]
    %v4580 = vld [vmem:[#allocation2 + $0x1c8] sm:$0xff]
    %v4581 = vld [vmem:[#allocation2 + $0x1d0] sm:$0xff]
    %v4582 = vld [vmem:[#allocation2 + $0x1d8] sm:$0xff]
    %v4583 = vld [vmem:[#allocation2 + $0x1e0] sm:$0xff]
    %v4584 = vld [vmem:[#allocation2 + $0x1e8] sm:$0xff]
    %v4585 = vld [vmem:[#allocation2 + $0x1f0] sm:$0xff]
    %v4586 = vld [vmem:[#allocation2 + $0x1f8] sm:$0xff]
    %v4587 = vld [vmem:[#allocation2 + $0x200] sm:$0xff]
    %v4588 = vld [vmem:[#allocation2 + $0x208] sm:$0xff]
    %v4589 = vld [vmem:[#allocation2 + $0x210] sm:$0xff]
    %v4590 = vld [vmem:[#allocation2 + $0x218] sm:$0xff]
    %v4591 = vld [vmem:[#allocation2 + $0x220] sm:$0xff]
    %v4592 = vld [vmem:[#allocation2 + $0x228] sm:$0xff]
    %v4593 = vld [vmem:[#allocation2 + $0x230] sm:$0xff]
    %v4594 = vld [vmem:[#allocation2 + $0x238] sm:$0xff]
    %v4595 = vld [vmem:[#allocation2 + $0x240] sm:$0xff]
    %v4596 = vld [vmem:[#allocation2 + $0x248] sm:$0xff]
    %v4597 = vld [vmem:[#allocation2 + $0x250] sm:$0xff]
    %v4598 = vld [vmem:[#allocation2 + $0x258] sm:$0xff]
    %v4599 = vld [vmem:[#allocation2 + $0x260] sm:$0xff]
    %v4600 = vld [vmem:[#allocation2 + $0x268] sm:$0xff]
    %v4601 = vld [vmem:[#allocation2 + $0x270] sm:$0xff]
    %v4602 = vld [vmem:[#allocation2 + $0x278] sm:$0xff]
    %v4603 = vld [vmem:[#allocation2 + $0x280] sm:$0xff]
    %v4604 = vld [vmem:[#allocation2 + $0x288] sm:$0xff]
    %v4605 = vld [vmem:[#allocation2 + $0x290] sm:$0xff]
    %v4606 = vld [vmem:[#allocation2 + $0x298] sm:$0xff]
    %v4607 = vld [vmem:[#allocation2 + $0x2a0] sm:$0xff]
    %v4608 = vld [vmem:[#allocation2 + $0x2a8] sm:$0xff]
    %v4609 = vld [vmem:[#allocation2 + $0x2b0] sm:$0xff]
    %v4610 = vld [vmem:[#allocation2 + $0x2b8] sm:$0xff]
    %v4611 = vld [vmem:[#allocation2 + $0x2c0] sm:$0xff]
    %v4612 = vld [vmem:[#allocation2 + $0x2c8] sm:$0xff]
    %v4613 = vld [vmem:[#allocation2 + $0x2d0] sm:$0xff]
    %v4614 = vld [vmem:[#allocation2 + $0x2d8] sm:$0xff]
    %v4615 = vld [vmem:[#allocation2 + $0x2e0] sm:$0xff]
    %v4616 = vld [vmem:[#allocation2 + $0x2e8] sm:$0xff]
    %v4617 = vld [vmem:[#allocation2 + $0x2f0] sm:$0xff]
    %v4618 = vld [vmem:[#allocation2 + $0x2f8] sm:$0xff]
    %v4619 = vld [vmem:[#allocation2 + $0x300] sm:$0xff]
    %v4620 = vld [vmem:[#allocation2 + $0x308] sm:$0xff]
    %v4621 = vld [vmem:[#allocation2 + $0x310] sm:$0xff]
    %v4622 = vld [vmem:[#allocation2 + $0x318] sm:$0xff]
    %v4623 = vld [vmem:[#allocation2 + $0x320] sm:$0xff]
    %v4624 = vld [vmem:[#allocation2 + $0x328] sm:$0xff]
    %v4625 = vld [vmem:[#allocation2 + $0x330] sm:$0xff]
    %v4626 = vld [vmem:[#allocation2 + $0x338] sm:$0xff]
    %v4627 = vld [vmem:[#allocation2 + $0x340] sm:$0xff]
    %v4628 = vld [vmem:[#allocation2 + $0x348] sm:$0xff]
    %v4629 = vld [vmem:[#allocation2 + $0x350] sm:$0xff]
    %v4630 = vld [vmem:[#allocation2 + $0x358] sm:$0xff]
    %s4631 = scalar_lea.vmem [#allocation5], 768
    %v4632 = vld [vmem:[%s4631] sm:$0xff]
    %v4633 = vld [vmem:[%s4631 + $0x8] sm:$0xff]
    %v4634 = vld [vmem:[%s4631 + $0x10] sm:$0xff]
    %v4635 = vld [vmem:[%s4631 + $0x18] sm:$0xff]
    %v4636 = vld [vmem:[%s4631 + $0x20] sm:$0xff]
    %v4637 = vld [vmem:[%s4631 + $0x28] sm:$0xff]
    %v4638 = vld [vmem:[%s4631 + $0x30] sm:$0xff]
    %v4639 = vld [vmem:[%s4631 + $0x38] sm:$0xff]
    %v4640 = vld [vmem:[%s4631 + $0x40] sm:$0xff]
    %v4641 = vld [vmem:[%s4631 + $0x48] sm:$0xff]
    %v4642 = vld [vmem:[%s4631 + $0x50] sm:$0xff]
    %v4643 = vld [vmem:[%s4631 + $0x58] sm:$0xff]
    %v4644 = vld [vmem:[%s4631 + $0x60] sm:$0xff]
    %v4645 = vld [vmem:[%s4631 + $0x68] sm:$0xff]
    %v4646 = vld [vmem:[%s4631 + $0x70] sm:$0xff]
    %v4647 = vld [vmem:[%s4631 + $0x78] sm:$0xff]
    %4648 = vmatprep.subr.mxu0 0.0
    %4649 = vmatpush1.msra.mxu0 %v4632
    %4650 = vmatprep.subr.mxu0 0.0
    %4651 = vmatpush1.msra.mxu0 %v4633
    %4652 = vmatprep.subr.mxu0 0.0
    %4653 = vmatpush1.msra.mxu0 %v4634
    %4654 = vmatprep.subr.mxu0 0.0
    %4655 = vmatpush1.msra.mxu0 %v4635
    %4656 = vmatprep.subr.mxu0 0.0
    %4657 = vmatpush1.msra.mxu0 %v4636
    %4658 = vmatprep.subr.mxu0 0.0
    %4659 = vmatpush1.msra.mxu0 %v4637
    %4660 = vmatprep.subr.mxu0 0.0
    %4661 = vmatpush1.msra.mxu0 %v4638
    %4662 = vmatprep.subr.mxu0 0.0
    %4663 = vmatpush1.msra.mxu0 %v4639
    %4664 = vmatprep.subr.mxu0 0.0
    %4665 = vmatpush1.msra.mxu0 %v4640
    %4666 = vmatprep.subr.mxu0 0.0
    %4667 = vmatpush1.msra.mxu0 %v4641
    %4668 = vmatprep.subr.mxu0 0.0
    %4669 = vmatpush1.msra.mxu0 %v4642
    %4670 = vmatprep.subr.mxu0 0.0
    %4671 = vmatpush1.msra.mxu0 %v4643
    %4672 = vmatprep.subr.mxu0 0.0
    %4673 = vmatpush1.msra.mxu0 %v4644
    %4674 = vmatprep.subr.mxu0 0.0
    %4675 = vmatpush1.msra.mxu0 %v4645
    %4676 = vmatprep.subr.mxu0 0.0
    %4677 = vmatpush1.msra.mxu0 %v4646
    %4678 = vmatprep.subr.mxu0 0.0
    %4679 = vmatpush1.msra.mxu0 %v4647
    %4680 = vmatprep.subr.mxu0 0.0
    %4681 = vmatpush1.msra.mxu0 0.0
    %4682 = vmatprep.subr.mxu0 0.0
    %4683 = vmatpush1.msra.mxu0 0.0
    %4684 = vmatprep.subr.mxu0 0.0
    %4685 = vmatpush1.msra.mxu0 0.0
    %4686 = vmatprep.subr.mxu0 0.0
    %4687 = vmatpush1.msra.mxu0 0.0
    %4688 = vmatprep.subr.mxu0 0.0
    %4689 = vmatpush1.msra.mxu0 0.0
    %4690 = vmatprep.subr.mxu0 0.0
    %4691 = vmatpush1.msra.mxu0 0.0
    %4692 = vmatprep.subr.mxu0 0.0
    %4693 = vmatpush1.msra.mxu0 0.0
    %4694 = vmatprep.subr.mxu0 0.0
    %4695 = vmatpush1.msra.mxu0 0.0
    %4696 = vmatprep.subr.mxu0 0.0
    %4697 = vmatpush1.msra.mxu0 0.0
    %4698 = vmatprep.subr.mxu0 0.0
    %4699 = vmatpush1.msra.mxu0 0.0
    %4700 = vmatprep.subr.mxu0 0.0
    %4701 = vmatpush1.msra.mxu0 0.0
    %4702 = vmatprep.subr.mxu0 0.0
    %4703 = vmatpush1.msra.mxu0 0.0
    %4704 = vmatprep.subr.mxu0 0.0
    %4705 = vmatpush1.msra.mxu0 0.0
    %4706 = vmatprep.subr.mxu0 0.0
    %4707 = vmatpush1.msra.mxu0 0.0
    %4708 = vmatprep.subr.mxu0 0.0
    %4709 = vmatpush1.msra.mxu0 0.0
    %4710 = vmatprep.subr.mxu0 0.0
    %4711 = vmatpush1.msra.mxu0 0.0
    %4712 = vmatprep.mubr.f32.mxu0 0.0
    %4713 = vmatmul.mubr.f32.gmra.mrb[0].mxu0 %v4531
    %v4714 = vpop.f32.mrb[0].mxu0
    %v4715 = vadd.f32 0.0, %v4714
    %v4716 = vpop.f32.mrb[0].mxu0
    %4717 = vmatprep.mubr.f32.mxu0 0.0
    %4718 = vmatmul.mubr.f32.gmra.mrb[0].mxu0 %v4532
    %v4719 = vpop.f32.mrb[0].mxu0
    %v4720 = vadd.f32 0.0, %v4719
    %v4721 = vpop.f32.mrb[0].mxu0
    %4722 = vmatprep.mubr.f32.mxu0 0.0
    %4723 = vmatmul.mubr.f32.gmra.mrb[0].mxu0 %v4533
    %v4724 = vpop.f32.mrb[0].mxu0
    %v4725 = vadd.f32 0.0, %v4724
    %v4726 = vpop.f32.mrb[0].mxu0
    %4727 = vmatprep.mubr.f32.mxu0 0.0
    %4728 = vmatmul.mubr.f32.gmra.mrb[0].mxu0 %v4534
    %v4729 = vpop.f32.mrb[0].mxu0
    %v4730 = vadd.f32 0.0, %v4729
    %v4731 = vpop.f32.mrb[0].mxu0
    %4732 = vmatprep.mubr.f32.mxu0 0.0
    %4733 = vmatmul.mubr.f32.gmra.mrb[0].mxu0 %v4535
    %v4734 = vpop.f32.mrb[0].mxu0
    %v4735 = vadd.f32 0.0, %v4734
    %v4736 = vpop.f32.mrb[0].mxu0
    %4737 = vmatprep.mubr.f32.mxu0 0.0
    %4738 = vmatmul.mubr.f32.gmra.mrb[0].mxu0 %v4536
    %v4739 = vpop.f32.mrb[0].mxu0
    %v4740 = vadd.f32 0.0, %v4739
    %v4741 = vpop.f32.mrb[0].mxu0
    %4742 = vmatprep.mubr.f32.mxu0 0.0
    %4743 = vmatmul.mubr.f32.gmra.mrb[0].mxu0 %v4537
    %v4744 = vpop.f32.mrb[0].mxu0
    %v4745 = vadd.f32 0.0, %v4744
    %v4746 = vpop.f32.mrb[0].mxu0
    %4747 = vmatprep.mubr.f32.mxu0 0.0
    %4748 = vmatmul.mubr.f32.gmra.mrb[0].mxu0 %v4538
    %v4749 = vpop.f32.mrb[0].mxu0
    %v4750 = vadd.f32 0.0, %v4749
    %v4751 = vpop.f32.mrb[0].mxu0
    %4752 = vmatprep.mubr.f32.mxu0 0.0
    %4753 = vmatmul.mubr.f32.gmra.mrb[0].mxu0 %v4539
    %v4754 = vpop.f32.mrb[0].mxu0
    %v4755 = vadd.f32 0.0, %v4754
    %v4756 = vpop.f32.mrb[0].mxu0
    %4757 = vmatprep.mubr.f32.mxu0 0.0
    %4758 = vmatmul.mubr.f32.gmra.mrb[0].mxu0 %v4540
    %v4759 = vpop.f32.mrb[0].mxu0
    %v4760 = vadd.f32 0.0, %v4759
    %v4761 = vpop.f32.mrb[0].mxu0
    %4762 = vmatprep.mubr.f32.mxu0 0.0
    %4763 = vmatmul.mubr.f32.gmra.mrb[0].mxu0 %v4541
    %v4764 = vpop.f32.mrb[0].mxu0
    %v4765 = vadd.f32 0.0, %v4764
    %v4766 = vpop.f32.mrb[0].mxu0
    %4767 = vmatprep.mubr.f32.mxu0 0.0
    %4768 = vmatmul.mubr.f32.gmra.mrb[0].mxu0 %v4542
    %v4769 = vpop.f32.mrb[0].mxu0
    %v4770 = vadd.f32 0.0, %v4769
    %v4771 = vpop.f32.mrb[0].mxu0
    %4772 = vmatprep.mubr.f32.mxu0 0.0
    %4773 = vmatmul.mubr.f32.gmra.mrb[0].mxu0 %v4543
    %v4774 = vpop.f32.mrb[0].mxu0
    %v4775 = vadd.f32 0.0, %v4774
    %v4776 = vpop.f32.mrb[0].mxu0
    %4777 = vmatprep.mubr.f32.mxu0 0.0
    %4778 = vmatmul.mubr.f32.gmra.mrb[0].mxu0 %v4544
    %v4779 = vpop.f32.mrb[0].mxu0
    %v4780 = vadd.f32 0.0, %v4779
    %v4781 = vpop.f32.mrb[0].mxu0
    %4782 = vmatprep.mubr.f32.mxu0 0.0
    %4783 = vmatmul.mubr.f32.gmra.mrb[0].mxu0 %v4545
    %v4784 = vpop.f32.mrb[0].mxu0
    %v4785 = vadd.f32 0.0, %v4784
    %v4786 = vpop.f32.mrb[0].mxu0
    %4787 = vmatprep.mubr.f32.mxu0 0.0
    %4788 = vmatmul.mubr.f32.gmra.mrb[0].mxu0 %v4546
    %v4789 = vpop.f32.mrb[0].mxu0
    %v4790 = vadd.f32 0.0, %v4789
    %v4791 = vpop.f32.mrb[0].mxu0
    %4792 = vmatprep.mubr.f32.mxu0 0.0
    %4793 = vmatmul.mubr.f32.gmra.mrb[0].mxu0 %v4547
    %v4794 = vpop.f32.mrb[0].mxu0
    %v4795 = vadd.f32 0.0, %v4794
    %v4796 = vpop.f32.mrb[0].mxu0
    %4797 = vmatprep.mubr.f32.mxu0 0.0
    %4798 = vmatmul.mubr.f32.gmra.mrb[0].mxu0 %v4548
    %v4799 = vpop.f32.mrb[0].mxu0
    %v4800 = vadd.f32 0.0, %v4799
    %v4801 = vpop.f32.mrb[0].mxu0
    %4802 = vmatprep.mubr.f32.mxu0 0.0
    %4803 = vmatmul.mubr.f32.gmra.mrb[0].mxu0 %v4549
    %v4804 = vpop.f32.mrb[0].mxu0
    %v4805 = vadd.f32 0.0, %v4804
    %v4806 = vpop.f32.mrb[0].mxu0
    %4807 = vmatprep.mubr.f32.mxu0 0.0
    %4808 = vmatmul.mubr.f32.gmra.mrb[0].mxu0 %v4550
    %v4809 = vpop.f32.mrb[0].mxu0
    %v4810 = vadd.f32 0.0, %v4809
    %v4811 = vpop.f32.mrb[0].mxu0
    %4812 = vmatprep.mubr.f32.mxu0 0.0
    %4813 = vmatmul.mubr.f32.gmra.mrb[0].mxu0 %v4551
    %v4814 = vpop.f32.mrb[0].mxu0
    %v4815 = vadd.f32 0.0, %v4814
    %v4816 = vpop.f32.mrb[0].mxu0
    %4817 = vmatprep.mubr.f32.mxu0 0.0
    %4818 = vmatmul.mubr.f32.gmra.mrb[0].mxu0 %v4552
    %v4819 = vpop.f32.mrb[0].mxu0
    %v4820 = vadd.f32 0.0, %v4819
    %v4821 = vpop.f32.mrb[0].mxu0
    %4822 = vmatprep.mubr.f32.mxu0 0.0
    %4823 = vmatmul.mubr.f32.gmra.mrb[0].mxu0 %v4553
    %v4824 = vpop.f32.mrb[0].mxu0
    %v4825 = vadd.f32 0.0, %v4824
    %v4826 = vpop.f32.mrb[0].mxu0
    %4827 = vmatprep.mubr.f32.mxu0 0.0
    %4828 = vmatmul.mubr.f32.gmra.mrb[0].mxu0 %v4554
    %v4829 = vpop.f32.mrb[0].mxu0
    %v4830 = vadd.f32 0.0, %v4829
    %v4831 = vpop.f32.mrb[0].mxu0
    %4832 = vmatprep.mubr.f32.mxu0 0.0
    %4833 = vmatmul.mubr.f32.gmra.mrb[0].mxu0 %v4555
    %v4834 = vpop.f32.mrb[0].mxu0
    %v4835 = vadd.f32 0.0, %v4834
    %v4836 = vpop.f32.mrb[0].mxu0
    %4837 = vmatprep.mubr.f32.mxu0 0.0
    %4838 = vmatmul.mubr.f32.gmra.mrb[0].mxu0 %v4556
    %v4839 = vpop.f32.mrb[0].mxu0
    %v4840 = vadd.f32 0.0, %v4839
    %v4841 = vpop.f32.mrb[0].mxu0
    %4842 = vmatprep.mubr.f32.mxu0 0.0
    %4843 = vmatmul.mubr.f32.gmra.mrb[0].mxu0 %v4557
    %v4844 = vpop.f32.mrb[0].mxu0
    %v4845 = vadd.f32 0.0, %v4844
    %v4846 = vpop.f32.mrb[0].mxu0
    %4847 = vmatprep.mubr.f32.mxu0 0.0
    %4848 = vmatmul.mubr.f32.gmra.mrb[0].mxu0 %v4558
    %v4849 = vpop.f32.mrb[0].mxu0
    %v4850 = vadd.f32 0.0, %v4849
    %v4851 = vpop.f32.mrb[0].mxu0
    %4852 = vmatprep.mubr.f32.mxu0 0.0
    %4853 = vmatmul.mubr.f32.gmra.mrb[0].mxu0 %v4559
    %v4854 = vpop.f32.mrb[0].mxu0
    %v4855 = vadd.f32 0.0, %v4854
    %v4856 = vpop.f32.mrb[0].mxu0
    %4857 = vmatprep.mubr.f32.mxu0 0.0
    %4858 = vmatmul.mubr.f32.gmra.mrb[0].mxu0 %v4560
    %v4859 = vpop.f32.mrb[0].mxu0
    %v4860 = vadd.f32 0.0, %v4859
    %v4861 = vpop.f32.mrb[0].mxu0
    %4862 = vmatprep.mubr.f32.mxu0 0.0
    %4863 = vmatmul.mubr.f32.gmra.mrb[0].mxu0 %v4561
    %v4864 = vpop.f32.mrb[0].mxu0
    %v4865 = vadd.f32 0.0, %v4864
    %v4866 = vpop.f32.mrb[0].mxu0
    %4867 = vmatprep.mubr.f32.mxu0 0.0
    %4868 = vmatmul.mubr.f32.gmra.mrb[0].mxu0 %v4562
    %v4869 = vpop.f32.mrb[0].mxu0
    %v4870 = vadd.f32 0.0, %v4869
    %v4871 = vpop.f32.mrb[0].mxu0
    %4872 = vmatprep.mubr.f32.mxu0 0.0
    %4873 = vmatmul.mubr.f32.gmra.mrb[0].mxu0 %v4563
    %v4874 = vpop.f32.mrb[0].mxu0
    %v4875 = vadd.f32 0.0, %v4874
    %v4876 = vpop.f32.mrb[0].mxu0
    %4877 = vmatprep.mubr.f32.mxu0 0.0
    %4878 = vmatmul.mubr.f32.gmra.mrb[0].mxu0 %v4564
    %v4879 = vpop.f32.mrb[0].mxu0
    %v4880 = vadd.f32 0.0, %v4879
    %v4881 = vpop.f32.mrb[0].mxu0
    %4882 = vmatprep.mubr.f32.mxu0 0.0
    %4883 = vmatmul.mubr.f32.gmra.mrb[0].mxu0 %v4565
    %v4884 = vpop.f32.mrb[0].mxu0
    %v4885 = vadd.f32 0.0, %v4884
    %v4886 = vpop.f32.mrb[0].mxu0
    %4887 = vmatprep.mubr.f32.mxu0 0.0
    %4888 = vmatmul.mubr.f32.gmra.mrb[0].mxu0 %v4566
    %v4889 = vpop.f32.mrb[0].mxu0
    %v4890 = vadd.f32 0.0, %v4889
    %v4891 = vpop.f32.mrb[0].mxu0
    %4892 = vmatprep.mubr.f32.mxu0 0.0
    %4893 = vmatmul.mubr.f32.gmra.mrb[0].mxu0 %v4567
    %v4894 = vpop.f32.mrb[0].mxu0
    %v4895 = vadd.f32 0.0, %v4894
    %v4896 = vpop.f32.mrb[0].mxu0
    %4897 = vmatprep.mubr.f32.mxu0 0.0
    %4898 = vmatmul.mubr.f32.gmra.mrb[0].mxu0 %v4568
    %v4899 = vpop.f32.mrb[0].mxu0
    %v4900 = vadd.f32 0.0, %v4899
    %v4901 = vpop.f32.mrb[0].mxu0
    %4902 = vmatprep.mubr.f32.mxu0 0.0
    %4903 = vmatmul.mubr.f32.gmra.mrb[0].mxu0 %v4569
    %v4904 = vpop.f32.mrb[0].mxu0
    %v4905 = vadd.f32 0.0, %v4904
    %v4906 = vpop.f32.mrb[0].mxu0
    %4907 = vmatprep.mubr.f32.mxu0 0.0
    %4908 = vmatmul.mubr.f32.gmra.mrb[0].mxu0 %v4570
    %v4909 = vpop.f32.mrb[0].mxu0
    %v4910 = vadd.f32 0.0, %v4909
    %v4911 = vpop.f32.mrb[0].mxu0
    %4912 = vmatprep.mubr.f32.mxu0 0.0
    %4913 = vmatmul.mubr.f32.gmra.mrb[0].mxu0 %v4571
    %v4914 = vpop.f32.mrb[0].mxu0
    %v4915 = vadd.f32 0.0, %v4914
    %v4916 = vpop.f32.mrb[0].mxu0
    %4917 = vmatprep.mubr.f32.mxu0 0.0
    %4918 = vmatmul.mubr.f32.gmra.mrb[0].mxu0 %v4572
    %v4919 = vpop.f32.mrb[0].mxu0
    %v4920 = vadd.f32 0.0, %v4919
    %v4921 = vpop.f32.mrb[0].mxu0
    %4922 = vmatprep.mubr.f32.mxu0 0.0
    %4923 = vmatmul.mubr.f32.gmra.mrb[0].mxu0 %v4573
    %v4924 = vpop.f32.mrb[0].mxu0
    %v4925 = vadd.f32 0.0, %v4924
    %v4926 = vpop.f32.mrb[0].mxu0
    %4927 = vmatprep.mubr.f32.mxu0 0.0
    %4928 = vmatmul.mubr.f32.gmra.mrb[0].mxu0 %v4574
    %v4929 = vpop.f32.mrb[0].mxu0
    %v4930 = vadd.f32 0.0, %v4929
    %v4931 = vpop.f32.mrb[0].mxu0
    %4932 = vmatprep.mubr.f32.mxu0 0.0
    %4933 = vmatmul.mubr.f32.gmra.mrb[0].mxu0 %v4575
    %v4934 = vpop.f32.mrb[0].mxu0
    %v4935 = vadd.f32 0.0, %v4934
    %v4936 = vpop.f32.mrb[0].mxu0
    %4937 = vmatprep.mubr.f32.mxu0 0.0
    %4938 = vmatmul.mubr.f32.gmra.mrb[0].mxu0 %v4576
    %v4939 = vpop.f32.mrb[0].mxu0
    %v4940 = vadd.f32 0.0, %v4939
    %v4941 = vpop.f32.mrb[0].mxu0
    %4942 = vmatprep.mubr.f32.mxu0 0.0
    %4943 = vmatmul.mubr.f32.gmra.mrb[0].mxu0 %v4577
    %v4944 = vpop.f32.mrb[0].mxu0
    %v4945 = vadd.f32 0.0, %v4944
    %v4946 = vpop.f32.mrb[0].mxu0
    %4947 = vmatprep.mubr.f32.mxu0 0.0
    %4948 = vmatmul.mubr.f32.gmra.mrb[0].mxu0 %v4578
    %v4949 = vpop.f32.mrb[0].mxu0
    %v4950 = vadd.f32 0.0, %v4949
    %v4951 = vpop.f32.mrb[0].mxu0
    %4952 = vmatprep.mubr.f32.mxu0 0.0
    %4953 = vmatmul.mubr.f32.gmra.mrb[0].mxu0 %v4579
    %v4954 = vpop.f32.mrb[0].mxu0
    %v4955 = vadd.f32 0.0, %v4954
    %v4956 = vpop.f32.mrb[0].mxu0
    %4957 = vmatprep.mubr.f32.mxu0 0.0
    %4958 = vmatmul.mubr.f32.gmra.mrb[0].mxu0 %v4580
    %v4959 = vpop.f32.mrb[0].mxu0
    %v4960 = vadd.f32 0.0, %v4959
    %v4961 = vpop.f32.mrb[0].mxu0
    %4962 = vmatprep.mubr.f32.mxu0 0.0
    %4963 = vmatmul.mubr.f32.gmra.mrb[0].mxu0 %v4581
    %v4964 = vpop.f32.mrb[0].mxu0
    %v4965 = vadd.f32 0.0, %v4964
    %v4966 = vpop.f32.mrb[0].mxu0
    %4967 = vmatprep.mubr.f32.mxu0 0.0
    %4968 = vmatmul.mubr.f32.gmra.mrb[0].mxu0 %v4582
    %v4969 = vpop.f32.mrb[0].mxu0
    %v4970 = vadd.f32 0.0, %v4969
    %v4971 = vpop.f32.mrb[0].mxu0
    %4972 = vmatprep.mubr.f32.mxu0 0.0
    %4973 = vmatmul.mubr.f32.gmra.mrb[0].mxu0 %v4583
    %v4974 = vpop.f32.mrb[0].mxu0
    %v4975 = vadd.f32 0.0, %v4974
    %v4976 = vpop.f32.mrb[0].mxu0
    %4977 = vmatprep.mubr.f32.mxu0 0.0
    %4978 = vmatmul.mubr.f32.gmra.mrb[0].mxu0 %v4584
    %v4979 = vpop.f32.mrb[0].mxu0
    %v4980 = vadd.f32 0.0, %v4979
    %v4981 = vpop.f32.mrb[0].mxu0
    %4982 = vmatprep.mubr.f32.mxu0 0.0
    %4983 = vmatmul.mubr.f32.gmra.mrb[0].mxu0 %v4585
    %v4984 = vpop.f32.mrb[0].mxu0
    %v4985 = vadd.f32 0.0, %v4984
    %v4986 = vpop.f32.mrb[0].mxu0
    %4987 = vmatprep.mubr.f32.mxu0 0.0
    %4988 = vmatmul.mubr.f32.gmra.mrb[0].mxu0 %v4586
    %v4989 = vpop.f32.mrb[0].mxu0
    %v4990 = vadd.f32 0.0, %v4989
    %v4991 = vpop.f32.mrb[0].mxu0
    %4992 = vmatprep.mubr.f32.mxu0 0.0
    %4993 = vmatmul.mubr.f32.gmra.mrb[0].mxu0 %v4587
    %v4994 = vpop.f32.mrb[0].mxu0
    %v4995 = vadd.f32 0.0, %v4994
    %v4996 = vpop.f32.mrb[0].mxu0
    %4997 = vmatprep.mubr.f32.mxu0 0.0
    %4998 = vmatmul.mubr.f32.gmra.mrb[0].mxu0 %v4588
    %v4999 = vpop.f32.mrb[0].mxu0
    %v5000 = vadd.f32 0.0, %v4999
    %v5001 = vpop.f32.mrb[0].mxu0
    %5002 = vmatprep.mubr.f32.mxu0 0.0
    %5003 = vmatmul.mubr.f32.gmra.mrb[0].mxu0 %v4589
    %v5004 = vpop.f32.mrb[0].mxu0
    %v5005 = vadd.f32 0.0, %v5004
    %v5006 = vpop.f32.mrb[0].mxu0
    %5007 = vmatprep.mubr.f32.mxu0 0.0
    %5008 = vmatmul.mubr.f32.gmra.mrb[0].mxu0 %v4590
    %v5009 = vpop.f32.mrb[0].mxu0
    %v5010 = vadd.f32 0.0, %v5009
    %v5011 = vpop.f32.mrb[0].mxu0
    %5012 = vmatprep.mubr.f32.mxu0 0.0
    %5013 = vmatmul.mubr.f32.gmra.mrb[0].mxu0 %v4591
    %v5014 = vpop.f32.mrb[0].mxu0
    %v5015 = vadd.f32 0.0, %v5014
    %v5016 = vpop.f32.mrb[0].mxu0
    %5017 = vmatprep.mubr.f32.mxu0 0.0
    %5018 = vmatmul.mubr.f32.gmra.mrb[0].mxu0 %v4592
    %v5019 = vpop.f32.mrb[0].mxu0
    %v5020 = vadd.f32 0.0, %v5019
    %v5021 = vpop.f32.mrb[0].mxu0
    %5022 = vmatprep.mubr.f32.mxu0 0.0
    %5023 = vmatmul.mubr.f32.gmra.mrb[0].mxu0 %v4593
    %v5024 = vpop.f32.mrb[0].mxu0
    %v5025 = vadd.f32 0.0, %v5024
    %v5026 = vpop.f32.mrb[0].mxu0
    %5027 = vmatprep.mubr.f32.mxu0 0.0
    %5028 = vmatmul.mubr.f32.gmra.mrb[0].mxu0 %v4594
    %v5029 = vpop.f32.mrb[0].mxu0
    %v5030 = vadd.f32 0.0, %v5029
    %v5031 = vpop.f32.mrb[0].mxu0
    %5032 = vmatprep.mubr.f32.mxu0 0.0
    %5033 = vmatmul.mubr.f32.gmra.mrb[0].mxu0 %v4595
    %v5034 = vpop.f32.mrb[0].mxu0
    %v5035 = vadd.f32 0.0, %v5034
    %v5036 = vpop.f32.mrb[0].mxu0
    %5037 = vmatprep.mubr.f32.mxu0 0.0
    %5038 = vmatmul.mubr.f32.gmra.mrb[0].mxu0 %v4596
    %v5039 = vpop.f32.mrb[0].mxu0
    %v5040 = vadd.f32 0.0, %v5039
    %v5041 = vpop.f32.mrb[0].mxu0
    %5042 = vmatprep.mubr.f32.mxu0 0.0
    %5043 = vmatmul.mubr.f32.gmra.mrb[0].mxu0 %v4597
    %v5044 = vpop.f32.mrb[0].mxu0
    %v5045 = vadd.f32 0.0, %v5044
    %v5046 = vpop.f32.mrb[0].mxu0
    %5047 = vmatprep.mubr.f32.mxu0 0.0
    %5048 = vmatmul.mubr.f32.gmra.mrb[0].mxu0 %v4598
    %v5049 = vpop.f32.mrb[0].mxu0
    %v5050 = vadd.f32 0.0, %v5049
    %v5051 = vpop.f32.mrb[0].mxu0
    %5052 = vmatprep.mubr.f32.mxu0 0.0
    %5053 = vmatmul.mubr.f32.gmra.mrb[0].mxu0 %v4599
    %v5054 = vpop.f32.mrb[0].mxu0
    %v5055 = vadd.f32 0.0, %v5054
    %v5056 = vpop.f32.mrb[0].mxu0
    %5057 = vmatprep.mubr.f32.mxu0 0.0
    %5058 = vmatmul.mubr.f32.gmra.mrb[0].mxu0 %v4600
    %v5059 = vpop.f32.mrb[0].mxu0
    %v5060 = vadd.f32 0.0, %v5059
    %v5061 = vpop.f32.mrb[0].mxu0
    %5062 = vmatprep.mubr.f32.mxu0 0.0
    %5063 = vmatmul.mubr.f32.gmra.mrb[0].mxu0 %v4601
    %v5064 = vpop.f32.mrb[0].mxu0
    %v5065 = vadd.f32 0.0, %v5064
    %v5066 = vpop.f32.mrb[0].mxu0
    %5067 = vmatprep.mubr.f32.mxu0 0.0
    %5068 = vmatmul.mubr.f32.gmra.mrb[0].mxu0 %v4602
    %v5069 = vpop.f32.mrb[0].mxu0
    %v5070 = vadd.f32 0.0, %v5069
    %v5071 = vpop.f32.mrb[0].mxu0
    %5072 = vmatprep.mubr.f32.mxu0 0.0
    %5073 = vmatmul.mubr.f32.gmra.mrb[0].mxu0 %v4603
    %v5074 = vpop.f32.mrb[0].mxu0
    %v5075 = vadd.f32 0.0, %v5074
    %v5076 = vpop.f32.mrb[0].mxu0
    %5077 = vmatprep.mubr.f32.mxu0 0.0
    %5078 = vmatmul.mubr.f32.gmra.mrb[0].mxu0 %v4604
    %v5079 = vpop.f32.mrb[0].mxu0
    %v5080 = vadd.f32 0.0, %v5079
    %v5081 = vpop.f32.mrb[0].mxu0
    %5082 = vmatprep.mubr.f32.mxu0 0.0
    %5083 = vmatmul.mubr.f32.gmra.mrb[0].mxu0 %v4605
    %v5084 = vpop.f32.mrb[0].mxu0
    %v5085 = vadd.f32 0.0, %v5084
    %v5086 = vpop.f32.mrb[0].mxu0
    %5087 = vmatprep.mubr.f32.mxu0 0.0
    %5088 = vmatmul.mubr.f32.gmra.mrb[0].mxu0 %v4606
    %v5089 = vpop.f32.mrb[0].mxu0
    %v5090 = vadd.f32 0.0, %v5089
    %v5091 = vpop.f32.mrb[0].mxu0
    %5092 = vmatprep.mubr.f32.mxu0 0.0
    %5093 = vmatmul.mubr.f32.gmra.mrb[0].mxu0 %v4607
    %v5094 = vpop.f32.mrb[0].mxu0
    %v5095 = vadd.f32 0.0, %v5094
    %v5096 = vpop.f32.mrb[0].mxu0
    %5097 = vmatprep.mubr.f32.mxu0 0.0
    %5098 = vmatmul.mubr.f32.gmra.mrb[0].mxu0 %v4608
    %v5099 = vpop.f32.mrb[0].mxu0
    %v5100 = vadd.f32 0.0, %v5099
    %v5101 = vpop.f32.mrb[0].mxu0
    %5102 = vmatprep.mubr.f32.mxu0 0.0
    %5103 = vmatmul.mubr.f32.gmra.mrb[0].mxu0 %v4609
    %v5104 = vpop.f32.mrb[0].mxu0
    %v5105 = vadd.f32 0.0, %v5104
    %v5106 = vpop.f32.mrb[0].mxu0
    %5107 = vmatprep.mubr.f32.mxu0 0.0
    %5108 = vmatmul.mubr.f32.gmra.mrb[0].mxu0 %v4610
    %v5109 = vpop.f32.mrb[0].mxu0
    %v5110 = vadd.f32 0.0, %v5109
    %v5111 = vpop.f32.mrb[0].mxu0
    %5112 = vmatprep.mubr.f32.mxu0 0.0
    %5113 = vmatmul.mubr.f32.gmra.mrb[0].mxu0 %v4611
    %v5114 = vpop.f32.mrb[0].mxu0
    %v5115 = vadd.f32 0.0, %v5114
    %v5116 = vpop.f32.mrb[0].mxu0
    %5117 = vmatprep.mubr.f32.mxu0 0.0
    %5118 = vmatmul.mubr.f32.gmra.mrb[0].mxu0 %v4612
    %v5119 = vpop.f32.mrb[0].mxu0
    %v5120 = vadd.f32 0.0, %v5119
    %v5121 = vpop.f32.mrb[0].mxu0
    %5122 = vmatprep.mubr.f32.mxu0 0.0
    %5123 = vmatmul.mubr.f32.gmra.mrb[0].mxu0 %v4613
    %v5124 = vpop.f32.mrb[0].mxu0
    %v5125 = vadd.f32 0.0, %v5124
    %v5126 = vpop.f32.mrb[0].mxu0
    %5127 = vmatprep.mubr.f32.mxu0 0.0
    %5128 = vmatmul.mubr.f32.gmra.mrb[0].mxu0 %v4614
    %v5129 = vpop.f32.mrb[0].mxu0
    %v5130 = vadd.f32 0.0, %v5129
    %v5131 = vpop.f32.mrb[0].mxu0
    %5132 = vmatprep.mubr.f32.mxu0 0.0
    %5133 = vmatmul.mubr.f32.gmra.mrb[0].mxu0 %v4615
    %v5134 = vpop.f32.mrb[0].mxu0
    %v5135 = vadd.f32 0.0, %v5134
    %v5136 = vpop.f32.mrb[0].mxu0
    %5137 = vmatprep.mubr.f32.mxu0 0.0
    %5138 = vmatmul.mubr.f32.gmra.mrb[0].mxu0 %v4616
    %v5139 = vpop.f32.mrb[0].mxu0
    %v5140 = vadd.f32 0.0, %v5139
    %v5141 = vpop.f32.mrb[0].mxu0
    %5142 = vmatprep.mubr.f32.mxu0 0.0
    %5143 = vmatmul.mubr.f32.gmra.mrb[0].mxu0 %v4617
    %v5144 = vpop.f32.mrb[0].mxu0
    %v5145 = vadd.f32 0.0, %v5144
    %v5146 = vpop.f32.mrb[0].mxu0
    %5147 = vmatprep.mubr.f32.mxu0 0.0
    %5148 = vmatmul.mubr.f32.gmra.mrb[0].mxu0 %v4618
    %v5149 = vpop.f32.mrb[0].mxu0
    %v5150 = vadd.f32 0.0, %v5149
    %v5151 = vpop.f32.mrb[0].mxu0
    %5152 = vmatprep.mubr.f32.mxu0 0.0
    %5153 = vmatmul.mubr.f32.gmra.mrb[0].mxu0 %v4619
    %v5154 = vpop.f32.mrb[0].mxu0
    %v5155 = vadd.f32 0.0, %v5154
    %v5156 = vpop.f32.mrb[0].mxu0
    %5157 = vmatprep.mubr.f32.mxu0 0.0
    %5158 = vmatmul.mubr.f32.gmra.mrb[0].mxu0 %v4620
    %v5159 = vpop.f32.mrb[0].mxu0
    %v5160 = vadd.f32 0.0, %v5159
    %v5161 = vpop.f32.mrb[0].mxu0
    %5162 = vmatprep.mubr.f32.mxu0 0.0
    %5163 = vmatmul.mubr.f32.gmra.mrb[0].mxu0 %v4621
    %v5164 = vpop.f32.mrb[0].mxu0
    %v5165 = vadd.f32 0.0, %v5164
    %v5166 = vpop.f32.mrb[0].mxu0
    %5167 = vmatprep.mubr.f32.mxu0 0.0
    %5168 = vmatmul.mubr.f32.gmra.mrb[0].mxu0 %v4622
    %v5169 = vpop.f32.mrb[0].mxu0
    %v5170 = vadd.f32 0.0, %v5169
    %v5171 = vpop.f32.mrb[0].mxu0
    %5172 = vmatprep.mubr.f32.mxu0 0.0
    %5173 = vmatmul.mubr.f32.gmra.mrb[0].mxu0 %v4623
    %v5174 = vpop.f32.mrb[0].mxu0
    %v5175 = vadd.f32 0.0, %v5174
    %v5176 = vpop.f32.mrb[0].mxu0
    %5177 = vmatprep.mubr.f32.mxu0 0.0
    %5178 = vmatmul.mubr.f32.gmra.mrb[0].mxu0 %v4624
    %v5179 = vpop.f32.mrb[0].mxu0
    %v5180 = vadd.f32 0.0, %v5179
    %v5181 = vpop.f32.mrb[0].mxu0
    %5182 = vmatprep.mubr.f32.mxu0 0.0
    %5183 = vmatmul.mubr.f32.gmra.mrb[0].mxu0 %v4625
    %v5184 = vpop.f32.mrb[0].mxu0
    %v5185 = vadd.f32 0.0, %v5184
    %v5186 = vpop.f32.mrb[0].mxu0
    %5187 = vmatprep.mubr.f32.mxu0 0.0
    %5188 = vmatmul.mubr.f32.gmra.mrb[0].mxu0 %v4626
    %v5189 = vpop.f32.mrb[0].mxu0
    %v5190 = vadd.f32 0.0, %v5189
    %v5191 = vpop.f32.mrb[0].mxu0
    %5192 = vmatprep.mubr.f32.mxu0 0.0
    %5193 = vmatmul.mubr.f32.gmra.mrb[0].mxu0 %v4627
    %v5194 = vpop.f32.mrb[0].mxu0
    %v5195 = vadd.f32 0.0, %v5194
    %v5196 = vpop.f32.mrb[0].mxu0
    %5197 = vmatprep.mubr.f32.mxu0 0.0
    %5198 = vmatmul.mubr.f32.gmra.mrb[0].mxu0 %v4628
    %v5199 = vpop.f32.mrb[0].mxu0
    %v5200 = vadd.f32 0.0, %v5199
    %v5201 = vpop.f32.mrb[0].mxu0
    %5202 = vmatprep.mubr.f32.mxu0 0.0
    %5203 = vmatmul.mubr.f32.gmra.mrb[0].mxu0 %v4629
    %v5204 = vpop.f32.mrb[0].mxu0
    %v5205 = vadd.f32 0.0, %v5204
    %v5206 = vpop.f32.mrb[0].mxu0
    %5207 = vmatprep.mubr.f32.mxu0 0.0
    %5208 = vmatmul.mubr.f32.gmra.mrb[0].mxu0 %v4630
    %v5209 = vpop.f32.mrb[0].mxu0
    %v5210 = vadd.f32 0.0, %v5209
    %v5211 = vpop.f32.mrb[0].mxu0
    %5212 = vdwg.mxu0
    %v5213 = vadd.f32 %v4431, %v4715
    %v5214 = vadd.f32 %v4432, %v4720
    %v5215 = vadd.f32 %v4433, %v4725
    %v5216 = vadd.f32 %v4434, %v4730
    %v5217 = vadd.f32 %v4435, %v4735
    %v5218 = vadd.f32 %v4436, %v4740
    %v5219 = vadd.f32 %v4437, %v4745
    %v5220 = vadd.f32 %v4438, %v4750
    %v5221 = vadd.f32 %v4439, %v4755
    %v5222 = vadd.f32 %v4440, %v4760
    %v5223 = vadd.f32 %v4441, %v4765
    %v5224 = vadd.f32 %v4442, %v4770
    %v5225 = vadd.f32 %v4443, %v4775
    %v5226 = vadd.f32 %v4444, %v4780
    %v5227 = vadd.f32 %v4445, %v4785
    %v5228 = vadd.f32 %v4446, %v4790
    %v5229 = vadd.f32 %v4447, %v4795
    %v5230 = vadd.f32 %v4448, %v4800
    %v5231 = vadd.f32 %v4449, %v4805
    %v5232 = vadd.f32 %v4450, %v4810
    %v5233 = vadd.f32 %v4451, %v4815
    %v5234 = vadd.f32 %v4452, %v4820
    %v5235 = vadd.f32 %v4453, %v4825
    %v5236 = vadd.f32 %v4454, %v4830
    %v5237 = vadd.f32 %v4455, %v4835
    %v5238 = vadd.f32 %v4456, %v4840
    %v5239 = vadd.f32 %v4457, %v4845
    %v5240 = vadd.f32 %v4458, %v4850
    %v5241 = vadd.f32 %v4459, %v4855
    %v5242 = vadd.f32 %v4460, %v4860
    %v5243 = vadd.f32 %v4461, %v4865
    %v5244 = vadd.f32 %v4462, %v4870
    %v5245 = vadd.f32 %v4463, %v4875
    %v5246 = vadd.f32 %v4464, %v4880
    %v5247 = vadd.f32 %v4465, %v4885
    %v5248 = vadd.f32 %v4466, %v4890
    %v5249 = vadd.f32 %v4467, %v4895
    %v5250 = vadd.f32 %v4468, %v4900
    %v5251 = vadd.f32 %v4469, %v4905
    %v5252 = vadd.f32 %v4470, %v4910
    %v5253 = vadd.f32 %v4471, %v4915
    %v5254 = vadd.f32 %v4472, %v4920
    %v5255 = vadd.f32 %v4473, %v4925
    %v5256 = vadd.f32 %v4474, %v4930
    %v5257 = vadd.f32 %v4475, %v4935
    %v5258 = vadd.f32 %v4476, %v4940
    %v5259 = vadd.f32 %v4477, %v4945
    %v5260 = vadd.f32 %v4478, %v4950
    %v5261 = vadd.f32 %v4479, %v4955
    %v5262 = vadd.f32 %v4480, %v4960
    %v5263 = vadd.f32 %v4481, %v4965
    %v5264 = vadd.f32 %v4482, %v4970
    %v5265 = vadd.f32 %v4483, %v4975
    %v5266 = vadd.f32 %v4484, %v4980
    %v5267 = vadd.f32 %v4485, %v4985
    %v5268 = vadd.f32 %v4486, %v4990
    %v5269 = vadd.f32 %v4487, %v4995
    %v5270 = vadd.f32 %v4488, %v5000
    %v5271 = vadd.f32 %v4489, %v5005
    %v5272 = vadd.f32 %v4490, %v5010
    %v5273 = vadd.f32 %v4491, %v5015
    %v5274 = vadd.f32 %v4492, %v5020
    %v5275 = vadd.f32 %v4493, %v5025
    %v5276 = vadd.f32 %v4494, %v5030
    %v5277 = vadd.f32 %v4495, %v5035
    %v5278 = vadd.f32 %v4496, %v5040
    %v5279 = vadd.f32 %v4497, %v5045
    %v5280 = vadd.f32 %v4498, %v5050
    %v5281 = vadd.f32 %v4499, %v5055
    %v5282 = vadd.f32 %v4500, %v5060
    %v5283 = vadd.f32 %v4501, %v5065
    %v5284 = vadd.f32 %v4502, %v5070
    %v5285 = vadd.f32 %v4503, %v5075
    %v5286 = vadd.f32 %v4504, %v5080
    %v5287 = vadd.f32 %v4505, %v5085
    %v5288 = vadd.f32 %v4506, %v5090
    %v5289 = vadd.f32 %v4507, %v5095
    %v5290 = vadd.f32 %v4508, %v5100
    %v5291 = vadd.f32 %v4509, %v5105
    %v5292 = vadd.f32 %v4510, %v5110
    %v5293 = vadd.f32 %v4511, %v5115
    %v5294 = vadd.f32 %v4512, %v5120
    %v5295 = vadd.f32 %v4513, %v5125
    %v5296 = vadd.f32 %v4514, %v5130
    %v5297 = vadd.f32 %v4515, %v5135
    %v5298 = vadd.f32 %v4516, %v5140
    %v5299 = vadd.f32 %v4517, %v5145
    %v5300 = vadd.f32 %v4518, %v5150
    %v5301 = vadd.f32 %v4519, %v5155
    %v5302 = vadd.f32 %v4520, %v5160
    %v5303 = vadd.f32 %v4521, %v5165
    %v5304 = vadd.f32 %v4522, %v5170
    %v5305 = vadd.f32 %v4523, %v5175
    %v5306 = vadd.f32 %v4524, %v5180
    %v5307 = vadd.f32 %v4525, %v5185
    %v5308 = vadd.f32 %v4526, %v5190
    %v5309 = vadd.f32 %v4527, %v5195
    %v5310 = vadd.f32 %v4528, %v5200
    %v5311 = vadd.f32 %v4529, %v5205
    %v5312 = vadd.f32 %v4530, %v5210
    %v5313 = vld [vmem:[#allocation2 + $0x41] sm:$0xff]
    %v5314 = vld [vmem:[#allocation2 + $0x49] sm:$0xff]
    %v5315 = vld [vmem:[#allocation2 + $0x51] sm:$0xff]
    %v5316 = vld [vmem:[#allocation2 + $0x59] sm:$0xff]
    %v5317 = vld [vmem:[#allocation2 + $0x61] sm:$0xff]
    %v5318 = vld [vmem:[#allocation2 + $0x69] sm:$0xff]
    %v5319 = vld [vmem:[#allocation2 + $0x71] sm:$0xff]
    %v5320 = vld [vmem:[#allocation2 + $0x79] sm:$0xff]
    %v5321 = vld [vmem:[#allocation2 + $0x81] sm:$0xff]
    %v5322 = vld [vmem:[#allocation2 + $0x89] sm:$0xff]
    %v5323 = vld [vmem:[#allocation2 + $0x91] sm:$0xff]
    %v5324 = vld [vmem:[#allocation2 + $0x99] sm:$0xff]
    %v5325 = vld [vmem:[#allocation2 + $0xa1] sm:$0xff]
    %v5326 = vld [vmem:[#allocation2 + $0xa9] sm:$0xff]
    %v5327 = vld [vmem:[#allocation2 + $0xb1] sm:$0xff]
    %v5328 = vld [vmem:[#allocation2 + $0xb9] sm:$0xff]
    %v5329 = vld [vmem:[#allocation2 + $0xc1] sm:$0xff]
    %v5330 = vld [vmem:[#allocation2 + $0xc9] sm:$0xff]
    %v5331 = vld [vmem:[#allocation2 + $0xd1] sm:$0xff]
    %v5332 = vld [vmem:[#allocation2 + $0xd9] sm:$0xff]
    %v5333 = vld [vmem:[#allocation2 + $0xe1] sm:$0xff]
    %v5334 = vld [vmem:[#allocation2 + $0xe9] sm:$0xff]
    %v5335 = vld [vmem:[#allocation2 + $0xf1] sm:$0xff]
    %v5336 = vld [vmem:[#allocation2 + $0xf9] sm:$0xff]
    %v5337 = vld [vmem:[#allocation2 + $0x101] sm:$0xff]
    %v5338 = vld [vmem:[#allocation2 + $0x109] sm:$0xff]
    %v5339 = vld [vmem:[#allocation2 + $0x111] sm:$0xff]
    %v5340 = vld [vmem:[#allocation2 + $0x119] sm:$0xff]
    %v5341 = vld [vmem:[#allocation2 + $0x121] sm:$0xff]
    %v5342 = vld [vmem:[#allocation2 + $0x129] sm:$0xff]
    %v5343 = vld [vmem:[#allocation2 + $0x131] sm:$0xff]
    %v5344 = vld [vmem:[#allocation2 + $0x139] sm:$0xff]
    %v5345 = vld [vmem:[#allocation2 + $0x141] sm:$0xff]
    %v5346 = vld [vmem:[#allocation2 + $0x149] sm:$0xff]
    %v5347 = vld [vmem:[#allocation2 + $0x151] sm:$0xff]
    %v5348 = vld [vmem:[#allocation2 + $0x159] sm:$0xff]
    %v5349 = vld [vmem:[#allocation2 + $0x161] sm:$0xff]
    %v5350 = vld [vmem:[#allocation2 + $0x169] sm:$0xff]
    %v5351 = vld [vmem:[#allocation2 + $0x171] sm:$0xff]
    %v5352 = vld [vmem:[#allocation2 + $0x179] sm:$0xff]
    %v5353 = vld [vmem:[#allocation2 + $0x181] sm:$0xff]
    %v5354 = vld [vmem:[#allocation2 + $0x189] sm:$0xff]
    %v5355 = vld [vmem:[#allocation2 + $0x191] sm:$0xff]
    %v5356 = vld [vmem:[#allocation2 + $0x199] sm:$0xff]
    %v5357 = vld [vmem:[#allocation2 + $0x1a1] sm:$0xff]
    %v5358 = vld [vmem:[#allocation2 + $0x1a9] sm:$0xff]
    %v5359 = vld [vmem:[#allocation2 + $0x1b1] sm:$0xff]
    %v5360 = vld [vmem:[#allocation2 + $0x1b9] sm:$0xff]
    %v5361 = vld [vmem:[#allocation2 + $0x1c1] sm:$0xff]
    %v5362 = vld [vmem:[#allocation2 + $0x1c9] sm:$0xff]
    %v5363 = vld [vmem:[#allocation2 + $0x1d1] sm:$0xff]
    %v5364 = vld [vmem:[#allocation2 + $0x1d9] sm:$0xff]
    %v5365 = vld [vmem:[#allocation2 + $0x1e1] sm:$0xff]
    %v5366 = vld [vmem:[#allocation2 + $0x1e9] sm:$0xff]
    %v5367 = vld [vmem:[#allocation2 + $0x1f1] sm:$0xff]
    %v5368 = vld [vmem:[#allocation2 + $0x1f9] sm:$0xff]
    %v5369 = vld [vmem:[#allocation2 + $0x201] sm:$0xff]
    %v5370 = vld [vmem:[#allocation2 + $0x209] sm:$0xff]
    %v5371 = vld [vmem:[#allocation2 + $0x211] sm:$0xff]
    %v5372 = vld [vmem:[#allocation2 + $0x219] sm:$0xff]
    %v5373 = vld [vmem:[#allocation2 + $0x221] sm:$0xff]
    %v5374 = vld [vmem:[#allocation2 + $0x229] sm:$0xff]
    %v5375 = vld [vmem:[#allocation2 + $0x231] sm:$0xff]
    %v5376 = vld [vmem:[#allocation2 + $0x239] sm:$0xff]
    %v5377 = vld [vmem:[#allocation2 + $0x241] sm:$0xff]
    %v5378 = vld [vmem:[#allocation2 + $0x249] sm:$0xff]
    %v5379 = vld [vmem:[#allocation2 + $0x251] sm:$0xff]
    %v5380 = vld [vmem:[#allocation2 + $0x259] sm:$0xff]
    %v5381 = vld [vmem:[#allocation2 + $0x261] sm:$0xff]
    %v5382 = vld [vmem:[#allocation2 + $0x269] sm:$0xff]
    %v5383 = vld [vmem:[#allocation2 + $0x271] sm:$0xff]
    %v5384 = vld [vmem:[#allocation2 + $0x279] sm:$0xff]
    %v5385 = vld [vmem:[#allocation2 + $0x281] sm:$0xff]
    %v5386 = vld [vmem:[#allocation2 + $0x289] sm:$0xff]
    %v5387 = vld [vmem:[#allocation2 + $0x291] sm:$0xff]
    %v5388 = vld [vmem:[#allocation2 + $0x299] sm:$0xff]
    %v5389 = vld [vmem:[#allocation2 + $0x2a1] sm:$0xff]
    %v5390 = vld [vmem:[#allocation2 + $0x2a9] sm:$0xff]
    %v5391 = vld [vmem:[#allocation2 + $0x2b1] sm:$0xff]
    %v5392 = vld [vmem:[#allocation2 + $0x2b9] sm:$0xff]
    %v5393 = vld [vmem:[#allocation2 + $0x2c1] sm:$0xff]
    %v5394 = vld [vmem:[#allocation2 + $0x2c9] sm:$0xff]
    %v5395 = vld [vmem:[#allocation2 + $0x2d1] sm:$0xff]
    %v5396 = vld [vmem:[#allocation2 + $0x2d9] sm:$0xff]
    %v5397 = vld [vmem:[#allocation2 + $0x2e1] sm:$0xff]
    %v5398 = vld [vmem:[#allocation2 + $0x2e9] sm:$0xff]
    %v5399 = vld [vmem:[#allocation2 + $0x2f1] sm:$0xff]
    %v5400 = vld [vmem:[#allocation2 + $0x2f9] sm:$0xff]
    %v5401 = vld [vmem:[#allocation2 + $0x301] sm:$0xff]
    %v5402 = vld [vmem:[#allocation2 + $0x309] sm:$0xff]
    %v5403 = vld [vmem:[#allocation2 + $0x311] sm:$0xff]
    %v5404 = vld [vmem:[#allocation2 + $0x319] sm:$0xff]
    %v5405 = vld [vmem:[#allocation2 + $0x321] sm:$0xff]
    %v5406 = vld [vmem:[#allocation2 + $0x329] sm:$0xff]
    %v5407 = vld [vmem:[#allocation2 + $0x331] sm:$0xff]
    %v5408 = vld [vmem:[#allocation2 + $0x339] sm:$0xff]
    %v5409 = vld [vmem:[#allocation2 + $0x341] sm:$0xff]
    %v5410 = vld [vmem:[#allocation2 + $0x349] sm:$0xff]
    %v5411 = vld [vmem:[#allocation2 + $0x351] sm:$0xff]
    %v5412 = vld [vmem:[#allocation2 + $0x359] sm:$0xff]
    %s5413 = scalar_lea.vmem [#allocation5], 896
    %v5414 = vld [vmem:[%s5413] sm:$0xff]
    %v5415 = vld [vmem:[%s5413 + $0x8] sm:$0xff]
    %v5416 = vld [vmem:[%s5413 + $0x10] sm:$0xff]
    %v5417 = vld [vmem:[%s5413 + $0x18] sm:$0xff]
    %v5418 = vld [vmem:[%s5413 + $0x20] sm:$0xff]
    %v5419 = vld [vmem:[%s5413 + $0x28] sm:$0xff]
    %v5420 = vld [vmem:[%s5413 + $0x30] sm:$0xff]
    %v5421 = vld [vmem:[%s5413 + $0x38] sm:$0xff]
    %v5422 = vld [vmem:[%s5413 + $0x40] sm:$0xff]
    %v5423 = vld [vmem:[%s5413 + $0x48] sm:$0xff]
    %v5424 = vld [vmem:[%s5413 + $0x50] sm:$0xff]
    %v5425 = vld [vmem:[%s5413 + $0x58] sm:$0xff]
    %v5426 = vld [vmem:[%s5413 + $0x60] sm:$0xff]
    %v5427 = vld [vmem:[%s5413 + $0x68] sm:$0xff]
    %v5428 = vld [vmem:[%s5413 + $0x70] sm:$0xff]
    %v5429 = vld [vmem:[%s5413 + $0x78] sm:$0xff]
    %5430 = vmatprep.subr.mxu0 0.0
    %5431 = vmatpush1.msra.mxu0 %v5414
    %5432 = vmatprep.subr.mxu0 0.0
    %5433 = vmatpush1.msra.mxu0 %v5415
    %5434 = vmatprep.subr.mxu0 0.0
    %5435 = vmatpush1.msra.mxu0 %v5416
    %5436 = vmatprep.subr.mxu0 0.0
    %5437 = vmatpush1.msra.mxu0 %v5417
    %5438 = vmatprep.subr.mxu0 0.0
    %5439 = vmatpush1.msra.mxu0 %v5418
    %5440 = vmatprep.subr.mxu0 0.0
    %5441 = vmatpush1.msra.mxu0 %v5419
    %5442 = vmatprep.subr.mxu0 0.0
    %5443 = vmatpush1.msra.mxu0 %v5420
    %5444 = vmatprep.subr.mxu0 0.0
    %5445 = vmatpush1.msra.mxu0 %v5421
    %5446 = vmatprep.subr.mxu0 0.0
    %5447 = vmatpush1.msra.mxu0 %v5422
    %5448 = vmatprep.subr.mxu0 0.0
    %5449 = vmatpush1.msra.mxu0 %v5423
    %5450 = vmatprep.subr.mxu0 0.0
    %5451 = vmatpush1.msra.mxu0 %v5424
    %5452 = vmatprep.subr.mxu0 0.0
    %5453 = vmatpush1.msra.mxu0 %v5425
    %5454 = vmatprep.subr.mxu0 0.0
    %5455 = vmatpush1.msra.mxu0 %v5426
    %5456 = vmatprep.subr.mxu0 0.0
    %5457 = vmatpush1.msra.mxu0 %v5427
    %5458 = vmatprep.subr.mxu0 0.0
    %5459 = vmatpush1.msra.mxu0 %v5428
    %5460 = vmatprep.subr.mxu0 0.0
    %5461 = vmatpush1.msra.mxu0 %v5429
    %5462 = vmatprep.subr.mxu0 0.0
    %5463 = vmatpush1.msra.mxu0 0.0
    %5464 = vmatprep.subr.mxu0 0.0
    %5465 = vmatpush1.msra.mxu0 0.0
    %5466 = vmatprep.subr.mxu0 0.0
    %5467 = vmatpush1.msra.mxu0 0.0
    %5468 = vmatprep.subr.mxu0 0.0
    %5469 = vmatpush1.msra.mxu0 0.0
    %5470 = vmatprep.subr.mxu0 0.0
    %5471 = vmatpush1.msra.mxu0 0.0
    %5472 = vmatprep.subr.mxu0 0.0
    %5473 = vmatpush1.msra.mxu0 0.0
    %5474 = vmatprep.subr.mxu0 0.0
    %5475 = vmatpush1.msra.mxu0 0.0
    %5476 = vmatprep.subr.mxu0 0.0
    %5477 = vmatpush1.msra.mxu0 0.0
    %5478 = vmatprep.subr.mxu0 0.0
    %5479 = vmatpush1.msra.mxu0 0.0
    %5480 = vmatprep.subr.mxu0 0.0
    %5481 = vmatpush1.msra.mxu0 0.0
    %5482 = vmatprep.subr.mxu0 0.0
    %5483 = vmatpush1.msra.mxu0 0.0
    %5484 = vmatprep.subr.mxu0 0.0
    %5485 = vmatpush1.msra.mxu0 0.0
    %5486 = vmatprep.subr.mxu0 0.0
    %5487 = vmatpush1.msra.mxu0 0.0
    %5488 = vmatprep.subr.mxu0 0.0
    %5489 = vmatpush1.msra.mxu0 0.0
    %5490 = vmatprep.subr.mxu0 0.0
    %5491 = vmatpush1.msra.mxu0 0.0
    %5492 = vmatprep.subr.mxu0 0.0
    %5493 = vmatpush1.msra.mxu0 0.0
    %5494 = vmatprep.mubr.f32.mxu0 0.0
    %5495 = vmatmul.mubr.f32.gmra.mrb[0].mxu0 %v5313
    %v5496 = vpop.f32.mrb[0].mxu0
    %v5497 = vadd.f32 0.0, %v5496
    %v5498 = vpop.f32.mrb[0].mxu0
    %5499 = vmatprep.mubr.f32.mxu0 0.0
    %5500 = vmatmul.mubr.f32.gmra.mrb[0].mxu0 %v5314
    %v5501 = vpop.f32.mrb[0].mxu0
    %v5502 = vadd.f32 0.0, %v5501
    %v5503 = vpop.f32.mrb[0].mxu0
    %5504 = vmatprep.mubr.f32.mxu0 0.0
    %5505 = vmatmul.mubr.f32.gmra.mrb[0].mxu0 %v5315
    %v5506 = vpop.f32.mrb[0].mxu0
    %v5507 = vadd.f32 0.0, %v5506
    %v5508 = vpop.f32.mrb[0].mxu0
    %5509 = vmatprep.mubr.f32.mxu0 0.0
    %5510 = vmatmul.mubr.f32.gmra.mrb[0].mxu0 %v5316
    %v5511 = vpop.f32.mrb[0].mxu0
    %v5512 = vadd.f32 0.0, %v5511
    %v5513 = vpop.f32.mrb[0].mxu0
    %5514 = vmatprep.mubr.f32.mxu0 0.0
    %5515 = vmatmul.mubr.f32.gmra.mrb[0].mxu0 %v5317
    %v5516 = vpop.f32.mrb[0].mxu0
    %v5517 = vadd.f32 0.0, %v5516
    %v5518 = vpop.f32.mrb[0].mxu0
    %5519 = vmatprep.mubr.f32.mxu0 0.0
    %5520 = vmatmul.mubr.f32.gmra.mrb[0].mxu0 %v5318
    %v5521 = vpop.f32.mrb[0].mxu0
    %v5522 = vadd.f32 0.0, %v5521
    %v5523 = vpop.f32.mrb[0].mxu0
    %5524 = vmatprep.mubr.f32.mxu0 0.0
    %5525 = vmatmul.mubr.f32.gmra.mrb[0].mxu0 %v5319
    %v5526 = vpop.f32.mrb[0].mxu0
    %v5527 = vadd.f32 0.0, %v5526
    %v5528 = vpop.f32.mrb[0].mxu0
    %5529 = vmatprep.mubr.f32.mxu0 0.0
    %5530 = vmatmul.mubr.f32.gmra.mrb[0].mxu0 %v5320
    %v5531 = vpop.f32.mrb[0].mxu0
    %v5532 = vadd.f32 0.0, %v5531
    %v5533 = vpop.f32.mrb[0].mxu0
    %5534 = vmatprep.mubr.f32.mxu0 0.0
    %5535 = vmatmul.mubr.f32.gmra.mrb[0].mxu0 %v5321
    %v5536 = vpop.f32.mrb[0].mxu0
    %v5537 = vadd.f32 0.0, %v5536
    %v5538 = vpop.f32.mrb[0].mxu0
    %5539 = vmatprep.mubr.f32.mxu0 0.0
    %5540 = vmatmul.mubr.f32.gmra.mrb[0].mxu0 %v5322
    %v5541 = vpop.f32.mrb[0].mxu0
    %v5542 = vadd.f32 0.0, %v5541
    %v5543 = vpop.f32.mrb[0].mxu0
    %5544 = vmatprep.mubr.f32.mxu0 0.0
    %5545 = vmatmul.mubr.f32.gmra.mrb[0].mxu0 %v5323
    %v5546 = vpop.f32.mrb[0].mxu0
    %v5547 = vadd.f32 0.0, %v5546
    %v5548 = vpop.f32.mrb[0].mxu0
    %5549 = vmatprep.mubr.f32.mxu0 0.0
    %5550 = vmatmul.mubr.f32.gmra.mrb[0].mxu0 %v5324
    %v5551 = vpop.f32.mrb[0].mxu0
    %v5552 = vadd.f32 0.0, %v5551
    %v5553 = vpop.f32.mrb[0].mxu0
    %5554 = vmatprep.mubr.f32.mxu0 0.0
    %5555 = vmatmul.mubr.f32.gmra.mrb[0].mxu0 %v5325
    %v5556 = vpop.f32.mrb[0].mxu0
    %v5557 = vadd.f32 0.0, %v5556
    %v5558 = vpop.f32.mrb[0].mxu0
    %5559 = vmatprep.mubr.f32.mxu0 0.0
    %5560 = vmatmul.mubr.f32.gmra.mrb[0].mxu0 %v5326
    %v5561 = vpop.f32.mrb[0].mxu0
    %v5562 = vadd.f32 0.0, %v5561
    %v5563 = vpop.f32.mrb[0].mxu0
    %5564 = vmatprep.mubr.f32.mxu0 0.0
    %5565 = vmatmul.mubr.f32.gmra.mrb[0].mxu0 %v5327
    %v5566 = vpop.f32.mrb[0].mxu0
    %v5567 = vadd.f32 0.0, %v5566
    %v5568 = vpop.f32.mrb[0].mxu0
    %5569 = vmatprep.mubr.f32.mxu0 0.0
    %5570 = vmatmul.mubr.f32.gmra.mrb[0].mxu0 %v5328
    %v5571 = vpop.f32.mrb[0].mxu0
    %v5572 = vadd.f32 0.0, %v5571
    %v5573 = vpop.f32.mrb[0].mxu0
    %5574 = vmatprep.mubr.f32.mxu0 0.0
    %5575 = vmatmul.mubr.f32.gmra.mrb[0].mxu0 %v5329
    %v5576 = vpop.f32.mrb[0].mxu0
    %v5577 = vadd.f32 0.0, %v5576
    %v5578 = vpop.f32.mrb[0].mxu0
    %5579 = vmatprep.mubr.f32.mxu0 0.0
    %5580 = vmatmul.mubr.f32.gmra.mrb[0].mxu0 %v5330
    %v5581 = vpop.f32.mrb[0].mxu0
    %v5582 = vadd.f32 0.0, %v5581
    %v5583 = vpop.f32.mrb[0].mxu0
    %5584 = vmatprep.mubr.f32.mxu0 0.0
    %5585 = vmatmul.mubr.f32.gmra.mrb[0].mxu0 %v5331
    %v5586 = vpop.f32.mrb[0].mxu0
    %v5587 = vadd.f32 0.0, %v5586
    %v5588 = vpop.f32.mrb[0].mxu0
    %5589 = vmatprep.mubr.f32.mxu0 0.0
    %5590 = vmatmul.mubr.f32.gmra.mrb[0].mxu0 %v5332
    %v5591 = vpop.f32.mrb[0].mxu0
    %v5592 = vadd.f32 0.0, %v5591
    %v5593 = vpop.f32.mrb[0].mxu0
    %5594 = vmatprep.mubr.f32.mxu0 0.0
    %5595 = vmatmul.mubr.f32.gmra.mrb[0].mxu0 %v5333
    %v5596 = vpop.f32.mrb[0].mxu0
    %v5597 = vadd.f32 0.0, %v5596
    %v5598 = vpop.f32.mrb[0].mxu0
    %5599 = vmatprep.mubr.f32.mxu0 0.0
    %5600 = vmatmul.mubr.f32.gmra.mrb[0].mxu0 %v5334
    %v5601 = vpop.f32.mrb[0].mxu0
    %v5602 = vadd.f32 0.0, %v5601
    %v5603 = vpop.f32.mrb[0].mxu0
    %5604 = vmatprep.mubr.f32.mxu0 0.0
    %5605 = vmatmul.mubr.f32.gmra.mrb[0].mxu0 %v5335
    %v5606 = vpop.f32.mrb[0].mxu0
    %v5607 = vadd.f32 0.0, %v5606
    %v5608 = vpop.f32.mrb[0].mxu0
    %5609 = vmatprep.mubr.f32.mxu0 0.0
    %5610 = vmatmul.mubr.f32.gmra.mrb[0].mxu0 %v5336
    %v5611 = vpop.f32.mrb[0].mxu0
    %v5612 = vadd.f32 0.0, %v5611
    %v5613 = vpop.f32.mrb[0].mxu0
    %5614 = vmatprep.mubr.f32.mxu0 0.0
    %5615 = vmatmul.mubr.f32.gmra.mrb[0].mxu0 %v5337
    %v5616 = vpop.f32.mrb[0].mxu0
    %v5617 = vadd.f32 0.0, %v5616
    %v5618 = vpop.f32.mrb[0].mxu0
    %5619 = vmatprep.mubr.f32.mxu0 0.0
    %5620 = vmatmul.mubr.f32.gmra.mrb[0].mxu0 %v5338
    %v5621 = vpop.f32.mrb[0].mxu0
    %v5622 = vadd.f32 0.0, %v5621
    %v5623 = vpop.f32.mrb[0].mxu0
    %5624 = vmatprep.mubr.f32.mxu0 0.0
    %5625 = vmatmul.mubr.f32.gmra.mrb[0].mxu0 %v5339
    %v5626 = vpop.f32.mrb[0].mxu0
    %v5627 = vadd.f32 0.0, %v5626
    %v5628 = vpop.f32.mrb[0].mxu0
    %5629 = vmatprep.mubr.f32.mxu0 0.0
    %5630 = vmatmul.mubr.f32.gmra.mrb[0].mxu0 %v5340
    %v5631 = vpop.f32.mrb[0].mxu0
    %v5632 = vadd.f32 0.0, %v5631
    %v5633 = vpop.f32.mrb[0].mxu0
    %5634 = vmatprep.mubr.f32.mxu0 0.0
    %5635 = vmatmul.mubr.f32.gmra.mrb[0].mxu0 %v5341
    %v5636 = vpop.f32.mrb[0].mxu0
    %v5637 = vadd.f32 0.0, %v5636
    %v5638 = vpop.f32.mrb[0].mxu0
    %5639 = vmatprep.mubr.f32.mxu0 0.0
    %5640 = vmatmul.mubr.f32.gmra.mrb[0].mxu0 %v5342
    %v5641 = vpop.f32.mrb[0].mxu0
    %v5642 = vadd.f32 0.0, %v5641
    %v5643 = vpop.f32.mrb[0].mxu0
    %5644 = vmatprep.mubr.f32.mxu0 0.0
    %5645 = vmatmul.mubr.f32.gmra.mrb[0].mxu0 %v5343
    %v5646 = vpop.f32.mrb[0].mxu0
    %v5647 = vadd.f32 0.0, %v5646
    %v5648 = vpop.f32.mrb[0].mxu0
    %5649 = vmatprep.mubr.f32.mxu0 0.0
    %5650 = vmatmul.mubr.f32.gmra.mrb[0].mxu0 %v5344
    %v5651 = vpop.f32.mrb[0].mxu0
    %v5652 = vadd.f32 0.0, %v5651
    %v5653 = vpop.f32.mrb[0].mxu0
    %5654 = vmatprep.mubr.f32.mxu0 0.0
    %5655 = vmatmul.mubr.f32.gmra.mrb[0].mxu0 %v5345
    %v5656 = vpop.f32.mrb[0].mxu0
    %v5657 = vadd.f32 0.0, %v5656
    %v5658 = vpop.f32.mrb[0].mxu0
    %5659 = vmatprep.mubr.f32.mxu0 0.0
    %5660 = vmatmul.mubr.f32.gmra.mrb[0].mxu0 %v5346
    %v5661 = vpop.f32.mrb[0].mxu0
    %v5662 = vadd.f32 0.0, %v5661
    %v5663 = vpop.f32.mrb[0].mxu0
    %5664 = vmatprep.mubr.f32.mxu0 0.0
    %5665 = vmatmul.mubr.f32.gmra.mrb[0].mxu0 %v5347
    %v5666 = vpop.f32.mrb[0].mxu0
    %v5667 = vadd.f32 0.0, %v5666
    %v5668 = vpop.f32.mrb[0].mxu0
    %5669 = vmatprep.mubr.f32.mxu0 0.0
    %5670 = vmatmul.mubr.f32.gmra.mrb[0].mxu0 %v5348
    %v5671 = vpop.f32.mrb[0].mxu0
    %v5672 = vadd.f32 0.0, %v5671
    %v5673 = vpop.f32.mrb[0].mxu0
    %5674 = vmatprep.mubr.f32.mxu0 0.0
    %5675 = vmatmul.mubr.f32.gmra.mrb[0].mxu0 %v5349
    %v5676 = vpop.f32.mrb[0].mxu0
    %v5677 = vadd.f32 0.0, %v5676
    %v5678 = vpop.f32.mrb[0].mxu0
    %5679 = vmatprep.mubr.f32.mxu0 0.0
    %5680 = vmatmul.mubr.f32.gmra.mrb[0].mxu0 %v5350
    %v5681 = vpop.f32.mrb[0].mxu0
    %v5682 = vadd.f32 0.0, %v5681
    %v5683 = vpop.f32.mrb[0].mxu0
    %5684 = vmatprep.mubr.f32.mxu0 0.0
    %5685 = vmatmul.mubr.f32.gmra.mrb[0].mxu0 %v5351
    %v5686 = vpop.f32.mrb[0].mxu0
    %v5687 = vadd.f32 0.0, %v5686
    %v5688 = vpop.f32.mrb[0].mxu0
    %5689 = vmatprep.mubr.f32.mxu0 0.0
    %5690 = vmatmul.mubr.f32.gmra.mrb[0].mxu0 %v5352
    %v5691 = vpop.f32.mrb[0].mxu0
    %v5692 = vadd.f32 0.0, %v5691
    %v5693 = vpop.f32.mrb[0].mxu0
    %5694 = vmatprep.mubr.f32.mxu0 0.0
    %5695 = vmatmul.mubr.f32.gmra.mrb[0].mxu0 %v5353
    %v5696 = vpop.f32.mrb[0].mxu0
    %v5697 = vadd.f32 0.0, %v5696
    %v5698 = vpop.f32.mrb[0].mxu0
    %5699 = vmatprep.mubr.f32.mxu0 0.0
    %5700 = vmatmul.mubr.f32.gmra.mrb[0].mxu0 %v5354
    %v5701 = vpop.f32.mrb[0].mxu0
    %v5702 = vadd.f32 0.0, %v5701
    %v5703 = vpop.f32.mrb[0].mxu0
    %5704 = vmatprep.mubr.f32.mxu0 0.0
    %5705 = vmatmul.mubr.f32.gmra.mrb[0].mxu0 %v5355
    %v5706 = vpop.f32.mrb[0].mxu0
    %v5707 = vadd.f32 0.0, %v5706
    %v5708 = vpop.f32.mrb[0].mxu0
    %5709 = vmatprep.mubr.f32.mxu0 0.0
    %5710 = vmatmul.mubr.f32.gmra.mrb[0].mxu0 %v5356
    %v5711 = vpop.f32.mrb[0].mxu0
    %v5712 = vadd.f32 0.0, %v5711
    %v5713 = vpop.f32.mrb[0].mxu0
    %5714 = vmatprep.mubr.f32.mxu0 0.0
    %5715 = vmatmul.mubr.f32.gmra.mrb[0].mxu0 %v5357
    %v5716 = vpop.f32.mrb[0].mxu0
    %v5717 = vadd.f32 0.0, %v5716
    %v5718 = vpop.f32.mrb[0].mxu0
    %5719 = vmatprep.mubr.f32.mxu0 0.0
    %5720 = vmatmul.mubr.f32.gmra.mrb[0].mxu0 %v5358
    %v5721 = vpop.f32.mrb[0].mxu0
    %v5722 = vadd.f32 0.0, %v5721
    %v5723 = vpop.f32.mrb[0].mxu0
    %5724 = vmatprep.mubr.f32.mxu0 0.0
    %5725 = vmatmul.mubr.f32.gmra.mrb[0].mxu0 %v5359
    %v5726 = vpop.f32.mrb[0].mxu0
    %v5727 = vadd.f32 0.0, %v5726
    %v5728 = vpop.f32.mrb[0].mxu0
    %5729 = vmatprep.mubr.f32.mxu0 0.0
    %5730 = vmatmul.mubr.f32.gmra.mrb[0].mxu0 %v5360
    %v5731 = vpop.f32.mrb[0].mxu0
    %v5732 = vadd.f32 0.0, %v5731
    %v5733 = vpop.f32.mrb[0].mxu0
    %5734 = vmatprep.mubr.f32.mxu0 0.0
    %5735 = vmatmul.mubr.f32.gmra.mrb[0].mxu0 %v5361
    %v5736 = vpop.f32.mrb[0].mxu0
    %v5737 = vadd.f32 0.0, %v5736
    %v5738 = vpop.f32.mrb[0].mxu0
    %5739 = vmatprep.mubr.f32.mxu0 0.0
    %5740 = vmatmul.mubr.f32.gmra.mrb[0].mxu0 %v5362
    %v5741 = vpop.f32.mrb[0].mxu0
    %v5742 = vadd.f32 0.0, %v5741
    %v5743 = vpop.f32.mrb[0].mxu0
    %5744 = vmatprep.mubr.f32.mxu0 0.0
    %5745 = vmatmul.mubr.f32.gmra.mrb[0].mxu0 %v5363
    %v5746 = vpop.f32.mrb[0].mxu0
    %v5747 = vadd.f32 0.0, %v5746
    %v5748 = vpop.f32.mrb[0].mxu0
    %5749 = vmatprep.mubr.f32.mxu0 0.0
    %5750 = vmatmul.mubr.f32.gmra.mrb[0].mxu0 %v5364
    %v5751 = vpop.f32.mrb[0].mxu0
    %v5752 = vadd.f32 0.0, %v5751
    %v5753 = vpop.f32.mrb[0].mxu0
    %5754 = vmatprep.mubr.f32.mxu0 0.0
    %5755 = vmatmul.mubr.f32.gmra.mrb[0].mxu0 %v5365
    %v5756 = vpop.f32.mrb[0].mxu0
    %v5757 = vadd.f32 0.0, %v5756
    %v5758 = vpop.f32.mrb[0].mxu0
    %5759 = vmatprep.mubr.f32.mxu0 0.0
    %5760 = vmatmul.mubr.f32.gmra.mrb[0].mxu0 %v5366
    %v5761 = vpop.f32.mrb[0].mxu0
    %v5762 = vadd.f32 0.0, %v5761
    %v5763 = vpop.f32.mrb[0].mxu0
    %5764 = vmatprep.mubr.f32.mxu0 0.0
    %5765 = vmatmul.mubr.f32.gmra.mrb[0].mxu0 %v5367
    %v5766 = vpop.f32.mrb[0].mxu0
    %v5767 = vadd.f32 0.0, %v5766
    %v5768 = vpop.f32.mrb[0].mxu0
    %5769 = vmatprep.mubr.f32.mxu0 0.0
    %5770 = vmatmul.mubr.f32.gmra.mrb[0].mxu0 %v5368
    %v5771 = vpop.f32.mrb[0].mxu0
    %v5772 = vadd.f32 0.0, %v5771
    %v5773 = vpop.f32.mrb[0].mxu0
    %5774 = vmatprep.mubr.f32.mxu0 0.0
    %5775 = vmatmul.mubr.f32.gmra.mrb[0].mxu0 %v5369
    %v5776 = vpop.f32.mrb[0].mxu0
    %v5777 = vadd.f32 0.0, %v5776
    %v5778 = vpop.f32.mrb[0].mxu0
    %5779 = vmatprep.mubr.f32.mxu0 0.0
    %5780 = vmatmul.mubr.f32.gmra.mrb[0].mxu0 %v5370
    %v5781 = vpop.f32.mrb[0].mxu0
    %v5782 = vadd.f32 0.0, %v5781
    %v5783 = vpop.f32.mrb[0].mxu0
    %5784 = vmatprep.mubr.f32.mxu0 0.0
    %5785 = vmatmul.mubr.f32.gmra.mrb[0].mxu0 %v5371
    %v5786 = vpop.f32.mrb[0].mxu0
    %v5787 = vadd.f32 0.0, %v5786
    %v5788 = vpop.f32.mrb[0].mxu0
    %5789 = vmatprep.mubr.f32.mxu0 0.0
    %5790 = vmatmul.mubr.f32.gmra.mrb[0].mxu0 %v5372
    %v5791 = vpop.f32.mrb[0].mxu0
    %v5792 = vadd.f32 0.0, %v5791
    %v5793 = vpop.f32.mrb[0].mxu0
    %5794 = vmatprep.mubr.f32.mxu0 0.0
    %5795 = vmatmul.mubr.f32.gmra.mrb[0].mxu0 %v5373
    %v5796 = vpop.f32.mrb[0].mxu0
    %v5797 = vadd.f32 0.0, %v5796
    %v5798 = vpop.f32.mrb[0].mxu0
    %5799 = vmatprep.mubr.f32.mxu0 0.0
    %5800 = vmatmul.mubr.f32.gmra.mrb[0].mxu0 %v5374
    %v5801 = vpop.f32.mrb[0].mxu0
    %v5802 = vadd.f32 0.0, %v5801
    %v5803 = vpop.f32.mrb[0].mxu0
    %5804 = vmatprep.mubr.f32.mxu0 0.0
    %5805 = vmatmul.mubr.f32.gmra.mrb[0].mxu0 %v5375
    %v5806 = vpop.f32.mrb[0].mxu0
    %v5807 = vadd.f32 0.0, %v5806
    %v5808 = vpop.f32.mrb[0].mxu0
    %5809 = vmatprep.mubr.f32.mxu0 0.0
    %5810 = vmatmul.mubr.f32.gmra.mrb[0].mxu0 %v5376
    %v5811 = vpop.f32.mrb[0].mxu0
    %v5812 = vadd.f32 0.0, %v5811
    %v5813 = vpop.f32.mrb[0].mxu0
    %5814 = vmatprep.mubr.f32.mxu0 0.0
    %5815 = vmatmul.mubr.f32.gmra.mrb[0].mxu0 %v5377
    %v5816 = vpop.f32.mrb[0].mxu0
    %v5817 = vadd.f32 0.0, %v5816
    %v5818 = vpop.f32.mrb[0].mxu0
    %5819 = vmatprep.mubr.f32.mxu0 0.0
    %5820 = vmatmul.mubr.f32.gmra.mrb[0].mxu0 %v5378
    %v5821 = vpop.f32.mrb[0].mxu0
    %v5822 = vadd.f32 0.0, %v5821
    %v5823 = vpop.f32.mrb[0].mxu0
    %5824 = vmatprep.mubr.f32.mxu0 0.0
    %5825 = vmatmul.mubr.f32.gmra.mrb[0].mxu0 %v5379
    %v5826 = vpop.f32.mrb[0].mxu0
    %v5827 = vadd.f32 0.0, %v5826
    %v5828 = vpop.f32.mrb[0].mxu0
    %5829 = vmatprep.mubr.f32.mxu0 0.0
    %5830 = vmatmul.mubr.f32.gmra.mrb[0].mxu0 %v5380
    %v5831 = vpop.f32.mrb[0].mxu0
    %v5832 = vadd.f32 0.0, %v5831
    %v5833 = vpop.f32.mrb[0].mxu0
    %5834 = vmatprep.mubr.f32.mxu0 0.0
    %5835 = vmatmul.mubr.f32.gmra.mrb[0].mxu0 %v5381
    %v5836 = vpop.f32.mrb[0].mxu0
    %v5837 = vadd.f32 0.0, %v5836
    %v5838 = vpop.f32.mrb[0].mxu0
    %5839 = vmatprep.mubr.f32.mxu0 0.0
    %5840 = vmatmul.mubr.f32.gmra.mrb[0].mxu0 %v5382
    %v5841 = vpop.f32.mrb[0].mxu0
    %v5842 = vadd.f32 0.0, %v5841
    %v5843 = vpop.f32.mrb[0].mxu0
    %5844 = vmatprep.mubr.f32.mxu0 0.0
    %5845 = vmatmul.mubr.f32.gmra.mrb[0].mxu0 %v5383
    %v5846 = vpop.f32.mrb[0].mxu0
    %v5847 = vadd.f32 0.0, %v5846
    %v5848 = vpop.f32.mrb[0].mxu0
    %5849 = vmatprep.mubr.f32.mxu0 0.0
    %5850 = vmatmul.mubr.f32.gmra.mrb[0].mxu0 %v5384
    %v5851 = vpop.f32.mrb[0].mxu0
    %v5852 = vadd.f32 0.0, %v5851
    %v5853 = vpop.f32.mrb[0].mxu0
    %5854 = vmatprep.mubr.f32.mxu0 0.0
    %5855 = vmatmul.mubr.f32.gmra.mrb[0].mxu0 %v5385
    %v5856 = vpop.f32.mrb[0].mxu0
    %v5857 = vadd.f32 0.0, %v5856
    %v5858 = vpop.f32.mrb[0].mxu0
    %5859 = vmatprep.mubr.f32.mxu0 0.0
    %5860 = vmatmul.mubr.f32.gmra.mrb[0].mxu0 %v5386
    %v5861 = vpop.f32.mrb[0].mxu0
    %v5862 = vadd.f32 0.0, %v5861
    %v5863 = vpop.f32.mrb[0].mxu0
    %5864 = vmatprep.mubr.f32.mxu0 0.0
    %5865 = vmatmul.mubr.f32.gmra.mrb[0].mxu0 %v5387
    %v5866 = vpop.f32.mrb[0].mxu0
    %v5867 = vadd.f32 0.0, %v5866
    %v5868 = vpop.f32.mrb[0].mxu0
    %5869 = vmatprep.mubr.f32.mxu0 0.0
    %5870 = vmatmul.mubr.f32.gmra.mrb[0].mxu0 %v5388
    %v5871 = vpop.f32.mrb[0].mxu0
    %v5872 = vadd.f32 0.0, %v5871
    %v5873 = vpop.f32.mrb[0].mxu0
    %5874 = vmatprep.mubr.f32.mxu0 0.0
    %5875 = vmatmul.mubr.f32.gmra.mrb[0].mxu0 %v5389
    %v5876 = vpop.f32.mrb[0].mxu0
    %v5877 = vadd.f32 0.0, %v5876
    %v5878 = vpop.f32.mrb[0].mxu0
    %5879 = vmatprep.mubr.f32.mxu0 0.0
    %5880 = vmatmul.mubr.f32.gmra.mrb[0].mxu0 %v5390
    %v5881 = vpop.f32.mrb[0].mxu0
    %v5882 = vadd.f32 0.0, %v5881
    %v5883 = vpop.f32.mrb[0].mxu0
    %5884 = vmatprep.mubr.f32.mxu0 0.0
    %5885 = vmatmul.mubr.f32.gmra.mrb[0].mxu0 %v5391
    %v5886 = vpop.f32.mrb[0].mxu0
    %v5887 = vadd.f32 0.0, %v5886
    %v5888 = vpop.f32.mrb[0].mxu0
    %5889 = vmatprep.mubr.f32.mxu0 0.0
    %5890 = vmatmul.mubr.f32.gmra.mrb[0].mxu0 %v5392
    %v5891 = vpop.f32.mrb[0].mxu0
    %v5892 = vadd.f32 0.0, %v5891
    %v5893 = vpop.f32.mrb[0].mxu0
    %5894 = vmatprep.mubr.f32.mxu0 0.0
    %5895 = vmatmul.mubr.f32.gmra.mrb[0].mxu0 %v5393
    %v5896 = vpop.f32.mrb[0].mxu0
    %v5897 = vadd.f32 0.0, %v5896
    %v5898 = vpop.f32.mrb[0].mxu0
    %5899 = vmatprep.mubr.f32.mxu0 0.0
    %5900 = vmatmul.mubr.f32.gmra.mrb[0].mxu0 %v5394
    %v5901 = vpop.f32.mrb[0].mxu0
    %v5902 = vadd.f32 0.0, %v5901
    %v5903 = vpop.f32.mrb[0].mxu0
    %5904 = vmatprep.mubr.f32.mxu0 0.0
    %5905 = vmatmul.mubr.f32.gmra.mrb[0].mxu0 %v5395
    %v5906 = vpop.f32.mrb[0].mxu0
    %v5907 = vadd.f32 0.0, %v5906
    %v5908 = vpop.f32.mrb[0].mxu0
    %5909 = vmatprep.mubr.f32.mxu0 0.0
    %5910 = vmatmul.mubr.f32.gmra.mrb[0].mxu0 %v5396
    %v5911 = vpop.f32.mrb[0].mxu0
    %v5912 = vadd.f32 0.0, %v5911
    %v5913 = vpop.f32.mrb[0].mxu0
    %5914 = vmatprep.mubr.f32.mxu0 0.0
    %5915 = vmatmul.mubr.f32.gmra.mrb[0].mxu0 %v5397
    %v5916 = vpop.f32.mrb[0].mxu0
    %v5917 = vadd.f32 0.0, %v5916
    %v5918 = vpop.f32.mrb[0].mxu0
    %5919 = vmatprep.mubr.f32.mxu0 0.0
    %5920 = vmatmul.mubr.f32.gmra.mrb[0].mxu0 %v5398
    %v5921 = vpop.f32.mrb[0].mxu0
    %v5922 = vadd.f32 0.0, %v5921
    %v5923 = vpop.f32.mrb[0].mxu0
    %5924 = vmatprep.mubr.f32.mxu0 0.0
    %5925 = vmatmul.mubr.f32.gmra.mrb[0].mxu0 %v5399
    %v5926 = vpop.f32.mrb[0].mxu0
    %v5927 = vadd.f32 0.0, %v5926
    %v5928 = vpop.f32.mrb[0].mxu0
    %5929 = vmatprep.mubr.f32.mxu0 0.0
    %5930 = vmatmul.mubr.f32.gmra.mrb[0].mxu0 %v5400
    %v5931 = vpop.f32.mrb[0].mxu0
    %v5932 = vadd.f32 0.0, %v5931
    %v5933 = vpop.f32.mrb[0].mxu0
    %5934 = vmatprep.mubr.f32.mxu0 0.0
    %5935 = vmatmul.mubr.f32.gmra.mrb[0].mxu0 %v5401
    %v5936 = vpop.f32.mrb[0].mxu0
    %v5937 = vadd.f32 0.0, %v5936
    %v5938 = vpop.f32.mrb[0].mxu0
    %5939 = vmatprep.mubr.f32.mxu0 0.0
    %5940 = vmatmul.mubr.f32.gmra.mrb[0].mxu0 %v5402
    %v5941 = vpop.f32.mrb[0].mxu0
    %v5942 = vadd.f32 0.0, %v5941
    %v5943 = vpop.f32.mrb[0].mxu0
    %5944 = vmatprep.mubr.f32.mxu0 0.0
    %5945 = vmatmul.mubr.f32.gmra.mrb[0].mxu0 %v5403
    %v5946 = vpop.f32.mrb[0].mxu0
    %v5947 = vadd.f32 0.0, %v5946
    %v5948 = vpop.f32.mrb[0].mxu0
    %5949 = vmatprep.mubr.f32.mxu0 0.0
    %5950 = vmatmul.mubr.f32.gmra.mrb[0].mxu0 %v5404
    %v5951 = vpop.f32.mrb[0].mxu0
    %v5952 = vadd.f32 0.0, %v5951
    %v5953 = vpop.f32.mrb[0].mxu0
    %5954 = vmatprep.mubr.f32.mxu0 0.0
    %5955 = vmatmul.mubr.f32.gmra.mrb[0].mxu0 %v5405
    %v5956 = vpop.f32.mrb[0].mxu0
    %v5957 = vadd.f32 0.0, %v5956
    %v5958 = vpop.f32.mrb[0].mxu0
    %5959 = vmatprep.mubr.f32.mxu0 0.0
    %5960 = vmatmul.mubr.f32.gmra.mrb[0].mxu0 %v5406
    %v5961 = vpop.f32.mrb[0].mxu0
    %v5962 = vadd.f32 0.0, %v5961
    %v5963 = vpop.f32.mrb[0].mxu0
    %5964 = vmatprep.mubr.f32.mxu0 0.0
    %5965 = vmatmul.mubr.f32.gmra.mrb[0].mxu0 %v5407
    %v5966 = vpop.f32.mrb[0].mxu0
    %v5967 = vadd.f32 0.0, %v5966
    %v5968 = vpop.f32.mrb[0].mxu0
    %5969 = vmatprep.mubr.f32.mxu0 0.0
    %5970 = vmatmul.mubr.f32.gmra.mrb[0].mxu0 %v5408
    %v5971 = vpop.f32.mrb[0].mxu0
    %v5972 = vadd.f32 0.0, %v5971
    %v5973 = vpop.f32.mrb[0].mxu0
    %5974 = vmatprep.mubr.f32.mxu0 0.0
    %5975 = vmatmul.mubr.f32.gmra.mrb[0].mxu0 %v5409
    %v5976 = vpop.f32.mrb[0].mxu0
    %v5977 = vadd.f32 0.0, %v5976
    %v5978 = vpop.f32.mrb[0].mxu0
    %5979 = vmatprep.mubr.f32.mxu0 0.0
    %5980 = vmatmul.mubr.f32.gmra.mrb[0].mxu0 %v5410
    %v5981 = vpop.f32.mrb[0].mxu0
    %v5982 = vadd.f32 0.0, %v5981
    %v5983 = vpop.f32.mrb[0].mxu0
    %5984 = vmatprep.mubr.f32.mxu0 0.0
    %5985 = vmatmul.mubr.f32.gmra.mrb[0].mxu0 %v5411
    %v5986 = vpop.f32.mrb[0].mxu0
    %v5987 = vadd.f32 0.0, %v5986
    %v5988 = vpop.f32.mrb[0].mxu0
    %5989 = vmatprep.mubr.f32.mxu0 0.0
    %5990 = vmatmul.mubr.f32.gmra.mrb[0].mxu0 %v5412
    %v5991 = vpop.f32.mrb[0].mxu0
    %v5992 = vadd.f32 0.0, %v5991
    %v5993 = vpop.f32.mrb[0].mxu0
    %5994 = vdwg.mxu0
    %v5995 = vadd.f32 %v5213, %v5497
    %v5996 = vadd.f32 %v5214, %v5502
    %v5997 = vadd.f32 %v5215, %v5507
    %v5998 = vadd.f32 %v5216, %v5512
    %v5999 = vadd.f32 %v5217, %v5517
    %v6000 = vadd.f32 %v5218, %v5522
    %v6001 = vadd.f32 %v5219, %v5527
    %v6002 = vadd.f32 %v5220, %v5532
    %v6003 = vadd.f32 %v5221, %v5537
    %v6004 = vadd.f32 %v5222, %v5542
    %v6005 = vadd.f32 %v5223, %v5547
    %v6006 = vadd.f32 %v5224, %v5552
    %v6007 = vadd.f32 %v5225, %v5557
    %v6008 = vadd.f32 %v5226, %v5562
    %v6009 = vadd.f32 %v5227, %v5567
    %v6010 = vadd.f32 %v5228, %v5572
    %v6011 = vadd.f32 %v5229, %v5577
    %v6012 = vadd.f32 %v5230, %v5582
    %v6013 = vadd.f32 %v5231, %v5587
    %v6014 = vadd.f32 %v5232, %v5592
    %v6015 = vadd.f32 %v5233, %v5597
    %v6016 = vadd.f32 %v5234, %v5602
    %v6017 = vadd.f32 %v5235, %v5607
    %v6018 = vadd.f32 %v5236, %v5612
    %v6019 = vadd.f32 %v5237, %v5617
    %v6020 = vadd.f32 %v5238, %v5622
    %v6021 = vadd.f32 %v5239, %v5627
    %v6022 = vadd.f32 %v5240, %v5632
    %v6023 = vadd.f32 %v5241, %v5637
    %v6024 = vadd.f32 %v5242, %v5642
    %v6025 = vadd.f32 %v5243, %v5647
    %v6026 = vadd.f32 %v5244, %v5652
    %v6027 = vadd.f32 %v5245, %v5657
    %v6028 = vadd.f32 %v5246, %v5662
    %v6029 = vadd.f32 %v5247, %v5667
    %v6030 = vadd.f32 %v5248, %v5672
    %v6031 = vadd.f32 %v5249, %v5677
    %v6032 = vadd.f32 %v5250, %v5682
    %v6033 = vadd.f32 %v5251, %v5687
    %v6034 = vadd.f32 %v5252, %v5692
    %v6035 = vadd.f32 %v5253, %v5697
    %v6036 = vadd.f32 %v5254, %v5702
    %v6037 = vadd.f32 %v5255, %v5707
    %v6038 = vadd.f32 %v5256, %v5712
    %v6039 = vadd.f32 %v5257, %v5717
    %v6040 = vadd.f32 %v5258, %v5722
    %v6041 = vadd.f32 %v5259, %v5727
    %v6042 = vadd.f32 %v5260, %v5732
    %v6043 = vadd.f32 %v5261, %v5737
    %v6044 = vadd.f32 %v5262, %v5742
    %v6045 = vadd.f32 %v5263, %v5747
    %v6046 = vadd.f32 %v5264, %v5752
    %v6047 = vadd.f32 %v5265, %v5757
    %v6048 = vadd.f32 %v5266, %v5762
    %v6049 = vadd.f32 %v5267, %v5767
    %v6050 = vadd.f32 %v5268, %v5772
    %v6051 = vadd.f32 %v5269, %v5777
    %v6052 = vadd.f32 %v5270, %v5782
    %v6053 = vadd.f32 %v5271, %v5787
    %v6054 = vadd.f32 %v5272, %v5792
    %v6055 = vadd.f32 %v5273, %v5797
    %v6056 = vadd.f32 %v5274, %v5802
    %v6057 = vadd.f32 %v5275, %v5807
    %v6058 = vadd.f32 %v5276, %v5812
    %v6059 = vadd.f32 %v5277, %v5817
    %v6060 = vadd.f32 %v5278, %v5822
    %v6061 = vadd.f32 %v5279, %v5827
    %v6062 = vadd.f32 %v5280, %v5832
    %v6063 = vadd.f32 %v5281, %v5837
    %v6064 = vadd.f32 %v5282, %v5842
    %v6065 = vadd.f32 %v5283, %v5847
    %v6066 = vadd.f32 %v5284, %v5852
    %v6067 = vadd.f32 %v5285, %v5857
    %v6068 = vadd.f32 %v5286, %v5862
    %v6069 = vadd.f32 %v5287, %v5867
    %v6070 = vadd.f32 %v5288, %v5872
    %v6071 = vadd.f32 %v5289, %v5877
    %v6072 = vadd.f32 %v5290, %v5882
    %v6073 = vadd.f32 %v5291, %v5887
    %v6074 = vadd.f32 %v5292, %v5892
    %v6075 = vadd.f32 %v5293, %v5897
    %v6076 = vadd.f32 %v5294, %v5902
    %v6077 = vadd.f32 %v5295, %v5907
    %v6078 = vadd.f32 %v5296, %v5912
    %v6079 = vadd.f32 %v5297, %v5917
    %v6080 = vadd.f32 %v5298, %v5922
    %v6081 = vadd.f32 %v5299, %v5927
    %v6082 = vadd.f32 %v5300, %v5932
    %v6083 = vadd.f32 %v5301, %v5937
    %v6084 = vadd.f32 %v5302, %v5942
    %v6085 = vadd.f32 %v5303, %v5947
    %v6086 = vadd.f32 %v5304, %v5952
    %v6087 = vadd.f32 %v5305, %v5957
    %v6088 = vadd.f32 %v5306, %v5962
    %v6089 = vadd.f32 %v5307, %v5967
    %v6090 = vadd.f32 %v5308, %v5972
    %v6091 = vadd.f32 %v5309, %v5977
    %v6092 = vadd.f32 %v5310, %v5982
    %v6093 = vadd.f32 %v5311, %v5987
    %v6094 = vadd.f32 %v5312, %v5992
    %v6095 = vld [vmem:[#allocation2 + $0x42] sm:$0xff]
    %v6096 = vld [vmem:[#allocation2 + $0x4a] sm:$0xff]
    %v6097 = vld [vmem:[#allocation2 + $0x52] sm:$0xff]
    %v6098 = vld [vmem:[#allocation2 + $0x5a] sm:$0xff]
    %v6099 = vld [vmem:[#allocation2 + $0x62] sm:$0xff]
    %v6100 = vld [vmem:[#allocation2 + $0x6a] sm:$0xff]
    %v6101 = vld [vmem:[#allocation2 + $0x72] sm:$0xff]
    %v6102 = vld [vmem:[#allocation2 + $0x7a] sm:$0xff]
    %v6103 = vld [vmem:[#allocation2 + $0x82] sm:$0xff]
    %v6104 = vld [vmem:[#allocation2 + $0x8a] sm:$0xff]
    %v6105 = vld [vmem:[#allocation2 + $0x92] sm:$0xff]
    %v6106 = vld [vmem:[#allocation2 + $0x9a] sm:$0xff]
    %v6107 = vld [vmem:[#allocation2 + $0xa2] sm:$0xff]
    %v6108 = vld [vmem:[#allocation2 + $0xaa] sm:$0xff]
    %v6109 = vld [vmem:[#allocation2 + $0xb2] sm:$0xff]
    %v6110 = vld [vmem:[#allocation2 + $0xba] sm:$0xff]
    %v6111 = vld [vmem:[#allocation2 + $0xc2] sm:$0xff]
    %v6112 = vld [vmem:[#allocation2 + $0xca] sm:$0xff]
    %v6113 = vld [vmem:[#allocation2 + $0xd2] sm:$0xff]
    %v6114 = vld [vmem:[#allocation2 + $0xda] sm:$0xff]
    %v6115 = vld [vmem:[#allocation2 + $0xe2] sm:$0xff]
    %v6116 = vld [vmem:[#allocation2 + $0xea] sm:$0xff]
    %v6117 = vld [vmem:[#allocation2 + $0xf2] sm:$0xff]
    %v6118 = vld [vmem:[#allocation2 + $0xfa] sm:$0xff]
    %v6119 = vld [vmem:[#allocation2 + $0x102] sm:$0xff]
    %v6120 = vld [vmem:[#allocation2 + $0x10a] sm:$0xff]
    %v6121 = vld [vmem:[#allocation2 + $0x112] sm:$0xff]
    %v6122 = vld [vmem:[#allocation2 + $0x11a] sm:$0xff]
    %v6123 = vld [vmem:[#allocation2 + $0x122] sm:$0xff]
    %v6124 = vld [vmem:[#allocation2 + $0x12a] sm:$0xff]
    %v6125 = vld [vmem:[#allocation2 + $0x132] sm:$0xff]
    %v6126 = vld [vmem:[#allocation2 + $0x13a] sm:$0xff]
    %v6127 = vld [vmem:[#allocation2 + $0x142] sm:$0xff]
    %v6128 = vld [vmem:[#allocation2 + $0x14a] sm:$0xff]
    %v6129 = vld [vmem:[#allocation2 + $0x152] sm:$0xff]
    %v6130 = vld [vmem:[#allocation2 + $0x15a] sm:$0xff]
    %v6131 = vld [vmem:[#allocation2 + $0x162] sm:$0xff]
    %v6132 = vld [vmem:[#allocation2 + $0x16a] sm:$0xff]
    %v6133 = vld [vmem:[#allocation2 + $0x172] sm:$0xff]
    %v6134 = vld [vmem:[#allocation2 + $0x17a] sm:$0xff]
    %v6135 = vld [vmem:[#allocation2 + $0x182] sm:$0xff]
    %v6136 = vld [vmem:[#allocation2 + $0x18a] sm:$0xff]
    %v6137 = vld [vmem:[#allocation2 + $0x192] sm:$0xff]
    %v6138 = vld [vmem:[#allocation2 + $0x19a] sm:$0xff]
    %v6139 = vld [vmem:[#allocation2 + $0x1a2] sm:$0xff]
    %v6140 = vld [vmem:[#allocation2 + $0x1aa] sm:$0xff]
    %v6141 = vld [vmem:[#allocation2 + $0x1b2] sm:$0xff]
    %v6142 = vld [vmem:[#allocation2 + $0x1ba] sm:$0xff]
    %v6143 = vld [vmem:[#allocation2 + $0x1c2] sm:$0xff]
    %v6144 = vld [vmem:[#allocation2 + $0x1ca] sm:$0xff]
    %v6145 = vld [vmem:[#allocation2 + $0x1d2] sm:$0xff]
    %v6146 = vld [vmem:[#allocation2 + $0x1da] sm:$0xff]
    %v6147 = vld [vmem:[#allocation2 + $0x1e2] sm:$0xff]
    %v6148 = vld [vmem:[#allocation2 + $0x1ea] sm:$0xff]
    %v6149 = vld [vmem:[#allocation2 + $0x1f2] sm:$0xff]
    %v6150 = vld [vmem:[#allocation2 + $0x1fa] sm:$0xff]
    %v6151 = vld [vmem:[#allocation2 + $0x202] sm:$0xff]
    %v6152 = vld [vmem:[#allocation2 + $0x20a] sm:$0xff]
    %v6153 = vld [vmem:[#allocation2 + $0x212] sm:$0xff]
    %v6154 = vld [vmem:[#allocation2 + $0x21a] sm:$0xff]
    %v6155 = vld [vmem:[#allocation2 + $0x222] sm:$0xff]
    %v6156 = vld [vmem:[#allocation2 + $0x22a] sm:$0xff]
    %v6157 = vld [vmem:[#allocation2 + $0x232] sm:$0xff]
    %v6158 = vld [vmem:[#allocation2 + $0x23a] sm:$0xff]
    %v6159 = vld [vmem:[#allocation2 + $0x242] sm:$0xff]
    %v6160 = vld [vmem:[#allocation2 + $0x24a] sm:$0xff]
    %v6161 = vld [vmem:[#allocation2 + $0x252] sm:$0xff]
    %v6162 = vld [vmem:[#allocation2 + $0x25a] sm:$0xff]
    %v6163 = vld [vmem:[#allocation2 + $0x262] sm:$0xff]
    %v6164 = vld [vmem:[#allocation2 + $0x26a] sm:$0xff]
    %v6165 = vld [vmem:[#allocation2 + $0x272] sm:$0xff]
    %v6166 = vld [vmem:[#allocation2 + $0x27a] sm:$0xff]
    %v6167 = vld [vmem:[#allocation2 + $0x282] sm:$0xff]
    %v6168 = vld [vmem:[#allocation2 + $0x28a] sm:$0xff]
    %v6169 = vld [vmem:[#allocation2 + $0x292] sm:$0xff]
    %v6170 = vld [vmem:[#allocation2 + $0x29a] sm:$0xff]
    %v6171 = vld [vmem:[#allocation2 + $0x2a2] sm:$0xff]
    %v6172 = vld [vmem:[#allocation2 + $0x2aa] sm:$0xff]
    %v6173 = vld [vmem:[#allocation2 + $0x2b2] sm:$0xff]
    %v6174 = vld [vmem:[#allocation2 + $0x2ba] sm:$0xff]
    %v6175 = vld [vmem:[#allocation2 + $0x2c2] sm:$0xff]
    %v6176 = vld [vmem:[#allocation2 + $0x2ca] sm:$0xff]
    %v6177 = vld [vmem:[#allocation2 + $0x2d2] sm:$0xff]
    %v6178 = vld [vmem:[#allocation2 + $0x2da] sm:$0xff]
    %v6179 = vld [vmem:[#allocation2 + $0x2e2] sm:$0xff]
    %v6180 = vld [vmem:[#allocation2 + $0x2ea] sm:$0xff]
    %v6181 = vld [vmem:[#allocation2 + $0x2f2] sm:$0xff]
    %v6182 = vld [vmem:[#allocation2 + $0x2fa] sm:$0xff]
    %v6183 = vld [vmem:[#allocation2 + $0x302] sm:$0xff]
    %v6184 = vld [vmem:[#allocation2 + $0x30a] sm:$0xff]
    %v6185 = vld [vmem:[#allocation2 + $0x312] sm:$0xff]
    %v6186 = vld [vmem:[#allocation2 + $0x31a] sm:$0xff]
    %v6187 = vld [vmem:[#allocation2 + $0x322] sm:$0xff]
    %v6188 = vld [vmem:[#allocation2 + $0x32a] sm:$0xff]
    %v6189 = vld [vmem:[#allocation2 + $0x332] sm:$0xff]
    %v6190 = vld [vmem:[#allocation2 + $0x33a] sm:$0xff]
    %v6191 = vld [vmem:[#allocation2 + $0x342] sm:$0xff]
    %v6192 = vld [vmem:[#allocation2 + $0x34a] sm:$0xff]
    %v6193 = vld [vmem:[#allocation2 + $0x352] sm:$0xff]
    %v6194 = vld [vmem:[#allocation2 + $0x35a] sm:$0xff]
    %s6195 = scalar_lea.vmem [#allocation5], 1024
    %v6196 = vld [vmem:[%s6195] sm:$0xff]
    %v6197 = vld [vmem:[%s6195 + $0x8] sm:$0xff]
    %v6198 = vld [vmem:[%s6195 + $0x10] sm:$0xff]
    %v6199 = vld [vmem:[%s6195 + $0x18] sm:$0xff]
    %v6200 = vld [vmem:[%s6195 + $0x20] sm:$0xff]
    %v6201 = vld [vmem:[%s6195 + $0x28] sm:$0xff]
    %v6202 = vld [vmem:[%s6195 + $0x30] sm:$0xff]
    %v6203 = vld [vmem:[%s6195 + $0x38] sm:$0xff]
    %v6204 = vld [vmem:[%s6195 + $0x40] sm:$0xff]
    %v6205 = vld [vmem:[%s6195 + $0x48] sm:$0xff]
    %v6206 = vld [vmem:[%s6195 + $0x50] sm:$0xff]
    %v6207 = vld [vmem:[%s6195 + $0x58] sm:$0xff]
    %v6208 = vld [vmem:[%s6195 + $0x60] sm:$0xff]
    %v6209 = vld [vmem:[%s6195 + $0x68] sm:$0xff]
    %v6210 = vld [vmem:[%s6195 + $0x70] sm:$0xff]
    %v6211 = vld [vmem:[%s6195 + $0x78] sm:$0xff]
    %6212 = vmatprep.subr.mxu0 0.0
    %6213 = vmatpush1.msra.mxu0 %v6196
    %6214 = vmatprep.subr.mxu0 0.0
    %6215 = vmatpush1.msra.mxu0 %v6197
    %6216 = vmatprep.subr.mxu0 0.0
    %6217 = vmatpush1.msra.mxu0 %v6198
    %6218 = vmatprep.subr.mxu0 0.0
    %6219 = vmatpush1.msra.mxu0 %v6199
    %6220 = vmatprep.subr.mxu0 0.0
    %6221 = vmatpush1.msra.mxu0 %v6200
    %6222 = vmatprep.subr.mxu0 0.0
    %6223 = vmatpush1.msra.mxu0 %v6201
    %6224 = vmatprep.subr.mxu0 0.0
    %6225 = vmatpush1.msra.mxu0 %v6202
    %6226 = vmatprep.subr.mxu0 0.0
    %6227 = vmatpush1.msra.mxu0 %v6203
    %6228 = vmatprep.subr.mxu0 0.0
    %6229 = vmatpush1.msra.mxu0 %v6204
    %6230 = vmatprep.subr.mxu0 0.0
    %6231 = vmatpush1.msra.mxu0 %v6205
    %6232 = vmatprep.subr.mxu0 0.0
    %6233 = vmatpush1.msra.mxu0 %v6206
    %6234 = vmatprep.subr.mxu0 0.0
    %6235 = vmatpush1.msra.mxu0 %v6207
    %6236 = vmatprep.subr.mxu0 0.0
    %6237 = vmatpush1.msra.mxu0 %v6208
    %6238 = vmatprep.subr.mxu0 0.0
    %6239 = vmatpush1.msra.mxu0 %v6209
    %6240 = vmatprep.subr.mxu0 0.0
    %6241 = vmatpush1.msra.mxu0 %v6210
    %6242 = vmatprep.subr.mxu0 0.0
    %6243 = vmatpush1.msra.mxu0 %v6211
    %6244 = vmatprep.subr.mxu0 0.0
    %6245 = vmatpush1.msra.mxu0 0.0
    %6246 = vmatprep.subr.mxu0 0.0
    %6247 = vmatpush1.msra.mxu0 0.0
    %6248 = vmatprep.subr.mxu0 0.0
    %6249 = vmatpush1.msra.mxu0 0.0
    %6250 = vmatprep.subr.mxu0 0.0
    %6251 = vmatpush1.msra.mxu0 0.0
    %6252 = vmatprep.subr.mxu0 0.0
    %6253 = vmatpush1.msra.mxu0 0.0
    %6254 = vmatprep.subr.mxu0 0.0
    %6255 = vmatpush1.msra.mxu0 0.0
    %6256 = vmatprep.subr.mxu0 0.0
    %6257 = vmatpush1.msra.mxu0 0.0
    %6258 = vmatprep.subr.mxu0 0.0
    %6259 = vmatpush1.msra.mxu0 0.0
    %6260 = vmatprep.subr.mxu0 0.0
    %6261 = vmatpush1.msra.mxu0 0.0
    %6262 = vmatprep.subr.mxu0 0.0
    %6263 = vmatpush1.msra.mxu0 0.0
    %6264 = vmatprep.subr.mxu0 0.0
    %6265 = vmatpush1.msra.mxu0 0.0
    %6266 = vmatprep.subr.mxu0 0.0
    %6267 = vmatpush1.msra.mxu0 0.0
    %6268 = vmatprep.subr.mxu0 0.0
    %6269 = vmatpush1.msra.mxu0 0.0
    %6270 = vmatprep.subr.mxu0 0.0
    %6271 = vmatpush1.msra.mxu0 0.0
    %6272 = vmatprep.subr.mxu0 0.0
    %6273 = vmatpush1.msra.mxu0 0.0
    %6274 = vmatprep.subr.mxu0 0.0
    %6275 = vmatpush1.msra.mxu0 0.0
    %6276 = vmatprep.mubr.f32.mxu0 0.0
    %6277 = vmatmul.mubr.f32.gmra.mrb[0].mxu0 %v6095
    %v6278 = vpop.f32.mrb[0].mxu0
    %v6279 = vadd.f32 0.0, %v6278
    %v6280 = vpop.f32.mrb[0].mxu0
    %6281 = vmatprep.mubr.f32.mxu0 0.0
    %6282 = vmatmul.mubr.f32.gmra.mrb[0].mxu0 %v6096
    %v6283 = vpop.f32.mrb[0].mxu0
    %v6284 = vadd.f32 0.0, %v6283
    %v6285 = vpop.f32.mrb[0].mxu0
    %6286 = vmatprep.mubr.f32.mxu0 0.0
    %6287 = vmatmul.mubr.f32.gmra.mrb[0].mxu0 %v6097
    %v6288 = vpop.f32.mrb[0].mxu0
    %v6289 = vadd.f32 0.0, %v6288
    %v6290 = vpop.f32.mrb[0].mxu0
    %6291 = vmatprep.mubr.f32.mxu0 0.0
    %6292 = vmatmul.mubr.f32.gmra.mrb[0].mxu0 %v6098
    %v6293 = vpop.f32.mrb[0].mxu0
    %v6294 = vadd.f32 0.0, %v6293
    %v6295 = vpop.f32.mrb[0].mxu0
    %6296 = vmatprep.mubr.f32.mxu0 0.0
    %6297 = vmatmul.mubr.f32.gmra.mrb[0].mxu0 %v6099
    %v6298 = vpop.f32.mrb[0].mxu0
    %v6299 = vadd.f32 0.0, %v6298
    %v6300 = vpop.f32.mrb[0].mxu0
    %6301 = vmatprep.mubr.f32.mxu0 0.0
    %6302 = vmatmul.mubr.f32.gmra.mrb[0].mxu0 %v6100
    %v6303 = vpop.f32.mrb[0].mxu0
    %v6304 = vadd.f32 0.0, %v6303
    %v6305 = vpop.f32.mrb[0].mxu0
    %6306 = vmatprep.mubr.f32.mxu0 0.0
    %6307 = vmatmul.mubr.f32.gmra.mrb[0].mxu0 %v6101
    %v6308 = vpop.f32.mrb[0].mxu0
    %v6309 = vadd.f32 0.0, %v6308
    %v6310 = vpop.f32.mrb[0].mxu0
    %6311 = vmatprep.mubr.f32.mxu0 0.0
    %6312 = vmatmul.mubr.f32.gmra.mrb[0].mxu0 %v6102
    %v6313 = vpop.f32.mrb[0].mxu0
    %v6314 = vadd.f32 0.0, %v6313
    %v6315 = vpop.f32.mrb[0].mxu0
    %6316 = vmatprep.mubr.f32.mxu0 0.0
    %6317 = vmatmul.mubr.f32.gmra.mrb[0].mxu0 %v6103
    %v6318 = vpop.f32.mrb[0].mxu0
    %v6319 = vadd.f32 0.0, %v6318
    %v6320 = vpop.f32.mrb[0].mxu0
    %6321 = vmatprep.mubr.f32.mxu0 0.0
    %6322 = vmatmul.mubr.f32.gmra.mrb[0].mxu0 %v6104
    %v6323 = vpop.f32.mrb[0].mxu0
    %v6324 = vadd.f32 0.0, %v6323
    %v6325 = vpop.f32.mrb[0].mxu0
    %6326 = vmatprep.mubr.f32.mxu0 0.0
    %6327 = vmatmul.mubr.f32.gmra.mrb[0].mxu0 %v6105
    %v6328 = vpop.f32.mrb[0].mxu0
    %v6329 = vadd.f32 0.0, %v6328
    %v6330 = vpop.f32.mrb[0].mxu0
    %6331 = vmatprep.mubr.f32.mxu0 0.0
    %6332 = vmatmul.mubr.f32.gmra.mrb[0].mxu0 %v6106
    %v6333 = vpop.f32.mrb[0].mxu0
    %v6334 = vadd.f32 0.0, %v6333
    %v6335 = vpop.f32.mrb[0].mxu0
    %6336 = vmatprep.mubr.f32.mxu0 0.0
    %6337 = vmatmul.mubr.f32.gmra.mrb[0].mxu0 %v6107
    %v6338 = vpop.f32.mrb[0].mxu0
    %v6339 = vadd.f32 0.0, %v6338
    %v6340 = vpop.f32.mrb[0].mxu0
    %6341 = vmatprep.mubr.f32.mxu0 0.0
    %6342 = vmatmul.mubr.f32.gmra.mrb[0].mxu0 %v6108
    %v6343 = vpop.f32.mrb[0].mxu0
    %v6344 = vadd.f32 0.0, %v6343
    %v6345 = vpop.f32.mrb[0].mxu0
    %6346 = vmatprep.mubr.f32.mxu0 0.0
    %6347 = vmatmul.mubr.f32.gmra.mrb[0].mxu0 %v6109
    %v6348 = vpop.f32.mrb[0].mxu0
    %v6349 = vadd.f32 0.0, %v6348
    %v6350 = vpop.f32.mrb[0].mxu0
    %6351 = vmatprep.mubr.f32.mxu0 0.0
    %6352 = vmatmul.mubr.f32.gmra.mrb[0].mxu0 %v6110
    %v6353 = vpop.f32.mrb[0].mxu0
    %v6354 = vadd.f32 0.0, %v6353
    %v6355 = vpop.f32.mrb[0].mxu0
    %6356 = vmatprep.mubr.f32.mxu0 0.0
    %6357 = vmatmul.mubr.f32.gmra.mrb[0].mxu0 %v6111
    %v6358 = vpop.f32.mrb[0].mxu0
    %v6359 = vadd.f32 0.0, %v6358
    %v6360 = vpop.f32.mrb[0].mxu0
    %6361 = vmatprep.mubr.f32.mxu0 0.0
    %6362 = vmatmul.mubr.f32.gmra.mrb[0].mxu0 %v6112
    %v6363 = vpop.f32.mrb[0].mxu0
    %v6364 = vadd.f32 0.0, %v6363
    %v6365 = vpop.f32.mrb[0].mxu0
    %6366 = vmatprep.mubr.f32.mxu0 0.0
    %6367 = vmatmul.mubr.f32.gmra.mrb[0].mxu0 %v6113
    %v6368 = vpop.f32.mrb[0].mxu0
    %v6369 = vadd.f32 0.0, %v6368
    %v6370 = vpop.f32.mrb[0].mxu0
    %6371 = vmatprep.mubr.f32.mxu0 0.0
    %6372 = vmatmul.mubr.f32.gmra.mrb[0].mxu0 %v6114
    %v6373 = vpop.f32.mrb[0].mxu0
    %v6374 = vadd.f32 0.0, %v6373
    %v6375 = vpop.f32.mrb[0].mxu0
    %6376 = vmatprep.mubr.f32.mxu0 0.0
    %6377 = vmatmul.mubr.f32.gmra.mrb[0].mxu0 %v6115
    %v6378 = vpop.f32.mrb[0].mxu0
    %v6379 = vadd.f32 0.0, %v6378
    %v6380 = vpop.f32.mrb[0].mxu0
    %6381 = vmatprep.mubr.f32.mxu0 0.0
    %6382 = vmatmul.mubr.f32.gmra.mrb[0].mxu0 %v6116
    %v6383 = vpop.f32.mrb[0].mxu0
    %v6384 = vadd.f32 0.0, %v6383
    %v6385 = vpop.f32.mrb[0].mxu0
    %6386 = vmatprep.mubr.f32.mxu0 0.0
    %6387 = vmatmul.mubr.f32.gmra.mrb[0].mxu0 %v6117
    %v6388 = vpop.f32.mrb[0].mxu0
    %v6389 = vadd.f32 0.0, %v6388
    %v6390 = vpop.f32.mrb[0].mxu0
    %6391 = vmatprep.mubr.f32.mxu0 0.0
    %6392 = vmatmul.mubr.f32.gmra.mrb[0].mxu0 %v6118
    %v6393 = vpop.f32.mrb[0].mxu0
    %v6394 = vadd.f32 0.0, %v6393
    %v6395 = vpop.f32.mrb[0].mxu0
    %6396 = vmatprep.mubr.f32.mxu0 0.0
    %6397 = vmatmul.mubr.f32.gmra.mrb[0].mxu0 %v6119
    %v6398 = vpop.f32.mrb[0].mxu0
    %v6399 = vadd.f32 0.0, %v6398
    %v6400 = vpop.f32.mrb[0].mxu0
    %6401 = vmatprep.mubr.f32.mxu0 0.0
    %6402 = vmatmul.mubr.f32.gmra.mrb[0].mxu0 %v6120
    %v6403 = vpop.f32.mrb[0].mxu0
    %v6404 = vadd.f32 0.0, %v6403
    %v6405 = vpop.f32.mrb[0].mxu0
    %6406 = vmatprep.mubr.f32.mxu0 0.0
    %6407 = vmatmul.mubr.f32.gmra.mrb[0].mxu0 %v6121
    %v6408 = vpop.f32.mrb[0].mxu0
    %v6409 = vadd.f32 0.0, %v6408
    %v6410 = vpop.f32.mrb[0].mxu0
    %6411 = vmatprep.mubr.f32.mxu0 0.0
    %6412 = vmatmul.mubr.f32.gmra.mrb[0].mxu0 %v6122
    %v6413 = vpop.f32.mrb[0].mxu0
    %v6414 = vadd.f32 0.0, %v6413
    %v6415 = vpop.f32.mrb[0].mxu0
    %6416 = vmatprep.mubr.f32.mxu0 0.0
    %6417 = vmatmul.mubr.f32.gmra.mrb[0].mxu0 %v6123
    %v6418 = vpop.f32.mrb[0].mxu0
    %v6419 = vadd.f32 0.0, %v6418
    %v6420 = vpop.f32.mrb[0].mxu0
    %6421 = vmatprep.mubr.f32.mxu0 0.0
    %6422 = vmatmul.mubr.f32.gmra.mrb[0].mxu0 %v6124
    %v6423 = vpop.f32.mrb[0].mxu0
    %v6424 = vadd.f32 0.0, %v6423
    %v6425 = vpop.f32.mrb[0].mxu0
    %6426 = vmatprep.mubr.f32.mxu0 0.0
    %6427 = vmatmul.mubr.f32.gmra.mrb[0].mxu0 %v6125
    %v6428 = vpop.f32.mrb[0].mxu0
    %v6429 = vadd.f32 0.0, %v6428
    %v6430 = vpop.f32.mrb[0].mxu0
    %6431 = vmatprep.mubr.f32.mxu0 0.0
    %6432 = vmatmul.mubr.f32.gmra.mrb[0].mxu0 %v6126
    %v6433 = vpop.f32.mrb[0].mxu0
    %v6434 = vadd.f32 0.0, %v6433
    %v6435 = vpop.f32.mrb[0].mxu0
    %6436 = vmatprep.mubr.f32.mxu0 0.0
    %6437 = vmatmul.mubr.f32.gmra.mrb[0].mxu0 %v6127
    %v6438 = vpop.f32.mrb[0].mxu0
    %v6439 = vadd.f32 0.0, %v6438
    %v6440 = vpop.f32.mrb[0].mxu0
    %6441 = vmatprep.mubr.f32.mxu0 0.0
    %6442 = vmatmul.mubr.f32.gmra.mrb[0].mxu0 %v6128
    %v6443 = vpop.f32.mrb[0].mxu0
    %v6444 = vadd.f32 0.0, %v6443
    %v6445 = vpop.f32.mrb[0].mxu0
    %6446 = vmatprep.mubr.f32.mxu0 0.0
    %6447 = vmatmul.mubr.f32.gmra.mrb[0].mxu0 %v6129
    %v6448 = vpop.f32.mrb[0].mxu0
    %v6449 = vadd.f32 0.0, %v6448
    %v6450 = vpop.f32.mrb[0].mxu0
    %6451 = vmatprep.mubr.f32.mxu0 0.0
    %6452 = vmatmul.mubr.f32.gmra.mrb[0].mxu0 %v6130
    %v6453 = vpop.f32.mrb[0].mxu0
    %v6454 = vadd.f32 0.0, %v6453
    %v6455 = vpop.f32.mrb[0].mxu0
    %6456 = vmatprep.mubr.f32.mxu0 0.0
    %6457 = vmatmul.mubr.f32.gmra.mrb[0].mxu0 %v6131
    %v6458 = vpop.f32.mrb[0].mxu0
    %v6459 = vadd.f32 0.0, %v6458
    %v6460 = vpop.f32.mrb[0].mxu0
    %6461 = vmatprep.mubr.f32.mxu0 0.0
    %6462 = vmatmul.mubr.f32.gmra.mrb[0].mxu0 %v6132
    %v6463 = vpop.f32.mrb[0].mxu0
    %v6464 = vadd.f32 0.0, %v6463
    %v6465 = vpop.f32.mrb[0].mxu0
    %6466 = vmatprep.mubr.f32.mxu0 0.0
    %6467 = vmatmul.mubr.f32.gmra.mrb[0].mxu0 %v6133
    %v6468 = vpop.f32.mrb[0].mxu0
    %v6469 = vadd.f32 0.0, %v6468
    %v6470 = vpop.f32.mrb[0].mxu0
    %6471 = vmatprep.mubr.f32.mxu0 0.0
    %6472 = vmatmul.mubr.f32.gmra.mrb[0].mxu0 %v6134
    %v6473 = vpop.f32.mrb[0].mxu0
    %v6474 = vadd.f32 0.0, %v6473
    %v6475 = vpop.f32.mrb[0].mxu0
    %6476 = vmatprep.mubr.f32.mxu0 0.0
    %6477 = vmatmul.mubr.f32.gmra.mrb[0].mxu0 %v6135
    %v6478 = vpop.f32.mrb[0].mxu0
    %v6479 = vadd.f32 0.0, %v6478
    %v6480 = vpop.f32.mrb[0].mxu0
    %6481 = vmatprep.mubr.f32.mxu0 0.0
    %6482 = vmatmul.mubr.f32.gmra.mrb[0].mxu0 %v6136
    %v6483 = vpop.f32.mrb[0].mxu0
    %v6484 = vadd.f32 0.0, %v6483
    %v6485 = vpop.f32.mrb[0].mxu0
    %6486 = vmatprep.mubr.f32.mxu0 0.0
    %6487 = vmatmul.mubr.f32.gmra.mrb[0].mxu0 %v6137
    %v6488 = vpop.f32.mrb[0].mxu0
    %v6489 = vadd.f32 0.0, %v6488
    %v6490 = vpop.f32.mrb[0].mxu0
    %6491 = vmatprep.mubr.f32.mxu0 0.0
    %6492 = vmatmul.mubr.f32.gmra.mrb[0].mxu0 %v6138
    %v6493 = vpop.f32.mrb[0].mxu0
    %v6494 = vadd.f32 0.0, %v6493
    %v6495 = vpop.f32.mrb[0].mxu0
    %6496 = vmatprep.mubr.f32.mxu0 0.0
    %6497 = vmatmul.mubr.f32.gmra.mrb[0].mxu0 %v6139
    %v6498 = vpop.f32.mrb[0].mxu0
    %v6499 = vadd.f32 0.0, %v6498
    %v6500 = vpop.f32.mrb[0].mxu0
    %6501 = vmatprep.mubr.f32.mxu0 0.0
    %6502 = vmatmul.mubr.f32.gmra.mrb[0].mxu0 %v6140
    %v6503 = vpop.f32.mrb[0].mxu0
    %v6504 = vadd.f32 0.0, %v6503
    %v6505 = vpop.f32.mrb[0].mxu0
    %6506 = vmatprep.mubr.f32.mxu0 0.0
    %6507 = vmatmul.mubr.f32.gmra.mrb[0].mxu0 %v6141
    %v6508 = vpop.f32.mrb[0].mxu0
    %v6509 = vadd.f32 0.0, %v6508
    %v6510 = vpop.f32.mrb[0].mxu0
    %6511 = vmatprep.mubr.f32.mxu0 0.0
    %6512 = vmatmul.mubr.f32.gmra.mrb[0].mxu0 %v6142
    %v6513 = vpop.f32.mrb[0].mxu0
    %v6514 = vadd.f32 0.0, %v6513
    %v6515 = vpop.f32.mrb[0].mxu0
    %6516 = vmatprep.mubr.f32.mxu0 0.0
    %6517 = vmatmul.mubr.f32.gmra.mrb[0].mxu0 %v6143
    %v6518 = vpop.f32.mrb[0].mxu0
    %v6519 = vadd.f32 0.0, %v6518
    %v6520 = vpop.f32.mrb[0].mxu0
    %6521 = vmatprep.mubr.f32.mxu0 0.0
    %6522 = vmatmul.mubr.f32.gmra.mrb[0].mxu0 %v6144
    %v6523 = vpop.f32.mrb[0].mxu0
    %v6524 = vadd.f32 0.0, %v6523
    %v6525 = vpop.f32.mrb[0].mxu0
    %6526 = vmatprep.mubr.f32.mxu0 0.0
    %6527 = vmatmul.mubr.f32.gmra.mrb[0].mxu0 %v6145
    %v6528 = vpop.f32.mrb[0].mxu0
    %v6529 = vadd.f32 0.0, %v6528
    %v6530 = vpop.f32.mrb[0].mxu0
    %6531 = vmatprep.mubr.f32.mxu0 0.0
    %6532 = vmatmul.mubr.f32.gmra.mrb[0].mxu0 %v6146
    %v6533 = vpop.f32.mrb[0].mxu0
    %v6534 = vadd.f32 0.0, %v6533
    %v6535 = vpop.f32.mrb[0].mxu0
    %6536 = vmatprep.mubr.f32.mxu0 0.0
    %6537 = vmatmul.mubr.f32.gmra.mrb[0].mxu0 %v6147
    %v6538 = vpop.f32.mrb[0].mxu0
    %v6539 = vadd.f32 0.0, %v6538
    %v6540 = vpop.f32.mrb[0].mxu0
    %6541 = vmatprep.mubr.f32.mxu0 0.0
    %6542 = vmatmul.mubr.f32.gmra.mrb[0].mxu0 %v6148
    %v6543 = vpop.f32.mrb[0].mxu0
    %v6544 = vadd.f32 0.0, %v6543
    %v6545 = vpop.f32.mrb[0].mxu0
    %6546 = vmatprep.mubr.f32.mxu0 0.0
    %6547 = vmatmul.mubr.f32.gmra.mrb[0].mxu0 %v6149
    %v6548 = vpop.f32.mrb[0].mxu0
    %v6549 = vadd.f32 0.0, %v6548
    %v6550 = vpop.f32.mrb[0].mxu0
    %6551 = vmatprep.mubr.f32.mxu0 0.0
    %6552 = vmatmul.mubr.f32.gmra.mrb[0].mxu0 %v6150
    %v6553 = vpop.f32.mrb[0].mxu0
    %v6554 = vadd.f32 0.0, %v6553
    %v6555 = vpop.f32.mrb[0].mxu0
    %6556 = vmatprep.mubr.f32.mxu0 0.0
    %6557 = vmatmul.mubr.f32.gmra.mrb[0].mxu0 %v6151
    %v6558 = vpop.f32.mrb[0].mxu0
    %v6559 = vadd.f32 0.0, %v6558
    %v6560 = vpop.f32.mrb[0].mxu0
    %6561 = vmatprep.mubr.f32.mxu0 0.0
    %6562 = vmatmul.mubr.f32.gmra.mrb[0].mxu0 %v6152
    %v6563 = vpop.f32.mrb[0].mxu0
    %v6564 = vadd.f32 0.0, %v6563
    %v6565 = vpop.f32.mrb[0].mxu0
    %6566 = vmatprep.mubr.f32.mxu0 0.0
    %6567 = vmatmul.mubr.f32.gmra.mrb[0].mxu0 %v6153
    %v6568 = vpop.f32.mrb[0].mxu0
    %v6569 = vadd.f32 0.0, %v6568
    %v6570 = vpop.f32.mrb[0].mxu0
    %6571 = vmatprep.mubr.f32.mxu0 0.0
    %6572 = vmatmul.mubr.f32.gmra.mrb[0].mxu0 %v6154
    %v6573 = vpop.f32.mrb[0].mxu0
    %v6574 = vadd.f32 0.0, %v6573
    %v6575 = vpop.f32.mrb[0].mxu0
    %6576 = vmatprep.mubr.f32.mxu0 0.0
    %6577 = vmatmul.mubr.f32.gmra.mrb[0].mxu0 %v6155
    %v6578 = vpop.f32.mrb[0].mxu0
    %v6579 = vadd.f32 0.0, %v6578
    %v6580 = vpop.f32.mrb[0].mxu0
    %6581 = vmatprep.mubr.f32.mxu0 0.0
    %6582 = vmatmul.mubr.f32.gmra.mrb[0].mxu0 %v6156
    %v6583 = vpop.f32.mrb[0].mxu0
    %v6584 = vadd.f32 0.0, %v6583
    %v6585 = vpop.f32.mrb[0].mxu0
    %6586 = vmatprep.mubr.f32.mxu0 0.0
    %6587 = vmatmul.mubr.f32.gmra.mrb[0].mxu0 %v6157
    %v6588 = vpop.f32.mrb[0].mxu0
    %v6589 = vadd.f32 0.0, %v6588
    %v6590 = vpop.f32.mrb[0].mxu0
    %6591 = vmatprep.mubr.f32.mxu0 0.0
    %6592 = vmatmul.mubr.f32.gmra.mrb[0].mxu0 %v6158
    %v6593 = vpop.f32.mrb[0].mxu0
    %v6594 = vadd.f32 0.0, %v6593
    %v6595 = vpop.f32.mrb[0].mxu0
    %6596 = vmatprep.mubr.f32.mxu0 0.0
    %6597 = vmatmul.mubr.f32.gmra.mrb[0].mxu0 %v6159
    %v6598 = vpop.f32.mrb[0].mxu0
    %v6599 = vadd.f32 0.0, %v6598
    %v6600 = vpop.f32.mrb[0].mxu0
    %6601 = vmatprep.mubr.f32.mxu0 0.0
    %6602 = vmatmul.mubr.f32.gmra.mrb[0].mxu0 %v6160
    %v6603 = vpop.f32.mrb[0].mxu0
    %v6604 = vadd.f32 0.0, %v6603
    %v6605 = vpop.f32.mrb[0].mxu0
    %6606 = vmatprep.mubr.f32.mxu0 0.0
    %6607 = vmatmul.mubr.f32.gmra.mrb[0].mxu0 %v6161
    %v6608 = vpop.f32.mrb[0].mxu0
    %v6609 = vadd.f32 0.0, %v6608
    %v6610 = vpop.f32.mrb[0].mxu0
    %6611 = vmatprep.mubr.f32.mxu0 0.0
    %6612 = vmatmul.mubr.f32.gmra.mrb[0].mxu0 %v6162
    %v6613 = vpop.f32.mrb[0].mxu0
    %v6614 = vadd.f32 0.0, %v6613
    %v6615 = vpop.f32.mrb[0].mxu0
    %6616 = vmatprep.mubr.f32.mxu0 0.0
    %6617 = vmatmul.mubr.f32.gmra.mrb[0].mxu0 %v6163
    %v6618 = vpop.f32.mrb[0].mxu0
    %v6619 = vadd.f32 0.0, %v6618
    %v6620 = vpop.f32.mrb[0].mxu0
    %6621 = vmatprep.mubr.f32.mxu0 0.0
    %6622 = vmatmul.mubr.f32.gmra.mrb[0].mxu0 %v6164
    %v6623 = vpop.f32.mrb[0].mxu0
    %v6624 = vadd.f32 0.0, %v6623
    %v6625 = vpop.f32.mrb[0].mxu0
    %6626 = vmatprep.mubr.f32.mxu0 0.0
    %6627 = vmatmul.mubr.f32.gmra.mrb[0].mxu0 %v6165
    %v6628 = vpop.f32.mrb[0].mxu0
    %v6629 = vadd.f32 0.0, %v6628
    %v6630 = vpop.f32.mrb[0].mxu0
    %6631 = vmatprep.mubr.f32.mxu0 0.0
    %6632 = vmatmul.mubr.f32.gmra.mrb[0].mxu0 %v6166
    %v6633 = vpop.f32.mrb[0].mxu0
    %v6634 = vadd.f32 0.0, %v6633
    %v6635 = vpop.f32.mrb[0].mxu0
    %6636 = vmatprep.mubr.f32.mxu0 0.0
    %6637 = vmatmul.mubr.f32.gmra.mrb[0].mxu0 %v6167
    %v6638 = vpop.f32.mrb[0].mxu0
    %v6639 = vadd.f32 0.0, %v6638
    %v6640 = vpop.f32.mrb[0].mxu0
    %6641 = vmatprep.mubr.f32.mxu0 0.0
    %6642 = vmatmul.mubr.f32.gmra.mrb[0].mxu0 %v6168
    %v6643 = vpop.f32.mrb[0].mxu0
    %v6644 = vadd.f32 0.0, %v6643
    %v6645 = vpop.f32.mrb[0].mxu0
    %6646 = vmatprep.mubr.f32.mxu0 0.0
    %6647 = vmatmul.mubr.f32.gmra.mrb[0].mxu0 %v6169
    %v6648 = vpop.f32.mrb[0].mxu0
    %v6649 = vadd.f32 0.0, %v6648
    %v6650 = vpop.f32.mrb[0].mxu0
    %6651 = vmatprep.mubr.f32.mxu0 0.0
    %6652 = vmatmul.mubr.f32.gmra.mrb[0].mxu0 %v6170
    %v6653 = vpop.f32.mrb[0].mxu0
    %v6654 = vadd.f32 0.0, %v6653
    %v6655 = vpop.f32.mrb[0].mxu0
    %6656 = vmatprep.mubr.f32.mxu0 0.0
    %6657 = vmatmul.mubr.f32.gmra.mrb[0].mxu0 %v6171
    %v6658 = vpop.f32.mrb[0].mxu0
    %v6659 = vadd.f32 0.0, %v6658
    %v6660 = vpop.f32.mrb[0].mxu0
    %6661 = vmatprep.mubr.f32.mxu0 0.0
    %6662 = vmatmul.mubr.f32.gmra.mrb[0].mxu0 %v6172
    %v6663 = vpop.f32.mrb[0].mxu0
    %v6664 = vadd.f32 0.0, %v6663
    %v6665 = vpop.f32.mrb[0].mxu0
    %6666 = vmatprep.mubr.f32.mxu0 0.0
    %6667 = vmatmul.mubr.f32.gmra.mrb[0].mxu0 %v6173
    %v6668 = vpop.f32.mrb[0].mxu0
    %v6669 = vadd.f32 0.0, %v6668
    %v6670 = vpop.f32.mrb[0].mxu0
    %6671 = vmatprep.mubr.f32.mxu0 0.0
    %6672 = vmatmul.mubr.f32.gmra.mrb[0].mxu0 %v6174
    %v6673 = vpop.f32.mrb[0].mxu0
    %v6674 = vadd.f32 0.0, %v6673
    %v6675 = vpop.f32.mrb[0].mxu0
    %6676 = vmatprep.mubr.f32.mxu0 0.0
    %6677 = vmatmul.mubr.f32.gmra.mrb[0].mxu0 %v6175
    %v6678 = vpop.f32.mrb[0].mxu0
    %v6679 = vadd.f32 0.0, %v6678
    %v6680 = vpop.f32.mrb[0].mxu0
    %6681 = vmatprep.mubr.f32.mxu0 0.0
    %6682 = vmatmul.mubr.f32.gmra.mrb[0].mxu0 %v6176
    %v6683 = vpop.f32.mrb[0].mxu0
    %v6684 = vadd.f32 0.0, %v6683
    %v6685 = vpop.f32.mrb[0].mxu0
    %6686 = vmatprep.mubr.f32.mxu0 0.0
    %6687 = vmatmul.mubr.f32.gmra.mrb[0].mxu0 %v6177
    %v6688 = vpop.f32.mrb[0].mxu0
    %v6689 = vadd.f32 0.0, %v6688
    %v6690 = vpop.f32.mrb[0].mxu0
    %6691 = vmatprep.mubr.f32.mxu0 0.0
    %6692 = vmatmul.mubr.f32.gmra.mrb[0].mxu0 %v6178
    %v6693 = vpop.f32.mrb[0].mxu0
    %v6694 = vadd.f32 0.0, %v6693
    %v6695 = vpop.f32.mrb[0].mxu0
    %6696 = vmatprep.mubr.f32.mxu0 0.0
    %6697 = vmatmul.mubr.f32.gmra.mrb[0].mxu0 %v6179
    %v6698 = vpop.f32.mrb[0].mxu0
    %v6699 = vadd.f32 0.0, %v6698
    %v6700 = vpop.f32.mrb[0].mxu0
    %6701 = vmatprep.mubr.f32.mxu0 0.0
    %6702 = vmatmul.mubr.f32.gmra.mrb[0].mxu0 %v6180
    %v6703 = vpop.f32.mrb[0].mxu0
    %v6704 = vadd.f32 0.0, %v6703
    %v6705 = vpop.f32.mrb[0].mxu0
    %6706 = vmatprep.mubr.f32.mxu0 0.0
    %6707 = vmatmul.mubr.f32.gmra.mrb[0].mxu0 %v6181
    %v6708 = vpop.f32.mrb[0].mxu0
    %v6709 = vadd.f32 0.0, %v6708
    %v6710 = vpop.f32.mrb[0].mxu0
    %6711 = vmatprep.mubr.f32.mxu0 0.0
    %6712 = vmatmul.mubr.f32.gmra.mrb[0].mxu0 %v6182
    %v6713 = vpop.f32.mrb[0].mxu0
    %v6714 = vadd.f32 0.0, %v6713
    %v6715 = vpop.f32.mrb[0].mxu0
    %6716 = vmatprep.mubr.f32.mxu0 0.0
    %6717 = vmatmul.mubr.f32.gmra.mrb[0].mxu0 %v6183
    %v6718 = vpop.f32.mrb[0].mxu0
    %v6719 = vadd.f32 0.0, %v6718
    %v6720 = vpop.f32.mrb[0].mxu0
    %6721 = vmatprep.mubr.f32.mxu0 0.0
    %6722 = vmatmul.mubr.f32.gmra.mrb[0].mxu0 %v6184
    %v6723 = vpop.f32.mrb[0].mxu0
    %v6724 = vadd.f32 0.0, %v6723
    %v6725 = vpop.f32.mrb[0].mxu0
    %6726 = vmatprep.mubr.f32.mxu0 0.0
    %6727 = vmatmul.mubr.f32.gmra.mrb[0].mxu0 %v6185
    %v6728 = vpop.f32.mrb[0].mxu0
    %v6729 = vadd.f32 0.0, %v6728
    %v6730 = vpop.f32.mrb[0].mxu0
    %6731 = vmatprep.mubr.f32.mxu0 0.0
    %6732 = vmatmul.mubr.f32.gmra.mrb[0].mxu0 %v6186
    %v6733 = vpop.f32.mrb[0].mxu0
    %v6734 = vadd.f32 0.0, %v6733
    %v6735 = vpop.f32.mrb[0].mxu0
    %6736 = vmatprep.mubr.f32.mxu0 0.0
    %6737 = vmatmul.mubr.f32.gmra.mrb[0].mxu0 %v6187
    %v6738 = vpop.f32.mrb[0].mxu0
    %v6739 = vadd.f32 0.0, %v6738
    %v6740 = vpop.f32.mrb[0].mxu0
    %6741 = vmatprep.mubr.f32.mxu0 0.0
    %6742 = vmatmul.mubr.f32.gmra.mrb[0].mxu0 %v6188
    %v6743 = vpop.f32.mrb[0].mxu0
    %v6744 = vadd.f32 0.0, %v6743
    %v6745 = vpop.f32.mrb[0].mxu0
    %6746 = vmatprep.mubr.f32.mxu0 0.0
    %6747 = vmatmul.mubr.f32.gmra.mrb[0].mxu0 %v6189
    %v6748 = vpop.f32.mrb[0].mxu0
    %v6749 = vadd.f32 0.0, %v6748
    %v6750 = vpop.f32.mrb[0].mxu0
    %6751 = vmatprep.mubr.f32.mxu0 0.0
    %6752 = vmatmul.mubr.f32.gmra.mrb[0].mxu0 %v6190
    %v6753 = vpop.f32.mrb[0].mxu0
    %v6754 = vadd.f32 0.0, %v6753
    %v6755 = vpop.f32.mrb[0].mxu0
    %6756 = vmatprep.mubr.f32.mxu0 0.0
    %6757 = vmatmul.mubr.f32.gmra.mrb[0].mxu0 %v6191
    %v6758 = vpop.f32.mrb[0].mxu0
    %v6759 = vadd.f32 0.0, %v6758
    %v6760 = vpop.f32.mrb[0].mxu0
    %6761 = vmatprep.mubr.f32.mxu0 0.0
    %6762 = vmatmul.mubr.f32.gmra.mrb[0].mxu0 %v6192
    %v6763 = vpop.f32.mrb[0].mxu0
    %v6764 = vadd.f32 0.0, %v6763
    %v6765 = vpop.f32.mrb[0].mxu0
    %6766 = vmatprep.mubr.f32.mxu0 0.0
    %6767 = vmatmul.mubr.f32.gmra.mrb[0].mxu0 %v6193
    %v6768 = vpop.f32.mrb[0].mxu0
    %v6769 = vadd.f32 0.0, %v6768
    %v6770 = vpop.f32.mrb[0].mxu0
    %6771 = vmatprep.mubr.f32.mxu0 0.0
    %6772 = vmatmul.mubr.f32.gmra.mrb[0].mxu0 %v6194
    %v6773 = vpop.f32.mrb[0].mxu0
    %v6774 = vadd.f32 0.0, %v6773
    %v6775 = vpop.f32.mrb[0].mxu0
    %6776 = vdwg.mxu0
    %v6777 = vadd.f32 %v5995, %v6279
    %v6778 = vadd.f32 %v5996, %v6284
    %v6779 = vadd.f32 %v5997, %v6289
    %v6780 = vadd.f32 %v5998, %v6294
    %v6781 = vadd.f32 %v5999, %v6299
    %v6782 = vadd.f32 %v6000, %v6304
    %v6783 = vadd.f32 %v6001, %v6309
    %v6784 = vadd.f32 %v6002, %v6314
    %v6785 = vadd.f32 %v6003, %v6319
    %v6786 = vadd.f32 %v6004, %v6324
    %v6787 = vadd.f32 %v6005, %v6329
    %v6788 = vadd.f32 %v6006, %v6334
    %v6789 = vadd.f32 %v6007, %v6339
    %v6790 = vadd.f32 %v6008, %v6344
    %v6791 = vadd.f32 %v6009, %v6349
    %v6792 = vadd.f32 %v6010, %v6354
    %v6793 = vadd.f32 %v6011, %v6359
    %v6794 = vadd.f32 %v6012, %v6364
    %v6795 = vadd.f32 %v6013, %v6369
    %v6796 = vadd.f32 %v6014, %v6374
    %v6797 = vadd.f32 %v6015, %v6379
    %v6798 = vadd.f32 %v6016, %v6384
    %v6799 = vadd.f32 %v6017, %v6389
    %v6800 = vadd.f32 %v6018, %v6394
    %v6801 = vadd.f32 %v6019, %v6399
    %v6802 = vadd.f32 %v6020, %v6404
    %v6803 = vadd.f32 %v6021, %v6409
    %v6804 = vadd.f32 %v6022, %v6414
    %v6805 = vadd.f32 %v6023, %v6419
    %v6806 = vadd.f32 %v6024, %v6424
    %v6807 = vadd.f32 %v6025, %v6429
    %v6808 = vadd.f32 %v6026, %v6434
    %v6809 = vadd.f32 %v6027, %v6439
    %v6810 = vadd.f32 %v6028, %v6444
    %v6811 = vadd.f32 %v6029, %v6449
    %v6812 = vadd.f32 %v6030, %v6454
    %v6813 = vadd.f32 %v6031, %v6459
    %v6814 = vadd.f32 %v6032, %v6464
    %v6815 = vadd.f32 %v6033, %v6469
    %v6816 = vadd.f32 %v6034, %v6474
    %v6817 = vadd.f32 %v6035, %v6479
    %v6818 = vadd.f32 %v6036, %v6484
    %v6819 = vadd.f32 %v6037, %v6489
    %v6820 = vadd.f32 %v6038, %v6494
    %v6821 = vadd.f32 %v6039, %v6499
    %v6822 = vadd.f32 %v6040, %v6504
    %v6823 = vadd.f32 %v6041, %v6509
    %v6824 = vadd.f32 %v6042, %v6514
    %v6825 = vadd.f32 %v6043, %v6519
    %v6826 = vadd.f32 %v6044, %v6524
    %v6827 = vadd.f32 %v6045, %v6529
    %v6828 = vadd.f32 %v6046, %v6534
    %v6829 = vadd.f32 %v6047, %v6539
    %v6830 = vadd.f32 %v6048, %v6544
    %v6831 = vadd.f32 %v6049, %v6549
    %v6832 = vadd.f32 %v6050, %v6554
    %v6833 = vadd.f32 %v6051, %v6559
    %v6834 = vadd.f32 %v6052, %v6564
    %v6835 = vadd.f32 %v6053, %v6569
    %v6836 = vadd.f32 %v6054, %v6574
    %v6837 = vadd.f32 %v6055, %v6579
    %v6838 = vadd.f32 %v6056, %v6584
    %v6839 = vadd.f32 %v6057, %v6589
    %v6840 = vadd.f32 %v6058, %v6594
    %v6841 = vadd.f32 %v6059, %v6599
    %v6842 = vadd.f32 %v6060, %v6604
    %v6843 = vadd.f32 %v6061, %v6609
    %v6844 = vadd.f32 %v6062, %v6614
    %v6845 = vadd.f32 %v6063, %v6619
    %v6846 = vadd.f32 %v6064, %v6624
    %v6847 = vadd.f32 %v6065, %v6629
    %v6848 = vadd.f32 %v6066, %v6634
    %v6849 = vadd.f32 %v6067, %v6639
    %v6850 = vadd.f32 %v6068, %v6644
    %v6851 = vadd.f32 %v6069, %v6649
    %v6852 = vadd.f32 %v6070, %v6654
    %v6853 = vadd.f32 %v6071, %v6659
    %v6854 = vadd.f32 %v6072, %v6664
    %v6855 = vadd.f32 %v6073, %v6669
    %v6856 = vadd.f32 %v6074, %v6674
    %v6857 = vadd.f32 %v6075, %v6679
    %v6858 = vadd.f32 %v6076, %v6684
    %v6859 = vadd.f32 %v6077, %v6689
    %v6860 = vadd.f32 %v6078, %v6694
    %v6861 = vadd.f32 %v6079, %v6699
    %v6862 = vadd.f32 %v6080, %v6704
    %v6863 = vadd.f32 %v6081, %v6709
    %v6864 = vadd.f32 %v6082, %v6714
    %v6865 = vadd.f32 %v6083, %v6719
    %v6866 = vadd.f32 %v6084, %v6724
    %v6867 = vadd.f32 %v6085, %v6729
    %v6868 = vadd.f32 %v6086, %v6734
    %v6869 = vadd.f32 %v6087, %v6739
    %v6870 = vadd.f32 %v6088, %v6744
    %v6871 = vadd.f32 %v6089, %v6749
    %v6872 = vadd.f32 %v6090, %v6754
    %v6873 = vadd.f32 %v6091, %v6759
    %v6874 = vadd.f32 %v6092, %v6764
    %v6875 = vadd.f32 %v6093, %v6769
    %v6876 = vadd.f32 %v6094, %v6774
    %6877 = vst [vmem:[#allocation7] sm:$0xff] %v6777
    %6878 = vst [vmem:[#allocation7 + $0x8] sm:$0xff] %v6778
    %6879 = vst [vmem:[#allocation7 + $0x10] sm:$0xff] %v6779
    %6880 = vst [vmem:[#allocation7 + $0x18] sm:$0xff] %v6780
    %6881 = vst [vmem:[#allocation7 + $0x20] sm:$0xff] %v6781
    %6882 = vst [vmem:[#allocation7 + $0x28] sm:$0xff] %v6782
    %6883 = vst [vmem:[#allocation7 + $0x30] sm:$0xff] %v6783
    %6884 = vst [vmem:[#allocation7 + $0x38] sm:$0xff] %v6784
    %6885 = vst [vmem:[#allocation7 + $0x40] sm:$0xff] %v6785
    %6886 = vst [vmem:[#allocation7 + $0x48] sm:$0xff] %v6786
    %6887 = vst [vmem:[#allocation7 + $0x50] sm:$0xff] %v6787
    %6888 = vst [vmem:[#allocation7 + $0x58] sm:$0xff] %v6788
    %6889 = vst [vmem:[#allocation7 + $0x60] sm:$0xff] %v6789
    %6890 = vst [vmem:[#allocation7 + $0x68] sm:$0xff] %v6790
    %6891 = vst [vmem:[#allocation7 + $0x70] sm:$0xff] %v6791
    %6892 = vst [vmem:[#allocation7 + $0x78] sm:$0xff] %v6792
    %6893 = vst [vmem:[#allocation7 + $0x80] sm:$0xff] %v6793
    %6894 = vst [vmem:[#allocation7 + $0x88] sm:$0xff] %v6794
    %6895 = vst [vmem:[#allocation7 + $0x90] sm:$0xff] %v6795
    %6896 = vst [vmem:[#allocation7 + $0x98] sm:$0xff] %v6796
    %6897 = vst [vmem:[#allocation7 + $0xa0] sm:$0xff] %v6797
    %6898 = vst [vmem:[#allocation7 + $0xa8] sm:$0xff] %v6798
    %6899 = vst [vmem:[#allocation7 + $0xb0] sm:$0xff] %v6799
    %6900 = vst [vmem:[#allocation7 + $0xb8] sm:$0xff] %v6800
    %6901 = vst [vmem:[#allocation7 + $0xc0] sm:$0xff] %v6801
    %6902 = vst [vmem:[#allocation7 + $0xc8] sm:$0xff] %v6802
    %6903 = vst [vmem:[#allocation7 + $0xd0] sm:$0xff] %v6803
    %6904 = vst [vmem:[#allocation7 + $0xd8] sm:$0xff] %v6804
    %6905 = vst [vmem:[#allocation7 + $0xe0] sm:$0xff] %v6805
    %6906 = vst [vmem:[#allocation7 + $0xe8] sm:$0xff] %v6806
    %6907 = vst [vmem:[#allocation7 + $0xf0] sm:$0xff] %v6807
    %6908 = vst [vmem:[#allocation7 + $0xf8] sm:$0xff] %v6808
    %6909 = vst [vmem:[#allocation7 + $0x100] sm:$0xff] %v6809
    %6910 = vst [vmem:[#allocation7 + $0x108] sm:$0xff] %v6810
    %6911 = vst [vmem:[#allocation7 + $0x110] sm:$0xff] %v6811
    %6912 = vst [vmem:[#allocation7 + $0x118] sm:$0xff] %v6812
    %6913 = vst [vmem:[#allocation7 + $0x120] sm:$0xff] %v6813
    %6914 = vst [vmem:[#allocation7 + $0x128] sm:$0xff] %v6814
    %6915 = vst [vmem:[#allocation7 + $0x130] sm:$0xff] %v6815
    %6916 = vst [vmem:[#allocation7 + $0x138] sm:$0xff] %v6816
    %6917 = vst [vmem:[#allocation7 + $0x140] sm:$0xff] %v6817
    %6918 = vst [vmem:[#allocation7 + $0x148] sm:$0xff] %v6818
    %6919 = vst [vmem:[#allocation7 + $0x150] sm:$0xff] %v6819
    %6920 = vst [vmem:[#allocation7 + $0x158] sm:$0xff] %v6820
    %6921 = vst [vmem:[#allocation7 + $0x160] sm:$0xff] %v6821
    %6922 = vst [vmem:[#allocation7 + $0x168] sm:$0xff] %v6822
    %6923 = vst [vmem:[#allocation7 + $0x170] sm:$0xff] %v6823
    %6924 = vst [vmem:[#allocation7 + $0x178] sm:$0xff] %v6824
    %6925 = vst [vmem:[#allocation7 + $0x180] sm:$0xff] %v6825
    %6926 = vst [vmem:[#allocation7 + $0x188] sm:$0xff] %v6826
    %6927 = vst [vmem:[#allocation7 + $0x190] sm:$0xff] %v6827
    %6928 = vst [vmem:[#allocation7 + $0x198] sm:$0xff] %v6828
    %6929 = vst [vmem:[#allocation7 + $0x1a0] sm:$0xff] %v6829
    %6930 = vst [vmem:[#allocation7 + $0x1a8] sm:$0xff] %v6830
    %6931 = vst [vmem:[#allocation7 + $0x1b0] sm:$0xff] %v6831
    %6932 = vst [vmem:[#allocation7 + $0x1b8] sm:$0xff] %v6832
    %6933 = vst [vmem:[#allocation7 + $0x1c0] sm:$0xff] %v6833
    %6934 = vst [vmem:[#allocation7 + $0x1c8] sm:$0xff] %v6834
    %6935 = vst [vmem:[#allocation7 + $0x1d0] sm:$0xff] %v6835
    %6936 = vst [vmem:[#allocation7 + $0x1d8] sm:$0xff] %v6836
    %6937 = vst [vmem:[#allocation7 + $0x1e0] sm:$0xff] %v6837
    %6938 = vst [vmem:[#allocation7 + $0x1e8] sm:$0xff] %v6838
    %6939 = vst [vmem:[#allocation7 + $0x1f0] sm:$0xff] %v6839
    %6940 = vst [vmem:[#allocation7 + $0x1f8] sm:$0xff] %v6840
    %6941 = vst [vmem:[#allocation7 + $0x200] sm:$0xff] %v6841
    %6942 = vst [vmem:[#allocation7 + $0x208] sm:$0xff] %v6842
    %6943 = vst [vmem:[#allocation7 + $0x210] sm:$0xff] %v6843
    %6944 = vst [vmem:[#allocation7 + $0x218] sm:$0xff] %v6844
    %6945 = vst [vmem:[#allocation7 + $0x220] sm:$0xff] %v6845
    %6946 = vst [vmem:[#allocation7 + $0x228] sm:$0xff] %v6846
    %6947 = vst [vmem:[#allocation7 + $0x230] sm:$0xff] %v6847
    %6948 = vst [vmem:[#allocation7 + $0x238] sm:$0xff] %v6848
    %6949 = vst [vmem:[#allocation7 + $0x240] sm:$0xff] %v6849
    %6950 = vst [vmem:[#allocation7 + $0x248] sm:$0xff] %v6850
    %6951 = vst [vmem:[#allocation7 + $0x250] sm:$0xff] %v6851
    %6952 = vst [vmem:[#allocation7 + $0x258] sm:$0xff] %v6852
    %6953 = vst [vmem:[#allocation7 + $0x260] sm:$0xff] %v6853
    %6954 = vst [vmem:[#allocation7 + $0x268] sm:$0xff] %v6854
    %6955 = vst [vmem:[#allocation7 + $0x270] sm:$0xff] %v6855
    %6956 = vst [vmem:[#allocation7 + $0x278] sm:$0xff] %v6856
    %6957 = vst [vmem:[#allocation7 + $0x280] sm:$0xff] %v6857
    %6958 = vst [vmem:[#allocation7 + $0x288] sm:$0xff] %v6858
    %6959 = vst [vmem:[#allocation7 + $0x290] sm:$0xff] %v6859
    %6960 = vst [vmem:[#allocation7 + $0x298] sm:$0xff] %v6860
    %6961 = vst [vmem:[#allocation7 + $0x2a0] sm:$0xff] %v6861
    %6962 = vst [vmem:[#allocation7 + $0x2a8] sm:$0xff] %v6862
    %6963 = vst [vmem:[#allocation7 + $0x2b0] sm:$0xff] %v6863
    %6964 = vst [vmem:[#allocation7 + $0x2b8] sm:$0xff] %v6864
    %6965 = vst [vmem:[#allocation7 + $0x2c0] sm:$0xff] %v6865
    %6966 = vst [vmem:[#allocation7 + $0x2c8] sm:$0xff] %v6866
    %6967 = vst [vmem:[#allocation7 + $0x2d0] sm:$0xff] %v6867
    %6968 = vst [vmem:[#allocation7 + $0x2d8] sm:$0xff] %v6868
    %6969 = vst [vmem:[#allocation7 + $0x2e0] sm:$0xff] %v6869
    %6970 = vst [vmem:[#allocation7 + $0x2e8] sm:$0xff] %v6870
    %6971 = vst [vmem:[#allocation7 + $0x2f0] sm:$0xff] %v6871
    %6972 = vst [vmem:[#allocation7 + $0x2f8] sm:$0xff] %v6872
    %6973 = vst [vmem:[#allocation7 + $0x300] sm:$0xff] %v6873
    %6974 = vst [vmem:[#allocation7 + $0x308] sm:$0xff] %v6874
    %6975 = vst [vmem:[#allocation7 + $0x310] sm:$0xff] %v6875
    %6976 = vst [vmem:[#allocation7 + $0x318] sm:$0xff] %v6876
    // Predicated region
    $region18: #{tpu_custom_call.1} parent=1 // pred_check
      _
    $region19: #{tpu_custom_call.1} parent=1 // pred_check_branch
      %6978 = sbr.rel (0) target = $region21
    $region20: #{tpu_custom_call.1} parent=1 // pred_region
      %s6980 = ssub.s32 12800, 12800
      %6981 = vsyncadd [#allocation4], %s6980
      %s6982 = sshll.u32 [#allocation7], 4
      %s6983 = int_to_ptr.vmem [resolvable:$true] %s6982
      %6988 = dma.vmem_to_hbm [thread:$0]  %s6983, 12800, %s2, [#allocation4], 128, 128, 8
    $region21: #{tpu_custom_call.1} parent=1 // pred_fallthru
      _
    // Predicated region
    $region22: #{tpu_custom_call.1} parent=1 // pred_check
      _
    $region23: #{tpu_custom_call.1} parent=1 // pred_check_branch
      %6990 = sbr.rel (0) target = $region25
    $region24: #{tpu_custom_call.1} parent=1 // pred_region
      %6991 = dma.done [#allocation4], 12800
    $region25: #{tpu_custom_call.1} parent=1 // pred_fallthru
      _
    %6992 = vsyncpa [#allocation3], 1
    %6993 = vsyncpa [#allocation6], 1
    %6994 = vsyncpa [#allocation4], 1

</llo_original>
